<compile_context>
chip_gen: v6e
topology: v6e:2x2x1
jax: 0.10.0
libtpu: 0.0.40
codegen_flags: <defaults>
</compile_context>

<pallas_src>
import math
import jax
import jax.numpy as jnp
from jax.experimental import pallas as pl
from jax.experimental.pallas import tpu as pltpu

OUT_FEATURES = 176   # df['label'].nunique() for the classify-leaves dataset
STEM_CH = 32
CARDINALITY = 4      # scaled down from 32
LANE = 128


def _round_up(x, m):
    return (x + m - 1) // m * m


def _cpad(c):
    return _round_up(c, LANE)


# ------------------------------------------------ fused matmul + affine + act
def _make_mm_affine_kernel(act):
    def kernel(a_ref, b_ref, scale_ref, shift_ref, o_ref, acc_ref):
        @pl.when(pl.program_id(2) == 0)
        def _():
            acc_ref[...] = jnp.zeros_like(acc_ref)

        acc_ref[...] += jnp.dot(a_ref[...], b_ref[...],
                                preferred_element_type=jnp.float32)

        @pl.when(pl.program_id(2) == pl.num_programs(2) - 1)
        def _():
            y = acc_ref[...] * scale_ref[...] + shift_ref[...]
            if act == "relu":
                y = jnp.maximum(y, 0.0)
            o_ref[...] = y.astype(o_ref.dtype)
    return kernel


def _pick_tk(K):
    """K tile that minimises padding of K (then prefers the largest tile)."""
    tk, kp = 512, _round_up(K, 512)
    for c in (384, 256, 128):
        cand = _round_up(K, c)
        if cand < kp:
            tk, kp = c, cand
    return tk, kp


def matmul_affine(a, b, scale, shift, act="none", out_dtype=jnp.bfloat16):
    """act((A @ B) * scale + shift); bf16 MXU inputs, f32 accumulate.

    b / scale / shift are pre-padded on N to a multiple of 128 at init, so the
    hot path has no per-call pad or slice on the channel dim.
    """
    M, K = a.shape
    K2, N = b.shape
    assert K == K2 and N % LANE == 0
    tm = min(512, _round_up(M, 8))
    Mp = _round_up(M, tm)
    tn = 256 if N % 256 == 0 else 128   # tn=128 already saturates the v5e MXU
    tk, Kp = _pick_tk(K)
    a_p = a.astype(jnp.bfloat16)
    if (Mp, Kp) != (M, K):
        a_p = jnp.pad(a_p, ((0, Mp - M), (0, Kp - K)))
    b_p = b.astype(jnp.bfloat16)
    if Kp != K:
        b_p = jnp.pad(b_p, ((0, Kp - K), (0, 0)))
    scale_p = scale.reshape(1, N).astype(jnp.float32)
    shift_p = shift.reshape(1, N).astype(jnp.float32)
    out = pl.pallas_call(
        _make_mm_affine_kernel(act),
        out_shape=jax.ShapeDtypeStruct((Mp, N), out_dtype),
        grid_spec=pltpu.PrefetchScalarGridSpec(
            num_scalar_prefetch=0,
            grid=(Mp // tm, N // tn, Kp // tk),
            in_specs=[pl.BlockSpec((tm, tk), lambda i, j, k: (i, k)),
                      pl.BlockSpec((tk, tn), lambda i, j, k: (k, j)),
                      pl.BlockSpec((1, tn), lambda i, j, k: (0, j)),
                      pl.BlockSpec((1, tn), lambda i, j, k: (0, j))],
            out_specs=pl.BlockSpec((tm, tn), lambda i, j, k: (i, j)),
            scratch_shapes=[pltpu.VMEM((tm, tn), jnp.float32)]),
        compiler_params=pltpu.CompilerParams(
            dimension_semantics=("parallel", "parallel", "arbitrary")),
    )(a_p, b_p, scale_p, shift_p)
    return out if Mp == M else out[:M]


# ------------------------------------------------------------ 1x1 conv (+BN)
def conv1x1_bn_act(x_nhwc, w, scale, shift, stride=1, act="relu"):
    N, H, W, Cin = x_nhwc.shape
    xs = x_nhwc[:, ::stride, ::stride, :] if stride > 1 else x_nhwc
    _, Ho, Wo, _ = xs.shape
    Cout = w.shape[1]
    out = matmul_affine(xs.reshape(N * Ho * Wo, Cin), w, scale, shift, act=act)
    return out.reshape(N, Ho, Wo, Cout)


# --------------------------------------------------------------- 7x7 stem
def _im2col(x_nhwc, kh, kw, stride, pad):
    N, H, W, C = x_nhwc.shape
    Ho = (H + 2 * pad - kh) // stride + 1
    Wo = (W + 2 * pad - kw) // stride + 1
    xp = jnp.pad(x_nhwc, ((0, 0), (pad, pad), (pad, pad), (0, 0)))
    cols = [xp[:, i:i + stride * Ho:stride, j:j + stride * Wo:stride, :]
            for i in range(kh) for j in range(kw)]
    cols = jnp.stack(cols, axis=3)                      # (N,Ho,Wo,kh*kw,C)
    return cols.reshape(N, Ho, Wo, kh * kw * C), Ho, Wo


def stem_conv_bn_relu(x_nhwc, w_flat, scale, shift, k=7, stride=2, pad=3):
    # TODO(synk): the 3-channel stem keeps a small im2col slab (49*3 columns);
    # every other conv in the network reads the activation directly.
    N = x_nhwc.shape[0]
    cols, Ho, Wo = _im2col(x_nhwc, k, k, stride, pad)
    Cout = w_flat.shape[1]
    out = matmul_affine(cols.reshape(N * Ho * Wo, cols.shape[-1]),
                        w_flat, scale, shift, act="relu")
    return out.reshape(N, Ho, Wo, Cout)


# ---------------------------------------------- direct conv / pool machinery
def _build_phases(x_nhwc, k, s, p, pad_value=0.0):
    """Spatially pad (+ stride-phase split for s>1) so conv/pool kernels can
    read every tap as a shifted window of one slab — no im2col in HBM."""
    N, H, W, C = x_nhwc.shape
    Ho = (H + 2 * p - k) // s + 1
    Wo = (W + 2 * p - k) // s + 1
    r = (k - 1) // s
    Hph = Ho + r
    Wslice = _round_up(Wo, 8)
    Wph = _round_up(Wslice + r, 8)
    Hneed = s * Hph + (s - 1)
    Wneed = s * Wph + (s - 1)
    xp = jnp.pad(x_nhwc,
                 ((0, 0), (p, Hneed - H - p), (p, Wneed - W - p), (0, 0)),
                 constant_values=pad_value)
    phases = [xp[:, a::s, b::s, :][:, :Hph, :Wph, :]
              for a in range(s) for b in range(s)]
    ph = jnp.concatenate(phases, axis=1) if len(phases) > 1 else phases[0]
    return ph, Ho, Wo, Hph, Wslice


def _make_direct_conv_kernel(k, s, Ho, Wo, Hph, Wslice, Cin, Cout, act):
    def kernel(x_ref, w_ref, scale_ref, shift_ref, o_ref):
        acc = jnp.zeros((Ho * Wslice, Cout), jnp.float32)
        for t in range(k * k):                       # taps unrolled in-kernel
            dh, dw = t // k, t % k
            phase = (dh % s) * s + (dw % s)
            row0 = phase * Hph + dh // s
            col0 = dw // s
            lhs = x_ref[0, row0:row0 + Ho, col0:col0 + Wslice, :]
            lhs = lhs.reshape(Ho * Wslice, Cin)
            acc = acc + jnp.dot(lhs, w_ref[t],
                                preferred_element_type=jnp.float32)
        y = acc * scale_ref[...] + shift_ref[...]
        if act == "relu":
            y = jnp.maximum(y, 0.0)
        y = y.reshape(Ho, Wslice, Cout)[:, :Wo, :]
        o_ref[0] = y.astype(o_ref.dtype)
    return kernel


def conv2d_bn_act_direct(x_nhwc, w_taps, scale, shift, k, stride, pad,
                         act="relu"):
    """k x k conv + folded BN (+ReLU) reading the activation directly."""
    N, H, W, Cin = x_nhwc.shape
    Cout = w_taps.shape[-1]
    ph, Ho, Wo, Hph, Wslice = _build_phases(x_nhwc, k, stride, pad, 0.0)
    Wph = ph.shape[2]
    ss = stride * stride
    kernel = _make_direct_conv_kernel(k, stride, Ho, Wo, Hph, Wslice,
                                      Cin, Cout, act)
    return pl.pallas_call(
        kernel,
        out_shape=jax.ShapeDtypeStruct((N, Ho, Wo, Cout), jnp.bfloat16),
        grid=(N,),
        in_specs=[
            pl.BlockSpec((1, ss * Hph, Wph, Cin), lambda n: (n, 0, 0, 0)),
            pl.BlockSpec((k * k, Cin, Cout), lambda n: (0, 0, 0)),
            pl.BlockSpec((1, Cout), lambda n: (0, 0)),
            pl.BlockSpec((1, Cout), lambda n: (0, 0)),
        ],
        out_specs=pl.BlockSpec((1, Ho, Wo, Cout), lambda n: (n, 0, 0, 0)),
        compiler_params=pltpu.CompilerParams(
            dimension_semantics=("parallel",)),
    )(ph, w_taps, scale, shift)


# ------------------------------------------------------------------- max pool
def _make_maxpool_kernel(k, s, Ho, Wo, Hph, Wslice):
    def kernel(x_ref, o_ref):
        m = None
        for t in range(k * k):
            dh, dw = t // k, t % k
            phase = (dh % s) * s + (dw % s)
            row0 = phase * Hph + dh // s
            col0 = dw // s
            v = x_ref[0, row0:row0 + Ho, col0:col0 + Wslice, :]
            m = v if m is None else jnp.maximum(m, v)
        o_ref[0] = m[:, :Wo, :]
    return kernel


def max_pool2d(x_nhwc, k=3, s=2, p=1):
    """MaxPool reading the padded strip directly (no (R,9,C) patch slab)."""
    N, H, W, C = x_nhwc.shape
    ph, Ho, Wo, Hph, Wslice = _build_phases(x_nhwc, k, s, p, -jnp.inf)
    Wph = ph.shape[2]
    ss = s * s
    return pl.pallas_call(
        _make_maxpool_kernel(k, s, Ho, Wo, Hph, Wslice),
        out_shape=jax.ShapeDtypeStruct((N, Ho, Wo, C), x_nhwc.dtype),
        grid=(N,),
        in_specs=[pl.BlockSpec((1, ss * Hph, Wph, C),
                               lambda n: (n, 0, 0, 0))],
        out_specs=pl.BlockSpec((1, Ho, Wo, C), lambda n: (n, 0, 0, 0)),
        compiler_params=pltpu.CompilerParams(
            dimension_semantics=("parallel",)),
    )(ph)


# ------------------------------------------------------- global average pool
def _make_gap_kernel(inv_hw):
    def kernel(x_ref, o_ref):
        @pl.when(pl.program_id(1) == 0)
        def _():
            o_ref[...] = jnp.zeros_like(o_ref)
        o_ref[...] += jnp.sum(x_ref[...].astype(jnp.float32), axis=1)

        @pl.when(pl.program_id(1) == pl.num_programs(1) - 1)
        def _():
            o_ref[...] = o_ref[...] * inv_hw
    return kernel


def global_avg_pool(x_nhwc):
    N, H, W, C = x_nhwc.shape
    HW = H * W
    x3 = x_nhwc.reshape(N, HW, C)
    # channel tiles first ("parallel": shardable over v7x's two TensorCores),
    # HW accumulation axis last ("arbitrary").
    tc = min(LANE, C)
    budget_rows = max(8, ((4 << 20) // max(N * tc * 2, 1)) // 8 * 8)
    th = min(_round_up(HW, 8), budget_rows)
    HWp = _round_up(HW, th)
    if HWp != HW:
        x3 = jnp.pad(x3, ((0, 0), (0, HWp - HW), (0, 0)))
    return pl.pallas_call(
        _make_gap_kernel(1.0 / HW),
        out_shape=jax.ShapeDtypeStruct((N, C), jnp.float32),
        grid=(C // tc, HWp // th),
        in_specs=[pl.BlockSpec((N, th, tc), lambda c, t: (0, t, c))],
        out_specs=pl.BlockSpec((N, tc), lambda c, t: (0, c)),
        compiler_params=pltpu.CompilerParams(
            dimension_semantics=("parallel", "arbitrary")),
    )(x3)


# ------------------------------------------------ fused SE FC1/ReLU/FC2/sigmoid
def _se_fc_kernel(s_ref, w1_ref, b1_ref, w2_ref, b2_ref, o_ref):
    h = jnp.dot(s_ref[...], w1_ref[...],
                preferred_element_type=jnp.float32) + b1_ref[...]
    h = jnp.maximum(h, 0.0)
    g = jnp.dot(h.astype(jnp.bfloat16), w2_ref[...],
                preferred_element_type=jnp.float32) + b2_ref[...]
    o_ref[...] = jax.nn.sigmoid(g)


def se_gate(s_nc, w1, b1, w2, b2):
    """sigmoid(relu(s@w1+b1)@w2+b2); one kernel, weights pre-padded at init."""
    N, C = s_nc.shape
    Crp = w1.shape[1]
    Np = max(8, _round_up(N, 8))
    s_p = s_nc.astype(jnp.bfloat16)
    if Np != N:
        s_p = jnp.pad(s_p, ((0, Np - N), (0, 0)))
    out = pl.pallas_call(
        _se_fc_kernel,
        out_shape=jax.ShapeDtypeStruct((Np, C), jnp.float32),
        grid=(1,),
        in_specs=[pl.BlockSpec((Np, C), lambda i: (0, 0)),
                  pl.BlockSpec((C, Crp), lambda i: (0, 0)),
                  pl.BlockSpec((1, Crp), lambda i: (0, 0)),
                  pl.BlockSpec((Crp, C), lambda i: (0, 0)),
                  pl.BlockSpec((1, C), lambda i: (0, 0))],
        out_specs=pl.BlockSpec((Np, C), lambda i: (0, 0)),
    )(s_p, w1, b1, w2, b2)
    return out[:N]


# -------------------- fused projection shortcut + SE gate + residual + ReLU
def _proj_se_kernel(x_ref, w_ref, scale_ref, shift_ref, y_ref, g_ref, o_ref):
    sc = jnp.dot(x_ref[0], w_ref[...], preferred_element_type=jnp.float32)
    sc = sc * scale_ref[...] + shift_ref[...]
    y = y_ref[0].astype(jnp.float32) * g_ref[0]
    o_ref[0] = jnp.maximum(y + sc, 0.0).astype(o_ref.dtype)


def proj_se_residual(x_nhwc, wd, scale_d, shift_d, y_nhwc, gate_nc, stride):
    """relu(y * gate + (x_s @ wd) * scale + shift) in one kernel: the SE gate
    and residual add are fused into the shortcut conv's epilogue."""
    N, H, W, Cin = x_nhwc.shape
    xs = x_nhwc[:, ::stride, ::stride, :] if stride > 1 else x_nhwc
    _, Ho, Wo, _ = xs.shape
    Cout = wd.shape[1]
    HW = Ho * Wo
    x3 = xs.reshape(N, HW, Cin)
    y3 = y_nhwc.reshape(N, HW, Cout)
    g3 = gate_nc.reshape(N, 1, Cout)
    out = pl.pallas_call(
        _proj_se_kernel,
        out_shape=jax.ShapeDtypeStruct((N, HW, Cout), jnp.bfloat16),
        grid=(N,),
        in_specs=[pl.BlockSpec((1, HW, Cin), lambda n: (n, 0, 0)),
                  pl.BlockSpec((Cin, Cout), lambda n: (0, 0)),
                  pl.BlockSpec((1, Cout), lambda n: (0, 0)),
                  pl.BlockSpec((1, Cout), lambda n: (0, 0)),
                  pl.BlockSpec((1, HW, Cout), lambda n: (n, 0, 0)),
                  pl.BlockSpec((1, 1, Cout), lambda n: (n, 0, 0))],
        out_specs=pl.BlockSpec((1, HW, Cout), lambda n: (n, 0, 0)),
        compiler_params=pltpu.CompilerParams(
            dimension_semantics=("parallel",)),
    )(x3, wd, scale_d, shift_d, y3, g3)
    return out.reshape(N, Ho, Wo, Cout)


# ------------------------------------------------------------- parameters
def _conv_weight(key, kh, kw, cin, cout):
    fan_in = kh * kw * cin
    return jax.random.normal(key, (kh, kw, cin, cout),
                             jnp.float32) / math.sqrt(fan_in)


def _bn_affine(key, c, cp):
    k1, k2, k3, k4 = jax.random.split(key, 4)
    gamma = 1.0 + 0.1 * jax.random.normal(k1, (c,), jnp.float32)
    beta = 0.1 * jax.random.normal(k2, (c,), jnp.float32)
    mean = 0.1 * jax.random.normal(k3, (c,), jnp.float32)
    var = 0.5 + jax.random.uniform(k4, (c,), jnp.float32)
    scale = gamma / jnp.sqrt(var + 1e-5)          # folded inference-mode BN
    shift = beta - mean * scale
    scale = jnp.pad(scale, (0, cp - c)).reshape(1, cp)
    shift = jnp.pad(shift, (0, cp - c)).reshape(1, cp)
    return scale, shift


def _linear(key, cin, cout):
    k1, k2 = jax.random.split(key)
    w = jax.random.normal(k1, (cin, cout), jnp.float32) / math.sqrt(cin)
    b = 0.01 * jax.random.normal(k2, (cout,), jnp.float32)
    return w, b.reshape(1, cout)


def _expand_grouped_weight(w, groups):
    """Grouped conv weight (kh,kw,cin_g,cout) -> block-diagonal dense weight."""
    kh, kw, cin_g, cout = w.shape
    cout_g = cout // groups
    cin = cin_g * groups
    wf = jnp.zeros((kh, kw, cin, cout), w.dtype)
    for g in range(groups):
        wf = wf.at[:, :, g * cin_g:(g + 1) * cin_g,
                   g * cout_g:(g + 1) * cout_g].set(
                       w[:, :, :, g * cout_g:(g + 1) * cout_g])
    return wf


def init_block(key, cin, width, cout, se_reduction=4):
    cinp, wp, coutp = _cpad(cin), _cpad(width), _cpad(cout)
    keys = jax.random.split(key, 10)
    p = {}
    w1 = _conv_weight(keys[0], 1, 1, cin, width)
    p["w1"] = jnp.pad(w1.reshape(cin, width),
                      ((0, cinp - cin), (0, wp - width))).astype(jnp.bfloat16)
    p["bn1"] = _bn_affine(keys[1], width, wp)
    w2g = _conv_weight(keys[2], 3, 3, width // CARDINALITY, width)
    # TODO(synk): at the real cardinality-32 scale, switch the grouped conv to
    # a per-group grid axis instead of this dense block-diagonal weight.
    w2 = _expand_grouped_weight(w2g, CARDINALITY)
    w2 = jnp.pad(w2, ((0, 0), (0, 0), (0, wp - width), (0, wp - width)))
    p["w2"] = w2.reshape(9, wp, wp).astype(jnp.bfloat16)       # taps-first
    p["bn2"] = _bn_affine(keys[3], width, wp)
    w3 = _conv_weight(keys[4], 1, 1, width, cout)
    p["w3"] = jnp.pad(w3.reshape(width, cout),
                      ((0, wp - width), (0, coutp - cout))).astype(jnp.bfloat16)
    p["bn3"] = _bn_affine(keys[5], cout, coutp)
    cr = cout // se_reduction
    crp = _cpad(cr)
    sw1, sb1 = _linear(keys[6], cout, cr)
    p["se_w1"] = jnp.pad(sw1, ((0, coutp - cout),
                               (0, crp - cr))).astype(jnp.bfloat16)
    p["se_b1"] = jnp.pad(sb1, ((0, 0), (0, crp - cr)))
    sw2, sb2 = _linear(keys[7], cr, cout)
    p["se_w2"] = jnp.pad(sw2, ((0, crp - cr),
                               (0, coutp - cout))).astype(jnp.bfloat16)
    p["se_b2"] = jnp.pad(sb2, ((0, 0), (0, coutp - cout)))
    wd = _conv_weight(keys[8], 1, 1, cin, cout)
    p["wd"] = jnp.pad(wd.reshape(cin, cout),
                      ((0, cinp - cin), (0, coutp - cout))).astype(jnp.bfloat16)
    p["bnd"] = _bn_affine(keys[9], cout, coutp)
    return p


def init_leafnet(key):
    keys = jax.random.split(key, 6)
    p = {}
    stem_cp = _cpad(STEM_CH)
    sw = _conv_weight(keys[0], 7, 7, 3, STEM_CH)
    p["stem_w"] = jnp.pad(sw.reshape(7 * 7 * 3, STEM_CH),
                          ((0, 0), (0, stem_cp - STEM_CH))).astype(jnp.bfloat16)
    p["stem_bn"] = _bn_affine(keys[1], STEM_CH, stem_cp)
    p["block1"] = init_block(keys[2], STEM_CH, 32, 64)
    p["block2"] = init_block(keys[3], 64, 64, 128)
    fcw, fcb = _linear(keys[4], 128, OUT_FEATURES)            # replaced fc
    outp = _cpad(OUT_FEATURES)
    p["fc_w"] = jnp.pad(fcw, ((0, 0),
                              (0, outp - OUT_FEATURES))).astype(jnp.bfloat16)
    p["fc_b"] = jnp.pad(fcb, ((0, 0), (0, outp - OUT_FEATURES)))
    return p


# ---------------------------------------------------------------- forward
def se_bottleneck(x, p, stride):
    s1, b1 = p["bn1"]
    s2, b2 = p["bn2"]
    s3, b3 = p["bn3"]
    sd, bd = p["bnd"]
    y = conv1x1_bn_act(x, p["w1"], s1, b1, stride=1, act="relu")
    y = conv2d_bn_act_direct(y, p["w2"], s2, b2, k=3, stride=stride, pad=1,
                             act="relu")
    y = conv1x1_bn_act(y, p["w3"], s3, b3, stride=1, act="none")
    # squeeze-and-excitation: GAP (tiled reduction) + fused FC1/ReLU/FC2/sigmoid
    pooled = global_avg_pool(y)                                   # (N, C) f32
    gate = se_gate(pooled, p["se_w1"], p["se_b1"], p["se_w2"], p["se_b2"])
    # projection shortcut conv1x1+BN with SE gate + residual + ReLU fused in
    return proj_se_residual(x, p["wd"], sd, bd, y, gate, stride)


def leafnet_forward(params, x_nchw):
    x = jnp.transpose(x_nchw, (0, 2, 3, 1)).astype(jnp.bfloat16)  # NCHW -> NHWC
    ssc, ssh = params["stem_bn"]
    x = stem_conv_bn_relu(x, params["stem_w"], ssc, ssh)           # conv7x7/2
    x = max_pool2d(x, 3, 2, 1)
    x = se_bottleneck(x, params["block1"], stride=1)
    x = se_bottleneck(x, params["block2"], stride=2)
    feat = global_avg_pool(x)                                      # (N, 128)
    ones = jnp.ones((1, params["fc_w"].shape[1]), jnp.float32)
    logits = matmul_affine(feat, params["fc_w"], ones, params["fc_b"],
                           act="none", out_dtype=jnp.float32)
    return logits[:, :OUT_FEATURES]       # padded channels sliced only here


if __name__ == "__main__":
    root = jax.random.PRNGKey(0)
    pkey, xkey = jax.random.split(root)
    params = init_leafnet(pkey)
    x = jax.random.normal(xkey, (2, 3, 32, 32), jnp.float32)       # NCHW
    fwd = jax.jit(leafnet_forward)
    out = fwd(params, x)
    jax.block_until_ready(out)
    assert out.shape == (2, OUT_FEATURES) and out.dtype == jnp.float32
    print("KERNEL_OK")
</pallas_src>

<mosaic_0001>
module attributes {stable_mosaic.version = 11 : i64} {
  func.func @kernel(%arg0: i32, %arg1: i32, %arg2: i32, %arg3: memref<512x256xbf16, #tpu.memory_space<vmem>>, %arg4: memref<256x128xbf16, #tpu.memory_space<vmem>>, %arg5: memref<1x128xf32, #tpu.memory_space<vmem>>, %arg6: memref<1x128xf32, #tpu.memory_space<vmem>>, %arg7: memref<512x128xbf16, #tpu.memory_space<vmem>>, %arg8: memref<512x128xf32, #tpu.memory_space<vmem>>) attributes {dimension_semantics = [#tpu.dimension_semantics<parallel>, #tpu.dimension_semantics<parallel>, #tpu.dimension_semantics<arbitrary>], iteration_bounds = array<i64: 1, 1, 1>, scalar_prefetch = 0 : i64, scratch_operands = 1 : i64, tpu.core_type = #tpu.core_type<tc>, window_params = [{transform_indices = @transform_0, window_bounds = array<i64: 512, 256>}, {transform_indices = @transform_1, window_bounds = array<i64: 256, 128>}, {transform_indices = @transform_2, window_bounds = array<i64: 1, 128>}, {transform_indices = @transform_3, window_bounds = array<i64: 1, 128>}, {transform_indices = @transform_4, window_bounds = array<i64: 512, 128>}]} {
    %c0_i32 = arith.constant 0 : i32
    %0 = arith.cmpi eq, %arg2, %c0_i32 : i32
    %1 = arith.extui %0 : i1 to i32
    %c0_i32_0 = arith.constant 0 : i32
    %2 = arith.cmpi ne, %1, %c0_i32_0 : i32
    scf.if %2 {
      %cst_10 = arith.constant 0.000000e+00 : f32
      %12 = vector.broadcast %cst_10 : f32 to vector<512x128xf32>
      %c0_11 = arith.constant 0 : index
      %c0_12 = arith.constant 0 : index
      %13 = vector.load %arg8[%c0_11, %c0_12] : memref<512x128xf32, #tpu.memory_space<vmem>>, vector<512x128xf32>
      tpu.vector_store %arg8[%c0_11, %c0_12], %12 {strides = array<i32>} : memref<512x128xf32, #tpu.memory_space<vmem>>, vector<512x128xf32>,
    } else {
    }
    %c0 = arith.constant 0 : index
    %c0_1 = arith.constant 0 : index
    %3 = vector.load %arg8[%c0, %c0_1] : memref<512x128xf32, #tpu.memory_space<vmem>>, vector<512x128xf32>
    %c0_2 = arith.constant 0 : index
    %c0_3 = arith.constant 0 : index
    %4 = vector.load %arg3[%c0_2, %c0_3] : memref<512x256xbf16, #tpu.memory_space<vmem>>, vector<512x256xbf16>
    %c0_4 = arith.constant 0 : index
    %c0_5 = arith.constant 0 : index
    %5 = vector.load %arg4[%c0_4, %c0_5] : memref<256x128xbf16, #tpu.memory_space<vmem>>, vector<256x128xbf16>
    %cst = arith.constant dense<0.000000e+00> : vector<512x128xf32>
    %6 = tpu.matmul %4, %5, %cst {dimension_numbers = #tpu.dot_dimension_numbers<[1], [0], [0], [1], [0, 0, 1, 1], [], []>} : vector<512x256xbf16>, vector<256x128xbf16>, vector<512x128xf32> -> vector<512x128xf32>
    %7 = arith.addf %3, %6 : vector<512x128xf32>
    %c0_6 = arith.constant 0 : index
    %c0_7 = arith.constant 0 : index
    %8 = vector.load %arg8[%c0_6, %c0_7] : memref<512x128xf32, #tpu.memory_space<vmem>>, vector<512x128xf32>
    tpu.vector_store %arg8[%c0_6, %c0_7], %7 {strides = array<i32>} : memref<512x128xf32, #tpu.memory_space<vmem>>, vector<512x128xf32>,
    %c0_i32_8 = arith.constant 0 : i32
    %9 = arith.cmpi eq, %arg2, %c0_i32_8 : i32
    %10 = arith.extui %9 : i1 to i32
    %c0_i32_9 = arith.constant 0 : i32
    %11 = arith.cmpi ne, %10, %c0_i32_9 : i32
    scf.if %11 {
      %c0_10 = arith.constant 0 : index
      %c0_11 = arith.constant 0 : index
      %12 = vector.load %arg8[%c0_10, %c0_11] : memref<512x128xf32, #tpu.memory_space<vmem>>, vector<512x128xf32>
      %c0_12 = arith.constant 0 : index
      %c0_13 = arith.constant 0 : index
      %13 = vector.load %arg5[%c0_12, %c0_13] : memref<1x128xf32, #tpu.memory_space<vmem>>, vector<1x128xf32>
      %14 = vector.broadcast %13 : vector<1x128xf32> to vector<512x128xf32>
      %15 = arith.mulf %12, %14 : vector<512x128xf32>
      %c0_14 = arith.constant 0 : index
      %c0_15 = arith.constant 0 : index
      %16 = vector.load %arg6[%c0_14, %c0_15] : memref<1x128xf32, #tpu.memory_space<vmem>>, vector<1x128xf32>
      %17 = vector.broadcast %16 : vector<1x128xf32> to vector<512x128xf32>
      %18 = arith.addf %15, %17 : vector<512x128xf32>
      %cst_16 = arith.constant 0.000000e+00 : f32
      %19 = vector.broadcast %cst_16 : f32 to vector<512x128xf32>
      %20 = arith.maximumf %18, %19 : vector<512x128xf32>
      %21 = arith.truncf %20 : vector<512x128xf32> to vector<512x128xbf16>
      %c0_17 = arith.constant 0 : index
      %c0_18 = arith.constant 0 : index
      %22 = vector.load %arg7[%c0_17, %c0_18] : memref<512x128xbf16, #tpu.memory_space<vmem>>, vector<512x128xbf16>
      tpu.vector_store %arg7[%c0_17, %c0_18], %21 {strides = array<i32>} : memref<512x128xbf16, #tpu.memory_space<vmem>>, vector<512x128xbf16>,
    } else {
    }
    return
  }
  func.func @transform_0(%arg0: i32, %arg1: i32, %arg2: i32) -> (i32, i32) {
    %c0_i32 = arith.constant 0 : i32
    return %arg0, %arg2 : i32, i32
  }
  func.func @transform_1(%arg0: i32, %arg1: i32, %arg2: i32) -> (i32, i32) {
    %c0_i32 = arith.constant 0 : i32
    return %arg2, %arg1 : i32, i32
  }
  func.func @transform_2(%arg0: i32, %arg1: i32, %arg2: i32) -> (i32, i32) {
    %c0_i32 = arith.constant 0 : i32
    %c0_i32_0 = arith.constant 0 : i32
    return %c0_i32, %arg1 : i32, i32
  }
  func.func @transform_3(%arg0: i32, %arg1: i32, %arg2: i32) -> (i32, i32) {
    %c0_i32 = arith.constant 0 : i32
    %c0_i32_0 = arith.constant 0 : i32
    return %c0_i32, %arg1 : i32, i32
  }
  func.func @transform_4(%arg0: i32, %arg1: i32, %arg2: i32) -> (i32, i32) {
    %c0_i32 = arith.constant 0 : i32
    return %arg0, %arg1 : i32, i32
  }
}

module attributes {stable_mosaic.version = 11 : i64} {
  func.func @kernel(%arg0: i32, %arg1: memref<1x36x16x128xbf16, #tpu.memory_space<vmem>>, %arg2: memref<1x8x8x128xbf16, #tpu.memory_space<vmem>>) attributes {dimension_semantics = [#tpu.dimension_semantics<parallel>], iteration_bounds = array<i64: 2>, scalar_prefetch = 0 : i64, scratch_operands = 0 : i64, tpu.core_type = #tpu.core_type<tc>, window_params = [{transform_indices = @transform_0, window_bounds = array<i64: 1, 36, 16, 128>}, {transform_indices = @transform_1, window_bounds = array<i64: 1, 8, 8, 128>}]} {
    %c0 = arith.constant 0 : index
    %c0_0 = arith.constant 0 : index
    %c0_1 = arith.constant 0 : index
    %c0_2 = arith.constant 0 : index
    %0 = vector.load %arg1[%c0, %c0_0, %c0_1, %c0_2] : memref<1x36x16x128xbf16, #tpu.memory_space<vmem>>, vector<1x8x8x128xbf16>
    %1 = vector.shape_cast %0 : vector<1x8x8x128xbf16> to vector<8x8x128xbf16>
    %c0_3 = arith.constant 0 : index
    %c9 = arith.constant 9 : index
    %c0_4 = arith.constant 0 : index
    %c0_5 = arith.constant 0 : index
    %2 = vector.load %arg1[%c0_3, %c9, %c0_4, %c0_5] : memref<1x36x16x128xbf16, #tpu.memory_space<vmem>>, vector<1x8x8x128xbf16>
    %3 = vector.shape_cast %2 : vector<1x8x8x128xbf16> to vector<8x8x128xbf16>
    %4 = arith.maximumf %1, %3 : vector<8x8x128xbf16>
    %c0_6 = arith.constant 0 : index
    %c0_7 = arith.constant 0 : index
    %c1 = arith.constant 1 : index
    %c0_8 = arith.constant 0 : index
    %5 = vector.load %arg1[%c0_6, %c0_7, %c1, %c0_8] : memref<1x36x16x128xbf16, #tpu.memory_space<vmem>>, vector<1x8x8x128xbf16>
    %6 = vector.shape_cast %5 : vector<1x8x8x128xbf16> to vector<8x8x128xbf16>
    %7 = arith.maximumf %4, %6 : vector<8x8x128xbf16>
    %c0_9 = arith.constant 0 : index
    %c18 = arith.constant 18 : index
    %c0_10 = arith.constant 0 : index
    %c0_11 = arith.constant 0 : index
    %8 = vector.load %arg1[%c0_9, %c18, %c0_10, %c0_11] : memref<1x36x16x128xbf16, #tpu.memory_space<vmem>>, vector<1x8x8x128xbf16>
    %9 = vector.shape_cast %8 : vector<1x8x8x128xbf16> to vector<8x8x128xbf16>
    %10 = arith.maximumf %7, %9 : vector<8x8x128xbf16>
    %c0_12 = arith.constant 0 : index
    %c27 = arith.constant 27 : index
    %c0_13 = arith.constant 0 : index
    %c0_14 = arith.constant 0 : index
    %11 = vector.load %arg1[%c0_12, %c27, %c0_13, %c0_14] : memref<1x36x16x128xbf16, #tpu.memory_space<vmem>>, vector<1x8x8x128xbf16>
    %12 = vector.shape_cast %11 : vector<1x8x8x128xbf16> to vector<8x8x128xbf16>
    %13 = arith.maximumf %10, %12 : vector<8x8x128xbf16>
    %c0_15 = arith.constant 0 : index
    %c18_16 = arith.constant 18 : index
    %c1_17 = arith.constant 1 : index
    %c0_18 = arith.constant 0 : index
    %14 = vector.load %arg1[%c0_15, %c18_16, %c1_17, %c0_18] : memref<1x36x16x128xbf16, #tpu.memory_space<vmem>>, vector<1x8x8x128xbf16>
    %15 = vector.shape_cast %14 : vector<1x8x8x128xbf16> to vector<8x8x128xbf16>
    %16 = arith.maximumf %13, %15 : vector<8x8x128xbf16>
    %c0_19 = arith.constant 0 : index
    %c1_20 = arith.constant 1 : index
    %c0_21 = arith.constant 0 : index
    %c0_22 = arith.constant 0 : index
    %17 = vector.load %arg1[%c0_19, %c1_20, %c0_21, %c0_22] : memref<1x36x16x128xbf16, #tpu.memory_space<vmem>>, vector<1x8x8x128xbf16>
    %18 = vector.shape_cast %17 : vector<1x8x8x128xbf16> to vector<8x8x128xbf16>
    %19 = arith.maximumf %16, %18 : vector<8x8x128xbf16>
    %c0_23 = arith.constant 0 : index
    %c10 = arith.constant 10 : index
    %c0_24 = arith.constant 0 : index
    %c0_25 = arith.constant 0 : index
    %20 = vector.load %arg1[%c0_23, %c10, %c0_24, %c0_25] : memref<1x36x16x128xbf16, #tpu.memory_space<vmem>>, vector<1x8x8x128xbf16>
    %21 = vector.shape_cast %20 : vector<1x8x8x128xbf16> to vector<8x8x128xbf16>
    %22 = arith.maximumf %19, %21 : vector<8x8x128xbf16>
    %c0_26 = arith.constant 0 : index
    %c1_27 = arith.constant 1 : index
    %c1_28 = arith.constant 1 : index
    %c0_29 = arith.constant 0 : index
    %23 = vector.load %arg1[%c0_26, %c1_27, %c1_28, %c0_29] : memref<1x36x16x128xbf16, #tpu.memory_space<vmem>>, vector<1x8x8x128xbf16>
    %24 = vector.shape_cast %23 : vector<1x8x8x128xbf16> to vector<8x8x128xbf16>
    %25 = arith.maximumf %22, %24 : vector<8x8x128xbf16>
    %c0_30 = arith.constant 0 : index
    %c0_31 = arith.constant 0 : index
    %c0_32 = arith.constant 0 : index
    %c0_33 = arith.constant 0 : index
    %26 = vector.load %arg2[%c0_30, %c0_31, %c0_32, %c0_33] : memref<1x8x8x128xbf16, #tpu.memory_space<vmem>>, vector<1x8x8x128xbf16>
    %27 = vector.shape_cast %26 : vector<1x8x8x128xbf16> to vector<8x8x128xbf16>
    %28 = vector.shape_cast %25 : vector<8x8x128xbf16> to vector<1x8x8x128xbf16>
    tpu.vector_store %arg2[%c0_30, %c0_31, %c0_32, %c0_33], %28 {strides = array<i32>} : memref<1x8x8x128xbf16, #tpu.memory_space<vmem>>, vector<1x8x8x128xbf16>,
    return
  }
  func.func @transform_0(%arg0: i32) -> (i32, i32, i32, i32) {
    %c0_i32 = arith.constant 0 : i32
    %c0_i32_0 = arith.constant 0 : i32
    %c0_i32_1 = arith.constant 0 : i32
    %c0_i32_2 = arith.constant 0 : i32
    return %arg0, %c0_i32, %c0_i32_0, %c0_i32_1 : i32, i32, i32, i32
  }
  func.func @transform_1(%arg0: i32) -> (i32, i32, i32, i32) {
    %c0_i32 = arith.constant 0 : i32
    %c0_i32_0 = arith.constant 0 : i32
    %c0_i32_1 = arith.constant 0 : i32
    %c0_i32_2 = arith.constant 0 : i32
    return %arg0, %c0_i32, %c0_i32_0, %c0_i32_1 : i32, i32, i32, i32
  }
}

module attributes {stable_mosaic.version = 11 : i64} {
  func.func @kernel(%arg0: i32, %arg1: i32, %arg2: i32, %arg3: memref<128x128xbf16, #tpu.memory_space<vmem>>, %arg4: memref<128x128xbf16, #tpu.memory_space<vmem>>, %arg5: memref<1x128xf32, #tpu.memory_space<vmem>>, %arg6: memref<1x128xf32, #tpu.memory_space<vmem>>, %arg7: memref<128x128xbf16, #tpu.memory_space<vmem>>, %arg8: memref<128x128xf32, #tpu.memory_space<vmem>>) attributes {dimension_semantics = [#tpu.dimension_semantics<parallel>, #tpu.dimension_semantics<parallel>, #tpu.dimension_semantics<arbitrary>], iteration_bounds = array<i64: 1, 1, 1>, scalar_prefetch = 0 : i64, scratch_operands = 1 : i64, tpu.core_type = #tpu.core_type<tc>, window_params = [{transform_indices = @transform_0, window_bounds = array<i64: 128, 128>}, {transform_indices = @transform_1, window_bounds = array<i64: 128, 128>}, {transform_indices = @transform_2, window_bounds = array<i64: 1, 128>}, {transform_indices = @transform_3, window_bounds = array<i64: 1, 128>}, {transform_indices = @transform_4, window_bounds = array<i64: 128, 128>}]} {
    %c0_i32 = arith.constant 0 : i32
    %0 = arith.cmpi eq, %arg2, %c0_i32 : i32
    %1 = arith.extui %0 : i1 to i32
    %c0_i32_0 = arith.constant 0 : i32
    %2 = arith.cmpi ne, %1, %c0_i32_0 : i32
    scf.if %2 {
      %cst_10 = arith.constant 0.000000e+00 : f32
      %12 = vector.broadcast %cst_10 : f32 to vector<128x128xf32>
      %c0_11 = arith.constant 0 : index
      %c0_12 = arith.constant 0 : index
      %13 = vector.load %arg8[%c0_11, %c0_12] : memref<128x128xf32, #tpu.memory_space<vmem>>, vector<128x128xf32>
      tpu.vector_store %arg8[%c0_11, %c0_12], %12 {strides = array<i32>} : memref<128x128xf32, #tpu.memory_space<vmem>>, vector<128x128xf32>,
    } else {
    }
    %c0 = arith.constant 0 : index
    %c0_1 = arith.constant 0 : index
    %3 = vector.load %arg8[%c0, %c0_1] : memref<128x128xf32, #tpu.memory_space<vmem>>, vector<128x128xf32>
    %c0_2 = arith.constant 0 : index
    %c0_3 = arith.constant 0 : index
    %4 = vector.load %arg3[%c0_2, %c0_3] : memref<128x128xbf16, #tpu.memory_space<vmem>>, vector<128x128xbf16>
    %c0_4 = arith.constant 0 : index
    %c0_5 = arith.constant 0 : index
    %5 = vector.load %arg4[%c0_4, %c0_5] : memref<128x128xbf16, #tpu.memory_space<vmem>>, vector<128x128xbf16>
    %cst = arith.constant dense<0.000000e+00> : vector<128x128xf32>
    %6 = tpu.matmul %4, %5, %cst {dimension_numbers = #tpu.dot_dimension_numbers<[1], [0], [0], [1], [0, 0, 1, 1], [], []>} : vector<128x128xbf16>, vector<128x128xbf16>, vector<128x128xf32> -> vector<128x128xf32>
    %7 = arith.addf %3, %6 : vector<128x128xf32>
    %c0_6 = arith.constant 0 : index
    %c0_7 = arith.constant 0 : index
    %8 = vector.load %arg8[%c0_6, %c0_7] : memref<128x128xf32, #tpu.memory_space<vmem>>, vector<128x128xf32>
    tpu.vector_store %arg8[%c0_6, %c0_7], %7 {strides = array<i32>} : memref<128x128xf32, #tpu.memory_space<vmem>>, vector<128x128xf32>,
    %c0_i32_8 = arith.constant 0 : i32
    %9 = arith.cmpi eq, %arg2, %c0_i32_8 : i32
    %10 = arith.extui %9 : i1 to i32
    %c0_i32_9 = arith.constant 0 : i32
    %11 = arith.cmpi ne, %10, %c0_i32_9 : i32
    scf.if %11 {
      %c0_10 = arith.constant 0 : index
      %c0_11 = arith.constant 0 : index
      %12 = vector.load %arg8[%c0_10, %c0_11] : memref<128x128xf32, #tpu.memory_space<vmem>>, vector<128x128xf32>
      %c0_12 = arith.constant 0 : index
      %c0_13 = arith.constant 0 : index
      %13 = vector.load %arg5[%c0_12, %c0_13] : memref<1x128xf32, #tpu.memory_space<vmem>>, vector<1x128xf32>
      %14 = vector.broadcast %13 : vector<1x128xf32> to vector<128x128xf32>
      %15 = arith.mulf %12, %14 : vector<128x128xf32>
      %c0_14 = arith.constant 0 : index
      %c0_15 = arith.constant 0 : index
      %16 = vector.load %arg6[%c0_14, %c0_15] : memref<1x128xf32, #tpu.memory_space<vmem>>, vector<1x128xf32>
      %17 = vector.broadcast %16 : vector<1x128xf32> to vector<128x128xf32>
      %18 = arith.addf %15, %17 : vector<128x128xf32>
      %cst_16 = arith.constant 0.000000e+00 : f32
      %19 = vector.broadcast %cst_16 : f32 to vector<128x128xf32>
      %20 = arith.maximumf %18, %19 : vector<128x128xf32>
      %21 = arith.truncf %20 : vector<128x128xf32> to vector<128x128xbf16>
      %c0_17 = arith.constant 0 : index
      %c0_18 = arith.constant 0 : index
      %22 = vector.load %arg7[%c0_17, %c0_18] : memref<128x128xbf16, #tpu.memory_space<vmem>>, vector<128x128xbf16>
      tpu.vector_store %arg7[%c0_17, %c0_18], %21 {strides = array<i32>} : memref<128x128xbf16, #tpu.memory_space<vmem>>, vector<128x128xbf16>,
    } else {
    }
    return
  }
  func.func @transform_0(%arg0: i32, %arg1: i32, %arg2: i32) -> (i32, i32) {
    %c0_i32 = arith.constant 0 : i32
    return %arg0, %arg2 : i32, i32
  }
  func.func @transform_1(%arg0: i32, %arg1: i32, %arg2: i32) -> (i32, i32) {
    %c0_i32 = arith.constant 0 : i32
    return %arg2, %arg1 : i32, i32
  }
  func.func @transform_2(%arg0: i32, %arg1: i32, %arg2: i32) -> (i32, i32) {
    %c0_i32 = arith.constant 0 : i32
    %c0_i32_0 = arith.constant 0 : i32
    return %c0_i32, %arg1 : i32, i32
  }
  func.func @transform_3(%arg0: i32, %arg1: i32, %arg2: i32) -> (i32, i32) {
    %c0_i32 = arith.constant 0 : i32
    %c0_i32_0 = arith.constant 0 : i32
    return %c0_i32, %arg1 : i32, i32
  }
  func.func @transform_4(%arg0: i32, %arg1: i32, %arg2: i32) -> (i32, i32) {
    %c0_i32 = arith.constant 0 : i32
    return %arg0, %arg1 : i32, i32
  }
}

module attributes {stable_mosaic.version = 11 : i64} {
  func.func @kernel(%arg0: i32, %arg1: i32, %arg2: i32, %arg3: memref<128x128xbf16, #tpu.memory_space<vmem>>, %arg4: memref<128x128xbf16, #tpu.memory_space<vmem>>, %arg5: memref<1x128xf32, #tpu.memory_space<vmem>>, %arg6: memref<1x128xf32, #tpu.memory_space<vmem>>, %arg7: memref<128x128xbf16, #tpu.memory_space<vmem>>, %arg8: memref<128x128xf32, #tpu.memory_space<vmem>>) attributes {dimension_semantics = [#tpu.dimension_semantics<parallel>, #tpu.dimension_semantics<parallel>, #tpu.dimension_semantics<arbitrary>], iteration_bounds = array<i64: 1, 1, 1>, scalar_prefetch = 0 : i64, scratch_operands = 1 : i64, tpu.core_type = #tpu.core_type<tc>, window_params = [{transform_indices = @transform_0, window_bounds = array<i64: 128, 128>}, {transform_indices = @transform_1, window_bounds = array<i64: 128, 128>}, {transform_indices = @transform_2, window_bounds = array<i64: 1, 128>}, {transform_indices = @transform_3, window_bounds = array<i64: 1, 128>}, {transform_indices = @transform_4, window_bounds = array<i64: 128, 128>}]} {
    %c0_i32 = arith.constant 0 : i32
    %0 = arith.cmpi eq, %arg2, %c0_i32 : i32
    %1 = arith.extui %0 : i1 to i32
    %c0_i32_0 = arith.constant 0 : i32
    %2 = arith.cmpi ne, %1, %c0_i32_0 : i32
    scf.if %2 {
      %cst_10 = arith.constant 0.000000e+00 : f32
      %12 = vector.broadcast %cst_10 : f32 to vector<128x128xf32>
      %c0_11 = arith.constant 0 : index
      %c0_12 = arith.constant 0 : index
      %13 = vector.load %arg8[%c0_11, %c0_12] : memref<128x128xf32, #tpu.memory_space<vmem>>, vector<128x128xf32>
      tpu.vector_store %arg8[%c0_11, %c0_12], %12 {strides = array<i32>} : memref<128x128xf32, #tpu.memory_space<vmem>>, vector<128x128xf32>,
    } else {
    }
    %c0 = arith.constant 0 : index
    %c0_1 = arith.constant 0 : index
    %3 = vector.load %arg8[%c0, %c0_1] : memref<128x128xf32, #tpu.memory_space<vmem>>, vector<128x128xf32>
    %c0_2 = arith.constant 0 : index
    %c0_3 = arith.constant 0 : index
    %4 = vector.load %arg3[%c0_2, %c0_3] : memref<128x128xbf16, #tpu.memory_space<vmem>>, vector<128x128xbf16>
    %c0_4 = arith.constant 0 : index
    %c0_5 = arith.constant 0 : index
    %5 = vector.load %arg4[%c0_4, %c0_5] : memref<128x128xbf16, #tpu.memory_space<vmem>>, vector<128x128xbf16>
    %cst = arith.constant dense<0.000000e+00> : vector<128x128xf32>
    %6 = tpu.matmul %4, %5, %cst {dimension_numbers = #tpu.dot_dimension_numbers<[1], [0], [0], [1], [0, 0, 1, 1], [], []>} : vector<128x128xbf16>, vector<128x128xbf16>, vector<128x128xf32> -> vector<128x128xf32>
    %7 = arith.addf %3, %6 : vector<128x128xf32>
    %c0_6 = arith.constant 0 : index
    %c0_7 = arith.constant 0 : index
    %8 = vector.load %arg8[%c0_6, %c0_7] : memref<128x128xf32, #tpu.memory_space<vmem>>, vector<128x128xf32>
    tpu.vector_store %arg8[%c0_6, %c0_7], %7 {strides = array<i32>} : memref<128x128xf32, #tpu.memory_space<vmem>>, vector<128x128xf32>,
    %c0_i32_8 = arith.constant 0 : i32
    %9 = arith.cmpi eq, %arg2, %c0_i32_8 : i32
    %10 = arith.extui %9 : i1 to i32
    %c0_i32_9 = arith.constant 0 : i32
    %11 = arith.cmpi ne, %10, %c0_i32_9 : i32
    scf.if %11 {
      %c0_10 = arith.constant 0 : index
      %c0_11 = arith.constant 0 : index
      %12 = vector.load %arg8[%c0_10, %c0_11] : memref<128x128xf32, #tpu.memory_space<vmem>>, vector<128x128xf32>
      %c0_12 = arith.constant 0 : index
      %c0_13 = arith.constant 0 : index
      %13 = vector.load %arg5[%c0_12, %c0_13] : memref<1x128xf32, #tpu.memory_space<vmem>>, vector<1x128xf32>
      %14 = vector.broadcast %13 : vector<1x128xf32> to vector<128x128xf32>
      %15 = arith.mulf %12, %14 : vector<128x128xf32>
      %c0_14 = arith.constant 0 : index
      %c0_15 = arith.constant 0 : index
      %16 = vector.load %arg6[%c0_14, %c0_15] : memref<1x128xf32, #tpu.memory_space<vmem>>, vector<1x128xf32>
      %17 = vector.broadcast %16 : vector<1x128xf32> to vector<128x128xf32>
      %18 = arith.addf %15, %17 : vector<128x128xf32>
      %19 = arith.truncf %18 : vector<128x128xf32> to vector<128x128xbf16>
      %c0_16 = arith.constant 0 : index
      %c0_17 = arith.constant 0 : index
      %20 = vector.load %arg7[%c0_16, %c0_17] : memref<128x128xbf16, #tpu.memory_space<vmem>>, vector<128x128xbf16>
      tpu.vector_store %arg7[%c0_16, %c0_17], %19 {strides = array<i32>} : memref<128x128xbf16, #tpu.memory_space<vmem>>, vector<128x128xbf16>,
    } else {
    }
    return
  }
  func.func @transform_0(%arg0: i32, %arg1: i32, %arg2: i32) -> (i32, i32) {
    %c0_i32 = arith.constant 0 : i32
    return %arg0, %arg2 : i32, i32
  }
  func.func @transform_1(%arg0: i32, %arg1: i32, %arg2: i32) -> (i32, i32) {
    %c0_i32 = arith.constant 0 : i32
    return %arg2, %arg1 : i32, i32
  }
  func.func @transform_2(%arg0: i32, %arg1: i32, %arg2: i32) -> (i32, i32) {
    %c0_i32 = arith.constant 0 : i32
    %c0_i32_0 = arith.constant 0 : i32
    return %c0_i32, %arg1 : i32, i32
  }
  func.func @transform_3(%arg0: i32, %arg1: i32, %arg2: i32) -> (i32, i32) {
    %c0_i32 = arith.constant 0 : i32
    %c0_i32_0 = arith.constant 0 : i32
    return %c0_i32, %arg1 : i32, i32
  }
  func.func @transform_4(%arg0: i32, %arg1: i32, %arg2: i32) -> (i32, i32) {
    %c0_i32 = arith.constant 0 : i32
    return %arg0, %arg1 : i32, i32
  }
}

module attributes {stable_mosaic.version = 11 : i64} {
  func.func @kernel(%arg0: i32, %arg1: memref<1x10x16x128xbf16, #tpu.memory_space<vmem>>, %arg2: memref<9x128x128xbf16, #tpu.memory_space<vmem>>, %arg3: memref<1x128xf32, #tpu.memory_space<vmem>>, %arg4: memref<1x128xf32, #tpu.memory_space<vmem>>, %arg5: memref<1x8x8x128xbf16, #tpu.memory_space<vmem>>) attributes {dimension_semantics = [#tpu.dimension_semantics<parallel>], iteration_bounds = array<i64: 2>, scalar_prefetch = 0 : i64, scratch_operands = 0 : i64, tpu.core_type = #tpu.core_type<tc>, window_params = [{transform_indices = @transform_0, window_bounds = array<i64: 1, 10, 16, 128>}, {pipeline_mode = #tpu.pipeline_mode<synchronous>, transform_indices = @transform_1, window_bounds = array<i64: 9, 128, 128>}, {pipeline_mode = #tpu.pipeline_mode<synchronous>, transform_indices = @transform_2, window_bounds = array<i64: 1, 128>}, {pipeline_mode = #tpu.pipeline_mode<synchronous>, transform_indices = @transform_3, window_bounds = array<i64: 1, 128>}, {transform_indices = @transform_4, window_bounds = array<i64: 1, 8, 8, 128>}]} {
    %cst = arith.constant 0.000000e+00 : f32
    %0 = vector.broadcast %cst : f32 to vector<64x128xf32>
    %c0 = arith.constant 0 : index
    %c0_0 = arith.constant 0 : index
    %c0_1 = arith.constant 0 : index
    %c0_2 = arith.constant 0 : index
    %1 = vector.load %arg1[%c0, %c0_0, %c0_1, %c0_2] : memref<1x10x16x128xbf16, #tpu.memory_space<vmem>>, vector<1x8x8x128xbf16>
    %2 = vector.shape_cast %1 : vector<1x8x8x128xbf16> to vector<8x8x128xbf16>
    %3 = vector.shape_cast %2 : vector<8x8x128xbf16> to vector<64x128xbf16>
    %c0_3 = arith.constant 0 : index
    %c0_4 = arith.constant 0 : index
    %c0_5 = arith.constant 0 : index
    %4 = vector.load %arg2[%c0_3, %c0_4, %c0_5] : memref<9x128x128xbf16, #tpu.memory_space<vmem>>, vector<1x128x128xbf16>
    %5 = vector.shape_cast %4 : vector<1x128x128xbf16> to vector<128x128xbf16>
    %cst_6 = arith.constant dense<0.000000e+00> : vector<64x128xf32>
    %6 = tpu.matmul %3, %5, %cst_6 {dimension_numbers = #tpu.dot_dimension_numbers<[1], [0], [0], [1], [0, 0, 1, 1], [], []>} : vector<64x128xbf16>, vector<128x128xbf16>, vector<64x128xf32> -> vector<64x128xf32>
    %7 = arith.addf %0, %6 : vector<64x128xf32>
    %c0_7 = arith.constant 0 : index
    %c0_8 = arith.constant 0 : index
    %c1 = arith.constant 1 : index
    %c0_9 = arith.constant 0 : index
    %8 = vector.load %arg1[%c0_7, %c0_8, %c1, %c0_9] : memref<1x10x16x128xbf16, #tpu.memory_space<vmem>>, vector<1x8x8x128xbf16>
    %9 = vector.shape_cast %8 : vector<1x8x8x128xbf16> to vector<8x8x128xbf16>
    %10 = vector.shape_cast %9 : vector<8x8x128xbf16> to vector<64x128xbf16>
    %c1_10 = arith.constant 1 : index
    %c0_11 = arith.constant 0 : index
    %c0_12 = arith.constant 0 : index
    %11 = vector.load %arg2[%c1_10, %c0_11, %c0_12] : memref<9x128x128xbf16, #tpu.memory_space<vmem>>, vector<1x128x128xbf16>
    %12 = vector.shape_cast %11 : vector<1x128x128xbf16> to vector<128x128xbf16>
    %cst_13 = arith.constant dense<0.000000e+00> : vector<64x128xf32>
    %13 = tpu.matmul %10, %12, %cst_13 {dimension_numbers = #tpu.dot_dimension_numbers<[1], [0], [0], [1], [0, 0, 1, 1], [], []>} : vector<64x128xbf16>, vector<128x128xbf16>, vector<64x128xf32> -> vector<64x128xf32>
    %14 = arith.addf %7, %13 : vector<64x128xf32>
    %c0_14 = arith.constant 0 : index
    %c0_15 = arith.constant 0 : index
    %c2 = arith.constant 2 : index
    %c0_16 = arith.constant 0 : index
    %15 = vector.load %arg1[%c0_14, %c0_15, %c2, %c0_16] : memref<1x10x16x128xbf16, #tpu.memory_space<vmem>>, vector<1x8x8x128xbf16>
    %16 = vector.shape_cast %15 : vector<1x8x8x128xbf16> to vector<8x8x128xbf16>
    %17 = vector.shape_cast %16 : vector<8x8x128xbf16> to vector<64x128xbf16>
    %c2_17 = arith.constant 2 : index
    %c0_18 = arith.constant 0 : index
    %c0_19 = arith.constant 0 : index
    %18 = vector.load %arg2[%c2_17, %c0_18, %c0_19] : memref<9x128x128xbf16, #tpu.memory_space<vmem>>, vector<1x128x128xbf16>
    %19 = vector.shape_cast %18 : vector<1x128x128xbf16> to vector<128x128xbf16>
    %cst_20 = arith.constant dense<0.000000e+00> : vector<64x128xf32>
    %20 = tpu.matmul %17, %19, %cst_20 {dimension_numbers = #tpu.dot_dimension_numbers<[1], [0], [0], [1], [0, 0, 1, 1], [], []>} : vector<64x128xbf16>, vector<128x128xbf16>, vector<64x128xf32> -> vector<64x128xf32>
    %21 = arith.addf %14, %20 : vector<64x128xf32>
    %c0_21 = arith.constant 0 : index
    %c1_22 = arith.constant 1 : index
    %c0_23 = arith.constant 0 : index
    %c0_24 = arith.constant 0 : index
    %22 = vector.load %arg1[%c0_21, %c1_22, %c0_23, %c0_24] : memref<1x10x16x128xbf16, #tpu.memory_space<vmem>>, vector<1x8x8x128xbf16>
    %23 = vector.shape_cast %22 : vector<1x8x8x128xbf16> to vector<8x8x128xbf16>
    %24 = vector.shape_cast %23 : vector<8x8x128xbf16> to vector<64x128xbf16>
    %c3 = arith.constant 3 : index
    %c0_25 = arith.constant 0 : index
    %c0_26 = arith.constant 0 : index
    %25 = vector.load %arg2[%c3, %c0_25, %c0_26] : memref<9x128x128xbf16, #tpu.memory_space<vmem>>, vector<1x128x128xbf16>
    %26 = vector.shape_cast %25 : vector<1x128x128xbf16> to vector<128x128xbf16>
    %cst_27 = arith.constant dense<0.000000e+00> : vector<64x128xf32>
    %27 = tpu.matmul %24, %26, %cst_27 {dimension_numbers = #tpu.dot_dimension_numbers<[1], [0], [0], [1], [0, 0, 1, 1], [], []>} : vector<64x128xbf16>, vector<128x128xbf16>, vector<64x128xf32> -> vector<64x128xf32>
    %28 = arith.addf %21, %27 : vector<64x128xf32>
    %c0_28 = arith.constant 0 : index
    %c1_29 = arith.constant 1 : index
    %c1_30 = arith.constant 1 : index
    %c0_31 = arith.constant 0 : index
    %29 = vector.load %arg1[%c0_28, %c1_29, %c1_30, %c0_31] : memref<1x10x16x128xbf16, #tpu.memory_space<vmem>>, vector<1x8x8x128xbf16>
    %30 = vector.shape_cast %29 : vector<1x8x8x128xbf16> to vector<8x8x128xbf16>
    %31 = vector.shape_cast %30 : vector<8x8x128xbf16> to vector<64x128xbf16>
    %c4 = arith.constant 4 : index
    %c0_32 = arith.constant 0 : index
    %c0_33 = arith.constant 0 : index
    %32 = vector.load %arg2[%c4, %c0_32, %c0_33] : memref<9x128x128xbf16, #tpu.memory_space<vmem>>, vector<1x128x128xbf16>
    %33 = vector.shape_cast %32 : vector<1x128x128xbf16> to vector<128x128xbf16>
    %cst_34 = arith.constant dense<0.000000e+00> : vector<64x128xf32>
    %34 = tpu.matmul %31, %33, %cst_34 {dimension_numbers = #tpu.dot_dimension_numbers<[1], [0], [0], [1], [0, 0, 1, 1], [], []>} : vector<64x128xbf16>, vector<128x128xbf16>, vector<64x128xf32> -> vector<64x128xf32>
    %35 = arith.addf %28, %34 : vector<64x128xf32>
    %c0_35 = arith.constant 0 : index
    %c1_36 = arith.constant 1 : index
    %c2_37 = arith.constant 2 : index
    %c0_38 = arith.constant 0 : index
    %36 = vector.load %arg1[%c0_35, %c1_36, %c2_37, %c0_38] : memref<1x10x16x128xbf16, #tpu.memory_space<vmem>>, vector<1x8x8x128xbf16>
    %37 = vector.shape_cast %36 : vector<1x8x8x128xbf16> to vector<8x8x128xbf16>
    %38 = vector.shape_cast %37 : vector<8x8x128xbf16> to vector<64x128xbf16>
    %c5 = arith.constant 5 : index
    %c0_39 = arith.constant 0 : index
    %c0_40 = arith.constant 0 : index
    %39 = vector.load %arg2[%c5, %c0_39, %c0_40] : memref<9x128x128xbf16, #tpu.memory_space<vmem>>, vector<1x128x128xbf16>
    %40 = vector.shape_cast %39 : vector<1x128x128xbf16> to vector<128x128xbf16>
    %cst_41 = arith.constant dense<0.000000e+00> : vector<64x128xf32>
    %41 = tpu.matmul %38, %40, %cst_41 {dimension_numbers = #tpu.dot_dimension_numbers<[1], [0], [0], [1], [0, 0, 1, 1], [], []>} : vector<64x128xbf16>, vector<128x128xbf16>, vector<64x128xf32> -> vector<64x128xf32>
    %42 = arith.addf %35, %41 : vector<64x128xf32>
    %c0_42 = arith.constant 0 : index
    %c2_43 = arith.constant 2 : index
    %c0_44 = arith.constant 0 : index
    %c0_45 = arith.constant 0 : index
    %43 = vector.load %arg1[%c0_42, %c2_43, %c0_44, %c0_45] : memref<1x10x16x128xbf16, #tpu.memory_space<vmem>>, vector<1x8x8x128xbf16>
    %44 = vector.shape_cast %43 : vector<1x8x8x128xbf16> to vector<8x8x128xbf16>
    %45 = vector.shape_cast %44 : vector<8x8x128xbf16> to vector<64x128xbf16>
    %c6 = arith.constant 6 : index
    %c0_46 = arith.constant 0 : index
    %c0_47 = arith.constant 0 : index
    %46 = vector.load %arg2[%c6, %c0_46, %c0_47] : memref<9x128x128xbf16, #tpu.memory_space<vmem>>, vector<1x128x128xbf16>
    %47 = vector.shape_cast %46 : vector<1x128x128xbf16> to vector<128x128xbf16>
    %cst_48 = arith.constant dense<0.000000e+00> : vector<64x128xf32>
    %48 = tpu.matmul %45, %47, %cst_48 {dimension_numbers = #tpu.dot_dimension_numbers<[1], [0], [0], [1], [0, 0, 1, 1], [], []>} : vector<64x128xbf16>, vector<128x128xbf16>, vector<64x128xf32> -> vector<64x128xf32>
    %49 = arith.addf %42, %48 : vector<64x128xf32>
    %c0_49 = arith.constant 0 : index
    %c2_50 = arith.constant 2 : index
    %c1_51 = arith.constant 1 : index
    %c0_52 = arith.constant 0 : index
    %50 = vector.load %arg1[%c0_49, %c2_50, %c1_51, %c0_52] : memref<1x10x16x128xbf16, #tpu.memory_space<vmem>>, vector<1x8x8x128xbf16>
    %51 = vector.shape_cast %50 : vector<1x8x8x128xbf16> to vector<8x8x128xbf16>
    %52 = vector.shape_cast %51 : vector<8x8x128xbf16> to vector<64x128xbf16>
    %c7 = arith.constant 7 : index
    %c0_53 = arith.constant 0 : index
    %c0_54 = arith.constant 0 : index
    %53 = vector.load %arg2[%c7, %c0_53, %c0_54] : memref<9x128x128xbf16, #tpu.memory_space<vmem>>, vector<1x128x128xbf16>
    %54 = vector.shape_cast %53 : vector<1x128x128xbf16> to vector<128x128xbf16>
    %cst_55 = arith.constant dense<0.000000e+00> : vector<64x128xf32>
    %55 = tpu.matmul %52, %54, %cst_55 {dimension_numbers = #tpu.dot_dimension_numbers<[1], [0], [0], [1], [0, 0, 1, 1], [], []>} : vector<64x128xbf16>, vector<128x128xbf16>, vector<64x128xf32> -> vector<64x128xf32>
    %56 = arith.addf %49, %55 : vector<64x128xf32>
    %c0_56 = arith.constant 0 : index
    %c2_57 = arith.constant 2 : index
    %c2_58 = arith.constant 2 : index
    %c0_59 = arith.constant 0 : index
    %57 = vector.load %arg1[%c0_56, %c2_57, %c2_58, %c0_59] : memref<1x10x16x128xbf16, #tpu.memory_space<vmem>>, vector<1x8x8x128xbf16>
    %58 = vector.shape_cast %57 : vector<1x8x8x128xbf16> to vector<8x8x128xbf16>
    %59 = vector.shape_cast %58 : vector<8x8x128xbf16> to vector<64x128xbf16>
    %c8 = arith.constant 8 : index
    %c0_60 = arith.constant 0 : index
    %c0_61 = arith.constant 0 : index
    %60 = vector.load %arg2[%c8, %c0_60, %c0_61] : memref<9x128x128xbf16, #tpu.memory_space<vmem>>, vector<1x128x128xbf16>
    %61 = vector.shape_cast %60 : vector<1x128x128xbf16> to vector<128x128xbf16>
    %cst_62 = arith.constant dense<0.000000e+00> : vector<64x128xf32>
    %62 = tpu.matmul %59, %61, %cst_62 {dimension_numbers = #tpu.dot_dimension_numbers<[1], [0], [0], [1], [0, 0, 1, 1], [], []>} : vector<64x128xbf16>, vector<128x128xbf16>, vector<64x128xf32> -> vector<64x128xf32>
    %63 = arith.addf %56, %62 : vector<64x128xf32>
    %c0_63 = arith.constant 0 : index
    %c0_64 = arith.constant 0 : index
    %64 = vector.load %arg3[%c0_63, %c0_64] : memref<1x128xf32, #tpu.memory_space<vmem>>, vector<1x128xf32>
    %65 = vector.broadcast %64 : vector<1x128xf32> to vector<64x128xf32>
    %66 = arith.mulf %63, %65 : vector<64x128xf32>
    %c0_65 = arith.constant 0 : index
    %c0_66 = arith.constant 0 : index
    %67 = vector.load %arg4[%c0_65, %c0_66] : memref<1x128xf32, #tpu.memory_space<vmem>>, vector<1x128xf32>
    %68 = vector.broadcast %67 : vector<1x128xf32> to vector<64x128xf32>
    %69 = arith.addf %66, %68 : vector<64x128xf32>
    %cst_67 = arith.constant 0.000000e+00 : f32
    %70 = vector.broadcast %cst_67 : f32 to vector<64x128xf32>
    %71 = arith.maximumf %69, %70 : vector<64x128xf32>
    %72 = vector.shape_cast %71 : vector<64x128xf32> to vector<8x8x128xf32>
    %73 = arith.truncf %72 : vector<8x8x128xf32> to vector<8x8x128xbf16>
    %c0_68 = arith.constant 0 : index
    %c0_69 = arith.constant 0 : index
    %c0_70 = arith.constant 0 : index
    %c0_71 = arith.constant 0 : index
    %74 = vector.load %arg5[%c0_68, %c0_69, %c0_70, %c0_71] : memref<1x8x8x128xbf16, #tpu.memory_space<vmem>>, vector<1x8x8x128xbf16>
    %75 = vector.shape_cast %74 : vector<1x8x8x128xbf16> to vector<8x8x128xbf16>
    %76 = vector.shape_cast %73 : vector<8x8x128xbf16> to vector<1x8x8x128xbf16>
    tpu.vector_store %arg5[%c0_68, %c0_69, %c0_70, %c0_71], %76 {strides = array<i32>} : memref<1x8x8x128xbf16, #tpu.memory_space<vmem>>, vector<1x8x8x128xbf16>,
    return
  }
  func.func @transform_0(%arg0: i32) -> (i32, i32, i32, i32) {
    %c0_i32 = arith.constant 0 : i32
    %c0_i32_0 = arith.constant 0 : i32
    %c0_i32_1 = arith.constant 0 : i32
    %c0_i32_2 = arith.constant 0 : i32
    return %arg0, %c0_i32, %c0_i32_0, %c0_i32_1 : i32, i32, i32, i32
  }
  func.func @transform_1(%arg0: i32) -> (i32, i32, i32) {
    %c0_i32 = arith.constant 0 : i32
    %c0_i32_0 = arith.constant 0 : i32
    %c0_i32_1 = arith.constant 0 : i32
    %c0_i32_2 = arith.constant 0 : i32
    return %c0_i32, %c0_i32_0, %c0_i32_1 : i32, i32, i32
  }
  func.func @transform_2(%arg0: i32) -> (i32, i32) {
    %c0_i32 = arith.constant 0 : i32
    %c0_i32_0 = arith.constant 0 : i32
    %c0_i32_1 = arith.constant 0 : i32
    return %c0_i32, %c0_i32_0 : i32, i32
  }
  func.func @transform_3(%arg0: i32) -> (i32, i32) {
    %c0_i32 = arith.constant 0 : i32
    %c0_i32_0 = arith.constant 0 : i32
    %c0_i32_1 = arith.constant 0 : i32
    return %c0_i32, %c0_i32_0 : i32, i32
  }
  func.func @transform_4(%arg0: i32) -> (i32, i32, i32, i32) {
    %c0_i32 = arith.constant 0 : i32
    %c0_i32_0 = arith.constant 0 : i32
    %c0_i32_1 = arith.constant 0 : i32
    %c0_i32_2 = arith.constant 0 : i32
    return %arg0, %c0_i32, %c0_i32_0, %c0_i32_1 : i32, i32, i32, i32
  }
}

module attributes {stable_mosaic.version = 11 : i64} {
  func.func @kernel(%arg0: i32, %arg1: i32, %arg2: memref<2x64x128xbf16, #tpu.memory_space<vmem>>, %arg3: memref<2x128xf32, #tpu.memory_space<vmem>>) attributes {dimension_semantics = [#tpu.dimension_semantics<parallel>, #tpu.dimension_semantics<arbitrary>], iteration_bounds = array<i64: 1, 1>, scalar_prefetch = 0 : i64, scratch_operands = 0 : i64, tpu.core_type = #tpu.core_type<tc>, window_params = [{transform_indices = @transform_0, window_bounds = array<i64: 2, 64, 128>}, {transform_indices = @transform_1, window_bounds = array<i64: 2, 128>}]} {
    %c0_i32 = arith.constant 0 : i32
    %0 = arith.cmpi eq, %arg1, %c0_i32 : i32
    %1 = arith.extui %0 : i1 to i32
    %c0_i32_0 = arith.constant 0 : i32
    %2 = arith.cmpi ne, %1, %c0_i32_0 : i32
    scf.if %2 {
      %cst_9 = arith.constant 0.000000e+00 : f32
      %12 = vector.broadcast %cst_9 : f32 to vector<2x128xf32>
      %c0_10 = arith.constant 0 : index
      %c0_11 = arith.constant 0 : index
      %13 = vector.load %arg3[%c0_10, %c0_11] : memref<2x128xf32, #tpu.memory_space<vmem>>, vector<2x128xf32>
      tpu.vector_store %arg3[%c0_10, %c0_11], %12 {strides = array<i32>} : memref<2x128xf32, #tpu.memory_space<vmem>>, vector<2x128xf32>,
    } else {
    }
    %c0 = arith.constant 0 : index
    %c0_1 = arith.constant 0 : index
    %3 = vector.load %arg3[%c0, %c0_1] : memref<2x128xf32, #tpu.memory_space<vmem>>, vector<2x128xf32>
    %c0_2 = arith.constant 0 : index
    %c0_3 = arith.constant 0 : index
    %c0_4 = arith.constant 0 : index
    %4 = vector.load %arg2[%c0_2, %c0_3, %c0_4] : memref<2x64x128xbf16, #tpu.memory_space<vmem>>, vector<2x64x128xbf16>
    %5 = arith.extf %4 : vector<2x64x128xbf16> to vector<2x64x128xf32>
    %cst = arith.constant dense<0.000000e+00> : vector<2x128xf32>
    %6 = vector.multi_reduction <add>, %5, %cst [1] : vector<2x64x128xf32> to vector<2x128xf32>
    %7 = arith.addf %3, %6 : vector<2x128xf32>
    %c0_5 = arith.constant 0 : index
    %c0_6 = arith.constant 0 : index
    %8 = vector.load %arg3[%c0_5, %c0_6] : memref<2x128xf32, #tpu.memory_space<vmem>>, vector<2x128xf32>
    tpu.vector_store %arg3[%c0_5, %c0_6], %7 {strides = array<i32>} : memref<2x128xf32, #tpu.memory_space<vmem>>, vector<2x128xf32>,
    %c0_i32_7 = arith.constant 0 : i32
    %9 = arith.cmpi eq, %arg1, %c0_i32_7 : i32
    %10 = arith.extui %9 : i1 to i32
    %c0_i32_8 = arith.constant 0 : i32
    %11 = arith.cmpi ne, %10, %c0_i32_8 : i32
    scf.if %11 {
      %c0_9 = arith.constant 0 : index
      %c0_10 = arith.constant 0 : index
      %12 = vector.load %arg3[%c0_9, %c0_10] : memref<2x128xf32, #tpu.memory_space<vmem>>, vector<2x128xf32>
      %cst_11 = arith.constant 1.562500e-02 : f32
      %13 = vector.broadcast %cst_11 : f32 to vector<2x128xf32>
      %14 = arith.mulf %12, %13 : vector<2x128xf32>
      %c0_12 = arith.constant 0 : index
      %c0_13 = arith.constant 0 : index
      %15 = vector.load %arg3[%c0_12, %c0_13] : memref<2x128xf32, #tpu.memory_space<vmem>>, vector<2x128xf32>
      tpu.vector_store %arg3[%c0_12, %c0_13], %14 {strides = array<i32>} : memref<2x128xf32, #tpu.memory_space<vmem>>, vector<2x128xf32>,
    } else {
    }
    return
  }
  func.func @transform_0(%arg0: i32, %arg1: i32) -> (i32, i32, i32) {
    %c0_i32 = arith.constant 0 : i32
    %c0_i32_0 = arith.constant 0 : i32
    return %c0_i32, %arg1, %arg0 : i32, i32, i32
  }
  func.func @transform_1(%arg0: i32, %arg1: i32) -> (i32, i32) {
    %c0_i32 = arith.constant 0 : i32
    %c0_i32_0 = arith.constant 0 : i32
    return %c0_i32, %arg0 : i32, i32
  }
}

module attributes {stable_mosaic.version = 11 : i64} {
  func.func @_se_fc_kernel(%arg0: i32, %arg1: memref<8x128xbf16, #tpu.memory_space<vmem>>, %arg2: memref<128x128xbf16, #tpu.memory_space<vmem>>, %arg3: memref<1x128xf32, #tpu.memory_space<vmem>>, %arg4: memref<128x128xbf16, #tpu.memory_space<vmem>>, %arg5: memref<1x128xf32, #tpu.memory_space<vmem>>, %arg6: memref<8x128xf32, #tpu.memory_space<vmem>>) attributes {dimension_semantics = [#tpu.dimension_semantics<arbitrary>], iteration_bounds = array<i64: 1>, scalar_prefetch = 0 : i64, scratch_operands = 0 : i64, tpu.core_type = #tpu.core_type<tc>, window_params = [{pipeline_mode = #tpu.pipeline_mode<synchronous>, transform_indices = @transform_0, window_bounds = array<i64: 8, 128>}, {pipeline_mode = #tpu.pipeline_mode<synchronous>, transform_indices = @transform_1, window_bounds = array<i64: 128, 128>}, {pipeline_mode = #tpu.pipeline_mode<synchronous>, transform_indices = @transform_2, window_bounds = array<i64: 1, 128>}, {pipeline_mode = #tpu.pipeline_mode<synchronous>, transform_indices = @transform_3, window_bounds = array<i64: 128, 128>}, {pipeline_mode = #tpu.pipeline_mode<synchronous>, transform_indices = @transform_4, window_bounds = array<i64: 1, 128>}, {pipeline_mode = #tpu.pipeline_mode<synchronous>, transform_indices = @transform_5, window_bounds = array<i64: 8, 128>}]} {
    %c0 = arith.constant 0 : index
    %c0_0 = arith.constant 0 : index
    %0 = vector.load %arg1[%c0, %c0_0] : memref<8x128xbf16, #tpu.memory_space<vmem>>, vector<8x128xbf16>
    %c0_1 = arith.constant 0 : index
    %c0_2 = arith.constant 0 : index
    %1 = vector.load %arg2[%c0_1, %c0_2] : memref<128x128xbf16, #tpu.memory_space<vmem>>, vector<128x128xbf16>
    %cst = arith.constant dense<0.000000e+00> : vector<8x128xf32>
    %2 = tpu.matmul %0, %1, %cst {dimension_numbers = #tpu.dot_dimension_numbers<[1], [0], [0], [1], [0, 0, 1, 1], [], []>} : vector<8x128xbf16>, vector<128x128xbf16>, vector<8x128xf32> -> vector<8x128xf32>
    %c0_3 = arith.constant 0 : index
    %c0_4 = arith.constant 0 : index
    %3 = vector.load %arg3[%c0_3, %c0_4] : memref<1x128xf32, #tpu.memory_space<vmem>>, vector<1x128xf32>
    %4 = vector.broadcast %3 : vector<1x128xf32> to vector<8x128xf32>
    %5 = arith.addf %2, %4 : vector<8x128xf32>
    %cst_5 = arith.constant 0.000000e+00 : f32
    %6 = vector.broadcast %cst_5 : f32 to vector<8x128xf32>
    %7 = arith.maximumf %5, %6 : vector<8x128xf32>
    %8 = arith.truncf %7 : vector<8x128xf32> to vector<8x128xbf16>
    %c0_6 = arith.constant 0 : index
    %c0_7 = arith.constant 0 : index
    %9 = vector.load %arg4[%c0_6, %c0_7] : memref<128x128xbf16, #tpu.memory_space<vmem>>, vector<128x128xbf16>
    %cst_8 = arith.constant dense<0.000000e+00> : vector<8x128xf32>
    %10 = tpu.matmul %8, %9, %cst_8 {dimension_numbers = #tpu.dot_dimension_numbers<[1], [0], [0], [1], [0, 0, 1, 1], [], []>} : vector<8x128xbf16>, vector<128x128xbf16>, vector<8x128xf32> -> vector<8x128xf32>
    %c0_9 = arith.constant 0 : index
    %c0_10 = arith.constant 0 : index
    %11 = vector.load %arg5[%c0_9, %c0_10] : memref<1x128xf32, #tpu.memory_space<vmem>>, vector<1x128xf32>
    %12 = vector.broadcast %11 : vector<1x128xf32> to vector<8x128xf32>
    %13 = arith.addf %10, %12 : vector<8x128xf32>
    %14 = arith.negf %13 : vector<8x128xf32>
    %15 = math.exp %14 : vector<8x128xf32>
    %cst_11 = arith.constant 1.000000e+00 : f32
    %16 = vector.broadcast %cst_11 : f32 to vector<8x128xf32>
    %17 = arith.addf %16, %15 : vector<8x128xf32>
    %18 = arith.divf %16, %17 : vector<8x128xf32>
    %c0_12 = arith.constant 0 : index
    %c0_13 = arith.constant 0 : index
    %19 = vector.load %arg6[%c0_12, %c0_13] : memref<8x128xf32, #tpu.memory_space<vmem>>, vector<8x128xf32>
    tpu.vector_store %arg6[%c0_12, %c0_13], %18 {strides = array<i32>} : memref<8x128xf32, #tpu.memory_space<vmem>>, vector<8x128xf32>,
    return
  }
  func.func @transform_0(%arg0: i32) -> (i32, i32) {
    %c0_i32 = arith.constant 0 : i32
    %c0_i32_0 = arith.constant 0 : i32
    %c0_i32_1 = arith.constant 0 : i32
    return %c0_i32, %c0_i32_0 : i32, i32
  }
  func.func @transform_1(%arg0: i32) -> (i32, i32) {
    %c0_i32 = arith.constant 0 : i32
    %c0_i32_0 = arith.constant 0 : i32
    %c0_i32_1 = arith.constant 0 : i32
    return %c0_i32, %c0_i32_0 : i32, i32
  }
  func.func @transform_2(%arg0: i32) -> (i32, i32) {
    %c0_i32 = arith.constant 0 : i32
    %c0_i32_0 = arith.constant 0 : i32
    %c0_i32_1 = arith.constant 0 : i32
    return %c0_i32, %c0_i32_0 : i32, i32
  }
  func.func @transform_3(%arg0: i32) -> (i32, i32) {
    %c0_i32 = arith.constant 0 : i32
    %c0_i32_0 = arith.constant 0 : i32
    %c0_i32_1 = arith.constant 0 : i32
    return %c0_i32, %c0_i32_0 : i32, i32
  }
  func.func @transform_4(%arg0: i32) -> (i32, i32) {
    %c0_i32 = arith.constant 0 : i32
    %c0_i32_0 = arith.constant 0 : i32
    %c0_i32_1 = arith.constant 0 : i32
    return %c0_i32, %c0_i32_0 : i32, i32
  }
  func.func @transform_5(%arg0: i32) -> (i32, i32) {
    %c0_i32 = arith.constant 0 : i32
    %c0_i32_0 = arith.constant 0 : i32
    %c0_i32_1 = arith.constant 0 : i32
    return %c0_i32, %c0_i32_0 : i32, i32
  }
}

module attributes {stable_mosaic.version = 11 : i64} {
  func.func @_proj_se_kernel(%arg0: i32, %arg1: memref<1x64x128xbf16, #tpu.memory_space<vmem>>, %arg2: memref<128x128xbf16, #tpu.memory_space<vmem>>, %arg3: memref<1x128xf32, #tpu.memory_space<vmem>>, %arg4: memref<1x128xf32, #tpu.memory_space<vmem>>, %arg5: memref<1x64x128xbf16, #tpu.memory_space<vmem>>, %arg6: memref<1x1x128xf32, #tpu.memory_space<vmem>>, %arg7: memref<1x64x128xbf16, #tpu.memory_space<vmem>>) attributes {dimension_semantics = [#tpu.dimension_semantics<parallel>], iteration_bounds = array<i64: 2>, scalar_prefetch = 0 : i64, scratch_operands = 0 : i64, tpu.core_type = #tpu.core_type<tc>, window_params = [{transform_indices = @transform_0, window_bounds = array<i64: 1, 64, 128>}, {pipeline_mode = #tpu.pipeline_mode<synchronous>, transform_indices = @transform_1, window_bounds = array<i64: 128, 128>}, {pipeline_mode = #tpu.pipeline_mode<synchronous>, transform_indices = @transform_2, window_bounds = array<i64: 1, 128>}, {pipeline_mode = #tpu.pipeline_mode<synchronous>, transform_indices = @transform_3, window_bounds = array<i64: 1, 128>}, {transform_indices = @transform_4, window_bounds = array<i64: 1, 64, 128>}, {transform_indices = @transform_5, window_bounds = array<i64: 1, 1, 128>}, {transform_indices = @transform_6, window_bounds = array<i64: 1, 64, 128>}]} {
    %c0 = arith.constant 0 : index
    %c0_0 = arith.constant 0 : index
    %c0_1 = arith.constant 0 : index
    %0 = vector.load %arg1[%c0, %c0_0, %c0_1] : memref<1x64x128xbf16, #tpu.memory_space<vmem>>, vector<1x64x128xbf16>
    %1 = vector.shape_cast %0 : vector<1x64x128xbf16> to vector<64x128xbf16>
    %c0_2 = arith.constant 0 : index
    %c0_3 = arith.constant 0 : index
    %2 = vector.load %arg2[%c0_2, %c0_3] : memref<128x128xbf16, #tpu.memory_space<vmem>>, vector<128x128xbf16>
    %cst = arith.constant dense<0.000000e+00> : vector<64x128xf32>
    %3 = tpu.matmul %1, %2, %cst {dimension_numbers = #tpu.dot_dimension_numbers<[1], [0], [0], [1], [0, 0, 1, 1], [], []>} : vector<64x128xbf16>, vector<128x128xbf16>, vector<64x128xf32> -> vector<64x128xf32>
    %c0_4 = arith.constant 0 : index
    %c0_5 = arith.constant 0 : index
    %4 = vector.load %arg3[%c0_4, %c0_5] : memref<1x128xf32, #tpu.memory_space<vmem>>, vector<1x128xf32>
    %5 = vector.broadcast %4 : vector<1x128xf32> to vector<64x128xf32>
    %6 = arith.mulf %3, %5 : vector<64x128xf32>
    %c0_6 = arith.constant 0 : index
    %c0_7 = arith.constant 0 : index
    %7 = vector.load %arg4[%c0_6, %c0_7] : memref<1x128xf32, #tpu.memory_space<vmem>>, vector<1x128xf32>
    %8 = vector.broadcast %7 : vector<1x128xf32> to vector<64x128xf32>
    %9 = arith.addf %6, %8 : vector<64x128xf32>
    %c0_8 = arith.constant 0 : index
    %c0_9 = arith.constant 0 : index
    %c0_10 = arith.constant 0 : index
    %10 = vector.load %arg5[%c0_8, %c0_9, %c0_10] : memref<1x64x128xbf16, #tpu.memory_space<vmem>>, vector<1x64x128xbf16>
    %11 = vector.shape_cast %10 : vector<1x64x128xbf16> to vector<64x128xbf16>
    %12 = arith.extf %11 : vector<64x128xbf16> to vector<64x128xf32>
    %c0_11 = arith.constant 0 : index
    %c0_12 = arith.constant 0 : index
    %c0_13 = arith.constant 0 : index
    %13 = vector.load %arg6[%c0_11, %c0_12, %c0_13] : memref<1x1x128xf32, #tpu.memory_space<vmem>>, vector<1x1x128xf32>
    %14 = vector.shape_cast %13 : vector<1x1x128xf32> to vector<1x128xf32>
    %15 = vector.broadcast %14 : vector<1x128xf32> to vector<64x128xf32>
    %16 = arith.mulf %12, %15 : vector<64x128xf32>
    %17 = arith.addf %16, %9 : vector<64x128xf32>
    %cst_14 = arith.constant 0.000000e+00 : f32
    %18 = vector.broadcast %cst_14 : f32 to vector<64x128xf32>
    %19 = arith.maximumf %17, %18 : vector<64x128xf32>
    %20 = arith.truncf %19 : vector<64x128xf32> to vector<64x128xbf16>
    %c0_15 = arith.constant 0 : index
    %c0_16 = arith.constant 0 : index
    %c0_17 = arith.constant 0 : index
    %21 = vector.load %arg7[%c0_15, %c0_16, %c0_17] : memref<1x64x128xbf16, #tpu.memory_space<vmem>>, vector<1x64x128xbf16>
    %22 = vector.shape_cast %21 : vector<1x64x128xbf16> to vector<64x128xbf16>
    %23 = vector.shape_cast %20 : vector<64x128xbf16> to vector<1x64x128xbf16>
    tpu.vector_store %arg7[%c0_15, %c0_16, %c0_17], %23 {strides = array<i32>} : memref<1x64x128xbf16, #tpu.memory_space<vmem>>, vector<1x64x128xbf16>,
    return
  }
  func.func @transform_0(%arg0: i32) -> (i32, i32, i32) {
    %c0_i32 = arith.constant 0 : i32
    %c0_i32_0 = arith.constant 0 : i32
    %c0_i32_1 = arith.constant 0 : i32
    return %arg0, %c0_i32, %c0_i32_0 : i32, i32, i32
  }
  func.func @transform_1(%arg0: i32) -> (i32, i32) {
    %c0_i32 = arith.constant 0 : i32
    %c0_i32_0 = arith.constant 0 : i32
    %c0_i32_1 = arith.constant 0 : i32
    return %c0_i32, %c0_i32_0 : i32, i32
  }
  func.func @transform_2(%arg0: i32) -> (i32, i32) {
    %c0_i32 = arith.constant 0 : i32
    %c0_i32_0 = arith.constant 0 : i32
    %c0_i32_1 = arith.constant 0 : i32
    return %c0_i32, %c0_i32_0 : i32, i32
  }
  func.func @transform_3(%arg0: i32) -> (i32, i32) {
    %c0_i32 = arith.constant 0 : i32
    %c0_i32_0 = arith.constant 0 : i32
    %c0_i32_1 = arith.constant 0 : i32
    return %c0_i32, %c0_i32_0 : i32, i32
  }
  func.func @transform_4(%arg0: i32) -> (i32, i32, i32) {
    %c0_i32 = arith.constant 0 : i32
    %c0_i32_0 = arith.constant 0 : i32
    %c0_i32_1 = arith.constant 0 : i32
    return %arg0, %c0_i32, %c0_i32_0 : i32, i32, i32
  }
  func.func @transform_5(%arg0: i32) -> (i32, i32, i32) {
    %c0_i32 = arith.constant 0 : i32
    %c0_i32_0 = arith.constant 0 : i32
    %c0_i32_1 = arith.constant 0 : i32
    return %arg0, %c0_i32, %c0_i32_0 : i32, i32, i32
  }
  func.func @transform_6(%arg0: i32) -> (i32, i32, i32) {
    %c0_i32 = arith.constant 0 : i32
    %c0_i32_0 = arith.constant 0 : i32
    %c0_i32_1 = arith.constant 0 : i32
    return %arg0, %c0_i32, %c0_i32_0 : i32, i32, i32
  }
}

module attributes {stable_mosaic.version = 11 : i64} {
  func.func @kernel(%arg0: i32, %arg1: i32, %arg2: i32, %arg3: memref<32x128xbf16, #tpu.memory_space<vmem>>, %arg4: memref<128x128xbf16, #tpu.memory_space<vmem>>, %arg5: memref<1x128xf32, #tpu.memory_space<vmem>>, %arg6: memref<1x128xf32, #tpu.memory_space<vmem>>, %arg7: memref<32x128xbf16, #tpu.memory_space<vmem>>, %arg8: memref<32x128xf32, #tpu.memory_space<vmem>>) attributes {dimension_semantics = [#tpu.dimension_semantics<parallel>, #tpu.dimension_semantics<parallel>, #tpu.dimension_semantics<arbitrary>], iteration_bounds = array<i64: 1, 1, 1>, scalar_prefetch = 0 : i64, scratch_operands = 1 : i64, tpu.core_type = #tpu.core_type<tc>, window_params = [{transform_indices = @transform_0, window_bounds = array<i64: 32, 128>}, {transform_indices = @transform_1, window_bounds = array<i64: 128, 128>}, {transform_indices = @transform_2, window_bounds = array<i64: 1, 128>}, {transform_indices = @transform_3, window_bounds = array<i64: 1, 128>}, {transform_indices = @transform_4, window_bounds = array<i64: 32, 128>}]} {
    %c0_i32 = arith.constant 0 : i32
    %0 = arith.cmpi eq, %arg2, %c0_i32 : i32
    %1 = arith.extui %0 : i1 to i32
    %c0_i32_0 = arith.constant 0 : i32
    %2 = arith.cmpi ne, %1, %c0_i32_0 : i32
    scf.if %2 {
      %cst_10 = arith.constant 0.000000e+00 : f32
      %12 = vector.broadcast %cst_10 : f32 to vector<32x128xf32>
      %c0_11 = arith.constant 0 : index
      %c0_12 = arith.constant 0 : index
      %13 = vector.load %arg8[%c0_11, %c0_12] : memref<32x128xf32, #tpu.memory_space<vmem>>, vector<32x128xf32>
      tpu.vector_store %arg8[%c0_11, %c0_12], %12 {strides = array<i32>} : memref<32x128xf32, #tpu.memory_space<vmem>>, vector<32x128xf32>,
    } else {
    }
    %c0 = arith.constant 0 : index
    %c0_1 = arith.constant 0 : index
    %3 = vector.load %arg8[%c0, %c0_1] : memref<32x128xf32, #tpu.memory_space<vmem>>, vector<32x128xf32>
    %c0_2 = arith.constant 0 : index
    %c0_3 = arith.constant 0 : index
    %4 = vector.load %arg3[%c0_2, %c0_3] : memref<32x128xbf16, #tpu.memory_space<vmem>>, vector<32x128xbf16>
    %c0_4 = arith.constant 0 : index
    %c0_5 = arith.constant 0 : index
    %5 = vector.load %arg4[%c0_4, %c0_5] : memref<128x128xbf16, #tpu.memory_space<vmem>>, vector<128x128xbf16>
    %cst = arith.constant dense<0.000000e+00> : vector<32x128xf32>
    %6 = tpu.matmul %4, %5, %cst {dimension_numbers = #tpu.dot_dimension_numbers<[1], [0], [0], [1], [0, 0, 1, 1], [], []>} : vector<32x128xbf16>, vector<128x128xbf16>, vector<32x128xf32> -> vector<32x128xf32>
    %7 = arith.addf %3, %6 : vector<32x128xf32>
    %c0_6 = arith.constant 0 : index
    %c0_7 = arith.constant 0 : index
    %8 = vector.load %arg8[%c0_6, %c0_7] : memref<32x128xf32, #tpu.memory_space<vmem>>, vector<32x128xf32>
    tpu.vector_store %arg8[%c0_6, %c0_7], %7 {strides = array<i32>} : memref<32x128xf32, #tpu.memory_space<vmem>>, vector<32x128xf32>,
    %c0_i32_8 = arith.constant 0 : i32
    %9 = arith.cmpi eq, %arg2, %c0_i32_8 : i32
    %10 = arith.extui %9 : i1 to i32
    %c0_i32_9 = arith.constant 0 : i32
    %11 = arith.cmpi ne, %10, %c0_i32_9 : i32
    scf.if %11 {
      %c0_10 = arith.constant 0 : index
      %c0_11 = arith.constant 0 : index
      %12 = vector.load %arg8[%c0_10, %c0_11] : memref<32x128xf32, #tpu.memory_space<vmem>>, vector<32x128xf32>
      %c0_12 = arith.constant 0 : index
      %c0_13 = arith.constant 0 : index
      %13 = vector.load %arg5[%c0_12, %c0_13] : memref<1x128xf32, #tpu.memory_space<vmem>>, vector<1x128xf32>
      %14 = vector.broadcast %13 : vector<1x128xf32> to vector<32x128xf32>
      %15 = arith.mulf %12, %14 : vector<32x128xf32>
      %c0_14 = arith.constant 0 : index
      %c0_15 = arith.constant 0 : index
      %16 = vector.load %arg6[%c0_14, %c0_15] : memref<1x128xf32, #tpu.memory_space<vmem>>, vector<1x128xf32>
      %17 = vector.broadcast %16 : vector<1x128xf32> to vector<32x128xf32>
      %18 = arith.addf %15, %17 : vector<32x128xf32>
      %19 = arith.truncf %18 : vector<32x128xf32> to vector<32x128xbf16>
      %c0_16 = arith.constant 0 : index
      %c0_17 = arith.constant 0 : index
      %20 = vector.load %arg7[%c0_16, %c0_17] : memref<32x128xbf16, #tpu.memory_space<vmem>>, vector<32x128xbf16>
      tpu.vector_store %arg7[%c0_16, %c0_17], %19 {strides = array<i32>} : memref<32x128xbf16, #tpu.memory_space<vmem>>, vector<32x128xbf16>,
    } else {
    }
    return
  }
  func.func @transform_0(%arg0: i32, %arg1: i32, %arg2: i32) -> (i32, i32) {
    %c0_i32 = arith.constant 0 : i32
    return %arg0, %arg2 : i32, i32
  }
  func.func @transform_1(%arg0: i32, %arg1: i32, %arg2: i32) -> (i32, i32) {
    %c0_i32 = arith.constant 0 : i32
    return %arg2, %arg1 : i32, i32
  }
  func.func @transform_2(%arg0: i32, %arg1: i32, %arg2: i32) -> (i32, i32) {
    %c0_i32 = arith.constant 0 : i32
    %c0_i32_0 = arith.constant 0 : i32
    return %c0_i32, %arg1 : i32, i32
  }
  func.func @transform_3(%arg0: i32, %arg1: i32, %arg2: i32) -> (i32, i32) {
    %c0_i32 = arith.constant 0 : i32
    %c0_i32_0 = arith.constant 0 : i32
    return %c0_i32, %arg1 : i32, i32
  }
  func.func @transform_4(%arg0: i32, %arg1: i32, %arg2: i32) -> (i32, i32) {
    %c0_i32 = arith.constant 0 : i32
    return %arg0, %arg1 : i32, i32
  }
}

module attributes {stable_mosaic.version = 11 : i64} {
  func.func @kernel(%arg0: i32, %arg1: memref<1x20x16x128xbf16, #tpu.memory_space<vmem>>, %arg2: memref<9x128x128xbf16, #tpu.memory_space<vmem>>, %arg3: memref<1x128xf32, #tpu.memory_space<vmem>>, %arg4: memref<1x128xf32, #tpu.memory_space<vmem>>, %arg5: memref<1x4x4x128xbf16, #tpu.memory_space<vmem>>) attributes {dimension_semantics = [#tpu.dimension_semantics<parallel>], iteration_bounds = array<i64: 2>, scalar_prefetch = 0 : i64, scratch_operands = 0 : i64, tpu.core_type = #tpu.core_type<tc>, window_params = [{transform_indices = @transform_0, window_bounds = array<i64: 1, 20, 16, 128>}, {pipeline_mode = #tpu.pipeline_mode<synchronous>, transform_indices = @transform_1, window_bounds = array<i64: 9, 128, 128>}, {pipeline_mode = #tpu.pipeline_mode<synchronous>, transform_indices = @transform_2, window_bounds = array<i64: 1, 128>}, {pipeline_mode = #tpu.pipeline_mode<synchronous>, transform_indices = @transform_3, window_bounds = array<i64: 1, 128>}, {transform_indices = @transform_4, window_bounds = array<i64: 1, 4, 4, 128>}]} {
    %cst = arith.constant 0.000000e+00 : f32
    %0 = vector.broadcast %cst : f32 to vector<32x128xf32>
    %c0 = arith.constant 0 : index
    %c0_0 = arith.constant 0 : index
    %c0_1 = arith.constant 0 : index
    %c0_2 = arith.constant 0 : index
    %1 = vector.load %arg1[%c0, %c0_0, %c0_1, %c0_2] : memref<1x20x16x128xbf16, #tpu.memory_space<vmem>>, vector<1x4x8x128xbf16>
    %2 = vector.shape_cast %1 : vector<1x4x8x128xbf16> to vector<4x8x128xbf16>
    %3 = vector.shape_cast %2 : vector<4x8x128xbf16> to vector<32x128xbf16>
    %c0_3 = arith.constant 0 : index
    %c0_4 = arith.constant 0 : index
    %c0_5 = arith.constant 0 : index
    %4 = vector.load %arg2[%c0_3, %c0_4, %c0_5] : memref<9x128x128xbf16, #tpu.memory_space<vmem>>, vector<1x128x128xbf16>
    %5 = vector.shape_cast %4 : vector<1x128x128xbf16> to vector<128x128xbf16>
    %cst_6 = arith.constant dense<0.000000e+00> : vector<32x128xf32>
    %6 = tpu.matmul %3, %5, %cst_6 {dimension_numbers = #tpu.dot_dimension_numbers<[1], [0], [0], [1], [0, 0, 1, 1], [], []>} : vector<32x128xbf16>, vector<128x128xbf16>, vector<32x128xf32> -> vector<32x128xf32>
    %7 = arith.addf %0, %6 : vector<32x128xf32>
    %c0_7 = arith.constant 0 : index
    %c5 = arith.constant 5 : index
    %c0_8 = arith.constant 0 : index
    %c0_9 = arith.constant 0 : index
    %8 = vector.load %arg1[%c0_7, %c5, %c0_8, %c0_9] : memref<1x20x16x128xbf16, #tpu.memory_space<vmem>>, vector<1x4x8x128xbf16>
    %9 = vector.shape_cast %8 : vector<1x4x8x128xbf16> to vector<4x8x128xbf16>
    %10 = vector.shape_cast %9 : vector<4x8x128xbf16> to vector<32x128xbf16>
    %c1 = arith.constant 1 : index
    %c0_10 = arith.constant 0 : index
    %c0_11 = arith.constant 0 : index
    %11 = vector.load %arg2[%c1, %c0_10, %c0_11] : memref<9x128x128xbf16, #tpu.memory_space<vmem>>, vector<1x128x128xbf16>
    %12 = vector.shape_cast %11 : vector<1x128x128xbf16> to vector<128x128xbf16>
    %cst_12 = arith.constant dense<0.000000e+00> : vector<32x128xf32>
    %13 = tpu.matmul %10, %12, %cst_12 {dimension_numbers = #tpu.dot_dimension_numbers<[1], [0], [0], [1], [0, 0, 1, 1], [], []>} : vector<32x128xbf16>, vector<128x128xbf16>, vector<32x128xf32> -> vector<32x128xf32>
    %14 = arith.addf %7, %13 : vector<32x128xf32>
    %c0_13 = arith.constant 0 : index
    %c0_14 = arith.constant 0 : index
    %c1_15 = arith.constant 1 : index
    %c0_16 = arith.constant 0 : index
    %15 = vector.load %arg1[%c0_13, %c0_14, %c1_15, %c0_16] : memref<1x20x16x128xbf16, #tpu.memory_space<vmem>>, vector<1x4x8x128xbf16>
    %16 = vector.shape_cast %15 : vector<1x4x8x128xbf16> to vector<4x8x128xbf16>
    %17 = vector.shape_cast %16 : vector<4x8x128xbf16> to vector<32x128xbf16>
    %c2 = arith.constant 2 : index
    %c0_17 = arith.constant 0 : index
    %c0_18 = arith.constant 0 : index
    %18 = vector.load %arg2[%c2, %c0_17, %c0_18] : memref<9x128x128xbf16, #tpu.memory_space<vmem>>, vector<1x128x128xbf16>
    %19 = vector.shape_cast %18 : vector<1x128x128xbf16> to vector<128x128xbf16>
    %cst_19 = arith.constant dense<0.000000e+00> : vector<32x128xf32>
    %20 = tpu.matmul %17, %19, %cst_19 {dimension_numbers = #tpu.dot_dimension_numbers<[1], [0], [0], [1], [0, 0, 1, 1], [], []>} : vector<32x128xbf16>, vector<128x128xbf16>, vector<32x128xf32> -> vector<32x128xf32>
    %21 = arith.addf %14, %20 : vector<32x128xf32>
    %c0_20 = arith.constant 0 : index
    %c10 = arith.constant 10 : index
    %c0_21 = arith.constant 0 : index
    %c0_22 = arith.constant 0 : index
    %22 = vector.load %arg1[%c0_20, %c10, %c0_21, %c0_22] : memref<1x20x16x128xbf16, #tpu.memory_space<vmem>>, vector<1x4x8x128xbf16>
    %23 = vector.shape_cast %22 : vector<1x4x8x128xbf16> to vector<4x8x128xbf16>
    %24 = vector.shape_cast %23 : vector<4x8x128xbf16> to vector<32x128xbf16>
    %c3 = arith.constant 3 : index
    %c0_23 = arith.constant 0 : index
    %c0_24 = arith.constant 0 : index
    %25 = vector.load %arg2[%c3, %c0_23, %c0_24] : memref<9x128x128xbf16, #tpu.memory_space<vmem>>, vector<1x128x128xbf16>
    %26 = vector.shape_cast %25 : vector<1x128x128xbf16> to vector<128x128xbf16>
    %cst_25 = arith.constant dense<0.000000e+00> : vector<32x128xf32>
    %27 = tpu.matmul %24, %26, %cst_25 {dimension_numbers = #tpu.dot_dimension_numbers<[1], [0], [0], [1], [0, 0, 1, 1], [], []>} : vector<32x128xbf16>, vector<128x128xbf16>, vector<32x128xf32> -> vector<32x128xf32>
    %28 = arith.addf %21, %27 : vector<32x128xf32>
    %c0_26 = arith.constant 0 : index
    %c15 = arith.constant 15 : index
    %c0_27 = arith.constant 0 : index
    %c0_28 = arith.constant 0 : index
    %29 = vector.load %arg1[%c0_26, %c15, %c0_27, %c0_28] : memref<1x20x16x128xbf16, #tpu.memory_space<vmem>>, vector<1x4x8x128xbf16>
    %30 = vector.shape_cast %29 : vector<1x4x8x128xbf16> to vector<4x8x128xbf16>
    %31 = vector.shape_cast %30 : vector<4x8x128xbf16> to vector<32x128xbf16>
    %c4 = arith.constant 4 : index
    %c0_29 = arith.constant 0 : index
    %c0_30 = arith.constant 0 : index
    %32 = vector.load %arg2[%c4, %c0_29, %c0_30] : memref<9x128x128xbf16, #tpu.memory_space<vmem>>, vector<1x128x128xbf16>
    %33 = vector.shape_cast %32 : vector<1x128x128xbf16> to vector<128x128xbf16>
    %cst_31 = arith.constant dense<0.000000e+00> : vector<32x128xf32>
    %34 = tpu.matmul %31, %33, %cst_31 {dimension_numbers = #tpu.dot_dimension_numbers<[1], [0], [0], [1], [0, 0, 1, 1], [], []>} : vector<32x128xbf16>, vector<128x128xbf16>, vector<32x128xf32> -> vector<32x128xf32>
    %35 = arith.addf %28, %34 : vector<32x128xf32>
    %c0_32 = arith.constant 0 : index
    %c10_33 = arith.constant 10 : index
    %c1_34 = arith.constant 1 : index
    %c0_35 = arith.constant 0 : index
    %36 = vector.load %arg1[%c0_32, %c10_33, %c1_34, %c0_35] : memref<1x20x16x128xbf16, #tpu.memory_space<vmem>>, vector<1x4x8x128xbf16>
    %37 = vector.shape_cast %36 : vector<1x4x8x128xbf16> to vector<4x8x128xbf16>
    %38 = vector.shape_cast %37 : vector<4x8x128xbf16> to vector<32x128xbf16>
    %c5_36 = arith.constant 5 : index
    %c0_37 = arith.constant 0 : index
    %c0_38 = arith.constant 0 : index
    %39 = vector.load %arg2[%c5_36, %c0_37, %c0_38] : memref<9x128x128xbf16, #tpu.memory_space<vmem>>, vector<1x128x128xbf16>
    %40 = vector.shape_cast %39 : vector<1x128x128xbf16> to vector<128x128xbf16>
    %cst_39 = arith.constant dense<0.000000e+00> : vector<32x128xf32>
    %41 = tpu.matmul %38, %40, %cst_39 {dimension_numbers = #tpu.dot_dimension_numbers<[1], [0], [0], [1], [0, 0, 1, 1], [], []>} : vector<32x128xbf16>, vector<128x128xbf16>, vector<32x128xf32> -> vector<32x128xf32>
    %42 = arith.addf %35, %41 : vector<32x128xf32>
    %c0_40 = arith.constant 0 : index
    %c1_41 = arith.constant 1 : index
    %c0_42 = arith.constant 0 : index
    %c0_43 = arith.constant 0 : index
    %43 = vector.load %arg1[%c0_40, %c1_41, %c0_42, %c0_43] : memref<1x20x16x128xbf16, #tpu.memory_space<vmem>>, vector<1x4x8x128xbf16>
    %44 = vector.shape_cast %43 : vector<1x4x8x128xbf16> to vector<4x8x128xbf16>
    %45 = vector.shape_cast %44 : vector<4x8x128xbf16> to vector<32x128xbf16>
    %c6 = arith.constant 6 : index
    %c0_44 = arith.constant 0 : index
    %c0_45 = arith.constant 0 : index
    %46 = vector.load %arg2[%c6, %c0_44, %c0_45] : memref<9x128x128xbf16, #tpu.memory_space<vmem>>, vector<1x128x128xbf16>
    %47 = vector.shape_cast %46 : vector<1x128x128xbf16> to vector<128x128xbf16>
    %cst_46 = arith.constant dense<0.000000e+00> : vector<32x128xf32>
    %48 = tpu.matmul %45, %47, %cst_46 {dimension_numbers = #tpu.dot_dimension_numbers<[1], [0], [0], [1], [0, 0, 1, 1], [], []>} : vector<32x128xbf16>, vector<128x128xbf16>, vector<32x128xf32> -> vector<32x128xf32>
    %49 = arith.addf %42, %48 : vector<32x128xf32>
    %c0_47 = arith.constant 0 : index
    %c6_48 = arith.constant 6 : index
    %c0_49 = arith.constant 0 : index
    %c0_50 = arith.constant 0 : index
    %50 = vector.load %arg1[%c0_47, %c6_48, %c0_49, %c0_50] : memref<1x20x16x128xbf16, #tpu.memory_space<vmem>>, vector<1x4x8x128xbf16>
    %51 = vector.shape_cast %50 : vector<1x4x8x128xbf16> to vector<4x8x128xbf16>
    %52 = vector.shape_cast %51 : vector<4x8x128xbf16> to vector<32x128xbf16>
    %c7 = arith.constant 7 : index
    %c0_51 = arith.constant 0 : index
    %c0_52 = arith.constant 0 : index
    %53 = vector.load %arg2[%c7, %c0_51, %c0_52] : memref<9x128x128xbf16, #tpu.memory_space<vmem>>, vector<1x128x128xbf16>
    %54 = vector.shape_cast %53 : vector<1x128x128xbf16> to vector<128x128xbf16>
    %cst_53 = arith.constant dense<0.000000e+00> : vector<32x128xf32>
    %55 = tpu.matmul %52, %54, %cst_53 {dimension_numbers = #tpu.dot_dimension_numbers<[1], [0], [0], [1], [0, 0, 1, 1], [], []>} : vector<32x128xbf16>, vector<128x128xbf16>, vector<32x128xf32> -> vector<32x128xf32>
    %56 = arith.addf %49, %55 : vector<32x128xf32>
    %c0_54 = arith.constant 0 : index
    %c1_55 = arith.constant 1 : index
    %c1_56 = arith.constant 1 : index
    %c0_57 = arith.constant 0 : index
    %57 = vector.load %arg1[%c0_54, %c1_55, %c1_56, %c0_57] : memref<1x20x16x128xbf16, #tpu.memory_space<vmem>>, vector<1x4x8x128xbf16>
    %58 = vector.shape_cast %57 : vector<1x4x8x128xbf16> to vector<4x8x128xbf16>
    %59 = vector.shape_cast %58 : vector<4x8x128xbf16> to vector<32x128xbf16>
    %c8 = arith.constant 8 : index
    %c0_58 = arith.constant 0 : index
    %c0_59 = arith.constant 0 : index
    %60 = vector.load %arg2[%c8, %c0_58, %c0_59] : memref<9x128x128xbf16, #tpu.memory_space<vmem>>, vector<1x128x128xbf16>
    %61 = vector.shape_cast %60 : vector<1x128x128xbf16> to vector<128x128xbf16>
    %cst_60 = arith.constant dense<0.000000e+00> : vector<32x128xf32>
    %62 = tpu.matmul %59, %61, %cst_60 {dimension_numbers = #tpu.dot_dimension_numbers<[1], [0], [0], [1], [0, 0, 1, 1], [], []>} : vector<32x128xbf16>, vector<128x128xbf16>, vector<32x128xf32> -> vector<32x128xf32>
    %63 = arith.addf %56, %62 : vector<32x128xf32>
    %c0_61 = arith.constant 0 : index
    %c0_62 = arith.constant 0 : index
    %64 = vector.load %arg3[%c0_61, %c0_62] : memref<1x128xf32, #tpu.memory_space<vmem>>, vector<1x128xf32>
    %65 = vector.broadcast %64 : vector<1x128xf32> to vector<32x128xf32>
    %66 = arith.mulf %63, %65 : vector<32x128xf32>
    %c0_63 = arith.constant 0 : index
    %c0_64 = arith.constant 0 : index
    %67 = vector.load %arg4[%c0_63, %c0_64] : memref<1x128xf32, #tpu.memory_space<vmem>>, vector<1x128xf32>
    %68 = vector.broadcast %67 : vector<1x128xf32> to vector<32x128xf32>
    %69 = arith.addf %66, %68 : vector<32x128xf32>
    %cst_65 = arith.constant 0.000000e+00 : f32
    %70 = vector.broadcast %cst_65 : f32 to vector<32x128xf32>
    %71 = arith.maximumf %69, %70 : vector<32x128xf32>
    %72 = vector.shape_cast %71 : vector<32x128xf32> to vector<4x8x128xf32>
    %73 = vector.extract_strided_slice %72 {offsets = [0, 0, 0], sizes = [4, 4, 128], strides = [1, 1, 1]} : vector<4x8x128xf32> to vector<4x4x128xf32>
    %74 = arith.truncf %73 : vector<4x4x128xf32> to vector<4x4x128xbf16>
    %c0_66 = arith.constant 0 : index
    %c0_67 = arith.constant 0 : index
    %c0_68 = arith.constant 0 : index
    %c0_69 = arith.constant 0 : index
    %75 = vector.load %arg5[%c0_66, %c0_67, %c0_68, %c0_69] : memref<1x4x4x128xbf16, #tpu.memory_space<vmem>>, vector<1x4x4x128xbf16>
    %76 = vector.shape_cast %75 : vector<1x4x4x128xbf16> to vector<4x4x128xbf16>
    %77 = vector.shape_cast %74 : vector<4x4x128xbf16> to vector<1x4x4x128xbf16>
    tpu.vector_store %arg5[%c0_66, %c0_67, %c0_68, %c0_69], %77 {strides = array<i32>} : memref<1x4x4x128xbf16, #tpu.memory_space<vmem>>, vector<1x4x4x128xbf16>,
    return
  }
  func.func @transform_0(%arg0: i32) -> (i32, i32, i32, i32) {
    %c0_i32 = arith.constant 0 : i32
    %c0_i32_0 = arith.constant 0 : i32
    %c0_i32_1 = arith.constant 0 : i32
    %c0_i32_2 = arith.constant 0 : i32
    return %arg0, %c0_i32, %c0_i32_0, %c0_i32_1 : i32, i32, i32, i32
  }
  func.func @transform_1(%arg0: i32) -> (i32, i32, i32) {
    %c0_i32 = arith.constant 0 : i32
    %c0_i32_0 = arith.constant 0 : i32
    %c0_i32_1 = arith.constant 0 : i32
    %c0_i32_2 = arith.constant 0 : i32
    return %c0_i32, %c0_i32_0, %c0_i32_1 : i32, i32, i32
  }
  func.func @transform_2(%arg0: i32) -> (i32, i32) {
    %c0_i32 = arith.constant 0 : i32
    %c0_i32_0 = arith.constant 0 : i32
    %c0_i32_1 = arith.constant 0 : i32
    return %c0_i32, %c0_i32_0 : i32, i32
  }
  func.func @transform_3(%arg0: i32) -> (i32, i32) {
    %c0_i32 = arith.constant 0 : i32
    %c0_i32_0 = arith.constant 0 : i32
    %c0_i32_1 = arith.constant 0 : i32
    return %c0_i32, %c0_i32_0 : i32, i32
  }
  func.func @transform_4(%arg0: i32) -> (i32, i32, i32, i32) {
    %c0_i32 = arith.constant 0 : i32
    %c0_i32_0 = arith.constant 0 : i32
    %c0_i32_1 = arith.constant 0 : i32
    %c0_i32_2 = arith.constant 0 : i32
    return %arg0, %c0_i32, %c0_i32_0, %c0_i32_1 : i32, i32, i32, i32
  }
}

module attributes {stable_mosaic.version = 11 : i64} {
  func.func @kernel(%arg0: i32, %arg1: i32, %arg2: memref<2x16x128xbf16, #tpu.memory_space<vmem>>, %arg3: memref<2x128xf32, #tpu.memory_space<vmem>>) attributes {dimension_semantics = [#tpu.dimension_semantics<parallel>, #tpu.dimension_semantics<arbitrary>], iteration_bounds = array<i64: 1, 1>, scalar_prefetch = 0 : i64, scratch_operands = 0 : i64, tpu.core_type = #tpu.core_type<tc>, window_params = [{transform_indices = @transform_0, window_bounds = array<i64: 2, 16, 128>}, {transform_indices = @transform_1, window_bounds = array<i64: 2, 128>}]} {
    %c0_i32 = arith.constant 0 : i32
    %0 = arith.cmpi eq, %arg1, %c0_i32 : i32
    %1 = arith.extui %0 : i1 to i32
    %c0_i32_0 = arith.constant 0 : i32
    %2 = arith.cmpi ne, %1, %c0_i32_0 : i32
    scf.if %2 {
      %cst_9 = arith.constant 0.000000e+00 : f32
      %12 = vector.broadcast %cst_9 : f32 to vector<2x128xf32>
      %c0_10 = arith.constant 0 : index
      %c0_11 = arith.constant 0 : index
      %13 = vector.load %arg3[%c0_10, %c0_11] : memref<2x128xf32, #tpu.memory_space<vmem>>, vector<2x128xf32>
      tpu.vector_store %arg3[%c0_10, %c0_11], %12 {strides = array<i32>} : memref<2x128xf32, #tpu.memory_space<vmem>>, vector<2x128xf32>,
    } else {
    }
    %c0 = arith.constant 0 : index
    %c0_1 = arith.constant 0 : index
    %3 = vector.load %arg3[%c0, %c0_1] : memref<2x128xf32, #tpu.memory_space<vmem>>, vector<2x128xf32>
    %c0_2 = arith.constant 0 : index
    %c0_3 = arith.constant 0 : index
    %c0_4 = arith.constant 0 : index
    %4 = vector.load %arg2[%c0_2, %c0_3, %c0_4] : memref<2x16x128xbf16, #tpu.memory_space<vmem>>, vector<2x16x128xbf16>
    %5 = arith.extf %4 : vector<2x16x128xbf16> to vector<2x16x128xf32>
    %cst = arith.constant dense<0.000000e+00> : vector<2x128xf32>
    %6 = vector.multi_reduction <add>, %5, %cst [1] : vector<2x16x128xf32> to vector<2x128xf32>
    %7 = arith.addf %3, %6 : vector<2x128xf32>
    %c0_5 = arith.constant 0 : index
    %c0_6 = arith.constant 0 : index
    %8 = vector.load %arg3[%c0_5, %c0_6] : memref<2x128xf32, #tpu.memory_space<vmem>>, vector<2x128xf32>
    tpu.vector_store %arg3[%c0_5, %c0_6], %7 {strides = array<i32>} : memref<2x128xf32, #tpu.memory_space<vmem>>, vector<2x128xf32>,
    %c0_i32_7 = arith.constant 0 : i32
    %9 = arith.cmpi eq, %arg1, %c0_i32_7 : i32
    %10 = arith.extui %9 : i1 to i32
    %c0_i32_8 = arith.constant 0 : i32
    %11 = arith.cmpi ne, %10, %c0_i32_8 : i32
    scf.if %11 {
      %c0_9 = arith.constant 0 : index
      %c0_10 = arith.constant 0 : index
      %12 = vector.load %arg3[%c0_9, %c0_10] : memref<2x128xf32, #tpu.memory_space<vmem>>, vector<2x128xf32>
      %cst_11 = arith.constant 6.250000e-02 : f32
      %13 = vector.broadcast %cst_11 : f32 to vector<2x128xf32>
      %14 = arith.mulf %12, %13 : vector<2x128xf32>
      %c0_12 = arith.constant 0 : index
      %c0_13 = arith.constant 0 : index
      %15 = vector.load %arg3[%c0_12, %c0_13] : memref<2x128xf32, #tpu.memory_space<vmem>>, vector<2x128xf32>
      tpu.vector_store %arg3[%c0_12, %c0_13], %14 {strides = array<i32>} : memref<2x128xf32, #tpu.memory_space<vmem>>, vector<2x128xf32>,
    } else {
    }
    return
  }
  func.func @transform_0(%arg0: i32, %arg1: i32) -> (i32, i32, i32) {
    %c0_i32 = arith.constant 0 : i32
    %c0_i32_0 = arith.constant 0 : i32
    return %c0_i32, %arg1, %arg0 : i32, i32, i32
  }
  func.func @transform_1(%arg0: i32, %arg1: i32) -> (i32, i32) {
    %c0_i32 = arith.constant 0 : i32
    %c0_i32_0 = arith.constant 0 : i32
    return %c0_i32, %arg0 : i32, i32
  }
}

module attributes {stable_mosaic.version = 11 : i64} {
  func.func @_proj_se_kernel(%arg0: i32, %arg1: memref<1x16x128xbf16, #tpu.memory_space<vmem>>, %arg2: memref<128x128xbf16, #tpu.memory_space<vmem>>, %arg3: memref<1x128xf32, #tpu.memory_space<vmem>>, %arg4: memref<1x128xf32, #tpu.memory_space<vmem>>, %arg5: memref<1x16x128xbf16, #tpu.memory_space<vmem>>, %arg6: memref<1x1x128xf32, #tpu.memory_space<vmem>>, %arg7: memref<1x16x128xbf16, #tpu.memory_space<vmem>>) attributes {dimension_semantics = [#tpu.dimension_semantics<parallel>], iteration_bounds = array<i64: 2>, scalar_prefetch = 0 : i64, scratch_operands = 0 : i64, tpu.core_type = #tpu.core_type<tc>, window_params = [{transform_indices = @transform_0, window_bounds = array<i64: 1, 16, 128>}, {pipeline_mode = #tpu.pipeline_mode<synchronous>, transform_indices = @transform_1, window_bounds = array<i64: 128, 128>}, {pipeline_mode = #tpu.pipeline_mode<synchronous>, transform_indices = @transform_2, window_bounds = array<i64: 1, 128>}, {pipeline_mode = #tpu.pipeline_mode<synchronous>, transform_indices = @transform_3, window_bounds = array<i64: 1, 128>}, {transform_indices = @transform_4, window_bounds = array<i64: 1, 16, 128>}, {transform_indices = @transform_5, window_bounds = array<i64: 1, 1, 128>}, {transform_indices = @transform_6, window_bounds = array<i64: 1, 16, 128>}]} {
    %c0 = arith.constant 0 : index
    %c0_0 = arith.constant 0 : index
    %c0_1 = arith.constant 0 : index
    %0 = vector.load %arg1[%c0, %c0_0, %c0_1] : memref<1x16x128xbf16, #tpu.memory_space<vmem>>, vector<1x16x128xbf16>
    %1 = vector.shape_cast %0 : vector<1x16x128xbf16> to vector<16x128xbf16>
    %c0_2 = arith.constant 0 : index
    %c0_3 = arith.constant 0 : index
    %2 = vector.load %arg2[%c0_2, %c0_3] : memref<128x128xbf16, #tpu.memory_space<vmem>>, vector<128x128xbf16>
    %cst = arith.constant dense<0.000000e+00> : vector<16x128xf32>
    %3 = tpu.matmul %1, %2, %cst {dimension_numbers = #tpu.dot_dimension_numbers<[1], [0], [0], [1], [0, 0, 1, 1], [], []>} : vector<16x128xbf16>, vector<128x128xbf16>, vector<16x128xf32> -> vector<16x128xf32>
    %c0_4 = arith.constant 0 : index
    %c0_5 = arith.constant 0 : index
    %4 = vector.load %arg3[%c0_4, %c0_5] : memref<1x128xf32, #tpu.memory_space<vmem>>, vector<1x128xf32>
    %5 = vector.broadcast %4 : vector<1x128xf32> to vector<16x128xf32>
    %6 = arith.mulf %3, %5 : vector<16x128xf32>
    %c0_6 = arith.constant 0 : index
    %c0_7 = arith.constant 0 : index
    %7 = vector.load %arg4[%c0_6, %c0_7] : memref<1x128xf32, #tpu.memory_space<vmem>>, vector<1x128xf32>
    %8 = vector.broadcast %7 : vector<1x128xf32> to vector<16x128xf32>
    %9 = arith.addf %6, %8 : vector<16x128xf32>
    %c0_8 = arith.constant 0 : index
    %c0_9 = arith.constant 0 : index
    %c0_10 = arith.constant 0 : index
    %10 = vector.load %arg5[%c0_8, %c0_9, %c0_10] : memref<1x16x128xbf16, #tpu.memory_space<vmem>>, vector<1x16x128xbf16>
    %11 = vector.shape_cast %10 : vector<1x16x128xbf16> to vector<16x128xbf16>
    %12 = arith.extf %11 : vector<16x128xbf16> to vector<16x128xf32>
    %c0_11 = arith.constant 0 : index
    %c0_12 = arith.constant 0 : index
    %c0_13 = arith.constant 0 : index
    %13 = vector.load %arg6[%c0_11, %c0_12, %c0_13] : memref<1x1x128xf32, #tpu.memory_space<vmem>>, vector<1x1x128xf32>
    %14 = vector.shape_cast %13 : vector<1x1x128xf32> to vector<1x128xf32>
    %15 = vector.broadcast %14 : vector<1x128xf32> to vector<16x128xf32>
    %16 = arith.mulf %12, %15 : vector<16x128xf32>
    %17 = arith.addf %16, %9 : vector<16x128xf32>
    %cst_14 = arith.constant 0.000000e+00 : f32
    %18 = vector.broadcast %cst_14 : f32 to vector<16x128xf32>
    %19 = arith.maximumf %17, %18 : vector<16x128xf32>
    %20 = arith.truncf %19 : vector<16x128xf32> to vector<16x128xbf16>
    %c0_15 = arith.constant 0 : index
    %c0_16 = arith.constant 0 : index
    %c0_17 = arith.constant 0 : index
    %21 = vector.load %arg7[%c0_15, %c0_16, %c0_17] : memref<1x16x128xbf16, #tpu.memory_space<vmem>>, vector<1x16x128xbf16>
    %22 = vector.shape_cast %21 : vector<1x16x128xbf16> to vector<16x128xbf16>
    %23 = vector.shape_cast %20 : vector<16x128xbf16> to vector<1x16x128xbf16>
    tpu.vector_store %arg7[%c0_15, %c0_16, %c0_17], %23 {strides = array<i32>} : memref<1x16x128xbf16, #tpu.memory_space<vmem>>, vector<1x16x128xbf16>,
    return
  }
  func.func @transform_0(%arg0: i32) -> (i32, i32, i32) {
    %c0_i32 = arith.constant 0 : i32
    %c0_i32_0 = arith.constant 0 : i32
    %c0_i32_1 = arith.constant 0 : i32
    return %arg0, %c0_i32, %c0_i32_0 : i32, i32, i32
  }
  func.func @transform_1(%arg0: i32) -> (i32, i32) {
    %c0_i32 = arith.constant 0 : i32
    %c0_i32_0 = arith.constant 0 : i32
    %c0_i32_1 = arith.constant 0 : i32
    return %c0_i32, %c0_i32_0 : i32, i32
  }
  func.func @transform_2(%arg0: i32) -> (i32, i32) {
    %c0_i32 = arith.constant 0 : i32
    %c0_i32_0 = arith.constant 0 : i32
    %c0_i32_1 = arith.constant 0 : i32
    return %c0_i32, %c0_i32_0 : i32, i32
  }
  func.func @transform_3(%arg0: i32) -> (i32, i32) {
    %c0_i32 = arith.constant 0 : i32
    %c0_i32_0 = arith.constant 0 : i32
    %c0_i32_1 = arith.constant 0 : i32
    return %c0_i32, %c0_i32_0 : i32, i32
  }
  func.func @transform_4(%arg0: i32) -> (i32, i32, i32) {
    %c0_i32 = arith.constant 0 : i32
    %c0_i32_0 = arith.constant 0 : i32
    %c0_i32_1 = arith.constant 0 : i32
    return %arg0, %c0_i32, %c0_i32_0 : i32, i32, i32
  }
  func.func @transform_5(%arg0: i32) -> (i32, i32, i32) {
    %c0_i32 = arith.constant 0 : i32
    %c0_i32_0 = arith.constant 0 : i32
    %c0_i32_1 = arith.constant 0 : i32
    return %arg0, %c0_i32, %c0_i32_0 : i32, i32, i32
  }
  func.func @transform_6(%arg0: i32) -> (i32, i32, i32) {
    %c0_i32 = arith.constant 0 : i32
    %c0_i32_0 = arith.constant 0 : i32
    %c0_i32_1 = arith.constant 0 : i32
    return %arg0, %c0_i32, %c0_i32_0 : i32, i32, i32
  }
}

module attributes {stable_mosaic.version = 11 : i64} {
  func.func @kernel(%arg0: i32, %arg1: i32, %arg2: i32, %arg3: memref<8x128xbf16, #tpu.memory_space<vmem>>, %arg4: memref<128x256xbf16, #tpu.memory_space<vmem>>, %arg5: memref<1x256xf32, #tpu.memory_space<vmem>>, %arg6: memref<1x256xf32, #tpu.memory_space<vmem>>, %arg7: memref<8x256xf32, #tpu.memory_space<vmem>>, %arg8: memref<8x256xf32, #tpu.memory_space<vmem>>) attributes {dimension_semantics = [#tpu.dimension_semantics<parallel>, #tpu.dimension_semantics<parallel>, #tpu.dimension_semantics<arbitrary>], iteration_bounds = array<i64: 1, 1, 1>, scalar_prefetch = 0 : i64, scratch_operands = 1 : i64, tpu.core_type = #tpu.core_type<tc>, window_params = [{transform_indices = @transform_0, window_bounds = array<i64: 8, 128>}, {transform_indices = @transform_1, window_bounds = array<i64: 128, 256>}, {transform_indices = @transform_2, window_bounds = array<i64: 1, 256>}, {transform_indices = @transform_3, window_bounds = array<i64: 1, 256>}, {transform_indices = @transform_4, window_bounds = array<i64: 8, 256>}]} {
    %c0_i32 = arith.constant 0 : i32
    %0 = arith.cmpi eq, %arg2, %c0_i32 : i32
    %1 = arith.extui %0 : i1 to i32
    %c0_i32_0 = arith.constant 0 : i32
    %2 = arith.cmpi ne, %1, %c0_i32_0 : i32
    scf.if %2 {
      %cst_10 = arith.constant 0.000000e+00 : f32
      %12 = vector.broadcast %cst_10 : f32 to vector<8x256xf32>
      %c0_11 = arith.constant 0 : index
      %c0_12 = arith.constant 0 : index
      %13 = vector.load %arg8[%c0_11, %c0_12] : memref<8x256xf32, #tpu.memory_space<vmem>>, vector<8x256xf32>
      tpu.vector_store %arg8[%c0_11, %c0_12], %12 {strides = array<i32>} : memref<8x256xf32, #tpu.memory_space<vmem>>, vector<8x256xf32>,
    } else {
    }
    %c0 = arith.constant 0 : index
    %c0_1 = arith.constant 0 : index
    %3 = vector.load %arg8[%c0, %c0_1] : memref<8x256xf32, #tpu.memory_space<vmem>>, vector<8x256xf32>
    %c0_2 = arith.constant 0 : index
    %c0_3 = arith.constant 0 : index
    %4 = vector.load %arg3[%c0_2, %c0_3] : memref<8x128xbf16, #tpu.memory_space<vmem>>, vector<8x128xbf16>
    %c0_4 = arith.constant 0 : index
    %c0_5 = arith.constant 0 : index
    %5 = vector.load %arg4[%c0_4, %c0_5] : memref<128x256xbf16, #tpu.memory_space<vmem>>, vector<128x256xbf16>
    %cst = arith.constant dense<0.000000e+00> : vector<8x256xf32>
    %6 = tpu.matmul %4, %5, %cst {dimension_numbers = #tpu.dot_dimension_numbers<[1], [0], [0], [1], [0, 0, 1, 1], [], []>} : vector<8x128xbf16>, vector<128x256xbf16>, vector<8x256xf32> -> vector<8x256xf32>
    %7 = arith.addf %3, %6 : vector<8x256xf32>
    %c0_6 = arith.constant 0 : index
    %c0_7 = arith.constant 0 : index
    %8 = vector.load %arg8[%c0_6, %c0_7] : memref<8x256xf32, #tpu.memory_space<vmem>>, vector<8x256xf32>
    tpu.vector_store %arg8[%c0_6, %c0_7], %7 {strides = array<i32>} : memref<8x256xf32, #tpu.memory_space<vmem>>, vector<8x256xf32>,
    %c0_i32_8 = arith.constant 0 : i32
    %9 = arith.cmpi eq, %arg2, %c0_i32_8 : i32
    %10 = arith.extui %9 : i1 to i32
    %c0_i32_9 = arith.constant 0 : i32
    %11 = arith.cmpi ne, %10, %c0_i32_9 : i32
    scf.if %11 {
      %c0_10 = arith.constant 0 : index
      %c0_11 = arith.constant 0 : index
      %12 = vector.load %arg8[%c0_10, %c0_11] : memref<8x256xf32, #tpu.memory_space<vmem>>, vector<8x256xf32>
      %c0_12 = arith.constant 0 : index
      %c0_13 = arith.constant 0 : index
      %13 = vector.load %arg5[%c0_12, %c0_13] : memref<1x256xf32, #tpu.memory_space<vmem>>, vector<1x256xf32>
      %14 = vector.broadcast %13 : vector<1x256xf32> to vector<8x256xf32>
      %15 = arith.mulf %12, %14 : vector<8x256xf32>
      %c0_14 = arith.constant 0 : index
      %c0_15 = arith.constant 0 : index
      %16 = vector.load %arg6[%c0_14, %c0_15] : memref<1x256xf32, #tpu.memory_space<vmem>>, vector<1x256xf32>
      %17 = vector.broadcast %16 : vector<1x256xf32> to vector<8x256xf32>
      %18 = arith.addf %15, %17 : vector<8x256xf32>
      %c0_16 = arith.constant 0 : index
      %c0_17 = arith.constant 0 : index
      %19 = vector.load %arg7[%c0_16, %c0_17] : memref<8x256xf32, #tpu.memory_space<vmem>>, vector<8x256xf32>
      tpu.vector_store %arg7[%c0_16, %c0_17], %18 {strides = array<i32>} : memref<8x256xf32, #tpu.memory_space<vmem>>, vector<8x256xf32>,
    } else {
    }
    return
  }
  func.func @transform_0(%arg0: i32, %arg1: i32, %arg2: i32) -> (i32, i32) {
    %c0_i32 = arith.constant 0 : i32
    return %arg0, %arg2 : i32, i32
  }
  func.func @transform_1(%arg0: i32, %arg1: i32, %arg2: i32) -> (i32, i32) {
    %c0_i32 = arith.constant 0 : i32
    return %arg2, %arg1 : i32, i32
  }
  func.func @transform_2(%arg0: i32, %arg1: i32, %arg2: i32) -> (i32, i32) {
    %c0_i32 = arith.constant 0 : i32
    %c0_i32_0 = arith.constant 0 : i32
    return %c0_i32, %arg1 : i32, i32
  }
  func.func @transform_3(%arg0: i32, %arg1: i32, %arg2: i32) -> (i32, i32) {
    %c0_i32 = arith.constant 0 : i32
    %c0_i32_0 = arith.constant 0 : i32
    return %c0_i32, %arg1 : i32, i32
  }
  func.func @transform_4(%arg0: i32, %arg1: i32, %arg2: i32) -> (i32, i32) {
    %c0_i32 = arith.constant 0 : i32
    return %arg0, %arg1 : i32, i32
  }
}

</mosaic_0001>

<llo_original>
// kernel: leafnet_forward.17
$region0: #{leafnet_forward.17}
  #allocation0 [shape = 'u32[]', space=smem, size = 0x4, offset = 0x4, fixed_abs, tag = 'smem constant byte address 0x4 - core index']
  #allocation1 [shape = 'u32[144,128]{1,0:T(1,128)}', space=vmem, size = 0x12000, scoped, tag = 'internal scratch']
  %s0 = inlined_call_operand.vmem [shape: bf16[2,36,16,128], index: 0, kind: input, shape index: {}]
  %s1 = inlined_call_operand.vmem [shape: bf16[2,8,8,128], index: 1, kind: output, shape index: {}]
  %s2 = sld [smem:[#allocation0]]
  $region37: #{leafnet_forward.17} parent=0
    _
  %s4 = ssub.s32 1, %s2
  %s5 = scalar_select 0, %s4, %s2
  loop: start=0, step=1, limit=4
  $region2: #{leafnet_forward.17} parent=0 // loop_pre_header
    _
  $region3: #{leafnet_forward.17} parent=0 // loop_header
    %s7 = sphi 0, %s11
    %p8 = scmp.ge.s32.totalorder %s7, 4
    %s17 = sphi 0, %s19
    %s20 = sphi 0, %s17
    %s21 = sphi 0, %s20
    %s37 = sphi 0, %s21
    %s43 = sphi 0, %s45
    %s46 = sphi 0, %s43
    %s47 = sphi 0, %s46
    %s63 = sphi 0, %s47
  $region4: #{leafnet_forward.17} parent=0 // loop_header_branch
    %10 = sbr.rel (%p8) target = $region8
  $region5: #{leafnet_forward.17} parent=0 // loop_body
    %s12 = ssub.s32 %s7, 1
    %s13 = ssub.s32 %s7, 2
    %s14 = sadd.s32 %s7, 1
    %s15 = ssub.s32 %s7, %s14
    %p16 = scmp.eq.s32.totalorder %s15, 0
    %s18 = sadd.s32 %s17, 1
    %s19 = scalar_select %p16, %s17, %s18
    %p22 = pneg %p16
    %p23 = scmp.eq.s32.totalorder %s7, 1
    %p24 = por %p22, %p23
    %p25 = scmp.ne.s32.totalorder %s17, %s20
    %p26 = scmp.eq.s32.totalorder %s7, 0
    %p27 = por %p25, %p26
    %p28 = scmp.ne.s32.totalorder %s17, %s20
    %p29 = scmp.eq.s32.totalorder %s12, 1
    %p30 = por %p28, %p29
    %p31 = scmp.ne.s32.totalorder %s20, %s21
    %p32 = scmp.eq.s32.totalorder %s12, 0
    %p33 = por %p31, %p32
    %p34 = scmp.ne.s32.totalorder %s20, %s21
    %p35 = scmp.eq.s32.totalorder %s13, 1
    %p36 = por %p34, %p35
    %p38 = scmp.ne.s32.totalorder %s21, %s37
    %p39 = scmp.eq.s32.totalorder %s13, 0
    %p40 = por %p38, %p39
    %s41 = ssub.s32 %s7, %s14
    %p42 = scmp.eq.s32.totalorder %s41, 0
    %s44 = sadd.s32 %s43, 1
    %s45 = scalar_select %p42, %s43, %s44
    %p48 = pneg %p42
    %p49 = scmp.eq.s32.totalorder %s7, 1
    %p50 = por %p48, %p49
    %p51 = scmp.ne.s32.totalorder %s43, %s46
    %p52 = scmp.eq.s32.totalorder %s7, 0
    %p53 = por %p51, %p52
    %p54 = scmp.ne.s32.totalorder %s43, %s46
    %p55 = scmp.eq.s32.totalorder %s12, 1
    %p56 = por %p54, %p55
    %p57 = scmp.ne.s32.totalorder %s46, %s47
    %p58 = scmp.eq.s32.totalorder %s12, 0
    %p59 = por %p57, %p58
    %p60 = scmp.ne.s32.totalorder %s46, %s47
    %p61 = scmp.eq.s32.totalorder %s13, 1
    %p62 = por %p60, %p61
    %p64 = scmp.ne.s32.totalorder %s47, %s63
    %p65 = scmp.eq.s32.totalorder %s13, 0
    %p66 = por %p64, %p65
    %p67 = scmp.le.s32.totalorder 1, %s7
    %p68 = scmp.lt.s32.totalorder %s7, 3
    %p69 = pnand %p67, %p68
    %p70 = pneg %p69
    // Predicated region
    $region9: #{leafnet_forward.17} parent=5 // pred_check
      _
    $region10: #{leafnet_forward.17} parent=5 // pred_check_branch
      %72 = sbr.rel (%p69) target = $region12
    $region11: #{leafnet_forward.17} parent=5 // pred_region
      %s73 = ssub.s32 %s7, 1
    $region12: #{leafnet_forward.17} parent=5 // pred_fallthru
      _
    %p74 = scmp.lt.s32.totalorder %s7, 2
    // Predicated region
    $region13: #{leafnet_forward.17} parent=5 // pred_check
      %p75 = pneg %p74
    $region14: #{leafnet_forward.17} parent=5 // pred_check_branch
      %77 = sbr.rel (%p75) target = $region16
    $region15: #{leafnet_forward.17} parent=5 // pred_region
      // Predicated region
      $region17: #{leafnet_forward.17} parent=15 // pred_check
        %p78 = pneg %p27
      $region18: #{leafnet_forward.17} parent=15 // pred_check_branch
        %80 = sbr.rel (%p78) target = $region20
      $region19: #{leafnet_forward.17} parent=15 // pred_region
        %p81 = scmp.lt.s32.totalorder %s7, 1
        %s82 = scalar_select %p81, %s7, 1
        %s83 = smul.addr %s82, 72
        %s84 = smul.addr %s83, 4
        %s85 = scalar_lea.vmem %s0, %s84
      $region20: #{leafnet_forward.17} parent=15 // pred_fallthru
        _
    $region16: #{leafnet_forward.17} parent=5 // pred_fallthru
      _
    %p86 = scmp.le.s32.totalorder 1, %s7
    %p87 = scmp.lt.s32.totalorder %s7, 3
    %p88 = pnand %p86, %p87
    %p89 = pneg %p88
    // Predicated region
    $region21: #{leafnet_forward.17} parent=5 // pred_check
      _
    $region22: #{leafnet_forward.17} parent=5 // pred_check_branch
      %91 = sbr.rel (%p88) target = $region24
    $region23: #{leafnet_forward.17} parent=5 // pred_region
      %s92 = ssub.s32 %s7, 1
      %p93 = scmp.lt.s32.totalorder %s12, 1
      %s94 = scalar_select %p93, %s12, 1
      %s95 = smul.addr %s94, 72
      %s96 = smul.addr %s95, 4
      %s97 = scalar_lea.vmem %s0, %s96
      %p98 = pneg %p33
      %p99 = pneg %p30
      %p100 = pneg %p59
      %p101 = pneg %p56
      %p102 = scmp.lt.s32.totalorder %s12, 1
      %s103 = scalar_select %p102, %s12, 1
      %s104 = smul.addr %s103, 8
      %s105 = smul.addr %s104, 4
      %s106 = scalar_lea.vmem %s1, %s105
      %p107 = scmp.lt.s32.totalorder %s12, 1
      %s108 = scalar_select %p107, %s12, 1
      %s109 = smul.addr %s108, 72
      %s110 = smul.addr %s109, 4
      %s111 = scalar_lea.vmem %s0, %s110
      %p112 = scmp.lt.s32.totalorder %s12, 1
      %s113 = scalar_select %p112, %s12, 1
      %s114 = smul.addr %s113, 8
      %s115 = smul.addr %s114, 4
      %s116 = scalar_lea.vmem %s1, %s115
      %v117 = vld [vmem:[%s111] sm:$0xf]
      %v118 = vld [vmem:[%s111 + $0x8] sm:$0xf]
      %v119 = vld [vmem:[%s111 + $0x10] sm:$0xf]
      %v120 = vld [vmem:[%s111 + $0x18] sm:$0xf]
      %v121 = vld [vmem:[%s111 + $0x20] sm:$0xf]
      %v122 = vld [vmem:[%s111 + $0x28] sm:$0xf]
      %v123 = vld [vmem:[%s111 + $0x30] sm:$0xf]
      %v124 = vld [vmem:[%s111 + $0x38] sm:$0xf]
      %s125 = scalar_lea.vmem %s111, 72
      %v126 = vld [vmem:[%s125] sm:$0xf]
      %v127 = vld [vmem:[%s125 + $0x8] sm:$0xf]
      %v128 = vld [vmem:[%s125 + $0x10] sm:$0xf]
      %v129 = vld [vmem:[%s125 + $0x18] sm:$0xf]
      %v130 = vld [vmem:[%s125 + $0x20] sm:$0xf]
      %v131 = vld [vmem:[%s125 + $0x28] sm:$0xf]
      %v132 = vld [vmem:[%s125 + $0x30] sm:$0xf]
      %v133 = vld [vmem:[%s125 + $0x38] sm:$0xf]
      %v134 = vmax.bf16 %v117, %v126
      %v135 = vmax.bf16 %v118, %v127
      %v136 = vmax.bf16 %v119, %v128
      %v137 = vmax.bf16 %v120, %v129
      %v138 = vmax.bf16 %v121, %v130
      %v139 = vmax.bf16 %v122, %v131
      %v140 = vmax.bf16 %v123, %v132
      %v141 = vmax.bf16 %v124, %v133
      %v142 = vld [vmem:[%s111 + $0x4] sm:$0x1]
      %v143 = vld [vmem:[%s111 + $0xc] sm:$0x1]
      %v144 = vld [vmem:[%s111 + $0x14] sm:$0x1]
      %v145 = vld [vmem:[%s111 + $0x1c] sm:$0x1]
      %v146 = vld [vmem:[%s111 + $0x24] sm:$0x1]
      %v147 = vld [vmem:[%s111 + $0x2c] sm:$0x1]
      %v148 = vld [vmem:[%s111 + $0x34] sm:$0x1]
      %v149 = vld [vmem:[%s111 + $0x3c] sm:$0x1]
      %vm150 = vsmask.f32 3328
      %vm151 = vsmask.f32 7440
      %vm152 = vmor %vm150, %vm151
      %v154 = vshrl.u32 %v117, 16
      %v156 = vrot.slane %v154, 4
      %v157 = vshll.u32 %v117, 16
      %v159 = vrot.slane %v157, 5
      %v160 = vor.u32 %v156, %v159
      %v161 = vrot.slane %v160, 4
      %v163 = vshll.u32 %v142, 16
      %v165 = vrot.slane %v163, 5
      %v166 = vsel %vm152, %v161, %v165
      %v168 = vshrl.u32 %v118, 16
      %v170 = vrot.slane %v168, 4
      %v171 = vshll.u32 %v118, 16
      %v173 = vrot.slane %v171, 5
      %v174 = vor.u32 %v170, %v173
      %v175 = vrot.slane %v174, 4
      %v177 = vshll.u32 %v143, 16
      %v179 = vrot.slane %v177, 5
      %v180 = vsel %vm152, %v175, %v179
      %v182 = vshrl.u32 %v119, 16
      %v184 = vrot.slane %v182, 4
      %v185 = vshll.u32 %v119, 16
      %v187 = vrot.slane %v185, 5
      %v188 = vor.u32 %v184, %v187
      %v189 = vrot.slane %v188, 4
      %v191 = vshll.u32 %v144, 16
      %v193 = vrot.slane %v191, 5
      %v194 = vsel %vm152, %v189, %v193
      %v196 = vshrl.u32 %v120, 16
      %v198 = vrot.slane %v196, 4
      %v199 = vshll.u32 %v120, 16
      %v201 = vrot.slane %v199, 5
      %v202 = vor.u32 %v198, %v201
      %v203 = vrot.slane %v202, 4
      %v205 = vshll.u32 %v145, 16
      %v207 = vrot.slane %v205, 5
      %v208 = vsel %vm152, %v203, %v207
      %v210 = vshrl.u32 %v121, 16
      %v212 = vrot.slane %v210, 4
      %v213 = vshll.u32 %v121, 16
      %v215 = vrot.slane %v213, 5
      %v216 = vor.u32 %v212, %v215
      %v217 = vrot.slane %v216, 4
      %v219 = vshll.u32 %v146, 16
      %v221 = vrot.slane %v219, 5
      %v222 = vsel %vm152, %v217, %v221
      %v224 = vshrl.u32 %v122, 16
      %v226 = vrot.slane %v224, 4
      %v227 = vshll.u32 %v122, 16
      %v229 = vrot.slane %v227, 5
      %v230 = vor.u32 %v226, %v229
      %v231 = vrot.slane %v230, 4
      %v233 = vshll.u32 %v147, 16
      %v235 = vrot.slane %v233, 5
      %v236 = vsel %vm152, %v231, %v235
      %v238 = vshrl.u32 %v123, 16
      %v240 = vrot.slane %v238, 4
      %v241 = vshll.u32 %v123, 16
      %v243 = vrot.slane %v241, 5
      %v244 = vor.u32 %v240, %v243
      %v245 = vrot.slane %v244, 4
      %v247 = vshll.u32 %v148, 16
      %v249 = vrot.slane %v247, 5
      %v250 = vsel %vm152, %v245, %v249
      %v252 = vshrl.u32 %v124, 16
      %v254 = vrot.slane %v252, 4
      %v255 = vshll.u32 %v124, 16
      %v257 = vrot.slane %v255, 5
      %v258 = vor.u32 %v254, %v257
      %v259 = vrot.slane %v258, 4
      %v261 = vshll.u32 %v149, 16
      %v263 = vrot.slane %v261, 5
      %v264 = vsel %vm152, %v259, %v263
      %v273 = vmax.bf16 %v134, %v166
      %v274 = vmax.bf16 %v135, %v180
      %v275 = vmax.bf16 %v136, %v194
      %v276 = vmax.bf16 %v137, %v208
      %v277 = vmax.bf16 %v138, %v222
      %v278 = vmax.bf16 %v139, %v236
      %v279 = vmax.bf16 %v140, %v250
      %v280 = vmax.bf16 %v141, %v264
      %s281 = scalar_lea.vmem %s111, 144
      %v282 = vld [vmem:[%s281] sm:$0xf]
      %v283 = vld [vmem:[%s281 + $0x8] sm:$0xf]
      %v284 = vld [vmem:[%s281 + $0x10] sm:$0xf]
      %v285 = vld [vmem:[%s281 + $0x18] sm:$0xf]
      %v286 = vld [vmem:[%s281 + $0x20] sm:$0xf]
      %v287 = vld [vmem:[%s281 + $0x28] sm:$0xf]
      %v288 = vld [vmem:[%s281 + $0x30] sm:$0xf]
      %v289 = vld [vmem:[%s281 + $0x38] sm:$0xf]
      %v290 = vmax.bf16 %v273, %v282
      %v291 = vmax.bf16 %v274, %v283
      %v292 = vmax.bf16 %v275, %v284
      %v293 = vmax.bf16 %v276, %v285
      %v294 = vmax.bf16 %v277, %v286
      %v295 = vmax.bf16 %v278, %v287
      %v296 = vmax.bf16 %v279, %v288
      %v297 = vmax.bf16 %v280, %v289
      %s298 = scalar_lea.vmem %s111, 216
      %v299 = vld [vmem:[%s298] sm:$0xf]
      %v300 = vld [vmem:[%s298 + $0x8] sm:$0xf]
      %v301 = vld [vmem:[%s298 + $0x10] sm:$0xf]
      %v302 = vld [vmem:[%s298 + $0x18] sm:$0xf]
      %v303 = vld [vmem:[%s298 + $0x20] sm:$0xf]
      %v304 = vld [vmem:[%s298 + $0x28] sm:$0xf]
      %v305 = vld [vmem:[%s298 + $0x30] sm:$0xf]
      %v306 = vld [vmem:[%s298 + $0x38] sm:$0xf]
      %v307 = vmax.bf16 %v290, %v299
      %v308 = vmax.bf16 %v291, %v300
      %v309 = vmax.bf16 %v292, %v301
      %v310 = vmax.bf16 %v293, %v302
      %v311 = vmax.bf16 %v294, %v303
      %v312 = vmax.bf16 %v295, %v304
      %v313 = vmax.bf16 %v296, %v305
      %v314 = vmax.bf16 %v297, %v306
      %v315 = vld [vmem:[%s281 + $0x4] sm:$0x1]
      %v316 = vld [vmem:[%s281 + $0xc] sm:$0x1]
      %v317 = vld [vmem:[%s281 + $0x14] sm:$0x1]
      %v318 = vld [vmem:[%s281 + $0x1c] sm:$0x1]
      %v319 = vld [vmem:[%s281 + $0x24] sm:$0x1]
      %v320 = vld [vmem:[%s281 + $0x2c] sm:$0x1]
      %v321 = vld [vmem:[%s281 + $0x34] sm:$0x1]
      %v322 = vld [vmem:[%s281 + $0x3c] sm:$0x1]
      %v324 = vshrl.u32 %v282, 16
      %v326 = vrot.slane %v324, 4
      %v327 = vshll.u32 %v282, 16
      %v329 = vrot.slane %v327, 5
      %v330 = vor.u32 %v326, %v329
      %v331 = vrot.slane %v330, 4
      %v333 = vshll.u32 %v315, 16
      %v335 = vrot.slane %v333, 5
      %v336 = vsel %vm152, %v331, %v335
      %v338 = vshrl.u32 %v283, 16
      %v340 = vrot.slane %v338, 4
      %v341 = vshll.u32 %v283, 16
      %v343 = vrot.slane %v341, 5
      %v344 = vor.u32 %v340, %v343
      %v345 = vrot.slane %v344, 4
      %v347 = vshll.u32 %v316, 16
      %v349 = vrot.slane %v347, 5
      %v350 = vsel %vm152, %v345, %v349
      %v352 = vshrl.u32 %v284, 16
      %v354 = vrot.slane %v352, 4
      %v355 = vshll.u32 %v284, 16
      %v357 = vrot.slane %v355, 5
      %v358 = vor.u32 %v354, %v357
      %v359 = vrot.slane %v358, 4
      %v361 = vshll.u32 %v317, 16
      %v363 = vrot.slane %v361, 5
      %v364 = vsel %vm152, %v359, %v363
      %v366 = vshrl.u32 %v285, 16
      %v368 = vrot.slane %v366, 4
      %v369 = vshll.u32 %v285, 16
      %v371 = vrot.slane %v369, 5
      %v372 = vor.u32 %v368, %v371
      %v373 = vrot.slane %v372, 4
      %v375 = vshll.u32 %v318, 16
      %v377 = vrot.slane %v375, 5
      %v378 = vsel %vm152, %v373, %v377
      %v380 = vshrl.u32 %v286, 16
      %v382 = vrot.slane %v380, 4
      %v383 = vshll.u32 %v286, 16
      %v385 = vrot.slane %v383, 5
      %v386 = vor.u32 %v382, %v385
      %v387 = vrot.slane %v386, 4
      %v389 = vshll.u32 %v319, 16
      %v391 = vrot.slane %v389, 5
      %v392 = vsel %vm152, %v387, %v391
      %v394 = vshrl.u32 %v287, 16
      %v396 = vrot.slane %v394, 4
      %v397 = vshll.u32 %v287, 16
      %v399 = vrot.slane %v397, 5
      %v400 = vor.u32 %v396, %v399
      %v401 = vrot.slane %v400, 4
      %v403 = vshll.u32 %v320, 16
      %v405 = vrot.slane %v403, 5
      %v406 = vsel %vm152, %v401, %v405
      %v408 = vshrl.u32 %v288, 16
      %v410 = vrot.slane %v408, 4
      %v411 = vshll.u32 %v288, 16
      %v413 = vrot.slane %v411, 5
      %v414 = vor.u32 %v410, %v413
      %v415 = vrot.slane %v414, 4
      %v417 = vshll.u32 %v321, 16
      %v419 = vrot.slane %v417, 5
      %v420 = vsel %vm152, %v415, %v419
      %v422 = vshrl.u32 %v289, 16
      %v424 = vrot.slane %v422, 4
      %v425 = vshll.u32 %v289, 16
      %v427 = vrot.slane %v425, 5
      %v428 = vor.u32 %v424, %v427
      %v429 = vrot.slane %v428, 4
      %v431 = vshll.u32 %v322, 16
      %v433 = vrot.slane %v431, 5
      %v434 = vsel %vm152, %v429, %v433
      %v443 = vmax.bf16 %v307, %v336
      %v444 = vmax.bf16 %v308, %v350
      %v445 = vmax.bf16 %v309, %v364
      %v446 = vmax.bf16 %v310, %v378
      %v447 = vmax.bf16 %v311, %v392
      %v448 = vmax.bf16 %v312, %v406
      %v449 = vmax.bf16 %v313, %v420
      %v450 = vmax.bf16 %v314, %v434
      %s451 = scalar_lea.vmem %s111, 8
      %v452 = vld [vmem:[%s451] sm:$0xf]
      %v453 = vld [vmem:[%s451 + $0x8] sm:$0xf]
      %v454 = vld [vmem:[%s451 + $0x10] sm:$0xf]
      %v455 = vld [vmem:[%s451 + $0x18] sm:$0xf]
      %v456 = vld [vmem:[%s451 + $0x20] sm:$0xf]
      %v457 = vld [vmem:[%s451 + $0x28] sm:$0xf]
      %v458 = vld [vmem:[%s451 + $0x30] sm:$0xf]
      %v459 = vld [vmem:[%s451 + $0x38] sm:$0xf]
      %v460 = vmax.bf16 %v443, %v452
      %v461 = vmax.bf16 %v444, %v453
      %v462 = vmax.bf16 %v445, %v454
      %v463 = vmax.bf16 %v446, %v455
      %v464 = vmax.bf16 %v447, %v456
      %v465 = vmax.bf16 %v448, %v457
      %v466 = vmax.bf16 %v449, %v458
      %v467 = vmax.bf16 %v450, %v459
      %s468 = scalar_lea.vmem %s111, 80
      %v469 = vld [vmem:[%s468] sm:$0xf]
      %v470 = vld [vmem:[%s468 + $0x8] sm:$0xf]
      %v471 = vld [vmem:[%s468 + $0x10] sm:$0xf]
      %v472 = vld [vmem:[%s468 + $0x18] sm:$0xf]
      %v473 = vld [vmem:[%s468 + $0x20] sm:$0xf]
      %v474 = vld [vmem:[%s468 + $0x28] sm:$0xf]
      %v475 = vld [vmem:[%s468 + $0x30] sm:$0xf]
      %v476 = vld [vmem:[%s468 + $0x38] sm:$0xf]
      %v477 = vmax.bf16 %v460, %v469
      %v478 = vmax.bf16 %v461, %v470
      %v479 = vmax.bf16 %v462, %v471
      %v480 = vmax.bf16 %v463, %v472
      %v481 = vmax.bf16 %v464, %v473
      %v482 = vmax.bf16 %v465, %v474
      %v483 = vmax.bf16 %v466, %v475
      %v484 = vmax.bf16 %v467, %v476
      %v485 = vld [vmem:[%s451 + $0x4] sm:$0x1]
      %v486 = vld [vmem:[%s451 + $0xc] sm:$0x1]
      %v487 = vld [vmem:[%s451 + $0x14] sm:$0x1]
      %v488 = vld [vmem:[%s451 + $0x1c] sm:$0x1]
      %v489 = vld [vmem:[%s451 + $0x24] sm:$0x1]
      %v490 = vld [vmem:[%s451 + $0x2c] sm:$0x1]
      %v491 = vld [vmem:[%s451 + $0x34] sm:$0x1]
      %v492 = vld [vmem:[%s451 + $0x3c] sm:$0x1]
      %v494 = vshrl.u32 %v452, 16
      %v496 = vrot.slane %v494, 4
      %v497 = vshll.u32 %v452, 16
      %v499 = vrot.slane %v497, 5
      %v500 = vor.u32 %v496, %v499
      %v501 = vrot.slane %v500, 4
      %v503 = vshll.u32 %v485, 16
      %v505 = vrot.slane %v503, 5
      %v506 = vsel %vm152, %v501, %v505
      %v508 = vshrl.u32 %v453, 16
      %v510 = vrot.slane %v508, 4
      %v511 = vshll.u32 %v453, 16
      %v513 = vrot.slane %v511, 5
      %v514 = vor.u32 %v510, %v513
      %v515 = vrot.slane %v514, 4
      %v517 = vshll.u32 %v486, 16
      %v519 = vrot.slane %v517, 5
      %v520 = vsel %vm152, %v515, %v519
      %v522 = vshrl.u32 %v454, 16
      %v524 = vrot.slane %v522, 4
      %v525 = vshll.u32 %v454, 16
      %v527 = vrot.slane %v525, 5
      %v528 = vor.u32 %v524, %v527
      %v529 = vrot.slane %v528, 4
      %v531 = vshll.u32 %v487, 16
      %v533 = vrot.slane %v531, 5
      %v534 = vsel %vm152, %v529, %v533
      %v536 = vshrl.u32 %v455, 16
      %v538 = vrot.slane %v536, 4
      %v539 = vshll.u32 %v455, 16
      %v541 = vrot.slane %v539, 5
      %v542 = vor.u32 %v538, %v541
      %v543 = vrot.slane %v542, 4
      %v545 = vshll.u32 %v488, 16
      %v547 = vrot.slane %v545, 5
      %v548 = vsel %vm152, %v543, %v547
      %v550 = vshrl.u32 %v456, 16
      %v552 = vrot.slane %v550, 4
      %v553 = vshll.u32 %v456, 16
      %v555 = vrot.slane %v553, 5
      %v556 = vor.u32 %v552, %v555
      %v557 = vrot.slane %v556, 4
      %v559 = vshll.u32 %v489, 16
      %v561 = vrot.slane %v559, 5
      %v562 = vsel %vm152, %v557, %v561
      %v564 = vshrl.u32 %v457, 16
      %v566 = vrot.slane %v564, 4
      %v567 = vshll.u32 %v457, 16
      %v569 = vrot.slane %v567, 5
      %v570 = vor.u32 %v566, %v569
      %v571 = vrot.slane %v570, 4
      %v573 = vshll.u32 %v490, 16
      %v575 = vrot.slane %v573, 5
      %v576 = vsel %vm152, %v571, %v575
      %v578 = vshrl.u32 %v458, 16
      %v580 = vrot.slane %v578, 4
      %v581 = vshll.u32 %v458, 16
      %v583 = vrot.slane %v581, 5
      %v584 = vor.u32 %v580, %v583
      %v585 = vrot.slane %v584, 4
      %v587 = vshll.u32 %v491, 16
      %v589 = vrot.slane %v587, 5
      %v590 = vsel %vm152, %v585, %v589
      %v592 = vshrl.u32 %v459, 16
      %v594 = vrot.slane %v592, 4
      %v595 = vshll.u32 %v459, 16
      %v597 = vrot.slane %v595, 5
      %v598 = vor.u32 %v594, %v597
      %v599 = vrot.slane %v598, 4
      %v601 = vshll.u32 %v492, 16
      %v603 = vrot.slane %v601, 5
      %v604 = vsel %vm152, %v599, %v603
      %v613 = vmax.bf16 %v477, %v506
      %v614 = vmax.bf16 %v478, %v520
      %v615 = vmax.bf16 %v479, %v534
      %v616 = vmax.bf16 %v480, %v548
      %v617 = vmax.bf16 %v481, %v562
      %v618 = vmax.bf16 %v482, %v576
      %v619 = vmax.bf16 %v483, %v590
      %v620 = vmax.bf16 %v484, %v604
      %621 = vst [vmem:[%s116] sm:$0xf] %v613
      %622 = vst [vmem:[%s116 + $0x4] sm:$0xf] %v614
      %623 = vst [vmem:[%s116 + $0x8] sm:$0xf] %v615
      %624 = vst [vmem:[%s116 + $0xc] sm:$0xf] %v616
      %625 = vst [vmem:[%s116 + $0x10] sm:$0xf] %v617
      %626 = vst [vmem:[%s116 + $0x14] sm:$0xf] %v618
      %627 = vst [vmem:[%s116 + $0x18] sm:$0xf] %v619
      %628 = vst [vmem:[%s116 + $0x1c] sm:$0xf] %v620
      %p629 = scmp.lt.s32.totalorder %s12, 1
      %s630 = scalar_select %p629, %s12, 1
      %s631 = smul.addr %s630, 8
      %s632 = smul.addr %s631, 4
      %s633 = scalar_lea.vmem %s1, %s632
      // Predicated region
      $region25: #{leafnet_forward.17} parent=23 // pred_check
        %p634 = pneg %p56
      $region26: #{leafnet_forward.17} parent=23 // pred_check_branch
        %636 = sbr.rel (%p634) target = $region28
      $region27: #{leafnet_forward.17} parent=23 // pred_region
        _
      $region28: #{leafnet_forward.17} parent=23 // pred_fallthru
        _
    $region24: #{leafnet_forward.17} parent=5 // pred_fallthru
      _
    %p637 = scmp.le.s32.totalorder 2, %s7
    // Predicated region
    $region29: #{leafnet_forward.17} parent=5 // pred_check
      %p638 = pneg %p637
    $region30: #{leafnet_forward.17} parent=5 // pred_check_branch
      %640 = sbr.rel (%p638) target = $region32
    $region31: #{leafnet_forward.17} parent=5 // pred_region
      %s641 = ssub.s32 %s7, 2
      // Predicated region
      $region33: #{leafnet_forward.17} parent=31 // pred_check
        %p642 = pneg %p62
      $region34: #{leafnet_forward.17} parent=31 // pred_check_branch
        %644 = sbr.rel (%p642) target = $region36
      $region35: #{leafnet_forward.17} parent=31 // pred_region
        %p645 = scmp.lt.s32.totalorder %s13, 1
        %s646 = scalar_select %p645, %s13, 1
        %s647 = smul.addr %s646, 8
        %s648 = smul.addr %s647, 4
        %s649 = scalar_lea.vmem %s1, %s648
      $region36: #{leafnet_forward.17} parent=31 // pred_fallthru
        _
    $region32: #{leafnet_forward.17} parent=5 // pred_fallthru
      _
  $region6: #{leafnet_forward.17} parent=0 // loop_footer
    %s11 = sadd.s32 1, %s7
  $region7: #{leafnet_forward.17} parent=0 // loop_footer_branch
    %6 = sbr.rel target = $region3
  $region8: #{leafnet_forward.17} parent=0 // loop_exit
    _

// kernel: leafnet_forward.18
$region0: #{leafnet_forward.18}
  #allocation0 [shape = 'u32[]', space=smem, size = 0x4, offset = 0x4, fixed_abs, tag = 'smem constant byte address 0x4 - core index']
  #allocation1 [shape = 'u32[144,128]{1,0:T(1,128)}', space=vmem, size = 0x12000, scoped, tag = 'internal scratch']
  #allocation2 [shape = 'f32[128,128]{1,0:T(8,128)}', space=vmem, size = 0x10000, scoped, tag = 'scratch operand']
  %s0 = inlined_call_operand.vmem [shape: bf16[128,128], index: 0, kind: input, shape index: {}]
  %s1 = inlined_call_operand.vmem [shape: bf16[128,128], index: 1, kind: input, shape index: {}]
  %s2 = inlined_call_operand.vmem [shape: f32[1,128], index: 2, kind: input, shape index: {}]
  %s3 = inlined_call_operand.vmem [shape: f32[1,128], index: 3, kind: input, shape index: {}]
  %s4 = inlined_call_operand.vmem [shape: bf16[128,128], index: 4, kind: output, shape index: {}]
  %s5 = sld [smem:[#allocation0]]
  $region34: #{leafnet_forward.18} parent=0
    _
  %s7 = ssub.s32 1, %s5
  %s8 = scalar_select 0, %s7, %s5
  // Predicated region
  $region2: #{leafnet_forward.18} parent=0 // pred_check
    _
  $region3: #{leafnet_forward.18} parent=0 // pred_check_branch
    %10 = sbr.rel (0) target = $region5
  $region4: #{leafnet_forward.18} parent=0 // pred_region
    _
  $region5: #{leafnet_forward.18} parent=0 // pred_fallthru
    _
  // Predicated region
  $region6: #{leafnet_forward.18} parent=0 // pred_check
    _
  $region7: #{leafnet_forward.18} parent=0 // pred_check_branch
    %12 = sbr.rel (0) target = $region9
  $region8: #{leafnet_forward.18} parent=0 // pred_region
    _
  $region9: #{leafnet_forward.18} parent=0 // pred_fallthru
    _
  // Predicated region
  $region10: #{leafnet_forward.18} parent=0 // pred_check
    _
  $region11: #{leafnet_forward.18} parent=0 // pred_check_branch
    %14 = sbr.rel (0) target = $region13
  $region12: #{leafnet_forward.18} parent=0 // pred_region
    _
  $region13: #{leafnet_forward.18} parent=0 // pred_fallthru
    _
  // Predicated region
  $region14: #{leafnet_forward.18} parent=0 // pred_check
    _
  $region15: #{leafnet_forward.18} parent=0 // pred_check_branch
    %16 = sbr.rel (0) target = $region17
  $region16: #{leafnet_forward.18} parent=0 // pred_region
    _
  $region17: #{leafnet_forward.18} parent=0 // pred_fallthru
    _
  %p18 = scmp.eq.s32.totalorder 0, 0
  // Predicated region
  $region18: #{leafnet_forward.18} parent=0 // pred_check
    %p19 = pneg %p18
  $region19: #{leafnet_forward.18} parent=0 // pred_check_branch
    %21 = sbr.rel (%p19) target = $region21
  $region20: #{leafnet_forward.18} parent=0 // pred_region
    %22 = vst [vmem:[#allocation2] sm:$0xff] 0.0
    %23 = vst [vmem:[#allocation2 + $0x8] sm:$0xff] 0.0
    %24 = vst [vmem:[#allocation2 + $0x10] sm:$0xff] 0.0
    %25 = vst [vmem:[#allocation2 + $0x18] sm:$0xff] 0.0
    %26 = vst [vmem:[#allocation2 + $0x20] sm:$0xff] 0.0
    %27 = vst [vmem:[#allocation2 + $0x28] sm:$0xff] 0.0
    %28 = vst [vmem:[#allocation2 + $0x30] sm:$0xff] 0.0
    %29 = vst [vmem:[#allocation2 + $0x38] sm:$0xff] 0.0
    %30 = vst [vmem:[#allocation2 + $0x40] sm:$0xff] 0.0
    %31 = vst [vmem:[#allocation2 + $0x48] sm:$0xff] 0.0
    %32 = vst [vmem:[#allocation2 + $0x50] sm:$0xff] 0.0
    %33 = vst [vmem:[#allocation2 + $0x58] sm:$0xff] 0.0
    %34 = vst [vmem:[#allocation2 + $0x60] sm:$0xff] 0.0
    %35 = vst [vmem:[#allocation2 + $0x68] sm:$0xff] 0.0
    %36 = vst [vmem:[#allocation2 + $0x70] sm:$0xff] 0.0
    %37 = vst [vmem:[#allocation2 + $0x78] sm:$0xff] 0.0
  $region21: #{leafnet_forward.18} parent=0 // pred_fallthru
    _
  %v38 = vld [vmem:[#allocation2] sm:$0xff]
  %v39 = vld [vmem:[#allocation2 + $0x8] sm:$0xff]
  %v40 = vld [vmem:[#allocation2 + $0x10] sm:$0xff]
  %v41 = vld [vmem:[#allocation2 + $0x18] sm:$0xff]
  %v42 = vld [vmem:[#allocation2 + $0x20] sm:$0xff]
  %v43 = vld [vmem:[#allocation2 + $0x28] sm:$0xff]
  %v44 = vld [vmem:[#allocation2 + $0x30] sm:$0xff]
  %v45 = vld [vmem:[#allocation2 + $0x38] sm:$0xff]
  %v46 = vld [vmem:[#allocation2 + $0x40] sm:$0xff]
  %v47 = vld [vmem:[#allocation2 + $0x48] sm:$0xff]
  %v48 = vld [vmem:[#allocation2 + $0x50] sm:$0xff]
  %v49 = vld [vmem:[#allocation2 + $0x58] sm:$0xff]
  %v50 = vld [vmem:[#allocation2 + $0x60] sm:$0xff]
  %v51 = vld [vmem:[#allocation2 + $0x68] sm:$0xff]
  %v52 = vld [vmem:[#allocation2 + $0x70] sm:$0xff]
  %v53 = vld [vmem:[#allocation2 + $0x78] sm:$0xff]
  %v54 = vld [vmem:[%s0] sm:$0xf]
  %v55 = vld [vmem:[%s0 + $0x4] sm:$0xf]
  %v56 = vld [vmem:[%s0 + $0x8] sm:$0xf]
  %v57 = vld [vmem:[%s0 + $0xc] sm:$0xf]
  %v58 = vld [vmem:[%s0 + $0x10] sm:$0xf]
  %v59 = vld [vmem:[%s0 + $0x14] sm:$0xf]
  %v60 = vld [vmem:[%s0 + $0x18] sm:$0xf]
  %v61 = vld [vmem:[%s0 + $0x1c] sm:$0xf]
  %v62 = vld [vmem:[%s0 + $0x20] sm:$0xf]
  %v63 = vld [vmem:[%s0 + $0x24] sm:$0xf]
  %v64 = vld [vmem:[%s0 + $0x28] sm:$0xf]
  %v65 = vld [vmem:[%s0 + $0x2c] sm:$0xf]
  %v66 = vld [vmem:[%s0 + $0x30] sm:$0xf]
  %v67 = vld [vmem:[%s0 + $0x34] sm:$0xf]
  %v68 = vld [vmem:[%s0 + $0x38] sm:$0xf]
  %v69 = vld [vmem:[%s0 + $0x3c] sm:$0xf]
  %v70 = vld [vmem:[%s1] sm:$0xf]
  %v71 = vld [vmem:[%s1 + $0x4] sm:$0xf]
  %v72 = vld [vmem:[%s1 + $0x8] sm:$0xf]
  %v73 = vld [vmem:[%s1 + $0xc] sm:$0xf]
  %v74 = vld [vmem:[%s1 + $0x10] sm:$0xf]
  %v75 = vld [vmem:[%s1 + $0x14] sm:$0xf]
  %v76 = vld [vmem:[%s1 + $0x18] sm:$0xf]
  %v77 = vld [vmem:[%s1 + $0x1c] sm:$0xf]
  %v78 = vld [vmem:[%s1 + $0x20] sm:$0xf]
  %v79 = vld [vmem:[%s1 + $0x24] sm:$0xf]
  %v80 = vld [vmem:[%s1 + $0x28] sm:$0xf]
  %v81 = vld [vmem:[%s1 + $0x2c] sm:$0xf]
  %v82 = vld [vmem:[%s1 + $0x30] sm:$0xf]
  %v83 = vld [vmem:[%s1 + $0x34] sm:$0xf]
  %v84 = vld [vmem:[%s1 + $0x38] sm:$0xf]
  %v85 = vld [vmem:[%s1 + $0x3c] sm:$0xf]
  %v102 = vunpack.c.l.b16 %v54
  %v103 = vunpack.c.l.b16 %v55
  %v104 = vunpack.c.l.b16 %v56
  %v105 = vunpack.c.l.b16 %v57
  %v106 = vunpack.c.l.b16 %v58
  %v107 = vunpack.c.l.b16 %v59
  %v108 = vunpack.c.l.b16 %v60
  %v109 = vunpack.c.l.b16 %v61
  %v110 = vunpack.c.l.b16 %v62
  %v111 = vunpack.c.l.b16 %v63
  %v112 = vunpack.c.l.b16 %v64
  %v113 = vunpack.c.l.b16 %v65
  %v114 = vunpack.c.l.b16 %v66
  %v115 = vunpack.c.l.b16 %v67
  %v116 = vunpack.c.l.b16 %v68
  %v117 = vunpack.c.l.b16 %v69
  %v118 = vpack.c.b16 %v103, %v102
  %v119 = vpack.c.b16 %v105, %v104
  %v120 = vpack.c.b16 %v107, %v106
  %v121 = vpack.c.b16 %v109, %v108
  %v122 = vpack.c.b16 %v111, %v110
  %v123 = vpack.c.b16 %v113, %v112
  %v124 = vpack.c.b16 %v115, %v114
  %v125 = vpack.c.b16 %v117, %v116
  %v150 = vunpack.c.l.b16 %v70
  %v151 = vunpack.c.l.b16 %v71
  %v152 = vunpack.c.l.b16 %v72
  %v153 = vunpack.c.l.b16 %v73
  %v154 = vunpack.c.l.b16 %v74
  %v155 = vunpack.c.l.b16 %v75
  %v156 = vunpack.c.l.b16 %v76
  %v157 = vunpack.c.l.b16 %v77
  %v158 = vunpack.c.l.b16 %v78
  %v159 = vunpack.c.l.b16 %v79
  %v160 = vunpack.c.l.b16 %v80
  %v161 = vunpack.c.l.b16 %v81
  %v162 = vunpack.c.l.b16 %v82
  %v163 = vunpack.c.l.b16 %v83
  %v164 = vunpack.c.l.b16 %v84
  %v165 = vunpack.c.l.b16 %v85
  %v166 = vpack.c.b16 %v151, %v150
  %v167 = vpack.c.b16 %v153, %v152
  %v168 = vpack.c.b16 %v155, %v154
  %v169 = vpack.c.b16 %v157, %v156
  %v170 = vpack.c.b16 %v159, %v158
  %v171 = vpack.c.b16 %v161, %v160
  %v172 = vpack.c.b16 %v163, %v162
  %v173 = vpack.c.b16 %v165, %v164
  %182 = vmatprep.subr.bf16.mxu0 0
  %183 = vmatpush1.bf16.msra.mxu0 %v173
  %184 = vmatprep.subr.bf16.mxu0 0
  %185 = vmatpush1.bf16.msra.mxu0 %v172
  %186 = vmatprep.subr.bf16.mxu0 0
  %187 = vmatpush1.bf16.msra.mxu0 %v171
  %188 = vmatprep.subr.bf16.mxu0 0
  %189 = vmatpush1.bf16.msra.mxu0 %v170
  %190 = vmatprep.subr.bf16.mxu0 0
  %191 = vmatpush1.bf16.msra.mxu0 %v169
  %192 = vmatprep.subr.bf16.mxu0 0
  %193 = vmatpush1.bf16.msra.mxu0 %v168
  %194 = vmatprep.subr.bf16.mxu0 0
  %195 = vmatpush1.bf16.msra.mxu0 %v167
  %196 = vmatprep.subr.bf16.mxu0 0
  %197 = vmatpush1.bf16.msra.mxu0 %v166
  %198 = vmatprep.subr.bf16.mxu0 0
  %199 = vmatpush2.bf16.msra.mxu0 0
  %200 = vmatprep.subr.bf16.mxu0 0
  %201 = vmatpush2.bf16.msra.mxu0 0
  %202 = vmatprep.subr.bf16.mxu0 0
  %203 = vmatpush2.bf16.msra.mxu0 0
  %204 = vmatprep.subr.bf16.mxu0 0
  %205 = vmatpush2.bf16.msra.mxu0 0
  %206 = vmatprep.subr.bf16.mxu0 0
  %207 = vmatpush2.bf16.msra.mxu0 0
  %208 = vmatprep.subr.bf16.mxu0 0
  %209 = vmatpush2.bf16.msra.mxu0 0
  %210 = vmatprep.subr.bf16.mxu0 0
  %211 = vmatpush2.bf16.msra.mxu0 0
  %212 = vmatprep.subr.bf16.mxu0 0
  %213 = vmatpush2.bf16.msra.mxu0 0
  %214 = vmatprep.mubr.bf16.mxu0 0
  %215 = vmatmul.mubr.bf16.gmra.mxu0 %v118
  %v216 = vpop.f32.mrf.mxu0
  %v217 = vadd.f32 0.0, %v216
  %v218 = vpop.f32.mrf.mxu0
  %v219 = vpop.f32.mrf.mxu0
  %v220 = vadd.f32 0.0, %v219
  %v221 = vpop.f32.mrf.mxu0
  %222 = vmatprep.mubr.bf16.mxu0 0
  %223 = vmatmul.mubr.bf16.gmra.mxu0 %v119
  %v224 = vpop.f32.mrf.mxu0
  %v225 = vadd.f32 0.0, %v224
  %v226 = vpop.f32.mrf.mxu0
  %v227 = vpop.f32.mrf.mxu0
  %v228 = vadd.f32 0.0, %v227
  %v229 = vpop.f32.mrf.mxu0
  %230 = vmatprep.mubr.bf16.mxu0 0
  %231 = vmatmul.mubr.bf16.gmra.mxu0 %v120
  %v232 = vpop.f32.mrf.mxu0
  %v233 = vadd.f32 0.0, %v232
  %v234 = vpop.f32.mrf.mxu0
  %v235 = vpop.f32.mrf.mxu0
  %v236 = vadd.f32 0.0, %v235
  %v237 = vpop.f32.mrf.mxu0
  %238 = vmatprep.mubr.bf16.mxu0 0
  %239 = vmatmul.mubr.bf16.gmra.mxu0 %v121
  %v240 = vpop.f32.mrf.mxu0
  %v241 = vadd.f32 0.0, %v240
  %v242 = vpop.f32.mrf.mxu0
  %v243 = vpop.f32.mrf.mxu0
  %v244 = vadd.f32 0.0, %v243
  %v245 = vpop.f32.mrf.mxu0
  %246 = vmatprep.mubr.bf16.mxu0 0
  %247 = vmatmul.mubr.bf16.gmra.mxu0 %v122
  %v248 = vpop.f32.mrf.mxu0
  %v249 = vadd.f32 0.0, %v248
  %v250 = vpop.f32.mrf.mxu0
  %v251 = vpop.f32.mrf.mxu0
  %v252 = vadd.f32 0.0, %v251
  %v253 = vpop.f32.mrf.mxu0
  %254 = vmatprep.mubr.bf16.mxu0 0
  %255 = vmatmul.mubr.bf16.gmra.mxu0 %v123
  %v256 = vpop.f32.mrf.mxu0
  %v257 = vadd.f32 0.0, %v256
  %v258 = vpop.f32.mrf.mxu0
  %v259 = vpop.f32.mrf.mxu0
  %v260 = vadd.f32 0.0, %v259
  %v261 = vpop.f32.mrf.mxu0
  %262 = vmatprep.mubr.bf16.mxu0 0
  %263 = vmatmul.mubr.bf16.gmra.mxu0 %v124
  %v264 = vpop.f32.mrf.mxu0
  %v265 = vadd.f32 0.0, %v264
  %v266 = vpop.f32.mrf.mxu0
  %v267 = vpop.f32.mrf.mxu0
  %v268 = vadd.f32 0.0, %v267
  %v269 = vpop.f32.mrf.mxu0
  %270 = vmatprep.mubr.bf16.mxu0 0
  %271 = vmatmul.mubr.bf16.gmra.mxu0 %v125
  %v272 = vpop.f32.mrf.mxu0
  %v273 = vadd.f32 0.0, %v272
  %v274 = vpop.f32.mrf.mxu0
  %v275 = vpop.f32.mrf.mxu0
  %v276 = vadd.f32 0.0, %v275
  %v277 = vpop.f32.mrf.mxu0
  %278 = vdwg.mxu0
  %v279 = vadd.f32 %v38, %v217
  %v280 = vadd.f32 %v39, %v220
  %v281 = vadd.f32 %v40, %v225
  %v282 = vadd.f32 %v41, %v228
  %v283 = vadd.f32 %v42, %v233
  %v284 = vadd.f32 %v43, %v236
  %v285 = vadd.f32 %v44, %v241
  %v286 = vadd.f32 %v45, %v244
  %v287 = vadd.f32 %v46, %v249
  %v288 = vadd.f32 %v47, %v252
  %v289 = vadd.f32 %v48, %v257
  %v290 = vadd.f32 %v49, %v260
  %v291 = vadd.f32 %v50, %v265
  %v292 = vadd.f32 %v51, %v268
  %v293 = vadd.f32 %v52, %v273
  %v294 = vadd.f32 %v53, %v276
  %295 = vst [vmem:[#allocation2] sm:$0xff] %v279
  %296 = vst [vmem:[#allocation2 + $0x8] sm:$0xff] %v280
  %297 = vst [vmem:[#allocation2 + $0x10] sm:$0xff] %v281
  %298 = vst [vmem:[#allocation2 + $0x18] sm:$0xff] %v282
  %299 = vst [vmem:[#allocation2 + $0x20] sm:$0xff] %v283
  %300 = vst [vmem:[#allocation2 + $0x28] sm:$0xff] %v284
  %301 = vst [vmem:[#allocation2 + $0x30] sm:$0xff] %v285
  %302 = vst [vmem:[#allocation2 + $0x38] sm:$0xff] %v286
  %303 = vst [vmem:[#allocation2 + $0x40] sm:$0xff] %v287
  %304 = vst [vmem:[#allocation2 + $0x48] sm:$0xff] %v288
  %305 = vst [vmem:[#allocation2 + $0x50] sm:$0xff] %v289
  %306 = vst [vmem:[#allocation2 + $0x58] sm:$0xff] %v290
  %307 = vst [vmem:[#allocation2 + $0x60] sm:$0xff] %v291
  %308 = vst [vmem:[#allocation2 + $0x68] sm:$0xff] %v292
  %309 = vst [vmem:[#allocation2 + $0x70] sm:$0xff] %v293
  %310 = vst [vmem:[#allocation2 + $0x78] sm:$0xff] %v294
  // Predicated region
  $region22: #{leafnet_forward.18} parent=0 // pred_check
    %p311 = pneg %p18
  $region23: #{leafnet_forward.18} parent=0 // pred_check_branch
    %313 = sbr.rel (%p311) target = $region25
  $region24: #{leafnet_forward.18} parent=0 // pred_region
    %v314 = vld [vmem:[#allocation2] sm:$0xff]
    %v315 = vld [vmem:[#allocation2 + $0x8] sm:$0xff]
    %v316 = vld [vmem:[#allocation2 + $0x10] sm:$0xff]
    %v317 = vld [vmem:[#allocation2 + $0x18] sm:$0xff]
    %v318 = vld [vmem:[#allocation2 + $0x20] sm:$0xff]
    %v319 = vld [vmem:[#allocation2 + $0x28] sm:$0xff]
    %v320 = vld [vmem:[#allocation2 + $0x30] sm:$0xff]
    %v321 = vld [vmem:[#allocation2 + $0x38] sm:$0xff]
    %v322 = vld [vmem:[#allocation2 + $0x40] sm:$0xff]
    %v323 = vld [vmem:[#allocation2 + $0x48] sm:$0xff]
    %v324 = vld [vmem:[#allocation2 + $0x50] sm:$0xff]
    %v325 = vld [vmem:[#allocation2 + $0x58] sm:$0xff]
    %v326 = vld [vmem:[#allocation2 + $0x60] sm:$0xff]
    %v327 = vld [vmem:[#allocation2 + $0x68] sm:$0xff]
    %v328 = vld [vmem:[#allocation2 + $0x70] sm:$0xff]
    %v329 = vld [vmem:[#allocation2 + $0x78] sm:$0xff]
    %v330 = vld [vmem:[%s2] sm:$0x1]
    %v332 = vlaneseq
    %v333 = vshrl.u32 %v332, 7
    %v334 = vsub.s32 0, %v333
    %v335 = vrot.slane %v330, %v334
    %v337 = vmul.f32 %v314, %v335
    %v338 = vmul.f32 %v315, %v335
    %v339 = vmul.f32 %v316, %v335
    %v340 = vmul.f32 %v317, %v335
    %v341 = vmul.f32 %v318, %v335
    %v342 = vmul.f32 %v319, %v335
    %v343 = vmul.f32 %v320, %v335
    %v344 = vmul.f32 %v321, %v335
    %v345 = vmul.f32 %v322, %v335
    %v346 = vmul.f32 %v323, %v335
    %v347 = vmul.f32 %v324, %v335
    %v348 = vmul.f32 %v325, %v335
    %v349 = vmul.f32 %v326, %v335
    %v350 = vmul.f32 %v327, %v335
    %v351 = vmul.f32 %v328, %v335
    %v352 = vmul.f32 %v329, %v335
    %v353 = vld [vmem:[%s3] sm:$0x1]
    %v355 = vlaneseq
    %v356 = vshrl.u32 %v355, 7
    %v357 = vsub.s32 0, %v356
    %v358 = vrot.slane %v353, %v357
    %v360 = vadd.f32 %v337, %v358
    %v361 = vadd.f32 %v338, %v358
    %v362 = vadd.f32 %v339, %v358
    %v363 = vadd.f32 %v340, %v358
    %v364 = vadd.f32 %v341, %v358
    %v365 = vadd.f32 %v342, %v358
    %v366 = vadd.f32 %v343, %v358
    %v367 = vadd.f32 %v344, %v358
    %v368 = vadd.f32 %v345, %v358
    %v369 = vadd.f32 %v346, %v358
    %v370 = vadd.f32 %v347, %v358
    %v371 = vadd.f32 %v348, %v358
    %v372 = vadd.f32 %v349, %v358
    %v373 = vadd.f32 %v350, %v358
    %v374 = vadd.f32 %v351, %v358
    %v375 = vadd.f32 %v352, %v358
    %v376 = vmax.f32 %v360, 0.0
    %v377 = vmax.f32 %v361, 0.0
    %v378 = vmax.f32 %v362, 0.0
    %v379 = vmax.f32 %v363, 0.0
    %v380 = vmax.f32 %v364, 0.0
    %v381 = vmax.f32 %v365, 0.0
    %v382 = vmax.f32 %v366, 0.0
    %v383 = vmax.f32 %v367, 0.0
    %v384 = vmax.f32 %v368, 0.0
    %v385 = vmax.f32 %v369, 0.0
    %v386 = vmax.f32 %v370, 0.0
    %v387 = vmax.f32 %v371, 0.0
    %v388 = vmax.f32 %v372, 0.0
    %v389 = vmax.f32 %v373, 0.0
    %v390 = vmax.f32 %v374, 0.0
    %v391 = vmax.f32 %v375, 0.0
    %v392 = vpack.c.bf16 %v377, %v376
    %v393 = vpack.c.bf16 %v379, %v378
    %v394 = vpack.c.bf16 %v381, %v380
    %v395 = vpack.c.bf16 %v383, %v382
    %v396 = vpack.c.bf16 %v385, %v384
    %v397 = vpack.c.bf16 %v387, %v386
    %v398 = vpack.c.bf16 %v389, %v388
    %v399 = vpack.c.bf16 %v391, %v390
    %v408 = vunpack.c.l.b16 %v392
    %v409 = vunpack.c.h.b16 %v392
    %v410 = vunpack.c.l.b16 %v393
    %v411 = vunpack.c.h.b16 %v393
    %v412 = vunpack.c.l.b16 %v394
    %v413 = vunpack.c.h.b16 %v394
    %v414 = vunpack.c.l.b16 %v395
    %v415 = vunpack.c.h.b16 %v395
    %v416 = vunpack.c.l.b16 %v396
    %v417 = vunpack.c.h.b16 %v396
    %v418 = vunpack.c.l.b16 %v397
    %v419 = vunpack.c.h.b16 %v397
    %v420 = vunpack.c.l.b16 %v398
    %v421 = vunpack.c.h.b16 %v398
    %v422 = vunpack.c.l.b16 %v399
    %v423 = vunpack.c.h.b16 %v399
    %v424 = vpack.c.b16 %v408, %v408
    %v425 = vpack.c.b16 %v409, %v409
    %v426 = vpack.c.b16 %v410, %v410
    %v427 = vpack.c.b16 %v411, %v411
    %v428 = vpack.c.b16 %v412, %v412
    %v429 = vpack.c.b16 %v413, %v413
    %v430 = vpack.c.b16 %v414, %v414
    %v431 = vpack.c.b16 %v415, %v415
    %v432 = vpack.c.b16 %v416, %v416
    %v433 = vpack.c.b16 %v417, %v417
    %v434 = vpack.c.b16 %v418, %v418
    %v435 = vpack.c.b16 %v419, %v419
    %v436 = vpack.c.b16 %v420, %v420
    %v437 = vpack.c.b16 %v421, %v421
    %v438 = vpack.c.b16 %v422, %v422
    %v439 = vpack.c.b16 %v423, %v423
    %456 = vst [vmem:[%s4] sm:$0xf] %v424
    %457 = vst [vmem:[%s4 + $0x4] sm:$0xf] %v425
    %458 = vst [vmem:[%s4 + $0x8] sm:$0xf] %v426
    %459 = vst [vmem:[%s4 + $0xc] sm:$0xf] %v427
    %460 = vst [vmem:[%s4 + $0x10] sm:$0xf] %v428
    %461 = vst [vmem:[%s4 + $0x14] sm:$0xf] %v429
    %462 = vst [vmem:[%s4 + $0x18] sm:$0xf] %v430
    %463 = vst [vmem:[%s4 + $0x1c] sm:$0xf] %v431
    %464 = vst [vmem:[%s4 + $0x20] sm:$0xf] %v432
    %465 = vst [vmem:[%s4 + $0x24] sm:$0xf] %v433
    %466 = vst [vmem:[%s4 + $0x28] sm:$0xf] %v434
    %467 = vst [vmem:[%s4 + $0x2c] sm:$0xf] %v435
    %468 = vst [vmem:[%s4 + $0x30] sm:$0xf] %v436
    %469 = vst [vmem:[%s4 + $0x34] sm:$0xf] %v437
    %470 = vst [vmem:[%s4 + $0x38] sm:$0xf] %v438
    %471 = vst [vmem:[%s4 + $0x3c] sm:$0xf] %v439
  $region25: #{leafnet_forward.18} parent=0 // pred_fallthru
    _
  // Predicated region
  $region26: #{leafnet_forward.18} parent=0 // pred_check
    _
  $region27: #{leafnet_forward.18} parent=0 // pred_check_branch
    %473 = sbr.rel (0) target = $region29
  $region28: #{leafnet_forward.18} parent=0 // pred_region
    _
  $region29: #{leafnet_forward.18} parent=0 // pred_fallthru
    _
  // Predicated region
  $region30: #{leafnet_forward.18} parent=0 // pred_check
    _
  $region31: #{leafnet_forward.18} parent=0 // pred_check_branch
    %475 = sbr.rel (0) target = $region33
  $region32: #{leafnet_forward.18} parent=0 // pred_region
    _
  $region33: #{leafnet_forward.18} parent=0 // pred_fallthru
    _

// kernel: leafnet_forward.16
$region0: #{leafnet_forward.16}
  #allocation0 [shape = 'u32[]', space=smem, size = 0x4, offset = 0x4, fixed_abs, tag = 'smem constant byte address 0x4 - core index']
  #allocation1 [shape = 'u32[144,128]{1,0:T(1,128)}', space=vmem, size = 0x12000, scoped, tag = 'internal scratch']
  #allocation2 [shape = 'f32[512,128]{1,0:T(8,128)}', space=vmem, size = 0x40000, scoped, tag = 'scratch operand']
  %s0 = inlined_call_operand.vmem [shape: bf16[512,256], index: 0, kind: input, shape index: {}]
  %s1 = inlined_call_operand.vmem [shape: bf16[256,128], index: 1, kind: input, shape index: {}]
  %s2 = inlined_call_operand.vmem [shape: f32[1,128], index: 2, kind: input, shape index: {}]
  %s3 = inlined_call_operand.vmem [shape: f32[1,128], index: 3, kind: input, shape index: {}]
  %s4 = inlined_call_operand.vmem [shape: bf16[512,128], index: 4, kind: output, shape index: {}]
  %s5 = sld [smem:[#allocation0]]
  $region34: #{leafnet_forward.16} parent=0
    _
  %s7 = ssub.s32 1, %s5
  %s8 = scalar_select 0, %s7, %s5
  // Predicated region
  $region2: #{leafnet_forward.16} parent=0 // pred_check
    _
  $region3: #{leafnet_forward.16} parent=0 // pred_check_branch
    %10 = sbr.rel (0) target = $region5
  $region4: #{leafnet_forward.16} parent=0 // pred_region
    _
  $region5: #{leafnet_forward.16} parent=0 // pred_fallthru
    _
  // Predicated region
  $region6: #{leafnet_forward.16} parent=0 // pred_check
    _
  $region7: #{leafnet_forward.16} parent=0 // pred_check_branch
    %12 = sbr.rel (0) target = $region9
  $region8: #{leafnet_forward.16} parent=0 // pred_region
    _
  $region9: #{leafnet_forward.16} parent=0 // pred_fallthru
    _
  // Predicated region
  $region10: #{leafnet_forward.16} parent=0 // pred_check
    _
  $region11: #{leafnet_forward.16} parent=0 // pred_check_branch
    %14 = sbr.rel (0) target = $region13
  $region12: #{leafnet_forward.16} parent=0 // pred_region
    _
  $region13: #{leafnet_forward.16} parent=0 // pred_fallthru
    _
  // Predicated region
  $region14: #{leafnet_forward.16} parent=0 // pred_check
    _
  $region15: #{leafnet_forward.16} parent=0 // pred_check_branch
    %16 = sbr.rel (0) target = $region17
  $region16: #{leafnet_forward.16} parent=0 // pred_region
    _
  $region17: #{leafnet_forward.16} parent=0 // pred_fallthru
    _
  %p18 = scmp.eq.s32.totalorder 0, 0
  // Predicated region
  $region18: #{leafnet_forward.16} parent=0 // pred_check
    %p19 = pneg %p18
  $region19: #{leafnet_forward.16} parent=0 // pred_check_branch
    %21 = sbr.rel (%p19) target = $region21
  $region20: #{leafnet_forward.16} parent=0 // pred_region
    %22 = vst [vmem:[#allocation2] sm:$0xff] 0.0
    %23 = vst [vmem:[#allocation2 + $0x8] sm:$0xff] 0.0
    %24 = vst [vmem:[#allocation2 + $0x10] sm:$0xff] 0.0
    %25 = vst [vmem:[#allocation2 + $0x18] sm:$0xff] 0.0
    %26 = vst [vmem:[#allocation2 + $0x20] sm:$0xff] 0.0
    %27 = vst [vmem:[#allocation2 + $0x28] sm:$0xff] 0.0
    %28 = vst [vmem:[#allocation2 + $0x30] sm:$0xff] 0.0
    %29 = vst [vmem:[#allocation2 + $0x38] sm:$0xff] 0.0
    %30 = vst [vmem:[#allocation2 + $0x40] sm:$0xff] 0.0
    %31 = vst [vmem:[#allocation2 + $0x48] sm:$0xff] 0.0
    %32 = vst [vmem:[#allocation2 + $0x50] sm:$0xff] 0.0
    %33 = vst [vmem:[#allocation2 + $0x58] sm:$0xff] 0.0
    %34 = vst [vmem:[#allocation2 + $0x60] sm:$0xff] 0.0
    %35 = vst [vmem:[#allocation2 + $0x68] sm:$0xff] 0.0
    %36 = vst [vmem:[#allocation2 + $0x70] sm:$0xff] 0.0
    %37 = vst [vmem:[#allocation2 + $0x78] sm:$0xff] 0.0
    %38 = vst [vmem:[#allocation2 + $0x80] sm:$0xff] 0.0
    %39 = vst [vmem:[#allocation2 + $0x88] sm:$0xff] 0.0
    %40 = vst [vmem:[#allocation2 + $0x90] sm:$0xff] 0.0
    %41 = vst [vmem:[#allocation2 + $0x98] sm:$0xff] 0.0
    %42 = vst [vmem:[#allocation2 + $0xa0] sm:$0xff] 0.0
    %43 = vst [vmem:[#allocation2 + $0xa8] sm:$0xff] 0.0
    %44 = vst [vmem:[#allocation2 + $0xb0] sm:$0xff] 0.0
    %45 = vst [vmem:[#allocation2 + $0xb8] sm:$0xff] 0.0
    %46 = vst [vmem:[#allocation2 + $0xc0] sm:$0xff] 0.0
    %47 = vst [vmem:[#allocation2 + $0xc8] sm:$0xff] 0.0
    %48 = vst [vmem:[#allocation2 + $0xd0] sm:$0xff] 0.0
    %49 = vst [vmem:[#allocation2 + $0xd8] sm:$0xff] 0.0
    %50 = vst [vmem:[#allocation2 + $0xe0] sm:$0xff] 0.0
    %51 = vst [vmem:[#allocation2 + $0xe8] sm:$0xff] 0.0
    %52 = vst [vmem:[#allocation2 + $0xf0] sm:$0xff] 0.0
    %53 = vst [vmem:[#allocation2 + $0xf8] sm:$0xff] 0.0
    %54 = vst [vmem:[#allocation2 + $0x100] sm:$0xff] 0.0
    %55 = vst [vmem:[#allocation2 + $0x108] sm:$0xff] 0.0
    %56 = vst [vmem:[#allocation2 + $0x110] sm:$0xff] 0.0
    %57 = vst [vmem:[#allocation2 + $0x118] sm:$0xff] 0.0
    %58 = vst [vmem:[#allocation2 + $0x120] sm:$0xff] 0.0
    %59 = vst [vmem:[#allocation2 + $0x128] sm:$0xff] 0.0
    %60 = vst [vmem:[#allocation2 + $0x130] sm:$0xff] 0.0
    %61 = vst [vmem:[#allocation2 + $0x138] sm:$0xff] 0.0
    %62 = vst [vmem:[#allocation2 + $0x140] sm:$0xff] 0.0
    %63 = vst [vmem:[#allocation2 + $0x148] sm:$0xff] 0.0
    %64 = vst [vmem:[#allocation2 + $0x150] sm:$0xff] 0.0
    %65 = vst [vmem:[#allocation2 + $0x158] sm:$0xff] 0.0
    %66 = vst [vmem:[#allocation2 + $0x160] sm:$0xff] 0.0
    %67 = vst [vmem:[#allocation2 + $0x168] sm:$0xff] 0.0
    %68 = vst [vmem:[#allocation2 + $0x170] sm:$0xff] 0.0
    %69 = vst [vmem:[#allocation2 + $0x178] sm:$0xff] 0.0
    %70 = vst [vmem:[#allocation2 + $0x180] sm:$0xff] 0.0
    %71 = vst [vmem:[#allocation2 + $0x188] sm:$0xff] 0.0
    %72 = vst [vmem:[#allocation2 + $0x190] sm:$0xff] 0.0
    %73 = vst [vmem:[#allocation2 + $0x198] sm:$0xff] 0.0
    %74 = vst [vmem:[#allocation2 + $0x1a0] sm:$0xff] 0.0
    %75 = vst [vmem:[#allocation2 + $0x1a8] sm:$0xff] 0.0
    %76 = vst [vmem:[#allocation2 + $0x1b0] sm:$0xff] 0.0
    %77 = vst [vmem:[#allocation2 + $0x1b8] sm:$0xff] 0.0
    %78 = vst [vmem:[#allocation2 + $0x1c0] sm:$0xff] 0.0
    %79 = vst [vmem:[#allocation2 + $0x1c8] sm:$0xff] 0.0
    %80 = vst [vmem:[#allocation2 + $0x1d0] sm:$0xff] 0.0
    %81 = vst [vmem:[#allocation2 + $0x1d8] sm:$0xff] 0.0
    %82 = vst [vmem:[#allocation2 + $0x1e0] sm:$0xff] 0.0
    %83 = vst [vmem:[#allocation2 + $0x1e8] sm:$0xff] 0.0
    %84 = vst [vmem:[#allocation2 + $0x1f0] sm:$0xff] 0.0
    %85 = vst [vmem:[#allocation2 + $0x1f8] sm:$0xff] 0.0
  $region21: #{leafnet_forward.16} parent=0 // pred_fallthru
    _
  %v86 = vld [vmem:[#allocation2] sm:$0xff]
  %v87 = vld [vmem:[#allocation2 + $0x8] sm:$0xff]
  %v88 = vld [vmem:[#allocation2 + $0x10] sm:$0xff]
  %v89 = vld [vmem:[#allocation2 + $0x18] sm:$0xff]
  %v90 = vld [vmem:[#allocation2 + $0x20] sm:$0xff]
  %v91 = vld [vmem:[#allocation2 + $0x28] sm:$0xff]
  %v92 = vld [vmem:[#allocation2 + $0x30] sm:$0xff]
  %v93 = vld [vmem:[#allocation2 + $0x38] sm:$0xff]
  %v94 = vld [vmem:[#allocation2 + $0x40] sm:$0xff]
  %v95 = vld [vmem:[#allocation2 + $0x48] sm:$0xff]
  %v96 = vld [vmem:[#allocation2 + $0x50] sm:$0xff]
  %v97 = vld [vmem:[#allocation2 + $0x58] sm:$0xff]
  %v98 = vld [vmem:[#allocation2 + $0x60] sm:$0xff]
  %v99 = vld [vmem:[#allocation2 + $0x68] sm:$0xff]
  %v100 = vld [vmem:[#allocation2 + $0x70] sm:$0xff]
  %v101 = vld [vmem:[#allocation2 + $0x78] sm:$0xff]
  %v102 = vld [vmem:[#allocation2 + $0x80] sm:$0xff]
  %v103 = vld [vmem:[#allocation2 + $0x88] sm:$0xff]
  %v104 = vld [vmem:[#allocation2 + $0x90] sm:$0xff]
  %v105 = vld [vmem:[#allocation2 + $0x98] sm:$0xff]
  %v106 = vld [vmem:[#allocation2 + $0xa0] sm:$0xff]
  %v107 = vld [vmem:[#allocation2 + $0xa8] sm:$0xff]
  %v108 = vld [vmem:[#allocation2 + $0xb0] sm:$0xff]
  %v109 = vld [vmem:[#allocation2 + $0xb8] sm:$0xff]
  %v110 = vld [vmem:[#allocation2 + $0xc0] sm:$0xff]
  %v111 = vld [vmem:[#allocation2 + $0xc8] sm:$0xff]
  %v112 = vld [vmem:[#allocation2 + $0xd0] sm:$0xff]
  %v113 = vld [vmem:[#allocation2 + $0xd8] sm:$0xff]
  %v114 = vld [vmem:[#allocation2 + $0xe0] sm:$0xff]
  %v115 = vld [vmem:[#allocation2 + $0xe8] sm:$0xff]
  %v116 = vld [vmem:[#allocation2 + $0xf0] sm:$0xff]
  %v117 = vld [vmem:[#allocation2 + $0xf8] sm:$0xff]
  %v118 = vld [vmem:[#allocation2 + $0x100] sm:$0xff]
  %v119 = vld [vmem:[#allocation2 + $0x108] sm:$0xff]
  %v120 = vld [vmem:[#allocation2 + $0x110] sm:$0xff]
  %v121 = vld [vmem:[#allocation2 + $0x118] sm:$0xff]
  %v122 = vld [vmem:[#allocation2 + $0x120] sm:$0xff]
  %v123 = vld [vmem:[#allocation2 + $0x128] sm:$0xff]
  %v124 = vld [vmem:[#allocation2 + $0x130] sm:$0xff]
  %v125 = vld [vmem:[#allocation2 + $0x138] sm:$0xff]
  %v126 = vld [vmem:[#allocation2 + $0x140] sm:$0xff]
  %v127 = vld [vmem:[#allocation2 + $0x148] sm:$0xff]
  %v128 = vld [vmem:[#allocation2 + $0x150] sm:$0xff]
  %v129 = vld [vmem:[#allocation2 + $0x158] sm:$0xff]
  %v130 = vld [vmem:[#allocation2 + $0x160] sm:$0xff]
  %v131 = vld [vmem:[#allocation2 + $0x168] sm:$0xff]
  %v132 = vld [vmem:[#allocation2 + $0x170] sm:$0xff]
  %v133 = vld [vmem:[#allocation2 + $0x178] sm:$0xff]
  %v134 = vld [vmem:[#allocation2 + $0x180] sm:$0xff]
  %v135 = vld [vmem:[#allocation2 + $0x188] sm:$0xff]
  %v136 = vld [vmem:[#allocation2 + $0x190] sm:$0xff]
  %v137 = vld [vmem:[#allocation2 + $0x198] sm:$0xff]
  %v138 = vld [vmem:[#allocation2 + $0x1a0] sm:$0xff]
  %v139 = vld [vmem:[#allocation2 + $0x1a8] sm:$0xff]
  %v140 = vld [vmem:[#allocation2 + $0x1b0] sm:$0xff]
  %v141 = vld [vmem:[#allocation2 + $0x1b8] sm:$0xff]
  %v142 = vld [vmem:[#allocation2 + $0x1c0] sm:$0xff]
  %v143 = vld [vmem:[#allocation2 + $0x1c8] sm:$0xff]
  %v144 = vld [vmem:[#allocation2 + $0x1d0] sm:$0xff]
  %v145 = vld [vmem:[#allocation2 + $0x1d8] sm:$0xff]
  %v146 = vld [vmem:[#allocation2 + $0x1e0] sm:$0xff]
  %v147 = vld [vmem:[#allocation2 + $0x1e8] sm:$0xff]
  %v148 = vld [vmem:[#allocation2 + $0x1f0] sm:$0xff]
  %v149 = vld [vmem:[#allocation2 + $0x1f8] sm:$0xff]
  %v150 = vld [vmem:[%s0] sm:$0xff]
  %v151 = vld [vmem:[%s0 + $0x8] sm:$0xff]
  %v152 = vld [vmem:[%s0 + $0x10] sm:$0xff]
  %v153 = vld [vmem:[%s0 + $0x18] sm:$0xff]
  %v154 = vld [vmem:[%s0 + $0x20] sm:$0xff]
  %v155 = vld [vmem:[%s0 + $0x28] sm:$0xff]
  %v156 = vld [vmem:[%s0 + $0x30] sm:$0xff]
  %v157 = vld [vmem:[%s0 + $0x38] sm:$0xff]
  %v158 = vld [vmem:[%s0 + $0x40] sm:$0xff]
  %v159 = vld [vmem:[%s0 + $0x48] sm:$0xff]
  %v160 = vld [vmem:[%s0 + $0x50] sm:$0xff]
  %v161 = vld [vmem:[%s0 + $0x58] sm:$0xff]
  %v162 = vld [vmem:[%s0 + $0x60] sm:$0xff]
  %v163 = vld [vmem:[%s0 + $0x68] sm:$0xff]
  %v164 = vld [vmem:[%s0 + $0x70] sm:$0xff]
  %v165 = vld [vmem:[%s0 + $0x78] sm:$0xff]
  %v166 = vld [vmem:[%s0 + $0x80] sm:$0xff]
  %v167 = vld [vmem:[%s0 + $0x88] sm:$0xff]
  %v168 = vld [vmem:[%s0 + $0x90] sm:$0xff]
  %v169 = vld [vmem:[%s0 + $0x98] sm:$0xff]
  %v170 = vld [vmem:[%s0 + $0xa0] sm:$0xff]
  %v171 = vld [vmem:[%s0 + $0xa8] sm:$0xff]
  %v172 = vld [vmem:[%s0 + $0xb0] sm:$0xff]
  %v173 = vld [vmem:[%s0 + $0xb8] sm:$0xff]
  %v174 = vld [vmem:[%s0 + $0xc0] sm:$0xff]
  %v175 = vld [vmem:[%s0 + $0xc8] sm:$0xff]
  %v176 = vld [vmem:[%s0 + $0xd0] sm:$0xff]
  %v177 = vld [vmem:[%s0 + $0xd8] sm:$0xff]
  %v178 = vld [vmem:[%s0 + $0xe0] sm:$0xff]
  %v179 = vld [vmem:[%s0 + $0xe8] sm:$0xff]
  %v180 = vld [vmem:[%s0 + $0xf0] sm:$0xff]
  %v181 = vld [vmem:[%s0 + $0xf8] sm:$0xff]
  %v182 = vld [vmem:[%s0 + $0x100] sm:$0xff]
  %v183 = vld [vmem:[%s0 + $0x108] sm:$0xff]
  %v184 = vld [vmem:[%s0 + $0x110] sm:$0xff]
  %v185 = vld [vmem:[%s0 + $0x118] sm:$0xff]
  %v186 = vld [vmem:[%s0 + $0x120] sm:$0xff]
  %v187 = vld [vmem:[%s0 + $0x128] sm:$0xff]
  %v188 = vld [vmem:[%s0 + $0x130] sm:$0xff]
  %v189 = vld [vmem:[%s0 + $0x138] sm:$0xff]
  %v190 = vld [vmem:[%s0 + $0x140] sm:$0xff]
  %v191 = vld [vmem:[%s0 + $0x148] sm:$0xff]
  %v192 = vld [vmem:[%s0 + $0x150] sm:$0xff]
  %v193 = vld [vmem:[%s0 + $0x158] sm:$0xff]
  %v194 = vld [vmem:[%s0 + $0x160] sm:$0xff]
  %v195 = vld [vmem:[%s0 + $0x168] sm:$0xff]
  %v196 = vld [vmem:[%s0 + $0x170] sm:$0xff]
  %v197 = vld [vmem:[%s0 + $0x178] sm:$0xff]
  %v198 = vld [vmem:[%s0 + $0x180] sm:$0xff]
  %v199 = vld [vmem:[%s0 + $0x188] sm:$0xff]
  %v200 = vld [vmem:[%s0 + $0x190] sm:$0xff]
  %v201 = vld [vmem:[%s0 + $0x198] sm:$0xff]
  %v202 = vld [vmem:[%s0 + $0x1a0] sm:$0xff]
  %v203 = vld [vmem:[%s0 + $0x1a8] sm:$0xff]
  %v204 = vld [vmem:[%s0 + $0x1b0] sm:$0xff]
  %v205 = vld [vmem:[%s0 + $0x1b8] sm:$0xff]
  %v206 = vld [vmem:[%s0 + $0x1c0] sm:$0xff]
  %v207 = vld [vmem:[%s0 + $0x1c8] sm:$0xff]
  %v208 = vld [vmem:[%s0 + $0x1d0] sm:$0xff]
  %v209 = vld [vmem:[%s0 + $0x1d8] sm:$0xff]
  %v210 = vld [vmem:[%s0 + $0x1e0] sm:$0xff]
  %v211 = vld [vmem:[%s0 + $0x1e8] sm:$0xff]
  %v212 = vld [vmem:[%s0 + $0x1f0] sm:$0xff]
  %v213 = vld [vmem:[%s0 + $0x1f8] sm:$0xff]
  %v214 = vld [vmem:[%s1] sm:$0xf]
  %v215 = vld [vmem:[%s1 + $0x4] sm:$0xf]
  %v216 = vld [vmem:[%s1 + $0x8] sm:$0xf]
  %v217 = vld [vmem:[%s1 + $0xc] sm:$0xf]
  %v218 = vld [vmem:[%s1 + $0x10] sm:$0xf]
  %v219 = vld [vmem:[%s1 + $0x14] sm:$0xf]
  %v220 = vld [vmem:[%s1 + $0x18] sm:$0xf]
  %v221 = vld [vmem:[%s1 + $0x1c] sm:$0xf]
  %v222 = vld [vmem:[%s1 + $0x20] sm:$0xf]
  %v223 = vld [vmem:[%s1 + $0x24] sm:$0xf]
  %v224 = vld [vmem:[%s1 + $0x28] sm:$0xf]
  %v225 = vld [vmem:[%s1 + $0x2c] sm:$0xf]
  %v226 = vld [vmem:[%s1 + $0x30] sm:$0xf]
  %v227 = vld [vmem:[%s1 + $0x34] sm:$0xf]
  %v228 = vld [vmem:[%s1 + $0x38] sm:$0xf]
  %v229 = vld [vmem:[%s1 + $0x3c] sm:$0xf]
  %v230 = vld [vmem:[%s1 + $0x40] sm:$0xf]
  %v231 = vld [vmem:[%s1 + $0x44] sm:$0xf]
  %v232 = vld [vmem:[%s1 + $0x48] sm:$0xf]
  %v233 = vld [vmem:[%s1 + $0x4c] sm:$0xf]
  %v234 = vld [vmem:[%s1 + $0x50] sm:$0xf]
  %v235 = vld [vmem:[%s1 + $0x54] sm:$0xf]
  %v236 = vld [vmem:[%s1 + $0x58] sm:$0xf]
  %v237 = vld [vmem:[%s1 + $0x5c] sm:$0xf]
  %v238 = vld [vmem:[%s1 + $0x60] sm:$0xf]
  %v239 = vld [vmem:[%s1 + $0x64] sm:$0xf]
  %v240 = vld [vmem:[%s1 + $0x68] sm:$0xf]
  %v241 = vld [vmem:[%s1 + $0x6c] sm:$0xf]
  %v242 = vld [vmem:[%s1 + $0x70] sm:$0xf]
  %v243 = vld [vmem:[%s1 + $0x74] sm:$0xf]
  %v244 = vld [vmem:[%s1 + $0x78] sm:$0xf]
  %v245 = vld [vmem:[%s1 + $0x7c] sm:$0xf]
  %v310 = vunpack.c.l.b16 %v150
  %v311 = vunpack.c.h.b16 %v150
  %v312 = vunpack.c.l.b16 %v151
  %v313 = vunpack.c.h.b16 %v151
  %v314 = vunpack.c.l.b16 %v152
  %v315 = vunpack.c.h.b16 %v152
  %v316 = vunpack.c.l.b16 %v153
  %v317 = vunpack.c.h.b16 %v153
  %v318 = vunpack.c.l.b16 %v154
  %v319 = vunpack.c.h.b16 %v154
  %v320 = vunpack.c.l.b16 %v155
  %v321 = vunpack.c.h.b16 %v155
  %v322 = vunpack.c.l.b16 %v156
  %v323 = vunpack.c.h.b16 %v156
  %v324 = vunpack.c.l.b16 %v157
  %v325 = vunpack.c.h.b16 %v157
  %v326 = vunpack.c.l.b16 %v158
  %v327 = vunpack.c.h.b16 %v158
  %v328 = vunpack.c.l.b16 %v159
  %v329 = vunpack.c.h.b16 %v159
  %v330 = vunpack.c.l.b16 %v160
  %v331 = vunpack.c.h.b16 %v160
  %v332 = vunpack.c.l.b16 %v161
  %v333 = vunpack.c.h.b16 %v161
  %v334 = vunpack.c.l.b16 %v162
  %v335 = vunpack.c.h.b16 %v162
  %v336 = vunpack.c.l.b16 %v163
  %v337 = vunpack.c.h.b16 %v163
  %v338 = vunpack.c.l.b16 %v164
  %v339 = vunpack.c.h.b16 %v164
  %v340 = vunpack.c.l.b16 %v165
  %v341 = vunpack.c.h.b16 %v165
  %v342 = vunpack.c.l.b16 %v166
  %v343 = vunpack.c.h.b16 %v166
  %v344 = vunpack.c.l.b16 %v167
  %v345 = vunpack.c.h.b16 %v167
  %v346 = vunpack.c.l.b16 %v168
  %v347 = vunpack.c.h.b16 %v168
  %v348 = vunpack.c.l.b16 %v169
  %v349 = vunpack.c.h.b16 %v169
  %v350 = vunpack.c.l.b16 %v170
  %v351 = vunpack.c.h.b16 %v170
  %v352 = vunpack.c.l.b16 %v171
  %v353 = vunpack.c.h.b16 %v171
  %v354 = vunpack.c.l.b16 %v172
  %v355 = vunpack.c.h.b16 %v172
  %v356 = vunpack.c.l.b16 %v173
  %v357 = vunpack.c.h.b16 %v173
  %v358 = vunpack.c.l.b16 %v174
  %v359 = vunpack.c.h.b16 %v174
  %v360 = vunpack.c.l.b16 %v175
  %v361 = vunpack.c.h.b16 %v175
  %v362 = vunpack.c.l.b16 %v176
  %v363 = vunpack.c.h.b16 %v176
  %v364 = vunpack.c.l.b16 %v177
  %v365 = vunpack.c.h.b16 %v177
  %v366 = vunpack.c.l.b16 %v178
  %v367 = vunpack.c.h.b16 %v178
  %v368 = vunpack.c.l.b16 %v179
  %v369 = vunpack.c.h.b16 %v179
  %v370 = vunpack.c.l.b16 %v180
  %v371 = vunpack.c.h.b16 %v180
  %v372 = vunpack.c.l.b16 %v181
  %v373 = vunpack.c.h.b16 %v181
  %v374 = vunpack.c.l.b16 %v182
  %v375 = vunpack.c.h.b16 %v182
  %v376 = vunpack.c.l.b16 %v183
  %v377 = vunpack.c.h.b16 %v183
  %v378 = vunpack.c.l.b16 %v184
  %v379 = vunpack.c.h.b16 %v184
  %v380 = vunpack.c.l.b16 %v185
  %v381 = vunpack.c.h.b16 %v185
  %v382 = vunpack.c.l.b16 %v186
  %v383 = vunpack.c.h.b16 %v186
  %v384 = vunpack.c.l.b16 %v187
  %v385 = vunpack.c.h.b16 %v187
  %v386 = vunpack.c.l.b16 %v188
  %v387 = vunpack.c.h.b16 %v188
  %v388 = vunpack.c.l.b16 %v189
  %v389 = vunpack.c.h.b16 %v189
  %v390 = vunpack.c.l.b16 %v190
  %v391 = vunpack.c.h.b16 %v190
  %v392 = vunpack.c.l.b16 %v191
  %v393 = vunpack.c.h.b16 %v191
  %v394 = vunpack.c.l.b16 %v192
  %v395 = vunpack.c.h.b16 %v192
  %v396 = vunpack.c.l.b16 %v193
  %v397 = vunpack.c.h.b16 %v193
  %v398 = vunpack.c.l.b16 %v194
  %v399 = vunpack.c.h.b16 %v194
  %v400 = vunpack.c.l.b16 %v195
  %v401 = vunpack.c.h.b16 %v195
  %v402 = vunpack.c.l.b16 %v196
  %v403 = vunpack.c.h.b16 %v196
  %v404 = vunpack.c.l.b16 %v197
  %v405 = vunpack.c.h.b16 %v197
  %v406 = vunpack.c.l.b16 %v198
  %v407 = vunpack.c.h.b16 %v198
  %v408 = vunpack.c.l.b16 %v199
  %v409 = vunpack.c.h.b16 %v199
  %v410 = vunpack.c.l.b16 %v200
  %v411 = vunpack.c.h.b16 %v200
  %v412 = vunpack.c.l.b16 %v201
  %v413 = vunpack.c.h.b16 %v201
  %v414 = vunpack.c.l.b16 %v202
  %v415 = vunpack.c.h.b16 %v202
  %v416 = vunpack.c.l.b16 %v203
  %v417 = vunpack.c.h.b16 %v203
  %v418 = vunpack.c.l.b16 %v204
  %v419 = vunpack.c.h.b16 %v204
  %v420 = vunpack.c.l.b16 %v205
  %v421 = vunpack.c.h.b16 %v205
  %v422 = vunpack.c.l.b16 %v206
  %v423 = vunpack.c.h.b16 %v206
  %v424 = vunpack.c.l.b16 %v207
  %v425 = vunpack.c.h.b16 %v207
  %v426 = vunpack.c.l.b16 %v208
  %v427 = vunpack.c.h.b16 %v208
  %v428 = vunpack.c.l.b16 %v209
  %v429 = vunpack.c.h.b16 %v209
  %v430 = vunpack.c.l.b16 %v210
  %v431 = vunpack.c.h.b16 %v210
  %v432 = vunpack.c.l.b16 %v211
  %v433 = vunpack.c.h.b16 %v211
  %v434 = vunpack.c.l.b16 %v212
  %v435 = vunpack.c.h.b16 %v212
  %v436 = vunpack.c.l.b16 %v213
  %v437 = vunpack.c.h.b16 %v213
  %v438 = vpack.c.b16 %v312, %v310
  %v439 = vpack.c.b16 %v313, %v311
  %v440 = vpack.c.b16 %v316, %v314
  %v441 = vpack.c.b16 %v317, %v315
  %v442 = vpack.c.b16 %v320, %v318
  %v443 = vpack.c.b16 %v321, %v319
  %v444 = vpack.c.b16 %v324, %v322
  %v445 = vpack.c.b16 %v325, %v323
  %v446 = vpack.c.b16 %v328, %v326
  %v447 = vpack.c.b16 %v329, %v327
  %v448 = vpack.c.b16 %v332, %v330
  %v449 = vpack.c.b16 %v333, %v331
  %v450 = vpack.c.b16 %v336, %v334
  %v451 = vpack.c.b16 %v337, %v335
  %v452 = vpack.c.b16 %v340, %v338
  %v453 = vpack.c.b16 %v341, %v339
  %v454 = vpack.c.b16 %v344, %v342
  %v455 = vpack.c.b16 %v345, %v343
  %v456 = vpack.c.b16 %v348, %v346
  %v457 = vpack.c.b16 %v349, %v347
  %v458 = vpack.c.b16 %v352, %v350
  %v459 = vpack.c.b16 %v353, %v351
  %v460 = vpack.c.b16 %v356, %v354
  %v461 = vpack.c.b16 %v357, %v355
  %v462 = vpack.c.b16 %v360, %v358
  %v463 = vpack.c.b16 %v361, %v359
  %v464 = vpack.c.b16 %v364, %v362
  %v465 = vpack.c.b16 %v365, %v363
  %v466 = vpack.c.b16 %v368, %v366
  %v467 = vpack.c.b16 %v369, %v367
  %v468 = vpack.c.b16 %v372, %v370
  %v469 = vpack.c.b16 %v373, %v371
  %v470 = vpack.c.b16 %v376, %v374
  %v471 = vpack.c.b16 %v377, %v375
  %v472 = vpack.c.b16 %v380, %v378
  %v473 = vpack.c.b16 %v381, %v379
  %v474 = vpack.c.b16 %v384, %v382
  %v475 = vpack.c.b16 %v385, %v383
  %v476 = vpack.c.b16 %v388, %v386
  %v477 = vpack.c.b16 %v389, %v387
  %v478 = vpack.c.b16 %v392, %v390
  %v479 = vpack.c.b16 %v393, %v391
  %v480 = vpack.c.b16 %v396, %v394
  %v481 = vpack.c.b16 %v397, %v395
  %v482 = vpack.c.b16 %v400, %v398
  %v483 = vpack.c.b16 %v401, %v399
  %v484 = vpack.c.b16 %v404, %v402
  %v485 = vpack.c.b16 %v405, %v403
  %v486 = vpack.c.b16 %v408, %v406
  %v487 = vpack.c.b16 %v409, %v407
  %v488 = vpack.c.b16 %v412, %v410
  %v489 = vpack.c.b16 %v413, %v411
  %v490 = vpack.c.b16 %v416, %v414
  %v491 = vpack.c.b16 %v417, %v415
  %v492 = vpack.c.b16 %v420, %v418
  %v493 = vpack.c.b16 %v421, %v419
  %v494 = vpack.c.b16 %v424, %v422
  %v495 = vpack.c.b16 %v425, %v423
  %v496 = vpack.c.b16 %v428, %v426
  %v497 = vpack.c.b16 %v429, %v427
  %v498 = vpack.c.b16 %v432, %v430
  %v499 = vpack.c.b16 %v433, %v431
  %v500 = vpack.c.b16 %v436, %v434
  %v501 = vpack.c.b16 %v437, %v435
  %v598 = vunpack.c.l.b16 %v214
  %v599 = vunpack.c.l.b16 %v215
  %v600 = vunpack.c.l.b16 %v216
  %v601 = vunpack.c.l.b16 %v217
  %v602 = vunpack.c.l.b16 %v218
  %v603 = vunpack.c.l.b16 %v219
  %v604 = vunpack.c.l.b16 %v220
  %v605 = vunpack.c.l.b16 %v221
  %v606 = vunpack.c.l.b16 %v222
  %v607 = vunpack.c.l.b16 %v223
  %v608 = vunpack.c.l.b16 %v224
  %v609 = vunpack.c.l.b16 %v225
  %v610 = vunpack.c.l.b16 %v226
  %v611 = vunpack.c.l.b16 %v227
  %v612 = vunpack.c.l.b16 %v228
  %v613 = vunpack.c.l.b16 %v229
  %v614 = vunpack.c.l.b16 %v230
  %v615 = vunpack.c.l.b16 %v231
  %v616 = vunpack.c.l.b16 %v232
  %v617 = vunpack.c.l.b16 %v233
  %v618 = vunpack.c.l.b16 %v234
  %v619 = vunpack.c.l.b16 %v235
  %v620 = vunpack.c.l.b16 %v236
  %v621 = vunpack.c.l.b16 %v237
  %v622 = vunpack.c.l.b16 %v238
  %v623 = vunpack.c.l.b16 %v239
  %v624 = vunpack.c.l.b16 %v240
  %v625 = vunpack.c.l.b16 %v241
  %v626 = vunpack.c.l.b16 %v242
  %v627 = vunpack.c.l.b16 %v243
  %v628 = vunpack.c.l.b16 %v244
  %v629 = vunpack.c.l.b16 %v245
  %v630 = vpack.c.b16 %v599, %v598
  %v631 = vpack.c.b16 %v601, %v600
  %v632 = vpack.c.b16 %v603, %v602
  %v633 = vpack.c.b16 %v605, %v604
  %v634 = vpack.c.b16 %v607, %v606
  %v635 = vpack.c.b16 %v609, %v608
  %v636 = vpack.c.b16 %v611, %v610
  %v637 = vpack.c.b16 %v613, %v612
  %v638 = vpack.c.b16 %v615, %v614
  %v639 = vpack.c.b16 %v617, %v616
  %v640 = vpack.c.b16 %v619, %v618
  %v641 = vpack.c.b16 %v621, %v620
  %v642 = vpack.c.b16 %v623, %v622
  %v643 = vpack.c.b16 %v625, %v624
  %v644 = vpack.c.b16 %v627, %v626
  %v645 = vpack.c.b16 %v629, %v628
  %662 = vmatprep.subr.bf16.mxu0 0
  %663 = vmatpush1.bf16.msra.mxu0 %v637
  %664 = vmatprep.subr.bf16.mxu0 0
  %665 = vmatpush1.bf16.msra.mxu0 %v636
  %666 = vmatprep.subr.bf16.mxu0 0
  %667 = vmatpush1.bf16.msra.mxu0 %v635
  %668 = vmatprep.subr.bf16.mxu0 0
  %669 = vmatpush1.bf16.msra.mxu0 %v634
  %670 = vmatprep.subr.bf16.mxu0 0
  %671 = vmatpush1.bf16.msra.mxu0 %v633
  %672 = vmatprep.subr.bf16.mxu0 0
  %673 = vmatpush1.bf16.msra.mxu0 %v632
  %674 = vmatprep.subr.bf16.mxu0 0
  %675 = vmatpush1.bf16.msra.mxu0 %v631
  %676 = vmatprep.subr.bf16.mxu0 0
  %677 = vmatpush1.bf16.msra.mxu0 %v630
  %678 = vmatprep.subr.bf16.mxu0 0
  %679 = vmatpush2.bf16.msra.mxu0 %v645
  %680 = vmatprep.subr.bf16.mxu0 0
  %681 = vmatpush2.bf16.msra.mxu0 %v644
  %682 = vmatprep.subr.bf16.mxu0 0
  %683 = vmatpush2.bf16.msra.mxu0 %v643
  %684 = vmatprep.subr.bf16.mxu0 0
  %685 = vmatpush2.bf16.msra.mxu0 %v642
  %686 = vmatprep.subr.bf16.mxu0 0
  %687 = vmatpush2.bf16.msra.mxu0 %v641
  %688 = vmatprep.subr.bf16.mxu0 0
  %689 = vmatpush2.bf16.msra.mxu0 %v640
  %690 = vmatprep.subr.bf16.mxu0 0
  %691 = vmatpush2.bf16.msra.mxu0 %v639
  %692 = vmatprep.subr.bf16.mxu0 0
  %693 = vmatpush2.bf16.msra.mxu0 %v638
  %694 = vmatprep.mubr.bf16.mxu0 %v439
  %695 = vmatmul.mubr.bf16.gmra.mxu0 %v438
  %v696 = vpop.f32.mrf.mxu0
  %v697 = vadd.f32 0.0, %v696
  %v698 = vpop.f32.mrf.mxu0
  %v699 = vpop.f32.mrf.mxu0
  %v700 = vadd.f32 0.0, %v699
  %v701 = vpop.f32.mrf.mxu0
  %702 = vmatprep.mubr.bf16.mxu0 %v441
  %703 = vmatmul.mubr.bf16.gmra.mxu0 %v440
  %v704 = vpop.f32.mrf.mxu0
  %v705 = vadd.f32 0.0, %v704
  %v706 = vpop.f32.mrf.mxu0
  %v707 = vpop.f32.mrf.mxu0
  %v708 = vadd.f32 0.0, %v707
  %v709 = vpop.f32.mrf.mxu0
  %710 = vmatprep.mubr.bf16.mxu0 %v443
  %711 = vmatmul.mubr.bf16.gmra.mxu0 %v442
  %v712 = vpop.f32.mrf.mxu0
  %v713 = vadd.f32 0.0, %v712
  %v714 = vpop.f32.mrf.mxu0
  %v715 = vpop.f32.mrf.mxu0
  %v716 = vadd.f32 0.0, %v715
  %v717 = vpop.f32.mrf.mxu0
  %718 = vmatprep.mubr.bf16.mxu0 %v445
  %719 = vmatmul.mubr.bf16.gmra.mxu0 %v444
  %v720 = vpop.f32.mrf.mxu0
  %v721 = vadd.f32 0.0, %v720
  %v722 = vpop.f32.mrf.mxu0
  %v723 = vpop.f32.mrf.mxu0
  %v724 = vadd.f32 0.0, %v723
  %v725 = vpop.f32.mrf.mxu0
  %726 = vmatprep.mubr.bf16.mxu0 %v447
  %727 = vmatmul.mubr.bf16.gmra.mxu0 %v446
  %v728 = vpop.f32.mrf.mxu0
  %v729 = vadd.f32 0.0, %v728
  %v730 = vpop.f32.mrf.mxu0
  %v731 = vpop.f32.mrf.mxu0
  %v732 = vadd.f32 0.0, %v731
  %v733 = vpop.f32.mrf.mxu0
  %734 = vmatprep.mubr.bf16.mxu0 %v449
  %735 = vmatmul.mubr.bf16.gmra.mxu0 %v448
  %v736 = vpop.f32.mrf.mxu0
  %v737 = vadd.f32 0.0, %v736
  %v738 = vpop.f32.mrf.mxu0
  %v739 = vpop.f32.mrf.mxu0
  %v740 = vadd.f32 0.0, %v739
  %v741 = vpop.f32.mrf.mxu0
  %742 = vmatprep.mubr.bf16.mxu0 %v451
  %743 = vmatmul.mubr.bf16.gmra.mxu0 %v450
  %v744 = vpop.f32.mrf.mxu0
  %v745 = vadd.f32 0.0, %v744
  %v746 = vpop.f32.mrf.mxu0
  %v747 = vpop.f32.mrf.mxu0
  %v748 = vadd.f32 0.0, %v747
  %v749 = vpop.f32.mrf.mxu0
  %750 = vmatprep.mubr.bf16.mxu0 %v453
  %751 = vmatmul.mubr.bf16.gmra.mxu0 %v452
  %v752 = vpop.f32.mrf.mxu0
  %v753 = vadd.f32 0.0, %v752
  %v754 = vpop.f32.mrf.mxu0
  %v755 = vpop.f32.mrf.mxu0
  %v756 = vadd.f32 0.0, %v755
  %v757 = vpop.f32.mrf.mxu0
  %758 = vmatprep.mubr.bf16.mxu0 %v455
  %759 = vmatmul.mubr.bf16.gmra.mxu0 %v454
  %v760 = vpop.f32.mrf.mxu0
  %v761 = vadd.f32 0.0, %v760
  %v762 = vpop.f32.mrf.mxu0
  %v763 = vpop.f32.mrf.mxu0
  %v764 = vadd.f32 0.0, %v763
  %v765 = vpop.f32.mrf.mxu0
  %766 = vmatprep.mubr.bf16.mxu0 %v457
  %767 = vmatmul.mubr.bf16.gmra.mxu0 %v456
  %v768 = vpop.f32.mrf.mxu0
  %v769 = vadd.f32 0.0, %v768
  %v770 = vpop.f32.mrf.mxu0
  %v771 = vpop.f32.mrf.mxu0
  %v772 = vadd.f32 0.0, %v771
  %v773 = vpop.f32.mrf.mxu0
  %774 = vmatprep.mubr.bf16.mxu0 %v459
  %775 = vmatmul.mubr.bf16.gmra.mxu0 %v458
  %v776 = vpop.f32.mrf.mxu0
  %v777 = vadd.f32 0.0, %v776
  %v778 = vpop.f32.mrf.mxu0
  %v779 = vpop.f32.mrf.mxu0
  %v780 = vadd.f32 0.0, %v779
  %v781 = vpop.f32.mrf.mxu0
  %782 = vmatprep.mubr.bf16.mxu0 %v461
  %783 = vmatmul.mubr.bf16.gmra.mxu0 %v460
  %v784 = vpop.f32.mrf.mxu0
  %v785 = vadd.f32 0.0, %v784
  %v786 = vpop.f32.mrf.mxu0
  %v787 = vpop.f32.mrf.mxu0
  %v788 = vadd.f32 0.0, %v787
  %v789 = vpop.f32.mrf.mxu0
  %790 = vmatprep.mubr.bf16.mxu0 %v463
  %791 = vmatmul.mubr.bf16.gmra.mxu0 %v462
  %v792 = vpop.f32.mrf.mxu0
  %v793 = vadd.f32 0.0, %v792
  %v794 = vpop.f32.mrf.mxu0
  %v795 = vpop.f32.mrf.mxu0
  %v796 = vadd.f32 0.0, %v795
  %v797 = vpop.f32.mrf.mxu0
  %798 = vmatprep.mubr.bf16.mxu0 %v465
  %799 = vmatmul.mubr.bf16.gmra.mxu0 %v464
  %v800 = vpop.f32.mrf.mxu0
  %v801 = vadd.f32 0.0, %v800
  %v802 = vpop.f32.mrf.mxu0
  %v803 = vpop.f32.mrf.mxu0
  %v804 = vadd.f32 0.0, %v803
  %v805 = vpop.f32.mrf.mxu0
  %806 = vmatprep.mubr.bf16.mxu0 %v467
  %807 = vmatmul.mubr.bf16.gmra.mxu0 %v466
  %v808 = vpop.f32.mrf.mxu0
  %v809 = vadd.f32 0.0, %v808
  %v810 = vpop.f32.mrf.mxu0
  %v811 = vpop.f32.mrf.mxu0
  %v812 = vadd.f32 0.0, %v811
  %v813 = vpop.f32.mrf.mxu0
  %814 = vmatprep.mubr.bf16.mxu0 %v469
  %815 = vmatmul.mubr.bf16.gmra.mxu0 %v468
  %v816 = vpop.f32.mrf.mxu0
  %v817 = vadd.f32 0.0, %v816
  %v818 = vpop.f32.mrf.mxu0
  %v819 = vpop.f32.mrf.mxu0
  %v820 = vadd.f32 0.0, %v819
  %v821 = vpop.f32.mrf.mxu0
  %822 = vmatprep.mubr.bf16.mxu0 %v471
  %823 = vmatmul.mubr.bf16.gmra.mxu0 %v470
  %v824 = vpop.f32.mrf.mxu0
  %v825 = vadd.f32 0.0, %v824
  %v826 = vpop.f32.mrf.mxu0
  %v827 = vpop.f32.mrf.mxu0
  %v828 = vadd.f32 0.0, %v827
  %v829 = vpop.f32.mrf.mxu0
  %830 = vmatprep.mubr.bf16.mxu0 %v473
  %831 = vmatmul.mubr.bf16.gmra.mxu0 %v472
  %v832 = vpop.f32.mrf.mxu0
  %v833 = vadd.f32 0.0, %v832
  %v834 = vpop.f32.mrf.mxu0
  %v835 = vpop.f32.mrf.mxu0
  %v836 = vadd.f32 0.0, %v835
  %v837 = vpop.f32.mrf.mxu0
  %838 = vmatprep.mubr.bf16.mxu0 %v475
  %839 = vmatmul.mubr.bf16.gmra.mxu0 %v474
  %v840 = vpop.f32.mrf.mxu0
  %v841 = vadd.f32 0.0, %v840
  %v842 = vpop.f32.mrf.mxu0
  %v843 = vpop.f32.mrf.mxu0
  %v844 = vadd.f32 0.0, %v843
  %v845 = vpop.f32.mrf.mxu0
  %846 = vmatprep.mubr.bf16.mxu0 %v477
  %847 = vmatmul.mubr.bf16.gmra.mxu0 %v476
  %v848 = vpop.f32.mrf.mxu0
  %v849 = vadd.f32 0.0, %v848
  %v850 = vpop.f32.mrf.mxu0
  %v851 = vpop.f32.mrf.mxu0
  %v852 = vadd.f32 0.0, %v851
  %v853 = vpop.f32.mrf.mxu0
  %854 = vmatprep.mubr.bf16.mxu0 %v479
  %855 = vmatmul.mubr.bf16.gmra.mxu0 %v478
  %v856 = vpop.f32.mrf.mxu0
  %v857 = vadd.f32 0.0, %v856
  %v858 = vpop.f32.mrf.mxu0
  %v859 = vpop.f32.mrf.mxu0
  %v860 = vadd.f32 0.0, %v859
  %v861 = vpop.f32.mrf.mxu0
  %862 = vmatprep.mubr.bf16.mxu0 %v481
  %863 = vmatmul.mubr.bf16.gmra.mxu0 %v480
  %v864 = vpop.f32.mrf.mxu0
  %v865 = vadd.f32 0.0, %v864
  %v866 = vpop.f32.mrf.mxu0
  %v867 = vpop.f32.mrf.mxu0
  %v868 = vadd.f32 0.0, %v867
  %v869 = vpop.f32.mrf.mxu0
  %870 = vmatprep.mubr.bf16.mxu0 %v483
  %871 = vmatmul.mubr.bf16.gmra.mxu0 %v482
  %v872 = vpop.f32.mrf.mxu0
  %v873 = vadd.f32 0.0, %v872
  %v874 = vpop.f32.mrf.mxu0
  %v875 = vpop.f32.mrf.mxu0
  %v876 = vadd.f32 0.0, %v875
  %v877 = vpop.f32.mrf.mxu0
  %878 = vmatprep.mubr.bf16.mxu0 %v485
  %879 = vmatmul.mubr.bf16.gmra.mxu0 %v484
  %v880 = vpop.f32.mrf.mxu0
  %v881 = vadd.f32 0.0, %v880
  %v882 = vpop.f32.mrf.mxu0
  %v883 = vpop.f32.mrf.mxu0
  %v884 = vadd.f32 0.0, %v883
  %v885 = vpop.f32.mrf.mxu0
  %886 = vmatprep.mubr.bf16.mxu0 %v487
  %887 = vmatmul.mubr.bf16.gmra.mxu0 %v486
  %v888 = vpop.f32.mrf.mxu0
  %v889 = vadd.f32 0.0, %v888
  %v890 = vpop.f32.mrf.mxu0
  %v891 = vpop.f32.mrf.mxu0
  %v892 = vadd.f32 0.0, %v891
  %v893 = vpop.f32.mrf.mxu0
  %894 = vmatprep.mubr.bf16.mxu0 %v489
  %895 = vmatmul.mubr.bf16.gmra.mxu0 %v488
  %v896 = vpop.f32.mrf.mxu0
  %v897 = vadd.f32 0.0, %v896
  %v898 = vpop.f32.mrf.mxu0
  %v899 = vpop.f32.mrf.mxu0
  %v900 = vadd.f32 0.0, %v899
  %v901 = vpop.f32.mrf.mxu0
  %902 = vmatprep.mubr.bf16.mxu0 %v491
  %903 = vmatmul.mubr.bf16.gmra.mxu0 %v490
  %v904 = vpop.f32.mrf.mxu0
  %v905 = vadd.f32 0.0, %v904
  %v906 = vpop.f32.mrf.mxu0
  %v907 = vpop.f32.mrf.mxu0
  %v908 = vadd.f32 0.0, %v907
  %v909 = vpop.f32.mrf.mxu0
  %910 = vmatprep.mubr.bf16.mxu0 %v493
  %911 = vmatmul.mubr.bf16.gmra.mxu0 %v492
  %v912 = vpop.f32.mrf.mxu0
  %v913 = vadd.f32 0.0, %v912
  %v914 = vpop.f32.mrf.mxu0
  %v915 = vpop.f32.mrf.mxu0
  %v916 = vadd.f32 0.0, %v915
  %v917 = vpop.f32.mrf.mxu0
  %918 = vmatprep.mubr.bf16.mxu0 %v495
  %919 = vmatmul.mubr.bf16.gmra.mxu0 %v494
  %v920 = vpop.f32.mrf.mxu0
  %v921 = vadd.f32 0.0, %v920
  %v922 = vpop.f32.mrf.mxu0
  %v923 = vpop.f32.mrf.mxu0
  %v924 = vadd.f32 0.0, %v923
  %v925 = vpop.f32.mrf.mxu0
  %926 = vmatprep.mubr.bf16.mxu0 %v497
  %927 = vmatmul.mubr.bf16.gmra.mxu0 %v496
  %v928 = vpop.f32.mrf.mxu0
  %v929 = vadd.f32 0.0, %v928
  %v930 = vpop.f32.mrf.mxu0
  %v931 = vpop.f32.mrf.mxu0
  %v932 = vadd.f32 0.0, %v931
  %v933 = vpop.f32.mrf.mxu0
  %934 = vmatprep.mubr.bf16.mxu0 %v499
  %935 = vmatmul.mubr.bf16.gmra.mxu0 %v498
  %v936 = vpop.f32.mrf.mxu0
  %v937 = vadd.f32 0.0, %v936
  %v938 = vpop.f32.mrf.mxu0
  %v939 = vpop.f32.mrf.mxu0
  %v940 = vadd.f32 0.0, %v939
  %v941 = vpop.f32.mrf.mxu0
  %942 = vmatprep.mubr.bf16.mxu0 %v501
  %943 = vmatmul.mubr.bf16.gmra.mxu0 %v500
  %v944 = vpop.f32.mrf.mxu0
  %v945 = vadd.f32 0.0, %v944
  %v946 = vpop.f32.mrf.mxu0
  %v947 = vpop.f32.mrf.mxu0
  %v948 = vadd.f32 0.0, %v947
  %v949 = vpop.f32.mrf.mxu0
  %950 = vdwg.mxu0
  %v951 = vadd.f32 %v86, %v697
  %v952 = vadd.f32 %v87, %v700
  %v953 = vadd.f32 %v88, %v705
  %v954 = vadd.f32 %v89, %v708
  %v955 = vadd.f32 %v90, %v713
  %v956 = vadd.f32 %v91, %v716
  %v957 = vadd.f32 %v92, %v721
  %v958 = vadd.f32 %v93, %v724
  %v959 = vadd.f32 %v94, %v729
  %v960 = vadd.f32 %v95, %v732
  %v961 = vadd.f32 %v96, %v737
  %v962 = vadd.f32 %v97, %v740
  %v963 = vadd.f32 %v98, %v745
  %v964 = vadd.f32 %v99, %v748
  %v965 = vadd.f32 %v100, %v753
  %v966 = vadd.f32 %v101, %v756
  %v967 = vadd.f32 %v102, %v761
  %v968 = vadd.f32 %v103, %v764
  %v969 = vadd.f32 %v104, %v769
  %v970 = vadd.f32 %v105, %v772
  %v971 = vadd.f32 %v106, %v777
  %v972 = vadd.f32 %v107, %v780
  %v973 = vadd.f32 %v108, %v785
  %v974 = vadd.f32 %v109, %v788
  %v975 = vadd.f32 %v110, %v793
  %v976 = vadd.f32 %v111, %v796
  %v977 = vadd.f32 %v112, %v801
  %v978 = vadd.f32 %v113, %v804
  %v979 = vadd.f32 %v114, %v809
  %v980 = vadd.f32 %v115, %v812
  %v981 = vadd.f32 %v116, %v817
  %v982 = vadd.f32 %v117, %v820
  %v983 = vadd.f32 %v118, %v825
  %v984 = vadd.f32 %v119, %v828
  %v985 = vadd.f32 %v120, %v833
  %v986 = vadd.f32 %v121, %v836
  %v987 = vadd.f32 %v122, %v841
  %v988 = vadd.f32 %v123, %v844
  %v989 = vadd.f32 %v124, %v849
  %v990 = vadd.f32 %v125, %v852
  %v991 = vadd.f32 %v126, %v857
  %v992 = vadd.f32 %v127, %v860
  %v993 = vadd.f32 %v128, %v865
  %v994 = vadd.f32 %v129, %v868
  %v995 = vadd.f32 %v130, %v873
  %v996 = vadd.f32 %v131, %v876
  %v997 = vadd.f32 %v132, %v881
  %v998 = vadd.f32 %v133, %v884
  %v999 = vadd.f32 %v134, %v889
  %v1000 = vadd.f32 %v135, %v892
  %v1001 = vadd.f32 %v136, %v897
  %v1002 = vadd.f32 %v137, %v900
  %v1003 = vadd.f32 %v138, %v905
  %v1004 = vadd.f32 %v139, %v908
  %v1005 = vadd.f32 %v140, %v913
  %v1006 = vadd.f32 %v141, %v916
  %v1007 = vadd.f32 %v142, %v921
  %v1008 = vadd.f32 %v143, %v924
  %v1009 = vadd.f32 %v144, %v929
  %v1010 = vadd.f32 %v145, %v932
  %v1011 = vadd.f32 %v146, %v937
  %v1012 = vadd.f32 %v147, %v940
  %v1013 = vadd.f32 %v148, %v945
  %v1014 = vadd.f32 %v149, %v948
  %1015 = vst [vmem:[#allocation2] sm:$0xff] %v951
  %1016 = vst [vmem:[#allocation2 + $0x8] sm:$0xff] %v952
  %1017 = vst [vmem:[#allocation2 + $0x10] sm:$0xff] %v953
  %1018 = vst [vmem:[#allocation2 + $0x18] sm:$0xff] %v954
  %1019 = vst [vmem:[#allocation2 + $0x20] sm:$0xff] %v955
  %1020 = vst [vmem:[#allocation2 + $0x28] sm:$0xff] %v956
  %1021 = vst [vmem:[#allocation2 + $0x30] sm:$0xff] %v957
  %1022 = vst [vmem:[#allocation2 + $0x38] sm:$0xff] %v958
  %1023 = vst [vmem:[#allocation2 + $0x40] sm:$0xff] %v959
  %1024 = vst [vmem:[#allocation2 + $0x48] sm:$0xff] %v960
  %1025 = vst [vmem:[#allocation2 + $0x50] sm:$0xff] %v961
  %1026 = vst [vmem:[#allocation2 + $0x58] sm:$0xff] %v962
  %1027 = vst [vmem:[#allocation2 + $0x60] sm:$0xff] %v963
  %1028 = vst [vmem:[#allocation2 + $0x68] sm:$0xff] %v964
  %1029 = vst [vmem:[#allocation2 + $0x70] sm:$0xff] %v965
  %1030 = vst [vmem:[#allocation2 + $0x78] sm:$0xff] %v966
  %1031 = vst [vmem:[#allocation2 + $0x80] sm:$0xff] %v967
  %1032 = vst [vmem:[#allocation2 + $0x88] sm:$0xff] %v968
  %1033 = vst [vmem:[#allocation2 + $0x90] sm:$0xff] %v969
  %1034 = vst [vmem:[#allocation2 + $0x98] sm:$0xff] %v970
  %1035 = vst [vmem:[#allocation2 + $0xa0] sm:$0xff] %v971
  %1036 = vst [vmem:[#allocation2 + $0xa8] sm:$0xff] %v972
  %1037 = vst [vmem:[#allocation2 + $0xb0] sm:$0xff] %v973
  %1038 = vst [vmem:[#allocation2 + $0xb8] sm:$0xff] %v974
  %1039 = vst [vmem:[#allocation2 + $0xc0] sm:$0xff] %v975
  %1040 = vst [vmem:[#allocation2 + $0xc8] sm:$0xff] %v976
  %1041 = vst [vmem:[#allocation2 + $0xd0] sm:$0xff] %v977
  %1042 = vst [vmem:[#allocation2 + $0xd8] sm:$0xff] %v978
  %1043 = vst [vmem:[#allocation2 + $0xe0] sm:$0xff] %v979
  %1044 = vst [vmem:[#allocation2 + $0xe8] sm:$0xff] %v980
  %1045 = vst [vmem:[#allocation2 + $0xf0] sm:$0xff] %v981
  %1046 = vst [vmem:[#allocation2 + $0xf8] sm:$0xff] %v982
  %1047 = vst [vmem:[#allocation2 + $0x100] sm:$0xff] %v983
  %1048 = vst [vmem:[#allocation2 + $0x108] sm:$0xff] %v984
  %1049 = vst [vmem:[#allocation2 + $0x110] sm:$0xff] %v985
  %1050 = vst [vmem:[#allocation2 + $0x118] sm:$0xff] %v986
  %1051 = vst [vmem:[#allocation2 + $0x120] sm:$0xff] %v987
  %1052 = vst [vmem:[#allocation2 + $0x128] sm:$0xff] %v988
  %1053 = vst [vmem:[#allocation2 + $0x130] sm:$0xff] %v989
  %1054 = vst [vmem:[#allocation2 + $0x138] sm:$0xff] %v990
  %1055 = vst [vmem:[#allocation2 + $0x140] sm:$0xff] %v991
  %1056 = vst [vmem:[#allocation2 + $0x148] sm:$0xff] %v992
  %1057 = vst [vmem:[#allocation2 + $0x150] sm:$0xff] %v993
  %1058 = vst [vmem:[#allocation2 + $0x158] sm:$0xff] %v994
  %1059 = vst [vmem:[#allocation2 + $0x160] sm:$0xff] %v995
  %1060 = vst [vmem:[#allocation2 + $0x168] sm:$0xff] %v996
  %1061 = vst [vmem:[#allocation2 + $0x170] sm:$0xff] %v997
  %1062 = vst [vmem:[#allocation2 + $0x178] sm:$0xff] %v998
  %1063 = vst [vmem:[#allocation2 + $0x180] sm:$0xff] %v999
  %1064 = vst [vmem:[#allocation2 + $0x188] sm:$0xff] %v1000
  %1065 = vst [vmem:[#allocation2 + $0x190] sm:$0xff] %v1001
  %1066 = vst [vmem:[#allocation2 + $0x198] sm:$0xff] %v1002
  %1067 = vst [vmem:[#allocation2 + $0x1a0] sm:$0xff] %v1003
  %1068 = vst [vmem:[#allocation2 + $0x1a8] sm:$0xff] %v1004
  %1069 = vst [vmem:[#allocation2 + $0x1b0] sm:$0xff] %v1005
  %1070 = vst [vmem:[#allocation2 + $0x1b8] sm:$0xff] %v1006
  %1071 = vst [vmem:[#allocation2 + $0x1c0] sm:$0xff] %v1007
  %1072 = vst [vmem:[#allocation2 + $0x1c8] sm:$0xff] %v1008
  %1073 = vst [vmem:[#allocation2 + $0x1d0] sm:$0xff] %v1009
  %1074 = vst [vmem:[#allocation2 + $0x1d8] sm:$0xff] %v1010
  %1075 = vst [vmem:[#allocation2 + $0x1e0] sm:$0xff] %v1011
  %1076 = vst [vmem:[#allocation2 + $0x1e8] sm:$0xff] %v1012
  %1077 = vst [vmem:[#allocation2 + $0x1f0] sm:$0xff] %v1013
  %1078 = vst [vmem:[#allocation2 + $0x1f8] sm:$0xff] %v1014
  // Predicated region
  $region22: #{leafnet_forward.16} parent=0 // pred_check
    %p1079 = pneg %p18
  $region23: #{leafnet_forward.16} parent=0 // pred_check_branch
    %1081 = sbr.rel (%p1079) target = $region25
  $region24: #{leafnet_forward.16} parent=0 // pred_region
    %v1082 = vld [vmem:[#allocation2] sm:$0xff]
    %v1083 = vld [vmem:[#allocation2 + $0x8] sm:$0xff]
    %v1084 = vld [vmem:[#allocation2 + $0x10] sm:$0xff]
    %v1085 = vld [vmem:[#allocation2 + $0x18] sm:$0xff]
    %v1086 = vld [vmem:[#allocation2 + $0x20] sm:$0xff]
    %v1087 = vld [vmem:[#allocation2 + $0x28] sm:$0xff]
    %v1088 = vld [vmem:[#allocation2 + $0x30] sm:$0xff]
    %v1089 = vld [vmem:[#allocation2 + $0x38] sm:$0xff]
    %v1090 = vld [vmem:[#allocation2 + $0x40] sm:$0xff]
    %v1091 = vld [vmem:[#allocation2 + $0x48] sm:$0xff]
    %v1092 = vld [vmem:[#allocation2 + $0x50] sm:$0xff]
    %v1093 = vld [vmem:[#allocation2 + $0x58] sm:$0xff]
    %v1094 = vld [vmem:[#allocation2 + $0x60] sm:$0xff]
    %v1095 = vld [vmem:[#allocation2 + $0x68] sm:$0xff]
    %v1096 = vld [vmem:[#allocation2 + $0x70] sm:$0xff]
    %v1097 = vld [vmem:[#allocation2 + $0x78] sm:$0xff]
    %v1098 = vld [vmem:[#allocation2 + $0x80] sm:$0xff]
    %v1099 = vld [vmem:[#allocation2 + $0x88] sm:$0xff]
    %v1100 = vld [vmem:[#allocation2 + $0x90] sm:$0xff]
    %v1101 = vld [vmem:[#allocation2 + $0x98] sm:$0xff]
    %v1102 = vld [vmem:[#allocation2 + $0xa0] sm:$0xff]
    %v1103 = vld [vmem:[#allocation2 + $0xa8] sm:$0xff]
    %v1104 = vld [vmem:[#allocation2 + $0xb0] sm:$0xff]
    %v1105 = vld [vmem:[#allocation2 + $0xb8] sm:$0xff]
    %v1106 = vld [vmem:[#allocation2 + $0xc0] sm:$0xff]
    %v1107 = vld [vmem:[#allocation2 + $0xc8] sm:$0xff]
    %v1108 = vld [vmem:[#allocation2 + $0xd0] sm:$0xff]
    %v1109 = vld [vmem:[#allocation2 + $0xd8] sm:$0xff]
    %v1110 = vld [vmem:[#allocation2 + $0xe0] sm:$0xff]
    %v1111 = vld [vmem:[#allocation2 + $0xe8] sm:$0xff]
    %v1112 = vld [vmem:[#allocation2 + $0xf0] sm:$0xff]
    %v1113 = vld [vmem:[#allocation2 + $0xf8] sm:$0xff]
    %v1114 = vld [vmem:[#allocation2 + $0x100] sm:$0xff]
    %v1115 = vld [vmem:[#allocation2 + $0x108] sm:$0xff]
    %v1116 = vld [vmem:[#allocation2 + $0x110] sm:$0xff]
    %v1117 = vld [vmem:[#allocation2 + $0x118] sm:$0xff]
    %v1118 = vld [vmem:[#allocation2 + $0x120] sm:$0xff]
    %v1119 = vld [vmem:[#allocation2 + $0x128] sm:$0xff]
    %v1120 = vld [vmem:[#allocation2 + $0x130] sm:$0xff]
    %v1121 = vld [vmem:[#allocation2 + $0x138] sm:$0xff]
    %v1122 = vld [vmem:[#allocation2 + $0x140] sm:$0xff]
    %v1123 = vld [vmem:[#allocation2 + $0x148] sm:$0xff]
    %v1124 = vld [vmem:[#allocation2 + $0x150] sm:$0xff]
    %v1125 = vld [vmem:[#allocation2 + $0x158] sm:$0xff]
    %v1126 = vld [vmem:[#allocation2 + $0x160] sm:$0xff]
    %v1127 = vld [vmem:[#allocation2 + $0x168] sm:$0xff]
    %v1128 = vld [vmem:[#allocation2 + $0x170] sm:$0xff]
    %v1129 = vld [vmem:[#allocation2 + $0x178] sm:$0xff]
    %v1130 = vld [vmem:[#allocation2 + $0x180] sm:$0xff]
    %v1131 = vld [vmem:[#allocation2 + $0x188] sm:$0xff]
    %v1132 = vld [vmem:[#allocation2 + $0x190] sm:$0xff]
    %v1133 = vld [vmem:[#allocation2 + $0x198] sm:$0xff]
    %v1134 = vld [vmem:[#allocation2 + $0x1a0] sm:$0xff]
    %v1135 = vld [vmem:[#allocation2 + $0x1a8] sm:$0xff]
    %v1136 = vld [vmem:[#allocation2 + $0x1b0] sm:$0xff]
    %v1137 = vld [vmem:[#allocation2 + $0x1b8] sm:$0xff]
    %v1138 = vld [vmem:[#allocation2 + $0x1c0] sm:$0xff]
    %v1139 = vld [vmem:[#allocation2 + $0x1c8] sm:$0xff]
    %v1140 = vld [vmem:[#allocation2 + $0x1d0] sm:$0xff]
    %v1141 = vld [vmem:[#allocation2 + $0x1d8] sm:$0xff]
    %v1142 = vld [vmem:[#allocation2 + $0x1e0] sm:$0xff]
    %v1143 = vld [vmem:[#allocation2 + $0x1e8] sm:$0xff]
    %v1144 = vld [vmem:[#allocation2 + $0x1f0] sm:$0xff]
    %v1145 = vld [vmem:[#allocation2 + $0x1f8] sm:$0xff]
    %v1146 = vld [vmem:[%s2] sm:$0x1]
    %v1148 = vlaneseq
    %v1149 = vshrl.u32 %v1148, 7
    %v1150 = vsub.s32 0, %v1149
    %v1151 = vrot.slane %v1146, %v1150
    %v1153 = vmul.f32 %v1082, %v1151
    %v1154 = vmul.f32 %v1083, %v1151
    %v1155 = vmul.f32 %v1084, %v1151
    %v1156 = vmul.f32 %v1085, %v1151
    %v1157 = vmul.f32 %v1086, %v1151
    %v1158 = vmul.f32 %v1087, %v1151
    %v1159 = vmul.f32 %v1088, %v1151
    %v1160 = vmul.f32 %v1089, %v1151
    %v1161 = vmul.f32 %v1090, %v1151
    %v1162 = vmul.f32 %v1091, %v1151
    %v1163 = vmul.f32 %v1092, %v1151
    %v1164 = vmul.f32 %v1093, %v1151
    %v1165 = vmul.f32 %v1094, %v1151
    %v1166 = vmul.f32 %v1095, %v1151
    %v1167 = vmul.f32 %v1096, %v1151
    %v1168 = vmul.f32 %v1097, %v1151
    %v1169 = vmul.f32 %v1098, %v1151
    %v1170 = vmul.f32 %v1099, %v1151
    %v1171 = vmul.f32 %v1100, %v1151
    %v1172 = vmul.f32 %v1101, %v1151
    %v1173 = vmul.f32 %v1102, %v1151
    %v1174 = vmul.f32 %v1103, %v1151
    %v1175 = vmul.f32 %v1104, %v1151
    %v1176 = vmul.f32 %v1105, %v1151
    %v1177 = vmul.f32 %v1106, %v1151
    %v1178 = vmul.f32 %v1107, %v1151
    %v1179 = vmul.f32 %v1108, %v1151
    %v1180 = vmul.f32 %v1109, %v1151
    %v1181 = vmul.f32 %v1110, %v1151
    %v1182 = vmul.f32 %v1111, %v1151
    %v1183 = vmul.f32 %v1112, %v1151
    %v1184 = vmul.f32 %v1113, %v1151
    %v1185 = vmul.f32 %v1114, %v1151
    %v1186 = vmul.f32 %v1115, %v1151
    %v1187 = vmul.f32 %v1116, %v1151
    %v1188 = vmul.f32 %v1117, %v1151
    %v1189 = vmul.f32 %v1118, %v1151
    %v1190 = vmul.f32 %v1119, %v1151
    %v1191 = vmul.f32 %v1120, %v1151
    %v1192 = vmul.f32 %v1121, %v1151
    %v1193 = vmul.f32 %v1122, %v1151
    %v1194 = vmul.f32 %v1123, %v1151
    %v1195 = vmul.f32 %v1124, %v1151
    %v1196 = vmul.f32 %v1125, %v1151
    %v1197 = vmul.f32 %v1126, %v1151
    %v1198 = vmul.f32 %v1127, %v1151
    %v1199 = vmul.f32 %v1128, %v1151
    %v1200 = vmul.f32 %v1129, %v1151
    %v1201 = vmul.f32 %v1130, %v1151
    %v1202 = vmul.f32 %v1131, %v1151
    %v1203 = vmul.f32 %v1132, %v1151
    %v1204 = vmul.f32 %v1133, %v1151
    %v1205 = vmul.f32 %v1134, %v1151
    %v1206 = vmul.f32 %v1135, %v1151
    %v1207 = vmul.f32 %v1136, %v1151
    %v1208 = vmul.f32 %v1137, %v1151
    %v1209 = vmul.f32 %v1138, %v1151
    %v1210 = vmul.f32 %v1139, %v1151
    %v1211 = vmul.f32 %v1140, %v1151
    %v1212 = vmul.f32 %v1141, %v1151
    %v1213 = vmul.f32 %v1142, %v1151
    %v1214 = vmul.f32 %v1143, %v1151
    %v1215 = vmul.f32 %v1144, %v1151
    %v1216 = vmul.f32 %v1145, %v1151
    %v1217 = vld [vmem:[%s3] sm:$0x1]
    %v1219 = vlaneseq
    %v1220 = vshrl.u32 %v1219, 7
    %v1221 = vsub.s32 0, %v1220
    %v1222 = vrot.slane %v1217, %v1221
    %v1224 = vadd.f32 %v1153, %v1222
    %v1225 = vadd.f32 %v1154, %v1222
    %v1226 = vadd.f32 %v1155, %v1222
    %v1227 = vadd.f32 %v1156, %v1222
    %v1228 = vadd.f32 %v1157, %v1222
    %v1229 = vadd.f32 %v1158, %v1222
    %v1230 = vadd.f32 %v1159, %v1222
    %v1231 = vadd.f32 %v1160, %v1222
    %v1232 = vadd.f32 %v1161, %v1222
    %v1233 = vadd.f32 %v1162, %v1222
    %v1234 = vadd.f32 %v1163, %v1222
    %v1235 = vadd.f32 %v1164, %v1222
    %v1236 = vadd.f32 %v1165, %v1222
    %v1237 = vadd.f32 %v1166, %v1222
    %v1238 = vadd.f32 %v1167, %v1222
    %v1239 = vadd.f32 %v1168, %v1222
    %v1240 = vadd.f32 %v1169, %v1222
    %v1241 = vadd.f32 %v1170, %v1222
    %v1242 = vadd.f32 %v1171, %v1222
    %v1243 = vadd.f32 %v1172, %v1222
    %v1244 = vadd.f32 %v1173, %v1222
    %v1245 = vadd.f32 %v1174, %v1222
    %v1246 = vadd.f32 %v1175, %v1222
    %v1247 = vadd.f32 %v1176, %v1222
    %v1248 = vadd.f32 %v1177, %v1222
    %v1249 = vadd.f32 %v1178, %v1222
    %v1250 = vadd.f32 %v1179, %v1222
    %v1251 = vadd.f32 %v1180, %v1222
    %v1252 = vadd.f32 %v1181, %v1222
    %v1253 = vadd.f32 %v1182, %v1222
    %v1254 = vadd.f32 %v1183, %v1222
    %v1255 = vadd.f32 %v1184, %v1222
    %v1256 = vadd.f32 %v1185, %v1222
    %v1257 = vadd.f32 %v1186, %v1222
    %v1258 = vadd.f32 %v1187, %v1222
    %v1259 = vadd.f32 %v1188, %v1222
    %v1260 = vadd.f32 %v1189, %v1222
    %v1261 = vadd.f32 %v1190, %v1222
    %v1262 = vadd.f32 %v1191, %v1222
    %v1263 = vadd.f32 %v1192, %v1222
    %v1264 = vadd.f32 %v1193, %v1222
    %v1265 = vadd.f32 %v1194, %v1222
    %v1266 = vadd.f32 %v1195, %v1222
    %v1267 = vadd.f32 %v1196, %v1222
    %v1268 = vadd.f32 %v1197, %v1222
    %v1269 = vadd.f32 %v1198, %v1222
    %v1270 = vadd.f32 %v1199, %v1222
    %v1271 = vadd.f32 %v1200, %v1222
    %v1272 = vadd.f32 %v1201, %v1222
    %v1273 = vadd.f32 %v1202, %v1222
    %v1274 = vadd.f32 %v1203, %v1222
    %v1275 = vadd.f32 %v1204, %v1222
    %v1276 = vadd.f32 %v1205, %v1222
    %v1277 = vadd.f32 %v1206, %v1222
    %v1278 = vadd.f32 %v1207, %v1222
    %v1279 = vadd.f32 %v1208, %v1222
    %v1280 = vadd.f32 %v1209, %v1222
    %v1281 = vadd.f32 %v1210, %v1222
    %v1282 = vadd.f32 %v1211, %v1222
    %v1283 = vadd.f32 %v1212, %v1222
    %v1284 = vadd.f32 %v1213, %v1222
    %v1285 = vadd.f32 %v1214, %v1222
    %v1286 = vadd.f32 %v1215, %v1222
    %v1287 = vadd.f32 %v1216, %v1222
    %v1288 = vmax.f32 %v1224, 0.0
    %v1289 = vmax.f32 %v1225, 0.0
    %v1290 = vmax.f32 %v1226, 0.0
    %v1291 = vmax.f32 %v1227, 0.0
    %v1292 = vmax.f32 %v1228, 0.0
    %v1293 = vmax.f32 %v1229, 0.0
    %v1294 = vmax.f32 %v1230, 0.0
    %v1295 = vmax.f32 %v1231, 0.0
    %v1296 = vmax.f32 %v1232, 0.0
    %v1297 = vmax.f32 %v1233, 0.0
    %v1298 = vmax.f32 %v1234, 0.0
    %v1299 = vmax.f32 %v1235, 0.0
    %v1300 = vmax.f32 %v1236, 0.0
    %v1301 = vmax.f32 %v1237, 0.0
    %v1302 = vmax.f32 %v1238, 0.0
    %v1303 = vmax.f32 %v1239, 0.0
    %v1304 = vmax.f32 %v1240, 0.0
    %v1305 = vmax.f32 %v1241, 0.0
    %v1306 = vmax.f32 %v1242, 0.0
    %v1307 = vmax.f32 %v1243, 0.0
    %v1308 = vmax.f32 %v1244, 0.0
    %v1309 = vmax.f32 %v1245, 0.0
    %v1310 = vmax.f32 %v1246, 0.0
    %v1311 = vmax.f32 %v1247, 0.0
    %v1312 = vmax.f32 %v1248, 0.0
    %v1313 = vmax.f32 %v1249, 0.0
    %v1314 = vmax.f32 %v1250, 0.0
    %v1315 = vmax.f32 %v1251, 0.0
    %v1316 = vmax.f32 %v1252, 0.0
    %v1317 = vmax.f32 %v1253, 0.0
    %v1318 = vmax.f32 %v1254, 0.0
    %v1319 = vmax.f32 %v1255, 0.0
    %v1320 = vmax.f32 %v1256, 0.0
    %v1321 = vmax.f32 %v1257, 0.0
    %v1322 = vmax.f32 %v1258, 0.0
    %v1323 = vmax.f32 %v1259, 0.0
    %v1324 = vmax.f32 %v1260, 0.0
    %v1325 = vmax.f32 %v1261, 0.0
    %v1326 = vmax.f32 %v1262, 0.0
    %v1327 = vmax.f32 %v1263, 0.0
    %v1328 = vmax.f32 %v1264, 0.0
    %v1329 = vmax.f32 %v1265, 0.0
    %v1330 = vmax.f32 %v1266, 0.0
    %v1331 = vmax.f32 %v1267, 0.0
    %v1332 = vmax.f32 %v1268, 0.0
    %v1333 = vmax.f32 %v1269, 0.0
    %v1334 = vmax.f32 %v1270, 0.0
    %v1335 = vmax.f32 %v1271, 0.0
    %v1336 = vmax.f32 %v1272, 0.0
    %v1337 = vmax.f32 %v1273, 0.0
    %v1338 = vmax.f32 %v1274, 0.0
    %v1339 = vmax.f32 %v1275, 0.0
    %v1340 = vmax.f32 %v1276, 0.0
    %v1341 = vmax.f32 %v1277, 0.0
    %v1342 = vmax.f32 %v1278, 0.0
    %v1343 = vmax.f32 %v1279, 0.0
    %v1344 = vmax.f32 %v1280, 0.0
    %v1345 = vmax.f32 %v1281, 0.0
    %v1346 = vmax.f32 %v1282, 0.0
    %v1347 = vmax.f32 %v1283, 0.0
    %v1348 = vmax.f32 %v1284, 0.0
    %v1349 = vmax.f32 %v1285, 0.0
    %v1350 = vmax.f32 %v1286, 0.0
    %v1351 = vmax.f32 %v1287, 0.0
    %v1352 = vpack.c.bf16 %v1289, %v1288
    %v1353 = vpack.c.bf16 %v1291, %v1290
    %v1354 = vpack.c.bf16 %v1293, %v1292
    %v1355 = vpack.c.bf16 %v1295, %v1294
    %v1356 = vpack.c.bf16 %v1297, %v1296
    %v1357 = vpack.c.bf16 %v1299, %v1298
    %v1358 = vpack.c.bf16 %v1301, %v1300
    %v1359 = vpack.c.bf16 %v1303, %v1302
    %v1360 = vpack.c.bf16 %v1305, %v1304
    %v1361 = vpack.c.bf16 %v1307, %v1306
    %v1362 = vpack.c.bf16 %v1309, %v1308
    %v1363 = vpack.c.bf16 %v1311, %v1310
    %v1364 = vpack.c.bf16 %v1313, %v1312
    %v1365 = vpack.c.bf16 %v1315, %v1314
    %v1366 = vpack.c.bf16 %v1317, %v1316
    %v1367 = vpack.c.bf16 %v1319, %v1318
    %v1368 = vpack.c.bf16 %v1321, %v1320
    %v1369 = vpack.c.bf16 %v1323, %v1322
    %v1370 = vpack.c.bf16 %v1325, %v1324
    %v1371 = vpack.c.bf16 %v1327, %v1326
    %v1372 = vpack.c.bf16 %v1329, %v1328
    %v1373 = vpack.c.bf16 %v1331, %v1330
    %v1374 = vpack.c.bf16 %v1333, %v1332
    %v1375 = vpack.c.bf16 %v1335, %v1334
    %v1376 = vpack.c.bf16 %v1337, %v1336
    %v1377 = vpack.c.bf16 %v1339, %v1338
    %v1378 = vpack.c.bf16 %v1341, %v1340
    %v1379 = vpack.c.bf16 %v1343, %v1342
    %v1380 = vpack.c.bf16 %v1345, %v1344
    %v1381 = vpack.c.bf16 %v1347, %v1346
    %v1382 = vpack.c.bf16 %v1349, %v1348
    %v1383 = vpack.c.bf16 %v1351, %v1350
    %v1416 = vunpack.c.l.b16 %v1352
    %v1417 = vunpack.c.h.b16 %v1352
    %v1418 = vunpack.c.l.b16 %v1353
    %v1419 = vunpack.c.h.b16 %v1353
    %v1420 = vunpack.c.l.b16 %v1354
    %v1421 = vunpack.c.h.b16 %v1354
    %v1422 = vunpack.c.l.b16 %v1355
    %v1423 = vunpack.c.h.b16 %v1355
    %v1424 = vunpack.c.l.b16 %v1356
    %v1425 = vunpack.c.h.b16 %v1356
    %v1426 = vunpack.c.l.b16 %v1357
    %v1427 = vunpack.c.h.b16 %v1357
    %v1428 = vunpack.c.l.b16 %v1358
    %v1429 = vunpack.c.h.b16 %v1358
    %v1430 = vunpack.c.l.b16 %v1359
    %v1431 = vunpack.c.h.b16 %v1359
    %v1432 = vunpack.c.l.b16 %v1360
    %v1433 = vunpack.c.h.b16 %v1360
    %v1434 = vunpack.c.l.b16 %v1361
    %v1435 = vunpack.c.h.b16 %v1361
    %v1436 = vunpack.c.l.b16 %v1362
    %v1437 = vunpack.c.h.b16 %v1362
    %v1438 = vunpack.c.l.b16 %v1363
    %v1439 = vunpack.c.h.b16 %v1363
    %v1440 = vunpack.c.l.b16 %v1364
    %v1441 = vunpack.c.h.b16 %v1364
    %v1442 = vunpack.c.l.b16 %v1365
    %v1443 = vunpack.c.h.b16 %v1365
    %v1444 = vunpack.c.l.b16 %v1366
    %v1445 = vunpack.c.h.b16 %v1366
    %v1446 = vunpack.c.l.b16 %v1367
    %v1447 = vunpack.c.h.b16 %v1367
    %v1448 = vunpack.c.l.b16 %v1368
    %v1449 = vunpack.c.h.b16 %v1368
    %v1450 = vunpack.c.l.b16 %v1369
    %v1451 = vunpack.c.h.b16 %v1369
    %v1452 = vunpack.c.l.b16 %v1370
    %v1453 = vunpack.c.h.b16 %v1370
    %v1454 = vunpack.c.l.b16 %v1371
    %v1455 = vunpack.c.h.b16 %v1371
    %v1456 = vunpack.c.l.b16 %v1372
    %v1457 = vunpack.c.h.b16 %v1372
    %v1458 = vunpack.c.l.b16 %v1373
    %v1459 = vunpack.c.h.b16 %v1373
    %v1460 = vunpack.c.l.b16 %v1374
    %v1461 = vunpack.c.h.b16 %v1374
    %v1462 = vunpack.c.l.b16 %v1375
    %v1463 = vunpack.c.h.b16 %v1375
    %v1464 = vunpack.c.l.b16 %v1376
    %v1465 = vunpack.c.h.b16 %v1376
    %v1466 = vunpack.c.l.b16 %v1377
    %v1467 = vunpack.c.h.b16 %v1377
    %v1468 = vunpack.c.l.b16 %v1378
    %v1469 = vunpack.c.h.b16 %v1378
    %v1470 = vunpack.c.l.b16 %v1379
    %v1471 = vunpack.c.h.b16 %v1379
    %v1472 = vunpack.c.l.b16 %v1380
    %v1473 = vunpack.c.h.b16 %v1380
    %v1474 = vunpack.c.l.b16 %v1381
    %v1475 = vunpack.c.h.b16 %v1381
    %v1476 = vunpack.c.l.b16 %v1382
    %v1477 = vunpack.c.h.b16 %v1382
    %v1478 = vunpack.c.l.b16 %v1383
    %v1479 = vunpack.c.h.b16 %v1383
    %v1480 = vpack.c.b16 %v1416, %v1416
    %v1481 = vpack.c.b16 %v1417, %v1417
    %v1482 = vpack.c.b16 %v1418, %v1418
    %v1483 = vpack.c.b16 %v1419, %v1419
    %v1484 = vpack.c.b16 %v1420, %v1420
    %v1485 = vpack.c.b16 %v1421, %v1421
    %v1486 = vpack.c.b16 %v1422, %v1422
    %v1487 = vpack.c.b16 %v1423, %v1423
    %v1488 = vpack.c.b16 %v1424, %v1424
    %v1489 = vpack.c.b16 %v1425, %v1425
    %v1490 = vpack.c.b16 %v1426, %v1426
    %v1491 = vpack.c.b16 %v1427, %v1427
    %v1492 = vpack.c.b16 %v1428, %v1428
    %v1493 = vpack.c.b16 %v1429, %v1429
    %v1494 = vpack.c.b16 %v1430, %v1430
    %v1495 = vpack.c.b16 %v1431, %v1431
    %v1496 = vpack.c.b16 %v1432, %v1432
    %v1497 = vpack.c.b16 %v1433, %v1433
    %v1498 = vpack.c.b16 %v1434, %v1434
    %v1499 = vpack.c.b16 %v1435, %v1435
    %v1500 = vpack.c.b16 %v1436, %v1436
    %v1501 = vpack.c.b16 %v1437, %v1437
    %v1502 = vpack.c.b16 %v1438, %v1438
    %v1503 = vpack.c.b16 %v1439, %v1439
    %v1504 = vpack.c.b16 %v1440, %v1440
    %v1505 = vpack.c.b16 %v1441, %v1441
    %v1506 = vpack.c.b16 %v1442, %v1442
    %v1507 = vpack.c.b16 %v1443, %v1443
    %v1508 = vpack.c.b16 %v1444, %v1444
    %v1509 = vpack.c.b16 %v1445, %v1445
    %v1510 = vpack.c.b16 %v1446, %v1446
    %v1511 = vpack.c.b16 %v1447, %v1447
    %v1512 = vpack.c.b16 %v1448, %v1448
    %v1513 = vpack.c.b16 %v1449, %v1449
    %v1514 = vpack.c.b16 %v1450, %v1450
    %v1515 = vpack.c.b16 %v1451, %v1451
    %v1516 = vpack.c.b16 %v1452, %v1452
    %v1517 = vpack.c.b16 %v1453, %v1453
    %v1518 = vpack.c.b16 %v1454, %v1454
    %v1519 = vpack.c.b16 %v1455, %v1455
    %v1520 = vpack.c.b16 %v1456, %v1456
    %v1521 = vpack.c.b16 %v1457, %v1457
    %v1522 = vpack.c.b16 %v1458, %v1458
    %v1523 = vpack.c.b16 %v1459, %v1459
    %v1524 = vpack.c.b16 %v1460, %v1460
    %v1525 = vpack.c.b16 %v1461, %v1461
    %v1526 = vpack.c.b16 %v1462, %v1462
    %v1527 = vpack.c.b16 %v1463, %v1463
    %v1528 = vpack.c.b16 %v1464, %v1464
    %v1529 = vpack.c.b16 %v1465, %v1465
    %v1530 = vpack.c.b16 %v1466, %v1466
    %v1531 = vpack.c.b16 %v1467, %v1467
    %v1532 = vpack.c.b16 %v1468, %v1468
    %v1533 = vpack.c.b16 %v1469, %v1469
    %v1534 = vpack.c.b16 %v1470, %v1470
    %v1535 = vpack.c.b16 %v1471, %v1471
    %v1536 = vpack.c.b16 %v1472, %v1472
    %v1537 = vpack.c.b16 %v1473, %v1473
    %v1538 = vpack.c.b16 %v1474, %v1474
    %v1539 = vpack.c.b16 %v1475, %v1475
    %v1540 = vpack.c.b16 %v1476, %v1476
    %v1541 = vpack.c.b16 %v1477, %v1477
    %v1542 = vpack.c.b16 %v1478, %v1478
    %v1543 = vpack.c.b16 %v1479, %v1479
    %1608 = vst [vmem:[%s4] sm:$0xf] %v1480
    %1609 = vst [vmem:[%s4 + $0x4] sm:$0xf] %v1481
    %1610 = vst [vmem:[%s4 + $0x8] sm:$0xf] %v1482
    %1611 = vst [vmem:[%s4 + $0xc] sm:$0xf] %v1483
    %1612 = vst [vmem:[%s4 + $0x10] sm:$0xf] %v1484
    %1613 = vst [vmem:[%s4 + $0x14] sm:$0xf] %v1485
    %1614 = vst [vmem:[%s4 + $0x18] sm:$0xf] %v1486
    %1615 = vst [vmem:[%s4 + $0x1c] sm:$0xf] %v1487
    %1616 = vst [vmem:[%s4 + $0x20] sm:$0xf] %v1488
    %1617 = vst [vmem:[%s4 + $0x24] sm:$0xf] %v1489
    %1618 = vst [vmem:[%s4 + $0x28] sm:$0xf] %v1490
    %1619 = vst [vmem:[%s4 + $0x2c] sm:$0xf] %v1491
    %1620 = vst [vmem:[%s4 + $0x30] sm:$0xf] %v1492
    %1621 = vst [vmem:[%s4 + $0x34] sm:$0xf] %v1493
    %1622 = vst [vmem:[%s4 + $0x38] sm:$0xf] %v1494
    %1623 = vst [vmem:[%s4 + $0x3c] sm:$0xf] %v1495
    %1624 = vst [vmem:[%s4 + $0x40] sm:$0xf] %v1496
    %1625 = vst [vmem:[%s4 + $0x44] sm:$0xf] %v1497
    %1626 = vst [vmem:[%s4 + $0x48] sm:$0xf] %v1498
    %1627 = vst [vmem:[%s4 + $0x4c] sm:$0xf] %v1499
    %1628 = vst [vmem:[%s4 + $0x50] sm:$0xf] %v1500
    %1629 = vst [vmem:[%s4 + $0x54] sm:$0xf] %v1501
    %1630 = vst [vmem:[%s4 + $0x58] sm:$0xf] %v1502
    %1631 = vst [vmem:[%s4 + $0x5c] sm:$0xf] %v1503
    %1632 = vst [vmem:[%s4 + $0x60] sm:$0xf] %v1504
    %1633 = vst [vmem:[%s4 + $0x64] sm:$0xf] %v1505
    %1634 = vst [vmem:[%s4 + $0x68] sm:$0xf] %v1506
    %1635 = vst [vmem:[%s4 + $0x6c] sm:$0xf] %v1507
    %1636 = vst [vmem:[%s4 + $0x70] sm:$0xf] %v1508
    %1637 = vst [vmem:[%s4 + $0x74] sm:$0xf] %v1509
    %1638 = vst [vmem:[%s4 + $0x78] sm:$0xf] %v1510
    %1639 = vst [vmem:[%s4 + $0x7c] sm:$0xf] %v1511
    %1640 = vst [vmem:[%s4 + $0x80] sm:$0xf] %v1512
    %1641 = vst [vmem:[%s4 + $0x84] sm:$0xf] %v1513
    %1642 = vst [vmem:[%s4 + $0x88] sm:$0xf] %v1514
    %1643 = vst [vmem:[%s4 + $0x8c] sm:$0xf] %v1515
    %1644 = vst [vmem:[%s4 + $0x90] sm:$0xf] %v1516
    %1645 = vst [vmem:[%s4 + $0x94] sm:$0xf] %v1517
    %1646 = vst [vmem:[%s4 + $0x98] sm:$0xf] %v1518
    %1647 = vst [vmem:[%s4 + $0x9c] sm:$0xf] %v1519
    %1648 = vst [vmem:[%s4 + $0xa0] sm:$0xf] %v1520
    %1649 = vst [vmem:[%s4 + $0xa4] sm:$0xf] %v1521
    %1650 = vst [vmem:[%s4 + $0xa8] sm:$0xf] %v1522
    %1651 = vst [vmem:[%s4 + $0xac] sm:$0xf] %v1523
    %1652 = vst [vmem:[%s4 + $0xb0] sm:$0xf] %v1524
    %1653 = vst [vmem:[%s4 + $0xb4] sm:$0xf] %v1525
    %1654 = vst [vmem:[%s4 + $0xb8] sm:$0xf] %v1526
    %1655 = vst [vmem:[%s4 + $0xbc] sm:$0xf] %v1527
    %1656 = vst [vmem:[%s4 + $0xc0] sm:$0xf] %v1528
    %1657 = vst [vmem:[%s4 + $0xc4] sm:$0xf] %v1529
    %1658 = vst [vmem:[%s4 + $0xc8] sm:$0xf] %v1530
    %1659 = vst [vmem:[%s4 + $0xcc] sm:$0xf] %v1531
    %1660 = vst [vmem:[%s4 + $0xd0] sm:$0xf] %v1532
    %1661 = vst [vmem:[%s4 + $0xd4] sm:$0xf] %v1533
    %1662 = vst [vmem:[%s4 + $0xd8] sm:$0xf] %v1534
    %1663 = vst [vmem:[%s4 + $0xdc] sm:$0xf] %v1535
    %1664 = vst [vmem:[%s4 + $0xe0] sm:$0xf] %v1536
    %1665 = vst [vmem:[%s4 + $0xe4] sm:$0xf] %v1537
    %1666 = vst [vmem:[%s4 + $0xe8] sm:$0xf] %v1538
    %1667 = vst [vmem:[%s4 + $0xec] sm:$0xf] %v1539
    %1668 = vst [vmem:[%s4 + $0xf0] sm:$0xf] %v1540
    %1669 = vst [vmem:[%s4 + $0xf4] sm:$0xf] %v1541
    %1670 = vst [vmem:[%s4 + $0xf8] sm:$0xf] %v1542
    %1671 = vst [vmem:[%s4 + $0xfc] sm:$0xf] %v1543
  $region25: #{leafnet_forward.16} parent=0 // pred_fallthru
    _
  // Predicated region
  $region26: #{leafnet_forward.16} parent=0 // pred_check
    _
  $region27: #{leafnet_forward.16} parent=0 // pred_check_branch
    %1673 = sbr.rel (0) target = $region29
  $region28: #{leafnet_forward.16} parent=0 // pred_region
    _
  $region29: #{leafnet_forward.16} parent=0 // pred_fallthru
    _
  // Predicated region
  $region30: #{leafnet_forward.16} parent=0 // pred_check
    _
  $region31: #{leafnet_forward.16} parent=0 // pred_check_branch
    %1675 = sbr.rel (0) target = $region33
  $region32: #{leafnet_forward.16} parent=0 // pred_region
    _
  $region33: #{leafnet_forward.16} parent=0 // pred_fallthru
    _

// kernel: leafnet_forward.21
$region0: #{leafnet_forward.21}
  #allocation0 [shape = 'u32[]', space=smem, size = 0x4, offset = 0x4, fixed_abs, tag = 'smem constant byte address 0x4 - core index']
  #allocation1 [shape = 'u32[144,128]{1,0:T(1,128)}', space=vmem, size = 0x12000, scoped, tag = 'internal scratch']
  %s0 = inlined_call_operand.vmem [shape: bf16[2,64,128], index: 0, kind: input, shape index: {}]
  %s1 = inlined_call_operand.vmem [shape: f32[2,128], index: 1, kind: output, shape index: {}]
  %s2 = sld [smem:[#allocation0]]
  $region22: #{leafnet_forward.21} parent=0
    _
  %s4 = ssub.s32 1, %s2
  %s5 = scalar_select 0, %s4, %s2
  // Predicated region
  $region2: #{leafnet_forward.21} parent=0 // pred_check
    _
  $region3: #{leafnet_forward.21} parent=0 // pred_check_branch
    %7 = sbr.rel (0) target = $region5
  $region4: #{leafnet_forward.21} parent=0 // pred_region
    _
  $region5: #{leafnet_forward.21} parent=0 // pred_fallthru
    _
  %p8 = scmp.eq.s32.totalorder 0, 0
  // Predicated region
  $region6: #{leafnet_forward.21} parent=0 // pred_check
    %p9 = pneg %p8
  $region7: #{leafnet_forward.21} parent=0 // pred_check_branch
    %11 = sbr.rel (%p9) target = $region9
  $region8: #{leafnet_forward.21} parent=0 // pred_region
    %12 = vst [vmem:[%s1] sm:$0x3] 0.0
  $region9: #{leafnet_forward.21} parent=0 // pred_fallthru
    _
  %v13 = vld [vmem:[%s1] sm:$0x3]
  %v14 = vld [vmem:[%s0] sm:$0xf]
  %v15 = vld [vmem:[%s0 + $0x4] sm:$0xf]
  %v16 = vld [vmem:[%s0 + $0x8] sm:$0xf]
  %v17 = vld [vmem:[%s0 + $0xc] sm:$0xf]
  %v18 = vld [vmem:[%s0 + $0x10] sm:$0xf]
  %v19 = vld [vmem:[%s0 + $0x14] sm:$0xf]
  %v20 = vld [vmem:[%s0 + $0x18] sm:$0xf]
  %v21 = vld [vmem:[%s0 + $0x1c] sm:$0xf]
  %v22 = vld [vmem:[%s0 + $0x20] sm:$0xf]
  %v23 = vld [vmem:[%s0 + $0x24] sm:$0xf]
  %v24 = vld [vmem:[%s0 + $0x28] sm:$0xf]
  %v25 = vld [vmem:[%s0 + $0x2c] sm:$0xf]
  %v26 = vld [vmem:[%s0 + $0x30] sm:$0xf]
  %v27 = vld [vmem:[%s0 + $0x34] sm:$0xf]
  %v28 = vld [vmem:[%s0 + $0x38] sm:$0xf]
  %v29 = vld [vmem:[%s0 + $0x3c] sm:$0xf]
  %v30 = vunpack.c.l.bf16 %v14
  %v31 = vunpack.c.l.bf16 %v15
  %v32 = vunpack.c.l.bf16 %v16
  %v33 = vunpack.c.l.bf16 %v17
  %v34 = vunpack.c.l.bf16 %v18
  %v35 = vunpack.c.l.bf16 %v19
  %v36 = vunpack.c.l.bf16 %v20
  %v37 = vunpack.c.l.bf16 %v21
  %v38 = vunpack.c.l.bf16 %v22
  %v39 = vunpack.c.l.bf16 %v23
  %v40 = vunpack.c.l.bf16 %v24
  %v41 = vunpack.c.l.bf16 %v25
  %v42 = vunpack.c.l.bf16 %v26
  %v43 = vunpack.c.l.bf16 %v27
  %v44 = vunpack.c.l.bf16 %v28
  %v45 = vunpack.c.l.bf16 %v29
  %v46 = vadd.f32 %v30, %v31
  %v47 = vadd.f32 %v46, %v32
  %v48 = vadd.f32 %v47, %v33
  %v49 = vadd.f32 %v48, %v34
  %v50 = vadd.f32 %v49, %v35
  %v51 = vadd.f32 %v50, %v36
  %v52 = vadd.f32 %v51, %v37
  %v53 = vrot.slane %v52, 4
  %v54 = vadd.f32 %v52, %v53
  %v55 = vrot.slane %v54, 2
  %v56 = vadd.f32 %v54, %v55
  %v57 = vrot.slane %v56, 1
  %v58 = vadd.f32 %v56, %v57
  %v59 = vadd.f32 %v38, %v39
  %v60 = vadd.f32 %v59, %v40
  %v61 = vadd.f32 %v60, %v41
  %v62 = vadd.f32 %v61, %v42
  %v63 = vadd.f32 %v62, %v43
  %v64 = vadd.f32 %v63, %v44
  %v65 = vadd.f32 %v64, %v45
  %v66 = vrot.slane %v65, 4
  %v67 = vadd.f32 %v65, %v66
  %v68 = vrot.slane %v67, 2
  %v69 = vadd.f32 %v67, %v68
  %v70 = vrot.slane %v69, 1
  %v71 = vadd.f32 %v69, %v70
  %vm74 = vcmask 1041409
  %v75 = vsel %vm74, %v71, %v58
  %v77 = vadd.f32 %v13, %v75
  %78 = vst [vmem:[%s1] sm:$0x3] %v77
  // Predicated region
  $region10: #{leafnet_forward.21} parent=0 // pred_check
    %p79 = pneg %p8
  $region11: #{leafnet_forward.21} parent=0 // pred_check_branch
    %81 = sbr.rel (%p79) target = $region13
  $region12: #{leafnet_forward.21} parent=0 // pred_region
    %v82 = vld [vmem:[%s1] sm:$0x3]
    %v83 = vmul.f32 %v82, 0.015625
    %84 = vst [vmem:[%s1] sm:$0x3] %v83
  $region13: #{leafnet_forward.21} parent=0 // pred_fallthru
    _
  // Predicated region
  $region14: #{leafnet_forward.21} parent=0 // pred_check
    _
  $region15: #{leafnet_forward.21} parent=0 // pred_check_branch
    %86 = sbr.rel (0) target = $region17
  $region16: #{leafnet_forward.21} parent=0 // pred_region
    _
  $region17: #{leafnet_forward.21} parent=0 // pred_fallthru
    _
  // Predicated region
  $region18: #{leafnet_forward.21} parent=0 // pred_check
    _
  $region19: #{leafnet_forward.21} parent=0 // pred_check_branch
    %88 = sbr.rel (0) target = $region21
  $region20: #{leafnet_forward.21} parent=0 // pred_region
    _
  $region21: #{leafnet_forward.21} parent=0 // pred_fallthru
    _

// kernel: leafnet_forward.20
$region0: #{leafnet_forward.20}
  #allocation0 [shape = 'u32[]', space=smem, size = 0x4, offset = 0x4, fixed_abs, tag = 'smem constant byte address 0x4 - core index']
  #allocation1 [shape = 'u32[144,128]{1,0:T(1,128)}', space=vmem, size = 0x12000, scoped, tag = 'internal scratch']
  #allocation2 [shape = 'f32[128,128]{1,0:T(8,128)}', space=vmem, size = 0x10000, scoped, tag = 'scratch operand']
  %s0 = inlined_call_operand.vmem [shape: bf16[128,128], index: 0, kind: input, shape index: {}]
  %s1 = inlined_call_operand.vmem [shape: bf16[128,128], index: 1, kind: input, shape index: {}]
  %s2 = inlined_call_operand.vmem [shape: f32[1,128], index: 2, kind: input, shape index: {}]
  %s3 = inlined_call_operand.vmem [shape: f32[1,128], index: 3, kind: input, shape index: {}]
  %s4 = inlined_call_operand.vmem [shape: bf16[128,128], index: 4, kind: output, shape index: {}]
  %s5 = sld [smem:[#allocation0]]
  $region34: #{leafnet_forward.20} parent=0
    _
  %s7 = ssub.s32 1, %s5
  %s8 = scalar_select 0, %s7, %s5
  // Predicated region
  $region2: #{leafnet_forward.20} parent=0 // pred_check
    _
  $region3: #{leafnet_forward.20} parent=0 // pred_check_branch
    %10 = sbr.rel (0) target = $region5
  $region4: #{leafnet_forward.20} parent=0 // pred_region
    _
  $region5: #{leafnet_forward.20} parent=0 // pred_fallthru
    _
  // Predicated region
  $region6: #{leafnet_forward.20} parent=0 // pred_check
    _
  $region7: #{leafnet_forward.20} parent=0 // pred_check_branch
    %12 = sbr.rel (0) target = $region9
  $region8: #{leafnet_forward.20} parent=0 // pred_region
    _
  $region9: #{leafnet_forward.20} parent=0 // pred_fallthru
    _
  // Predicated region
  $region10: #{leafnet_forward.20} parent=0 // pred_check
    _
  $region11: #{leafnet_forward.20} parent=0 // pred_check_branch
    %14 = sbr.rel (0) target = $region13
  $region12: #{leafnet_forward.20} parent=0 // pred_region
    _
  $region13: #{leafnet_forward.20} parent=0 // pred_fallthru
    _
  // Predicated region
  $region14: #{leafnet_forward.20} parent=0 // pred_check
    _
  $region15: #{leafnet_forward.20} parent=0 // pred_check_branch
    %16 = sbr.rel (0) target = $region17
  $region16: #{leafnet_forward.20} parent=0 // pred_region
    _
  $region17: #{leafnet_forward.20} parent=0 // pred_fallthru
    _
  %p18 = scmp.eq.s32.totalorder 0, 0
  // Predicated region
  $region18: #{leafnet_forward.20} parent=0 // pred_check
    %p19 = pneg %p18
  $region19: #{leafnet_forward.20} parent=0 // pred_check_branch
    %21 = sbr.rel (%p19) target = $region21
  $region20: #{leafnet_forward.20} parent=0 // pred_region
    %22 = vst [vmem:[#allocation2] sm:$0xff] 0.0
    %23 = vst [vmem:[#allocation2 + $0x8] sm:$0xff] 0.0
    %24 = vst [vmem:[#allocation2 + $0x10] sm:$0xff] 0.0
    %25 = vst [vmem:[#allocation2 + $0x18] sm:$0xff] 0.0
    %26 = vst [vmem:[#allocation2 + $0x20] sm:$0xff] 0.0
    %27 = vst [vmem:[#allocation2 + $0x28] sm:$0xff] 0.0
    %28 = vst [vmem:[#allocation2 + $0x30] sm:$0xff] 0.0
    %29 = vst [vmem:[#allocation2 + $0x38] sm:$0xff] 0.0
    %30 = vst [vmem:[#allocation2 + $0x40] sm:$0xff] 0.0
    %31 = vst [vmem:[#allocation2 + $0x48] sm:$0xff] 0.0
    %32 = vst [vmem:[#allocation2 + $0x50] sm:$0xff] 0.0
    %33 = vst [vmem:[#allocation2 + $0x58] sm:$0xff] 0.0
    %34 = vst [vmem:[#allocation2 + $0x60] sm:$0xff] 0.0
    %35 = vst [vmem:[#allocation2 + $0x68] sm:$0xff] 0.0
    %36 = vst [vmem:[#allocation2 + $0x70] sm:$0xff] 0.0
    %37 = vst [vmem:[#allocation2 + $0x78] sm:$0xff] 0.0
  $region21: #{leafnet_forward.20} parent=0 // pred_fallthru
    _
  %v38 = vld [vmem:[#allocation2] sm:$0xff]
  %v39 = vld [vmem:[#allocation2 + $0x8] sm:$0xff]
  %v40 = vld [vmem:[#allocation2 + $0x10] sm:$0xff]
  %v41 = vld [vmem:[#allocation2 + $0x18] sm:$0xff]
  %v42 = vld [vmem:[#allocation2 + $0x20] sm:$0xff]
  %v43 = vld [vmem:[#allocation2 + $0x28] sm:$0xff]
  %v44 = vld [vmem:[#allocation2 + $0x30] sm:$0xff]
  %v45 = vld [vmem:[#allocation2 + $0x38] sm:$0xff]
  %v46 = vld [vmem:[#allocation2 + $0x40] sm:$0xff]
  %v47 = vld [vmem:[#allocation2 + $0x48] sm:$0xff]
  %v48 = vld [vmem:[#allocation2 + $0x50] sm:$0xff]
  %v49 = vld [vmem:[#allocation2 + $0x58] sm:$0xff]
  %v50 = vld [vmem:[#allocation2 + $0x60] sm:$0xff]
  %v51 = vld [vmem:[#allocation2 + $0x68] sm:$0xff]
  %v52 = vld [vmem:[#allocation2 + $0x70] sm:$0xff]
  %v53 = vld [vmem:[#allocation2 + $0x78] sm:$0xff]
  %v54 = vld [vmem:[%s0] sm:$0xf]
  %v55 = vld [vmem:[%s0 + $0x4] sm:$0xf]
  %v56 = vld [vmem:[%s0 + $0x8] sm:$0xf]
  %v57 = vld [vmem:[%s0 + $0xc] sm:$0xf]
  %v58 = vld [vmem:[%s0 + $0x10] sm:$0xf]
  %v59 = vld [vmem:[%s0 + $0x14] sm:$0xf]
  %v60 = vld [vmem:[%s0 + $0x18] sm:$0xf]
  %v61 = vld [vmem:[%s0 + $0x1c] sm:$0xf]
  %v62 = vld [vmem:[%s0 + $0x20] sm:$0xf]
  %v63 = vld [vmem:[%s0 + $0x24] sm:$0xf]
  %v64 = vld [vmem:[%s0 + $0x28] sm:$0xf]
  %v65 = vld [vmem:[%s0 + $0x2c] sm:$0xf]
  %v66 = vld [vmem:[%s0 + $0x30] sm:$0xf]
  %v67 = vld [vmem:[%s0 + $0x34] sm:$0xf]
  %v68 = vld [vmem:[%s0 + $0x38] sm:$0xf]
  %v69 = vld [vmem:[%s0 + $0x3c] sm:$0xf]
  %v70 = vld [vmem:[%s1] sm:$0xf]
  %v71 = vld [vmem:[%s1 + $0x4] sm:$0xf]
  %v72 = vld [vmem:[%s1 + $0x8] sm:$0xf]
  %v73 = vld [vmem:[%s1 + $0xc] sm:$0xf]
  %v74 = vld [vmem:[%s1 + $0x10] sm:$0xf]
  %v75 = vld [vmem:[%s1 + $0x14] sm:$0xf]
  %v76 = vld [vmem:[%s1 + $0x18] sm:$0xf]
  %v77 = vld [vmem:[%s1 + $0x1c] sm:$0xf]
  %v78 = vld [vmem:[%s1 + $0x20] sm:$0xf]
  %v79 = vld [vmem:[%s1 + $0x24] sm:$0xf]
  %v80 = vld [vmem:[%s1 + $0x28] sm:$0xf]
  %v81 = vld [vmem:[%s1 + $0x2c] sm:$0xf]
  %v82 = vld [vmem:[%s1 + $0x30] sm:$0xf]
  %v83 = vld [vmem:[%s1 + $0x34] sm:$0xf]
  %v84 = vld [vmem:[%s1 + $0x38] sm:$0xf]
  %v85 = vld [vmem:[%s1 + $0x3c] sm:$0xf]
  %v102 = vunpack.c.l.b16 %v54
  %v103 = vunpack.c.l.b16 %v55
  %v104 = vunpack.c.l.b16 %v56
  %v105 = vunpack.c.l.b16 %v57
  %v106 = vunpack.c.l.b16 %v58
  %v107 = vunpack.c.l.b16 %v59
  %v108 = vunpack.c.l.b16 %v60
  %v109 = vunpack.c.l.b16 %v61
  %v110 = vunpack.c.l.b16 %v62
  %v111 = vunpack.c.l.b16 %v63
  %v112 = vunpack.c.l.b16 %v64
  %v113 = vunpack.c.l.b16 %v65
  %v114 = vunpack.c.l.b16 %v66
  %v115 = vunpack.c.l.b16 %v67
  %v116 = vunpack.c.l.b16 %v68
  %v117 = vunpack.c.l.b16 %v69
  %v118 = vpack.c.b16 %v103, %v102
  %v119 = vpack.c.b16 %v105, %v104
  %v120 = vpack.c.b16 %v107, %v106
  %v121 = vpack.c.b16 %v109, %v108
  %v122 = vpack.c.b16 %v111, %v110
  %v123 = vpack.c.b16 %v113, %v112
  %v124 = vpack.c.b16 %v115, %v114
  %v125 = vpack.c.b16 %v117, %v116
  %v150 = vunpack.c.l.b16 %v70
  %v151 = vunpack.c.l.b16 %v71
  %v152 = vunpack.c.l.b16 %v72
  %v153 = vunpack.c.l.b16 %v73
  %v154 = vunpack.c.l.b16 %v74
  %v155 = vunpack.c.l.b16 %v75
  %v156 = vunpack.c.l.b16 %v76
  %v157 = vunpack.c.l.b16 %v77
  %v158 = vunpack.c.l.b16 %v78
  %v159 = vunpack.c.l.b16 %v79
  %v160 = vunpack.c.l.b16 %v80
  %v161 = vunpack.c.l.b16 %v81
  %v162 = vunpack.c.l.b16 %v82
  %v163 = vunpack.c.l.b16 %v83
  %v164 = vunpack.c.l.b16 %v84
  %v165 = vunpack.c.l.b16 %v85
  %v166 = vpack.c.b16 %v151, %v150
  %v167 = vpack.c.b16 %v153, %v152
  %v168 = vpack.c.b16 %v155, %v154
  %v169 = vpack.c.b16 %v157, %v156
  %v170 = vpack.c.b16 %v159, %v158
  %v171 = vpack.c.b16 %v161, %v160
  %v172 = vpack.c.b16 %v163, %v162
  %v173 = vpack.c.b16 %v165, %v164
  %182 = vmatprep.subr.bf16.mxu0 0
  %183 = vmatpush1.bf16.msra.mxu0 %v173
  %184 = vmatprep.subr.bf16.mxu0 0
  %185 = vmatpush1.bf16.msra.mxu0 %v172
  %186 = vmatprep.subr.bf16.mxu0 0
  %187 = vmatpush1.bf16.msra.mxu0 %v171
  %188 = vmatprep.subr.bf16.mxu0 0
  %189 = vmatpush1.bf16.msra.mxu0 %v170
  %190 = vmatprep.subr.bf16.mxu0 0
  %191 = vmatpush1.bf16.msra.mxu0 %v169
  %192 = vmatprep.subr.bf16.mxu0 0
  %193 = vmatpush1.bf16.msra.mxu0 %v168
  %194 = vmatprep.subr.bf16.mxu0 0
  %195 = vmatpush1.bf16.msra.mxu0 %v167
  %196 = vmatprep.subr.bf16.mxu0 0
  %197 = vmatpush1.bf16.msra.mxu0 %v166
  %198 = vmatprep.subr.bf16.mxu0 0
  %199 = vmatpush2.bf16.msra.mxu0 0
  %200 = vmatprep.subr.bf16.mxu0 0
  %201 = vmatpush2.bf16.msra.mxu0 0
  %202 = vmatprep.subr.bf16.mxu0 0
  %203 = vmatpush2.bf16.msra.mxu0 0
  %204 = vmatprep.subr.bf16.mxu0 0
  %205 = vmatpush2.bf16.msra.mxu0 0
  %206 = vmatprep.subr.bf16.mxu0 0
  %207 = vmatpush2.bf16.msra.mxu0 0
  %208 = vmatprep.subr.bf16.mxu0 0
  %209 = vmatpush2.bf16.msra.mxu0 0
  %210 = vmatprep.subr.bf16.mxu0 0
  %211 = vmatpush2.bf16.msra.mxu0 0
  %212 = vmatprep.subr.bf16.mxu0 0
  %213 = vmatpush2.bf16.msra.mxu0 0
  %214 = vmatprep.mubr.bf16.mxu0 0
  %215 = vmatmul.mubr.bf16.gmra.mxu0 %v118
  %v216 = vpop.f32.mrf.mxu0
  %v217 = vadd.f32 0.0, %v216
  %v218 = vpop.f32.mrf.mxu0
  %v219 = vpop.f32.mrf.mxu0
  %v220 = vadd.f32 0.0, %v219
  %v221 = vpop.f32.mrf.mxu0
  %222 = vmatprep.mubr.bf16.mxu0 0
  %223 = vmatmul.mubr.bf16.gmra.mxu0 %v119
  %v224 = vpop.f32.mrf.mxu0
  %v225 = vadd.f32 0.0, %v224
  %v226 = vpop.f32.mrf.mxu0
  %v227 = vpop.f32.mrf.mxu0
  %v228 = vadd.f32 0.0, %v227
  %v229 = vpop.f32.mrf.mxu0
  %230 = vmatprep.mubr.bf16.mxu0 0
  %231 = vmatmul.mubr.bf16.gmra.mxu0 %v120
  %v232 = vpop.f32.mrf.mxu0
  %v233 = vadd.f32 0.0, %v232
  %v234 = vpop.f32.mrf.mxu0
  %v235 = vpop.f32.mrf.mxu0
  %v236 = vadd.f32 0.0, %v235
  %v237 = vpop.f32.mrf.mxu0
  %238 = vmatprep.mubr.bf16.mxu0 0
  %239 = vmatmul.mubr.bf16.gmra.mxu0 %v121
  %v240 = vpop.f32.mrf.mxu0
  %v241 = vadd.f32 0.0, %v240
  %v242 = vpop.f32.mrf.mxu0
  %v243 = vpop.f32.mrf.mxu0
  %v244 = vadd.f32 0.0, %v243
  %v245 = vpop.f32.mrf.mxu0
  %246 = vmatprep.mubr.bf16.mxu0 0
  %247 = vmatmul.mubr.bf16.gmra.mxu0 %v122
  %v248 = vpop.f32.mrf.mxu0
  %v249 = vadd.f32 0.0, %v248
  %v250 = vpop.f32.mrf.mxu0
  %v251 = vpop.f32.mrf.mxu0
  %v252 = vadd.f32 0.0, %v251
  %v253 = vpop.f32.mrf.mxu0
  %254 = vmatprep.mubr.bf16.mxu0 0
  %255 = vmatmul.mubr.bf16.gmra.mxu0 %v123
  %v256 = vpop.f32.mrf.mxu0
  %v257 = vadd.f32 0.0, %v256
  %v258 = vpop.f32.mrf.mxu0
  %v259 = vpop.f32.mrf.mxu0
  %v260 = vadd.f32 0.0, %v259
  %v261 = vpop.f32.mrf.mxu0
  %262 = vmatprep.mubr.bf16.mxu0 0
  %263 = vmatmul.mubr.bf16.gmra.mxu0 %v124
  %v264 = vpop.f32.mrf.mxu0
  %v265 = vadd.f32 0.0, %v264
  %v266 = vpop.f32.mrf.mxu0
  %v267 = vpop.f32.mrf.mxu0
  %v268 = vadd.f32 0.0, %v267
  %v269 = vpop.f32.mrf.mxu0
  %270 = vmatprep.mubr.bf16.mxu0 0
  %271 = vmatmul.mubr.bf16.gmra.mxu0 %v125
  %v272 = vpop.f32.mrf.mxu0
  %v273 = vadd.f32 0.0, %v272
  %v274 = vpop.f32.mrf.mxu0
  %v275 = vpop.f32.mrf.mxu0
  %v276 = vadd.f32 0.0, %v275
  %v277 = vpop.f32.mrf.mxu0
  %278 = vdwg.mxu0
  %v279 = vadd.f32 %v38, %v217
  %v280 = vadd.f32 %v39, %v220
  %v281 = vadd.f32 %v40, %v225
  %v282 = vadd.f32 %v41, %v228
  %v283 = vadd.f32 %v42, %v233
  %v284 = vadd.f32 %v43, %v236
  %v285 = vadd.f32 %v44, %v241
  %v286 = vadd.f32 %v45, %v244
  %v287 = vadd.f32 %v46, %v249
  %v288 = vadd.f32 %v47, %v252
  %v289 = vadd.f32 %v48, %v257
  %v290 = vadd.f32 %v49, %v260
  %v291 = vadd.f32 %v50, %v265
  %v292 = vadd.f32 %v51, %v268
  %v293 = vadd.f32 %v52, %v273
  %v294 = vadd.f32 %v53, %v276
  %295 = vst [vmem:[#allocation2] sm:$0xff] %v279
  %296 = vst [vmem:[#allocation2 + $0x8] sm:$0xff] %v280
  %297 = vst [vmem:[#allocation2 + $0x10] sm:$0xff] %v281
  %298 = vst [vmem:[#allocation2 + $0x18] sm:$0xff] %v282
  %299 = vst [vmem:[#allocation2 + $0x20] sm:$0xff] %v283
  %300 = vst [vmem:[#allocation2 + $0x28] sm:$0xff] %v284
  %301 = vst [vmem:[#allocation2 + $0x30] sm:$0xff] %v285
  %302 = vst [vmem:[#allocation2 + $0x38] sm:$0xff] %v286
  %303 = vst [vmem:[#allocation2 + $0x40] sm:$0xff] %v287
  %304 = vst [vmem:[#allocation2 + $0x48] sm:$0xff] %v288
  %305 = vst [vmem:[#allocation2 + $0x50] sm:$0xff] %v289
  %306 = vst [vmem:[#allocation2 + $0x58] sm:$0xff] %v290
  %307 = vst [vmem:[#allocation2 + $0x60] sm:$0xff] %v291
  %308 = vst [vmem:[#allocation2 + $0x68] sm:$0xff] %v292
  %309 = vst [vmem:[#allocation2 + $0x70] sm:$0xff] %v293
  %310 = vst [vmem:[#allocation2 + $0x78] sm:$0xff] %v294
  // Predicated region
  $region22: #{leafnet_forward.20} parent=0 // pred_check
    %p311 = pneg %p18
  $region23: #{leafnet_forward.20} parent=0 // pred_check_branch
    %313 = sbr.rel (%p311) target = $region25
  $region24: #{leafnet_forward.20} parent=0 // pred_region
    %v314 = vld [vmem:[#allocation2] sm:$0xff]
    %v315 = vld [vmem:[#allocation2 + $0x8] sm:$0xff]
    %v316 = vld [vmem:[#allocation2 + $0x10] sm:$0xff]
    %v317 = vld [vmem:[#allocation2 + $0x18] sm:$0xff]
    %v318 = vld [vmem:[#allocation2 + $0x20] sm:$0xff]
    %v319 = vld [vmem:[#allocation2 + $0x28] sm:$0xff]
    %v320 = vld [vmem:[#allocation2 + $0x30] sm:$0xff]
    %v321 = vld [vmem:[#allocation2 + $0x38] sm:$0xff]
    %v322 = vld [vmem:[#allocation2 + $0x40] sm:$0xff]
    %v323 = vld [vmem:[#allocation2 + $0x48] sm:$0xff]
    %v324 = vld [vmem:[#allocation2 + $0x50] sm:$0xff]
    %v325 = vld [vmem:[#allocation2 + $0x58] sm:$0xff]
    %v326 = vld [vmem:[#allocation2 + $0x60] sm:$0xff]
    %v327 = vld [vmem:[#allocation2 + $0x68] sm:$0xff]
    %v328 = vld [vmem:[#allocation2 + $0x70] sm:$0xff]
    %v329 = vld [vmem:[#allocation2 + $0x78] sm:$0xff]
    %v330 = vld [vmem:[%s2] sm:$0x1]
    %v332 = vlaneseq
    %v333 = vshrl.u32 %v332, 7
    %v334 = vsub.s32 0, %v333
    %v335 = vrot.slane %v330, %v334
    %v337 = vmul.f32 %v314, %v335
    %v338 = vmul.f32 %v315, %v335
    %v339 = vmul.f32 %v316, %v335
    %v340 = vmul.f32 %v317, %v335
    %v341 = vmul.f32 %v318, %v335
    %v342 = vmul.f32 %v319, %v335
    %v343 = vmul.f32 %v320, %v335
    %v344 = vmul.f32 %v321, %v335
    %v345 = vmul.f32 %v322, %v335
    %v346 = vmul.f32 %v323, %v335
    %v347 = vmul.f32 %v324, %v335
    %v348 = vmul.f32 %v325, %v335
    %v349 = vmul.f32 %v326, %v335
    %v350 = vmul.f32 %v327, %v335
    %v351 = vmul.f32 %v328, %v335
    %v352 = vmul.f32 %v329, %v335
    %v353 = vld [vmem:[%s3] sm:$0x1]
    %v355 = vlaneseq
    %v356 = vshrl.u32 %v355, 7
    %v357 = vsub.s32 0, %v356
    %v358 = vrot.slane %v353, %v357
    %v360 = vadd.f32 %v337, %v358
    %v361 = vadd.f32 %v338, %v358
    %v362 = vadd.f32 %v339, %v358
    %v363 = vadd.f32 %v340, %v358
    %v364 = vadd.f32 %v341, %v358
    %v365 = vadd.f32 %v342, %v358
    %v366 = vadd.f32 %v343, %v358
    %v367 = vadd.f32 %v344, %v358
    %v368 = vadd.f32 %v345, %v358
    %v369 = vadd.f32 %v346, %v358
    %v370 = vadd.f32 %v347, %v358
    %v371 = vadd.f32 %v348, %v358
    %v372 = vadd.f32 %v349, %v358
    %v373 = vadd.f32 %v350, %v358
    %v374 = vadd.f32 %v351, %v358
    %v375 = vadd.f32 %v352, %v358
    %v376 = vpack.c.bf16 %v361, %v360
    %v377 = vpack.c.bf16 %v363, %v362
    %v378 = vpack.c.bf16 %v365, %v364
    %v379 = vpack.c.bf16 %v367, %v366
    %v380 = vpack.c.bf16 %v369, %v368
    %v381 = vpack.c.bf16 %v371, %v370
    %v382 = vpack.c.bf16 %v373, %v372
    %v383 = vpack.c.bf16 %v375, %v374
    %v392 = vunpack.c.l.b16 %v376
    %v393 = vunpack.c.h.b16 %v376
    %v394 = vunpack.c.l.b16 %v377
    %v395 = vunpack.c.h.b16 %v377
    %v396 = vunpack.c.l.b16 %v378
    %v397 = vunpack.c.h.b16 %v378
    %v398 = vunpack.c.l.b16 %v379
    %v399 = vunpack.c.h.b16 %v379
    %v400 = vunpack.c.l.b16 %v380
    %v401 = vunpack.c.h.b16 %v380
    %v402 = vunpack.c.l.b16 %v381
    %v403 = vunpack.c.h.b16 %v381
    %v404 = vunpack.c.l.b16 %v382
    %v405 = vunpack.c.h.b16 %v382
    %v406 = vunpack.c.l.b16 %v383
    %v407 = vunpack.c.h.b16 %v383
    %v408 = vpack.c.b16 %v392, %v392
    %v409 = vpack.c.b16 %v393, %v393
    %v410 = vpack.c.b16 %v394, %v394
    %v411 = vpack.c.b16 %v395, %v395
    %v412 = vpack.c.b16 %v396, %v396
    %v413 = vpack.c.b16 %v397, %v397
    %v414 = vpack.c.b16 %v398, %v398
    %v415 = vpack.c.b16 %v399, %v399
    %v416 = vpack.c.b16 %v400, %v400
    %v417 = vpack.c.b16 %v401, %v401
    %v418 = vpack.c.b16 %v402, %v402
    %v419 = vpack.c.b16 %v403, %v403
    %v420 = vpack.c.b16 %v404, %v404
    %v421 = vpack.c.b16 %v405, %v405
    %v422 = vpack.c.b16 %v406, %v406
    %v423 = vpack.c.b16 %v407, %v407
    %440 = vst [vmem:[%s4] sm:$0xf] %v408
    %441 = vst [vmem:[%s4 + $0x4] sm:$0xf] %v409
    %442 = vst [vmem:[%s4 + $0x8] sm:$0xf] %v410
    %443 = vst [vmem:[%s4 + $0xc] sm:$0xf] %v411
    %444 = vst [vmem:[%s4 + $0x10] sm:$0xf] %v412
    %445 = vst [vmem:[%s4 + $0x14] sm:$0xf] %v413
    %446 = vst [vmem:[%s4 + $0x18] sm:$0xf] %v414
    %447 = vst [vmem:[%s4 + $0x1c] sm:$0xf] %v415
    %448 = vst [vmem:[%s4 + $0x20] sm:$0xf] %v416
    %449 = vst [vmem:[%s4 + $0x24] sm:$0xf] %v417
    %450 = vst [vmem:[%s4 + $0x28] sm:$0xf] %v418
    %451 = vst [vmem:[%s4 + $0x2c] sm:$0xf] %v419
    %452 = vst [vmem:[%s4 + $0x30] sm:$0xf] %v420
    %453 = vst [vmem:[%s4 + $0x34] sm:$0xf] %v421
    %454 = vst [vmem:[%s4 + $0x38] sm:$0xf] %v422
    %455 = vst [vmem:[%s4 + $0x3c] sm:$0xf] %v423
  $region25: #{leafnet_forward.20} parent=0 // pred_fallthru
    _
  // Predicated region
  $region26: #{leafnet_forward.20} parent=0 // pred_check
    _
  $region27: #{leafnet_forward.20} parent=0 // pred_check_branch
    %457 = sbr.rel (0) target = $region29
  $region28: #{leafnet_forward.20} parent=0 // pred_region
    _
  $region29: #{leafnet_forward.20} parent=0 // pred_fallthru
    _
  // Predicated region
  $region30: #{leafnet_forward.20} parent=0 // pred_check
    _
  $region31: #{leafnet_forward.20} parent=0 // pred_check_branch
    %459 = sbr.rel (0) target = $region33
  $region32: #{leafnet_forward.20} parent=0 // pred_region
    _
  $region33: #{leafnet_forward.20} parent=0 // pred_fallthru
    _

// kernel: leafnet_forward.23
$region0: #{leafnet_forward.23}
  #allocation0 [shape = 'u32[]', space=smem, size = 0x4, offset = 0x4, fixed_abs, tag = 'smem constant byte address 0x4 - core index']
  #allocation1 [shape = 'u32[144,128]{1,0:T(1,128)}', space=vmem, size = 0x12000, scoped, tag = 'internal scratch']
  %s0 = inlined_call_operand.vmem [shape: bf16[2,64,128], index: 0, kind: input, shape index: {}]
  %s1 = inlined_call_operand.vmem [shape: bf16[128,128], index: 1, kind: input, shape index: {}]
  %s2 = inlined_call_operand.vmem [shape: f32[1,128], index: 2, kind: input, shape index: {}]
  %s3 = inlined_call_operand.vmem [shape: f32[1,128], index: 3, kind: input, shape index: {}]
  %s4 = inlined_call_operand.vmem [shape: bf16[2,64,128], index: 4, kind: input, shape index: {}]
  %s5 = inlined_call_operand.vmem [shape: f32[2,1,128], index: 5, kind: input, shape index: {}]
  %s6 = inlined_call_operand.vmem [shape: bf16[2,64,128], index: 6, kind: output, shape index: {}]
  %s7 = sld [smem:[#allocation0]]
  $region57: #{leafnet_forward.23} parent=0
    _
  %s9 = ssub.s32 1, %s7
  %s10 = scalar_select 0, %s9, %s7
  loop: start=0, step=1, limit=4
  $region2: #{leafnet_forward.23} parent=0 // loop_pre_header
    _
  $region3: #{leafnet_forward.23} parent=0 // loop_header
    %s12 = sphi 0, %s16
    %p13 = scmp.ge.s32.totalorder %s12, 4
    %s22 = sphi 0, %s24
    %s25 = sphi 0, %s22
    %s26 = sphi 0, %s25
    %s42 = sphi 0, %s26
    %s46 = sphi 0, %s46
    %s48 = sphi 0, %s46
    %s49 = sphi 0, %s48
    %s63 = sphi 0, %s49
    %s67 = sphi 0, %s67
    %s69 = sphi 0, %s67
    %s70 = sphi 0, %s69
    %s84 = sphi 0, %s70
    %s88 = sphi 0, %s88
    %s90 = sphi 0, %s88
    %s91 = sphi 0, %s90
    %s105 = sphi 0, %s91
    %s111 = sphi 0, %s113
    %s114 = sphi 0, %s111
    %s115 = sphi 0, %s114
    %s131 = sphi 0, %s115
    %s137 = sphi 0, %s139
    %s140 = sphi 0, %s137
    %s141 = sphi 0, %s140
    %s157 = sphi 0, %s141
    %s163 = sphi 0, %s165
    %s166 = sphi 0, %s163
    %s167 = sphi 0, %s166
    %s183 = sphi 0, %s167
  $region4: #{leafnet_forward.23} parent=0 // loop_header_branch
    %15 = sbr.rel (%p13) target = $region8
  $region5: #{leafnet_forward.23} parent=0 // loop_body
    %s17 = ssub.s32 %s12, 1
    %s18 = ssub.s32 %s12, 2
    %s19 = sadd.s32 %s12, 1
    %s20 = ssub.s32 %s12, %s19
    %p21 = scmp.eq.s32.totalorder %s20, 0
    %s23 = sadd.s32 %s22, 1
    %s24 = scalar_select %p21, %s22, %s23
    %p27 = pneg %p21
    %p28 = scmp.eq.s32.totalorder %s12, 1
    %p29 = por %p27, %p28
    %p30 = scmp.ne.s32.totalorder %s22, %s25
    %p31 = scmp.eq.s32.totalorder %s12, 0
    %p32 = por %p30, %p31
    %p33 = scmp.ne.s32.totalorder %s22, %s25
    %p34 = scmp.eq.s32.totalorder %s17, 1
    %p35 = por %p33, %p34
    %p36 = scmp.ne.s32.totalorder %s25, %s26
    %p37 = scmp.eq.s32.totalorder %s17, 0
    %p38 = por %p36, %p37
    %p39 = scmp.ne.s32.totalorder %s25, %s26
    %p40 = scmp.eq.s32.totalorder %s18, 1
    %p41 = por %p39, %p40
    %p43 = scmp.ne.s32.totalorder %s26, %s42
    %p44 = scmp.eq.s32.totalorder %s18, 0
    %p45 = por %p43, %p44
    %s47 = sadd.s32 %s46, 1
    %p50 = scmp.eq.s32.totalorder %s12, 1
    %p51 = scmp.ne.s32.totalorder %s46, %s48
    %p52 = scmp.eq.s32.totalorder %s12, 0
    %p53 = por %p51, %p52
    %p54 = scmp.ne.s32.totalorder %s46, %s48
    %p55 = scmp.eq.s32.totalorder %s17, 1
    %p56 = por %p54, %p55
    %p57 = scmp.ne.s32.totalorder %s48, %s49
    %p58 = scmp.eq.s32.totalorder %s17, 0
    %p59 = por %p57, %p58
    %p60 = scmp.ne.s32.totalorder %s48, %s49
    %p61 = scmp.eq.s32.totalorder %s18, 1
    %p62 = por %p60, %p61
    %p64 = scmp.ne.s32.totalorder %s49, %s63
    %p65 = scmp.eq.s32.totalorder %s18, 0
    %p66 = por %p64, %p65
    %s68 = sadd.s32 %s67, 1
    %p71 = scmp.eq.s32.totalorder %s12, 1
    %p72 = scmp.ne.s32.totalorder %s67, %s69
    %p73 = scmp.eq.s32.totalorder %s12, 0
    %p74 = por %p72, %p73
    %p75 = scmp.ne.s32.totalorder %s67, %s69
    %p76 = scmp.eq.s32.totalorder %s17, 1
    %p77 = por %p75, %p76
    %p78 = scmp.ne.s32.totalorder %s69, %s70
    %p79 = scmp.eq.s32.totalorder %s17, 0
    %p80 = por %p78, %p79
    %p81 = scmp.ne.s32.totalorder %s69, %s70
    %p82 = scmp.eq.s32.totalorder %s18, 1
    %p83 = por %p81, %p82
    %p85 = scmp.ne.s32.totalorder %s70, %s84
    %p86 = scmp.eq.s32.totalorder %s18, 0
    %p87 = por %p85, %p86
    %s89 = sadd.s32 %s88, 1
    %p92 = scmp.eq.s32.totalorder %s12, 1
    %p93 = scmp.ne.s32.totalorder %s88, %s90
    %p94 = scmp.eq.s32.totalorder %s12, 0
    %p95 = por %p93, %p94
    %p96 = scmp.ne.s32.totalorder %s88, %s90
    %p97 = scmp.eq.s32.totalorder %s17, 1
    %p98 = por %p96, %p97
    %p99 = scmp.ne.s32.totalorder %s90, %s91
    %p100 = scmp.eq.s32.totalorder %s17, 0
    %p101 = por %p99, %p100
    %p102 = scmp.ne.s32.totalorder %s90, %s91
    %p103 = scmp.eq.s32.totalorder %s18, 1
    %p104 = por %p102, %p103
    %p106 = scmp.ne.s32.totalorder %s91, %s105
    %p107 = scmp.eq.s32.totalorder %s18, 0
    %p108 = por %p106, %p107
    %s109 = ssub.s32 %s12, %s19
    %p110 = scmp.eq.s32.totalorder %s109, 0
    %s112 = sadd.s32 %s111, 1
    %s113 = scalar_select %p110, %s111, %s112
    %p116 = pneg %p110
    %p117 = scmp.eq.s32.totalorder %s12, 1
    %p118 = por %p116, %p117
    %p119 = scmp.ne.s32.totalorder %s111, %s114
    %p120 = scmp.eq.s32.totalorder %s12, 0
    %p121 = por %p119, %p120
    %p122 = scmp.ne.s32.totalorder %s111, %s114
    %p123 = scmp.eq.s32.totalorder %s17, 1
    %p124 = por %p122, %p123
    %p125 = scmp.ne.s32.totalorder %s114, %s115
    %p126 = scmp.eq.s32.totalorder %s17, 0
    %p127 = por %p125, %p126
    %p128 = scmp.ne.s32.totalorder %s114, %s115
    %p129 = scmp.eq.s32.totalorder %s18, 1
    %p130 = por %p128, %p129
    %p132 = scmp.ne.s32.totalorder %s115, %s131
    %p133 = scmp.eq.s32.totalorder %s18, 0
    %p134 = por %p132, %p133
    %s135 = ssub.s32 %s12, %s19
    %p136 = scmp.eq.s32.totalorder %s135, 0
    %s138 = sadd.s32 %s137, 1
    %s139 = scalar_select %p136, %s137, %s138
    %p142 = pneg %p136
    %p143 = scmp.eq.s32.totalorder %s12, 1
    %p144 = por %p142, %p143
    %p145 = scmp.ne.s32.totalorder %s137, %s140
    %p146 = scmp.eq.s32.totalorder %s12, 0
    %p147 = por %p145, %p146
    %p148 = scmp.ne.s32.totalorder %s137, %s140
    %p149 = scmp.eq.s32.totalorder %s17, 1
    %p150 = por %p148, %p149
    %p151 = scmp.ne.s32.totalorder %s140, %s141
    %p152 = scmp.eq.s32.totalorder %s17, 0
    %p153 = por %p151, %p152
    %p154 = scmp.ne.s32.totalorder %s140, %s141
    %p155 = scmp.eq.s32.totalorder %s18, 1
    %p156 = por %p154, %p155
    %p158 = scmp.ne.s32.totalorder %s141, %s157
    %p159 = scmp.eq.s32.totalorder %s18, 0
    %p160 = por %p158, %p159
    %s161 = ssub.s32 %s12, %s19
    %p162 = scmp.eq.s32.totalorder %s161, 0
    %s164 = sadd.s32 %s163, 1
    %s165 = scalar_select %p162, %s163, %s164
    %p168 = pneg %p162
    %p169 = scmp.eq.s32.totalorder %s12, 1
    %p170 = por %p168, %p169
    %p171 = scmp.ne.s32.totalorder %s163, %s166
    %p172 = scmp.eq.s32.totalorder %s12, 0
    %p173 = por %p171, %p172
    %p174 = scmp.ne.s32.totalorder %s163, %s166
    %p175 = scmp.eq.s32.totalorder %s17, 1
    %p176 = por %p174, %p175
    %p177 = scmp.ne.s32.totalorder %s166, %s167
    %p178 = scmp.eq.s32.totalorder %s17, 0
    %p179 = por %p177, %p178
    %p180 = scmp.ne.s32.totalorder %s166, %s167
    %p181 = scmp.eq.s32.totalorder %s18, 1
    %p182 = por %p180, %p181
    %p184 = scmp.ne.s32.totalorder %s167, %s183
    %p185 = scmp.eq.s32.totalorder %s18, 0
    %p186 = por %p184, %p185
    %p187 = scmp.le.s32.totalorder 1, %s12
    %p188 = scmp.lt.s32.totalorder %s12, 3
    %p189 = pnand %p187, %p188
    %p190 = pneg %p189
    // Predicated region
    $region9: #{leafnet_forward.23} parent=5 // pred_check
      _
    $region10: #{leafnet_forward.23} parent=5 // pred_check_branch
      %192 = sbr.rel (%p189) target = $region12
    $region11: #{leafnet_forward.23} parent=5 // pred_region
      %s193 = ssub.s32 %s12, 1
      // Predicated region
      $region13: #{leafnet_forward.23} parent=11 // pred_check
        %p194 = pneg %p59
      $region14: #{leafnet_forward.23} parent=11 // pred_check_branch
        %196 = sbr.rel (%p194) target = $region16
      $region15: #{leafnet_forward.23} parent=11 // pred_region
        _
      $region16: #{leafnet_forward.23} parent=11 // pred_fallthru
        _
      // Predicated region
      $region17: #{leafnet_forward.23} parent=11 // pred_check
        %p197 = pneg %p80
      $region18: #{leafnet_forward.23} parent=11 // pred_check_branch
        %199 = sbr.rel (%p197) target = $region20
      $region19: #{leafnet_forward.23} parent=11 // pred_region
        _
      $region20: #{leafnet_forward.23} parent=11 // pred_fallthru
        _
      // Predicated region
      $region21: #{leafnet_forward.23} parent=11 // pred_check
        %p200 = pneg %p101
      $region22: #{leafnet_forward.23} parent=11 // pred_check_branch
        %202 = sbr.rel (%p200) target = $region24
      $region23: #{leafnet_forward.23} parent=11 // pred_region
        _
      $region24: #{leafnet_forward.23} parent=11 // pred_fallthru
        _
    $region12: #{leafnet_forward.23} parent=5 // pred_fallthru
      _
    %p203 = scmp.lt.s32.totalorder %s12, 2
    // Predicated region
    $region25: #{leafnet_forward.23} parent=5 // pred_check
      %p204 = pneg %p203
    $region26: #{leafnet_forward.23} parent=5 // pred_check_branch
      %206 = sbr.rel (%p204) target = $region28
    $region27: #{leafnet_forward.23} parent=5 // pred_region
      // Predicated region
      $region29: #{leafnet_forward.23} parent=27 // pred_check
        %p207 = pneg %p32
      $region30: #{leafnet_forward.23} parent=27 // pred_check_branch
        %209 = sbr.rel (%p207) target = $region32
      $region31: #{leafnet_forward.23} parent=27 // pred_region
        %p210 = scmp.lt.s32.totalorder %s12, 1
        %s211 = scalar_select %p210, %s12, 1
        %s212 = smul.addr %s211, 8
        %s213 = smul.addr %s212, 4
        %s214 = scalar_lea.vmem %s0, %s213
      $region32: #{leafnet_forward.23} parent=27 // pred_fallthru
        _
      // Predicated region
      $region33: #{leafnet_forward.23} parent=27 // pred_check
        %p215 = pneg %p121
      $region34: #{leafnet_forward.23} parent=27 // pred_check_branch
        %217 = sbr.rel (%p215) target = $region36
      $region35: #{leafnet_forward.23} parent=27 // pred_region
        %p218 = scmp.lt.s32.totalorder %s12, 1
        %s219 = scalar_select %p218, %s12, 1
        %s220 = smul.addr %s219, 8
        %s221 = smul.addr %s220, 4
        %s222 = scalar_lea.vmem %s4, %s221
      $region36: #{leafnet_forward.23} parent=27 // pred_fallthru
        _
      // Predicated region
      $region37: #{leafnet_forward.23} parent=27 // pred_check
        %p223 = pneg %p147
      $region38: #{leafnet_forward.23} parent=27 // pred_check_branch
        %225 = sbr.rel (%p223) target = $region40
      $region39: #{leafnet_forward.23} parent=27 // pred_region
        %p226 = scmp.lt.s32.totalorder %s12, 1
        %s227 = scalar_select %p226, %s12, 1
        %s228 = scalar_lea.vmem %s5, %s227
      $region40: #{leafnet_forward.23} parent=27 // pred_fallthru
        _
    $region28: #{leafnet_forward.23} parent=5 // pred_fallthru
      _
    %p229 = scmp.le.s32.totalorder 1, %s12
    %p230 = scmp.lt.s32.totalorder %s12, 3
    %p231 = pnand %p229, %p230
    %p232 = pneg %p231
    // Predicated region
    $region41: #{leafnet_forward.23} parent=5 // pred_check
      _
    $region42: #{leafnet_forward.23} parent=5 // pred_check_branch
      %234 = sbr.rel (%p231) target = $region44
    $region43: #{leafnet_forward.23} parent=5 // pred_region
      %s235 = ssub.s32 %s12, 1
      %p236 = scmp.lt.s32.totalorder %s17, 1
      %s237 = scalar_select %p236, %s17, 1
      %s238 = smul.addr %s237, 8
      %s239 = smul.addr %s238, 4
      %s240 = scalar_lea.vmem %s0, %s239
      %p241 = pneg %p38
      %p242 = pneg %p35
      %p243 = pneg %p59
      %p244 = pneg %p56
      %p245 = pneg %p80
      %p246 = pneg %p77
      %p247 = pneg %p101
      %p248 = pneg %p98
      %p249 = scmp.lt.s32.totalorder %s17, 1
      %s250 = scalar_select %p249, %s17, 1
      %s251 = smul.addr %s250, 8
      %s252 = smul.addr %s251, 4
      %s253 = scalar_lea.vmem %s4, %s252
      %p254 = pneg %p127
      %p255 = pneg %p124
      %p256 = scmp.lt.s32.totalorder %s17, 1
      %s257 = scalar_select %p256, %s17, 1
      %s258 = scalar_lea.vmem %s5, %s257
      %p259 = pneg %p153
      %p260 = pneg %p150
      %p261 = pneg %p179
      %p262 = pneg %p176
      %p263 = scmp.lt.s32.totalorder %s17, 1
      %s264 = scalar_select %p263, %s17, 1
      %s265 = smul.addr %s264, 8
      %s266 = smul.addr %s265, 4
      %s267 = scalar_lea.vmem %s6, %s266
      %p268 = scmp.lt.s32.totalorder %s17, 1
      %s269 = scalar_select %p268, %s17, 1
      %s270 = smul.addr %s269, 8
      %s271 = smul.addr %s270, 4
      %s272 = scalar_lea.vmem %s0, %s271
      %p273 = scmp.lt.s32.totalorder %s17, 1
      %s274 = scalar_select %p273, %s17, 1
      %s275 = smul.addr %s274, 8
      %s276 = smul.addr %s275, 4
      %s277 = scalar_lea.vmem %s4, %s276
      %p278 = scmp.lt.s32.totalorder %s17, 1
      %s279 = scalar_select %p278, %s17, 1
      %s280 = scalar_lea.vmem %s5, %s279
      %p281 = scmp.lt.s32.totalorder %s17, 1
      %s282 = scalar_select %p281, %s17, 1
      %s283 = smul.addr %s282, 8
      %s284 = smul.addr %s283, 4
      %s285 = scalar_lea.vmem %s6, %s284
      %v287 = vld [vmem:[%s272] sm:$0xf]
      %v288 = vld [vmem:[%s272 + $0x4] sm:$0xf]
      %v289 = vld [vmem:[%s272 + $0x8] sm:$0xf]
      %v290 = vld [vmem:[%s272 + $0xc] sm:$0xf]
      %v291 = vld [vmem:[%s272 + $0x10] sm:$0xf]
      %v292 = vld [vmem:[%s272 + $0x14] sm:$0xf]
      %v293 = vld [vmem:[%s272 + $0x18] sm:$0xf]
      %v294 = vld [vmem:[%s272 + $0x1c] sm:$0xf]
      %v295 = vld [vmem:[%s1] sm:$0xf]
      %v296 = vld [vmem:[%s1 + $0x4] sm:$0xf]
      %v297 = vld [vmem:[%s1 + $0x8] sm:$0xf]
      %v298 = vld [vmem:[%s1 + $0xc] sm:$0xf]
      %v299 = vld [vmem:[%s1 + $0x10] sm:$0xf]
      %v300 = vld [vmem:[%s1 + $0x14] sm:$0xf]
      %v301 = vld [vmem:[%s1 + $0x18] sm:$0xf]
      %v302 = vld [vmem:[%s1 + $0x1c] sm:$0xf]
      %v303 = vld [vmem:[%s1 + $0x20] sm:$0xf]
      %v304 = vld [vmem:[%s1 + $0x24] sm:$0xf]
      %v305 = vld [vmem:[%s1 + $0x28] sm:$0xf]
      %v306 = vld [vmem:[%s1 + $0x2c] sm:$0xf]
      %v307 = vld [vmem:[%s1 + $0x30] sm:$0xf]
      %v308 = vld [vmem:[%s1 + $0x34] sm:$0xf]
      %v309 = vld [vmem:[%s1 + $0x38] sm:$0xf]
      %v310 = vld [vmem:[%s1 + $0x3c] sm:$0xf]
      %v319 = vunpack.c.l.b16 %v287
      %v320 = vunpack.c.l.b16 %v288
      %v321 = vunpack.c.l.b16 %v289
      %v322 = vunpack.c.l.b16 %v290
      %v323 = vunpack.c.l.b16 %v291
      %v324 = vunpack.c.l.b16 %v292
      %v325 = vunpack.c.l.b16 %v293
      %v326 = vunpack.c.l.b16 %v294
      %v327 = vpack.c.b16 %v320, %v319
      %v328 = vpack.c.b16 %v322, %v321
      %v329 = vpack.c.b16 %v324, %v323
      %v330 = vpack.c.b16 %v326, %v325
      %v351 = vunpack.c.l.b16 %v295
      %v352 = vunpack.c.l.b16 %v296
      %v353 = vunpack.c.l.b16 %v297
      %v354 = vunpack.c.l.b16 %v298
      %v355 = vunpack.c.l.b16 %v299
      %v356 = vunpack.c.l.b16 %v300
      %v357 = vunpack.c.l.b16 %v301
      %v358 = vunpack.c.l.b16 %v302
      %v359 = vunpack.c.l.b16 %v303
      %v360 = vunpack.c.l.b16 %v304
      %v361 = vunpack.c.l.b16 %v305
      %v362 = vunpack.c.l.b16 %v306
      %v363 = vunpack.c.l.b16 %v307
      %v364 = vunpack.c.l.b16 %v308
      %v365 = vunpack.c.l.b16 %v309
      %v366 = vunpack.c.l.b16 %v310
      %v367 = vpack.c.b16 %v352, %v351
      %v368 = vpack.c.b16 %v354, %v353
      %v369 = vpack.c.b16 %v356, %v355
      %v370 = vpack.c.b16 %v358, %v357
      %v371 = vpack.c.b16 %v360, %v359
      %v372 = vpack.c.b16 %v362, %v361
      %v373 = vpack.c.b16 %v364, %v363
      %v374 = vpack.c.b16 %v366, %v365
      %383 = vmatprep.subr.bf16.mxu0 0
      %384 = vmatpush1.bf16.msra.mxu0 %v374
      %385 = vmatprep.subr.bf16.mxu0 0
      %386 = vmatpush1.bf16.msra.mxu0 %v373
      %387 = vmatprep.subr.bf16.mxu0 0
      %388 = vmatpush1.bf16.msra.mxu0 %v372
      %389 = vmatprep.subr.bf16.mxu0 0
      %390 = vmatpush1.bf16.msra.mxu0 %v371
      %391 = vmatprep.subr.bf16.mxu0 0
      %392 = vmatpush1.bf16.msra.mxu0 %v370
      %393 = vmatprep.subr.bf16.mxu0 0
      %394 = vmatpush1.bf16.msra.mxu0 %v369
      %395 = vmatprep.subr.bf16.mxu0 0
      %396 = vmatpush1.bf16.msra.mxu0 %v368
      %397 = vmatprep.subr.bf16.mxu0 0
      %398 = vmatpush1.bf16.msra.mxu0 %v367
      %399 = vmatprep.subr.bf16.mxu0 0
      %400 = vmatpush2.bf16.msra.mxu0 0
      %401 = vmatprep.subr.bf16.mxu0 0
      %402 = vmatpush2.bf16.msra.mxu0 0
      %403 = vmatprep.subr.bf16.mxu0 0
      %404 = vmatpush2.bf16.msra.mxu0 0
      %405 = vmatprep.subr.bf16.mxu0 0
      %406 = vmatpush2.bf16.msra.mxu0 0
      %407 = vmatprep.subr.bf16.mxu0 0
      %408 = vmatpush2.bf16.msra.mxu0 0
      %409 = vmatprep.subr.bf16.mxu0 0
      %410 = vmatpush2.bf16.msra.mxu0 0
      %411 = vmatprep.subr.bf16.mxu0 0
      %412 = vmatpush2.bf16.msra.mxu0 0
      %413 = vmatprep.subr.bf16.mxu0 0
      %414 = vmatpush2.bf16.msra.mxu0 0
      %415 = vmatprep.mubr.bf16.mxu0 0
      %416 = vmatmul.mubr.bf16.gmra.mxu0 %v327
      %v417 = vpop.f32.mrf.mxu0
      %v418 = vadd.f32 0.0, %v417
      %v419 = vpop.f32.mrf.mxu0
      %v420 = vpop.f32.mrf.mxu0
      %v421 = vadd.f32 0.0, %v420
      %v422 = vpop.f32.mrf.mxu0
      %423 = vmatprep.mubr.bf16.mxu0 0
      %424 = vmatmul.mubr.bf16.gmra.mxu0 %v328
      %v425 = vpop.f32.mrf.mxu0
      %v426 = vadd.f32 0.0, %v425
      %v427 = vpop.f32.mrf.mxu0
      %v428 = vpop.f32.mrf.mxu0
      %v429 = vadd.f32 0.0, %v428
      %v430 = vpop.f32.mrf.mxu0
      %431 = vmatprep.mubr.bf16.mxu0 0
      %432 = vmatmul.mubr.bf16.gmra.mxu0 %v329
      %v433 = vpop.f32.mrf.mxu0
      %v434 = vadd.f32 0.0, %v433
      %v435 = vpop.f32.mrf.mxu0
      %v436 = vpop.f32.mrf.mxu0
      %v437 = vadd.f32 0.0, %v436
      %v438 = vpop.f32.mrf.mxu0
      %439 = vmatprep.mubr.bf16.mxu0 0
      %440 = vmatmul.mubr.bf16.gmra.mxu0 %v330
      %v441 = vpop.f32.mrf.mxu0
      %v442 = vadd.f32 0.0, %v441
      %v443 = vpop.f32.mrf.mxu0
      %v444 = vpop.f32.mrf.mxu0
      %v445 = vadd.f32 0.0, %v444
      %v446 = vpop.f32.mrf.mxu0
      %447 = vdwg.mxu0
      %v448 = vld [vmem:[%s2] sm:$0x1]
      %v450 = vlaneseq
      %v451 = vshrl.u32 %v450, 7
      %v452 = vsub.s32 0, %v451
      %v453 = vrot.slane %v448, %v452
      %v455 = vmul.f32 %v418, %v453
      %v456 = vmul.f32 %v421, %v453
      %v457 = vmul.f32 %v426, %v453
      %v458 = vmul.f32 %v429, %v453
      %v459 = vmul.f32 %v434, %v453
      %v460 = vmul.f32 %v437, %v453
      %v461 = vmul.f32 %v442, %v453
      %v462 = vmul.f32 %v445, %v453
      %v463 = vld [vmem:[%s3] sm:$0x1]
      %v465 = vlaneseq
      %v466 = vshrl.u32 %v465, 7
      %v467 = vsub.s32 0, %v466
      %v468 = vrot.slane %v463, %v467
      %v470 = vadd.f32 %v455, %v468
      %v471 = vadd.f32 %v456, %v468
      %v472 = vadd.f32 %v457, %v468
      %v473 = vadd.f32 %v458, %v468
      %v474 = vadd.f32 %v459, %v468
      %v475 = vadd.f32 %v460, %v468
      %v476 = vadd.f32 %v461, %v468
      %v477 = vadd.f32 %v462, %v468
      %v478 = vld [vmem:[%s277] sm:$0xf]
      %v479 = vld [vmem:[%s277 + $0x4] sm:$0xf]
      %v480 = vld [vmem:[%s277 + $0x8] sm:$0xf]
      %v481 = vld [vmem:[%s277 + $0xc] sm:$0xf]
      %v482 = vld [vmem:[%s277 + $0x10] sm:$0xf]
      %v483 = vld [vmem:[%s277 + $0x14] sm:$0xf]
      %v484 = vld [vmem:[%s277 + $0x18] sm:$0xf]
      %v485 = vld [vmem:[%s277 + $0x1c] sm:$0xf]
      %v486 = vunpack.c.l.bf16 %v478
      %v487 = vunpack.c.l.bf16 %v479
      %v488 = vunpack.c.l.bf16 %v480
      %v489 = vunpack.c.l.bf16 %v481
      %v490 = vunpack.c.l.bf16 %v482
      %v491 = vunpack.c.l.bf16 %v483
      %v492 = vunpack.c.l.bf16 %v484
      %v493 = vunpack.c.l.bf16 %v485
      %v494 = vld [vmem:[%s280] sm:$0x1]
      %v496 = vlaneseq
      %v497 = vshrl.u32 %v496, 7
      %v498 = vsub.s32 0, %v497
      %v499 = vrot.slane %v494, %v498
      %v501 = vmul.f32 %v486, %v499
      %v502 = vmul.f32 %v487, %v499
      %v503 = vmul.f32 %v488, %v499
      %v504 = vmul.f32 %v489, %v499
      %v505 = vmul.f32 %v490, %v499
      %v506 = vmul.f32 %v491, %v499
      %v507 = vmul.f32 %v492, %v499
      %v508 = vmul.f32 %v493, %v499
      %v509 = vadd.f32 %v501, %v470
      %v510 = vadd.f32 %v502, %v471
      %v511 = vadd.f32 %v503, %v472
      %v512 = vadd.f32 %v504, %v473
      %v513 = vadd.f32 %v505, %v474
      %v514 = vadd.f32 %v506, %v475
      %v515 = vadd.f32 %v507, %v476
      %v516 = vadd.f32 %v508, %v477
      %v517 = vmax.f32 %v509, 0.0
      %v518 = vmax.f32 %v510, 0.0
      %v519 = vmax.f32 %v511, 0.0
      %v520 = vmax.f32 %v512, 0.0
      %v521 = vmax.f32 %v513, 0.0
      %v522 = vmax.f32 %v514, 0.0
      %v523 = vmax.f32 %v515, 0.0
      %v524 = vmax.f32 %v516, 0.0
      %v525 = vpack.c.bf16 %v518, %v517
      %v526 = vpack.c.bf16 %v520, %v519
      %v527 = vpack.c.bf16 %v522, %v521
      %v528 = vpack.c.bf16 %v524, %v523
      %v533 = vunpack.c.l.b16 %v525
      %v534 = vunpack.c.h.b16 %v525
      %v535 = vunpack.c.l.b16 %v526
      %v536 = vunpack.c.h.b16 %v526
      %v537 = vunpack.c.l.b16 %v527
      %v538 = vunpack.c.h.b16 %v527
      %v539 = vunpack.c.l.b16 %v528
      %v540 = vunpack.c.h.b16 %v528
      %v541 = vpack.c.b16 %v533, %v533
      %v542 = vpack.c.b16 %v534, %v534
      %v543 = vpack.c.b16 %v535, %v535
      %v544 = vpack.c.b16 %v536, %v536
      %v545 = vpack.c.b16 %v537, %v537
      %v546 = vpack.c.b16 %v538, %v538
      %v547 = vpack.c.b16 %v539, %v539
      %v548 = vpack.c.b16 %v540, %v540
      %557 = vst [vmem:[%s285] sm:$0xf] %v541
      %558 = vst [vmem:[%s285 + $0x4] sm:$0xf] %v542
      %559 = vst [vmem:[%s285 + $0x8] sm:$0xf] %v543
      %560 = vst [vmem:[%s285 + $0xc] sm:$0xf] %v544
      %561 = vst [vmem:[%s285 + $0x10] sm:$0xf] %v545
      %562 = vst [vmem:[%s285 + $0x14] sm:$0xf] %v546
      %563 = vst [vmem:[%s285 + $0x18] sm:$0xf] %v547
      %564 = vst [vmem:[%s285 + $0x1c] sm:$0xf] %v548
      %p565 = scmp.lt.s32.totalorder %s17, 1
      %s566 = scalar_select %p565, %s17, 1
      %s567 = smul.addr %s566, 8
      %s568 = smul.addr %s567, 4
      %s569 = scalar_lea.vmem %s6, %s568
      // Predicated region
      $region45: #{leafnet_forward.23} parent=43 // pred_check
        %p570 = pneg %p176
      $region46: #{leafnet_forward.23} parent=43 // pred_check_branch
        %572 = sbr.rel (%p570) target = $region48
      $region47: #{leafnet_forward.23} parent=43 // pred_region
        _
      $region48: #{leafnet_forward.23} parent=43 // pred_fallthru
        _
    $region44: #{leafnet_forward.23} parent=5 // pred_fallthru
      _
    %p573 = scmp.le.s32.totalorder 2, %s12
    // Predicated region
    $region49: #{leafnet_forward.23} parent=5 // pred_check
      %p574 = pneg %p573
    $region50: #{leafnet_forward.23} parent=5 // pred_check_branch
      %576 = sbr.rel (%p574) target = $region52
    $region51: #{leafnet_forward.23} parent=5 // pred_region
      %s577 = ssub.s32 %s12, 2
      // Predicated region
      $region53: #{leafnet_forward.23} parent=51 // pred_check
        %p578 = pneg %p182
      $region54: #{leafnet_forward.23} parent=51 // pred_check_branch
        %580 = sbr.rel (%p578) target = $region56
      $region55: #{leafnet_forward.23} parent=51 // pred_region
        %p581 = scmp.lt.s32.totalorder %s18, 1
        %s582 = scalar_select %p581, %s18, 1
        %s583 = smul.addr %s582, 8
        %s584 = smul.addr %s583, 4
        %s585 = scalar_lea.vmem %s6, %s584
      $region56: #{leafnet_forward.23} parent=51 // pred_fallthru
        _
    $region52: #{leafnet_forward.23} parent=5 // pred_fallthru
      _
  $region6: #{leafnet_forward.23} parent=0 // loop_footer
    %s16 = sadd.s32 1, %s12
  $region7: #{leafnet_forward.23} parent=0 // loop_footer_branch
    %11 = sbr.rel target = $region3
  $region8: #{leafnet_forward.23} parent=0 // loop_exit
    _

// kernel: leafnet_forward.22
$region0: #{leafnet_forward.22}
  #allocation0 [shape = 'u32[]', space=smem, size = 0x4, offset = 0x4, fixed_abs, tag = 'smem constant byte address 0x4 - core index']
  #allocation1 [shape = 'u32[144,128]{1,0:T(1,128)}', space=vmem, size = 0x12000, scoped, tag = 'internal scratch']
  %s0 = inlined_call_operand.vmem [shape: bf16[8,128], index: 0, kind: input, shape index: {}]
  %s1 = inlined_call_operand.vmem [shape: bf16[128,128], index: 1, kind: input, shape index: {}]
  %s2 = inlined_call_operand.vmem [shape: f32[1,128], index: 2, kind: input, shape index: {}]
  %s3 = inlined_call_operand.vmem [shape: bf16[128,128], index: 3, kind: input, shape index: {}]
  %s4 = inlined_call_operand.vmem [shape: f32[1,128], index: 4, kind: input, shape index: {}]
  %s5 = inlined_call_operand.vmem [shape: f32[8,128], index: 5, kind: output, shape index: {}]
  %s6 = sld [smem:[#allocation0]]
  $region30: #{leafnet_forward.22} parent=0
    _
  %s8 = ssub.s32 1, %s6
  %s9 = scalar_select 0, %s8, %s6
  // Predicated region
  $region2: #{leafnet_forward.22} parent=0 // pred_check
    _
  $region3: #{leafnet_forward.22} parent=0 // pred_check_branch
    %11 = sbr.rel (0) target = $region5
  $region4: #{leafnet_forward.22} parent=0 // pred_region
    _
  $region5: #{leafnet_forward.22} parent=0 // pred_fallthru
    _
  // Predicated region
  $region6: #{leafnet_forward.22} parent=0 // pred_check
    _
  $region7: #{leafnet_forward.22} parent=0 // pred_check_branch
    %13 = sbr.rel (0) target = $region9
  $region8: #{leafnet_forward.22} parent=0 // pred_region
    _
  $region9: #{leafnet_forward.22} parent=0 // pred_fallthru
    _
  // Predicated region
  $region10: #{leafnet_forward.22} parent=0 // pred_check
    _
  $region11: #{leafnet_forward.22} parent=0 // pred_check_branch
    %15 = sbr.rel (0) target = $region13
  $region12: #{leafnet_forward.22} parent=0 // pred_region
    _
  $region13: #{leafnet_forward.22} parent=0 // pred_fallthru
    _
  // Predicated region
  $region14: #{leafnet_forward.22} parent=0 // pred_check
    _
  $region15: #{leafnet_forward.22} parent=0 // pred_check_branch
    %17 = sbr.rel (0) target = $region17
  $region16: #{leafnet_forward.22} parent=0 // pred_region
    _
  $region17: #{leafnet_forward.22} parent=0 // pred_fallthru
    _
  // Predicated region
  $region18: #{leafnet_forward.22} parent=0 // pred_check
    _
  $region19: #{leafnet_forward.22} parent=0 // pred_check_branch
    %19 = sbr.rel (0) target = $region21
  $region20: #{leafnet_forward.22} parent=0 // pred_region
    _
  $region21: #{leafnet_forward.22} parent=0 // pred_fallthru
    _
  %v21 = vld [vmem:[%s0] sm:$0xf]
  %v22 = vld [vmem:[%s1] sm:$0xf]
  %v23 = vld [vmem:[%s1 + $0x4] sm:$0xf]
  %v24 = vld [vmem:[%s1 + $0x8] sm:$0xf]
  %v25 = vld [vmem:[%s1 + $0xc] sm:$0xf]
  %v26 = vld [vmem:[%s1 + $0x10] sm:$0xf]
  %v27 = vld [vmem:[%s1 + $0x14] sm:$0xf]
  %v28 = vld [vmem:[%s1 + $0x18] sm:$0xf]
  %v29 = vld [vmem:[%s1 + $0x1c] sm:$0xf]
  %v30 = vld [vmem:[%s1 + $0x20] sm:$0xf]
  %v31 = vld [vmem:[%s1 + $0x24] sm:$0xf]
  %v32 = vld [vmem:[%s1 + $0x28] sm:$0xf]
  %v33 = vld [vmem:[%s1 + $0x2c] sm:$0xf]
  %v34 = vld [vmem:[%s1 + $0x30] sm:$0xf]
  %v35 = vld [vmem:[%s1 + $0x34] sm:$0xf]
  %v36 = vld [vmem:[%s1 + $0x38] sm:$0xf]
  %v37 = vld [vmem:[%s1 + $0x3c] sm:$0xf]
  %v38 = vld [vmem:[%s2] sm:$0x1]
  %v40 = vlaneseq
  %v41 = vshrl.u32 %v40, 7
  %v42 = vsub.s32 0, %v41
  %v43 = vrot.slane %v38, %v42
  %v61 = vunpack.c.l.b16 %v22
  %v62 = vunpack.c.l.b16 %v23
  %v63 = vunpack.c.l.b16 %v24
  %v64 = vunpack.c.l.b16 %v25
  %v65 = vunpack.c.l.b16 %v26
  %v66 = vunpack.c.l.b16 %v27
  %v67 = vunpack.c.l.b16 %v28
  %v68 = vunpack.c.l.b16 %v29
  %v69 = vunpack.c.l.b16 %v30
  %v70 = vunpack.c.l.b16 %v31
  %v71 = vunpack.c.l.b16 %v32
  %v72 = vunpack.c.l.b16 %v33
  %v73 = vunpack.c.l.b16 %v34
  %v74 = vunpack.c.l.b16 %v35
  %v75 = vunpack.c.l.b16 %v36
  %v76 = vunpack.c.l.b16 %v37
  %v77 = vpack.c.b16 %v62, %v61
  %v78 = vpack.c.b16 %v64, %v63
  %v79 = vpack.c.b16 %v66, %v65
  %v80 = vpack.c.b16 %v68, %v67
  %v81 = vpack.c.b16 %v70, %v69
  %v82 = vpack.c.b16 %v72, %v71
  %v83 = vpack.c.b16 %v74, %v73
  %v84 = vpack.c.b16 %v76, %v75
  %93 = vmatprep.subr.bf16.mxu0 0
  %94 = vmatpush1.bf16.msra.mxu0 %v84
  %95 = vmatprep.subr.bf16.mxu0 0
  %96 = vmatpush1.bf16.msra.mxu0 %v83
  %97 = vmatprep.subr.bf16.mxu0 0
  %98 = vmatpush1.bf16.msra.mxu0 %v82
  %99 = vmatprep.subr.bf16.mxu0 0
  %100 = vmatpush1.bf16.msra.mxu0 %v81
  %101 = vmatprep.subr.bf16.mxu0 0
  %102 = vmatpush1.bf16.msra.mxu0 %v80
  %103 = vmatprep.subr.bf16.mxu0 0
  %104 = vmatpush1.bf16.msra.mxu0 %v79
  %105 = vmatprep.subr.bf16.mxu0 0
  %106 = vmatpush1.bf16.msra.mxu0 %v78
  %107 = vmatprep.subr.bf16.mxu0 0
  %108 = vmatpush1.bf16.msra.mxu0 %v77
  %109 = vmatprep.subr.bf16.mxu0 0
  %110 = vmatpush2.bf16.msra.mxu0 0
  %111 = vmatprep.subr.bf16.mxu0 0
  %112 = vmatpush2.bf16.msra.mxu0 0
  %113 = vmatprep.subr.bf16.mxu0 0
  %114 = vmatpush2.bf16.msra.mxu0 0
  %115 = vmatprep.subr.bf16.mxu0 0
  %116 = vmatpush2.bf16.msra.mxu0 0
  %117 = vmatprep.subr.bf16.mxu0 0
  %118 = vmatpush2.bf16.msra.mxu0 0
  %119 = vmatprep.subr.bf16.mxu0 0
  %120 = vmatpush2.bf16.msra.mxu0 0
  %121 = vmatprep.subr.bf16.mxu0 0
  %122 = vmatpush2.bf16.msra.mxu0 0
  %123 = vmatprep.subr.bf16.mxu0 0
  %124 = vmatpush2.bf16.msra.mxu0 0
  %125 = vmatprep.mubr.bf16.mxu0 0
  %126 = vmatmul.mubr.bf16.gmra.mxu0 %v21
  %v127 = vpop.f32.mrf.mxu0
  %v128 = vadd.f32 %v43, %v127
  %v129 = vpop.f32.mrf.mxu0
  %v130 = vpop.f32.mrf.mxu0
  %v131 = vpop.f32.mrf.mxu0
  %132 = vdwg.mxu0
  %v133 = vmax.f32 %v128, 0.0
  %v134 = vpack.c.bf16 %v133, %v133
  %v135 = vld [vmem:[%s3] sm:$0xf]
  %v136 = vld [vmem:[%s3 + $0x4] sm:$0xf]
  %v137 = vld [vmem:[%s3 + $0x8] sm:$0xf]
  %v138 = vld [vmem:[%s3 + $0xc] sm:$0xf]
  %v139 = vld [vmem:[%s3 + $0x10] sm:$0xf]
  %v140 = vld [vmem:[%s3 + $0x14] sm:$0xf]
  %v141 = vld [vmem:[%s3 + $0x18] sm:$0xf]
  %v142 = vld [vmem:[%s3 + $0x1c] sm:$0xf]
  %v143 = vld [vmem:[%s3 + $0x20] sm:$0xf]
  %v144 = vld [vmem:[%s3 + $0x24] sm:$0xf]
  %v145 = vld [vmem:[%s3 + $0x28] sm:$0xf]
  %v146 = vld [vmem:[%s3 + $0x2c] sm:$0xf]
  %v147 = vld [vmem:[%s3 + $0x30] sm:$0xf]
  %v148 = vld [vmem:[%s3 + $0x34] sm:$0xf]
  %v149 = vld [vmem:[%s3 + $0x38] sm:$0xf]
  %v150 = vld [vmem:[%s3 + $0x3c] sm:$0xf]
  %v151 = vld [vmem:[%s4] sm:$0x1]
  %v153 = vlaneseq
  %v154 = vshrl.u32 %v153, 7
  %v155 = vsub.s32 0, %v154
  %v156 = vrot.slane %v151, %v155
  %v174 = vunpack.c.l.b16 %v135
  %v175 = vunpack.c.l.b16 %v136
  %v176 = vunpack.c.l.b16 %v137
  %v177 = vunpack.c.l.b16 %v138
  %v178 = vunpack.c.l.b16 %v139
  %v179 = vunpack.c.l.b16 %v140
  %v180 = vunpack.c.l.b16 %v141
  %v181 = vunpack.c.l.b16 %v142
  %v182 = vunpack.c.l.b16 %v143
  %v183 = vunpack.c.l.b16 %v144
  %v184 = vunpack.c.l.b16 %v145
  %v185 = vunpack.c.l.b16 %v146
  %v186 = vunpack.c.l.b16 %v147
  %v187 = vunpack.c.l.b16 %v148
  %v188 = vunpack.c.l.b16 %v149
  %v189 = vunpack.c.l.b16 %v150
  %v190 = vpack.c.b16 %v175, %v174
  %v191 = vpack.c.b16 %v177, %v176
  %v192 = vpack.c.b16 %v179, %v178
  %v193 = vpack.c.b16 %v181, %v180
  %v194 = vpack.c.b16 %v183, %v182
  %v195 = vpack.c.b16 %v185, %v184
  %v196 = vpack.c.b16 %v187, %v186
  %v197 = vpack.c.b16 %v189, %v188
  %206 = vmatprep.subr.bf16.mxu0 0
  %207 = vmatpush1.bf16.msra.mxu0 %v197
  %208 = vmatprep.subr.bf16.mxu0 0
  %209 = vmatpush1.bf16.msra.mxu0 %v196
  %210 = vmatprep.subr.bf16.mxu0 0
  %211 = vmatpush1.bf16.msra.mxu0 %v195
  %212 = vmatprep.subr.bf16.mxu0 0
  %213 = vmatpush1.bf16.msra.mxu0 %v194
  %214 = vmatprep.subr.bf16.mxu0 0
  %215 = vmatpush1.bf16.msra.mxu0 %v193
  %216 = vmatprep.subr.bf16.mxu0 0
  %217 = vmatpush1.bf16.msra.mxu0 %v192
  %218 = vmatprep.subr.bf16.mxu0 0
  %219 = vmatpush1.bf16.msra.mxu0 %v191
  %220 = vmatprep.subr.bf16.mxu0 0
  %221 = vmatpush1.bf16.msra.mxu0 %v190
  %222 = vmatprep.subr.bf16.mxu0 0
  %223 = vmatpush2.bf16.msra.mxu0 0
  %224 = vmatprep.subr.bf16.mxu0 0
  %225 = vmatpush2.bf16.msra.mxu0 0
  %226 = vmatprep.subr.bf16.mxu0 0
  %227 = vmatpush2.bf16.msra.mxu0 0
  %228 = vmatprep.subr.bf16.mxu0 0
  %229 = vmatpush2.bf16.msra.mxu0 0
  %230 = vmatprep.subr.bf16.mxu0 0
  %231 = vmatpush2.bf16.msra.mxu0 0
  %232 = vmatprep.subr.bf16.mxu0 0
  %233 = vmatpush2.bf16.msra.mxu0 0
  %234 = vmatprep.subr.bf16.mxu0 0
  %235 = vmatpush2.bf16.msra.mxu0 0
  %236 = vmatprep.subr.bf16.mxu0 0
  %237 = vmatpush2.bf16.msra.mxu0 0
  %238 = vmatprep.mubr.bf16.mxu0 0
  %239 = vmatmul.mubr.bf16.gmra.mxu0 %v134
  %v240 = vpop.f32.mrf.mxu0
  %v241 = vadd.f32 %v156, %v240
  %v242 = vpop.f32.mrf.mxu0
  %v243 = vpop.f32.mrf.mxu0
  %v244 = vpop.f32.mrf.mxu0
  %245 = vdwg.mxu0
  %v246 = vxor.u32 %v241, 2147483648
  %v247 = vmul.f32 %v246, 1.442695
  %v248 = vpow.pop %v247
  %v249 = vadd.f32 %v248, 1.0
  %v250 = vrcp.pop %v249
  %v251 = vmul.f32 1.0, %v250
  %252 = vst [vmem:[%s5] sm:$0xff] %v251
  // Predicated region
  $region22: #{leafnet_forward.22} parent=0 // pred_check
    _
  $region23: #{leafnet_forward.22} parent=0 // pred_check_branch
    %254 = sbr.rel (0) target = $region25
  $region24: #{leafnet_forward.22} parent=0 // pred_region
    _
  $region25: #{leafnet_forward.22} parent=0 // pred_fallthru
    _
  // Predicated region
  $region26: #{leafnet_forward.22} parent=0 // pred_check
    _
  $region27: #{leafnet_forward.22} parent=0 // pred_check_branch
    %256 = sbr.rel (0) target = $region29
  $region28: #{leafnet_forward.22} parent=0 // pred_region
    _
  $region29: #{leafnet_forward.22} parent=0 // pred_fallthru
    _

// kernel: leafnet_forward.19
$region0: #{leafnet_forward.19}
  #allocation0 [shape = 'u32[]', space=smem, size = 0x4, offset = 0x4, fixed_abs, tag = 'smem constant byte address 0x4 - core index']
  #allocation1 [shape = 'u32[144,128]{1,0:T(1,128)}', space=vmem, size = 0x12000, scoped, tag = 'internal scratch']
  %s0 = inlined_call_operand.vmem [shape: bf16[2,10,16,128], index: 0, kind: input, shape index: {}]
  %s1 = inlined_call_operand.vmem [shape: bf16[9,128,128], index: 1, kind: input, shape index: {}]
  %s2 = inlined_call_operand.vmem [shape: f32[1,128], index: 2, kind: input, shape index: {}]
  %s3 = inlined_call_operand.vmem [shape: f32[1,128], index: 3, kind: input, shape index: {}]
  %s4 = inlined_call_operand.vmem [shape: bf16[2,8,8,128], index: 4, kind: output, shape index: {}]
  %s5 = sld [smem:[#allocation0]]
  $region49: #{leafnet_forward.19} parent=0
    _
  %s7 = ssub.s32 1, %s5
  %s8 = scalar_select 0, %s7, %s5
  loop: start=0, step=1, limit=4
  $region2: #{leafnet_forward.19} parent=0 // loop_pre_header
    _
  $region3: #{leafnet_forward.19} parent=0 // loop_header
    %s10 = sphi 0, %s14
    %p11 = scmp.ge.s32.totalorder %s10, 4
    %s20 = sphi 0, %s22
    %s23 = sphi 0, %s20
    %s24 = sphi 0, %s23
    %s40 = sphi 0, %s24
    %s44 = sphi 0, %s44
    %s46 = sphi 0, %s44
    %s47 = sphi 0, %s46
    %s61 = sphi 0, %s47
    %s65 = sphi 0, %s65
    %s67 = sphi 0, %s65
    %s68 = sphi 0, %s67
    %s82 = sphi 0, %s68
    %s86 = sphi 0, %s86
    %s88 = sphi 0, %s86
    %s89 = sphi 0, %s88
    %s103 = sphi 0, %s89
    %s109 = sphi 0, %s111
    %s112 = sphi 0, %s109
    %s113 = sphi 0, %s112
    %s129 = sphi 0, %s113
  $region4: #{leafnet_forward.19} parent=0 // loop_header_branch
    %13 = sbr.rel (%p11) target = $region8
  $region5: #{leafnet_forward.19} parent=0 // loop_body
    %s15 = ssub.s32 %s10, 1
    %s16 = ssub.s32 %s10, 2
    %s17 = sadd.s32 %s10, 1
    %s18 = ssub.s32 %s10, %s17
    %p19 = scmp.eq.s32.totalorder %s18, 0
    %s21 = sadd.s32 %s20, 1
    %s22 = scalar_select %p19, %s20, %s21
    %p25 = pneg %p19
    %p26 = scmp.eq.s32.totalorder %s10, 1
    %p27 = por %p25, %p26
    %p28 = scmp.ne.s32.totalorder %s20, %s23
    %p29 = scmp.eq.s32.totalorder %s10, 0
    %p30 = por %p28, %p29
    %p31 = scmp.ne.s32.totalorder %s20, %s23
    %p32 = scmp.eq.s32.totalorder %s15, 1
    %p33 = por %p31, %p32
    %p34 = scmp.ne.s32.totalorder %s23, %s24
    %p35 = scmp.eq.s32.totalorder %s15, 0
    %p36 = por %p34, %p35
    %p37 = scmp.ne.s32.totalorder %s23, %s24
    %p38 = scmp.eq.s32.totalorder %s16, 1
    %p39 = por %p37, %p38
    %p41 = scmp.ne.s32.totalorder %s24, %s40
    %p42 = scmp.eq.s32.totalorder %s16, 0
    %p43 = por %p41, %p42
    %s45 = sadd.s32 %s44, 1
    %p48 = scmp.eq.s32.totalorder %s10, 1
    %p49 = scmp.ne.s32.totalorder %s44, %s46
    %p50 = scmp.eq.s32.totalorder %s10, 0
    %p51 = por %p49, %p50
    %p52 = scmp.ne.s32.totalorder %s44, %s46
    %p53 = scmp.eq.s32.totalorder %s15, 1
    %p54 = por %p52, %p53
    %p55 = scmp.ne.s32.totalorder %s46, %s47
    %p56 = scmp.eq.s32.totalorder %s15, 0
    %p57 = por %p55, %p56
    %p58 = scmp.ne.s32.totalorder %s46, %s47
    %p59 = scmp.eq.s32.totalorder %s16, 1
    %p60 = por %p58, %p59
    %p62 = scmp.ne.s32.totalorder %s47, %s61
    %p63 = scmp.eq.s32.totalorder %s16, 0
    %p64 = por %p62, %p63
    %s66 = sadd.s32 %s65, 1
    %p69 = scmp.eq.s32.totalorder %s10, 1
    %p70 = scmp.ne.s32.totalorder %s65, %s67
    %p71 = scmp.eq.s32.totalorder %s10, 0
    %p72 = por %p70, %p71
    %p73 = scmp.ne.s32.totalorder %s65, %s67
    %p74 = scmp.eq.s32.totalorder %s15, 1
    %p75 = por %p73, %p74
    %p76 = scmp.ne.s32.totalorder %s67, %s68
    %p77 = scmp.eq.s32.totalorder %s15, 0
    %p78 = por %p76, %p77
    %p79 = scmp.ne.s32.totalorder %s67, %s68
    %p80 = scmp.eq.s32.totalorder %s16, 1
    %p81 = por %p79, %p80
    %p83 = scmp.ne.s32.totalorder %s68, %s82
    %p84 = scmp.eq.s32.totalorder %s16, 0
    %p85 = por %p83, %p84
    %s87 = sadd.s32 %s86, 1
    %p90 = scmp.eq.s32.totalorder %s10, 1
    %p91 = scmp.ne.s32.totalorder %s86, %s88
    %p92 = scmp.eq.s32.totalorder %s10, 0
    %p93 = por %p91, %p92
    %p94 = scmp.ne.s32.totalorder %s86, %s88
    %p95 = scmp.eq.s32.totalorder %s15, 1
    %p96 = por %p94, %p95
    %p97 = scmp.ne.s32.totalorder %s88, %s89
    %p98 = scmp.eq.s32.totalorder %s15, 0
    %p99 = por %p97, %p98
    %p100 = scmp.ne.s32.totalorder %s88, %s89
    %p101 = scmp.eq.s32.totalorder %s16, 1
    %p102 = por %p100, %p101
    %p104 = scmp.ne.s32.totalorder %s89, %s103
    %p105 = scmp.eq.s32.totalorder %s16, 0
    %p106 = por %p104, %p105
    %s107 = ssub.s32 %s10, %s17
    %p108 = scmp.eq.s32.totalorder %s107, 0
    %s110 = sadd.s32 %s109, 1
    %s111 = scalar_select %p108, %s109, %s110
    %p114 = pneg %p108
    %p115 = scmp.eq.s32.totalorder %s10, 1
    %p116 = por %p114, %p115
    %p117 = scmp.ne.s32.totalorder %s109, %s112
    %p118 = scmp.eq.s32.totalorder %s10, 0
    %p119 = por %p117, %p118
    %p120 = scmp.ne.s32.totalorder %s109, %s112
    %p121 = scmp.eq.s32.totalorder %s15, 1
    %p122 = por %p120, %p121
    %p123 = scmp.ne.s32.totalorder %s112, %s113
    %p124 = scmp.eq.s32.totalorder %s15, 0
    %p125 = por %p123, %p124
    %p126 = scmp.ne.s32.totalorder %s112, %s113
    %p127 = scmp.eq.s32.totalorder %s16, 1
    %p128 = por %p126, %p127
    %p130 = scmp.ne.s32.totalorder %s113, %s129
    %p131 = scmp.eq.s32.totalorder %s16, 0
    %p132 = por %p130, %p131
    %p133 = scmp.le.s32.totalorder 1, %s10
    %p134 = scmp.lt.s32.totalorder %s10, 3
    %p135 = pnand %p133, %p134
    %p136 = pneg %p135
    // Predicated region
    $region9: #{leafnet_forward.19} parent=5 // pred_check
      _
    $region10: #{leafnet_forward.19} parent=5 // pred_check_branch
      %138 = sbr.rel (%p135) target = $region12
    $region11: #{leafnet_forward.19} parent=5 // pred_region
      %s139 = ssub.s32 %s10, 1
      // Predicated region
      $region13: #{leafnet_forward.19} parent=11 // pred_check
        %p140 = pneg %p57
      $region14: #{leafnet_forward.19} parent=11 // pred_check_branch
        %142 = sbr.rel (%p140) target = $region16
      $region15: #{leafnet_forward.19} parent=11 // pred_region
        _
      $region16: #{leafnet_forward.19} parent=11 // pred_fallthru
        _
      // Predicated region
      $region17: #{leafnet_forward.19} parent=11 // pred_check
        %p143 = pneg %p78
      $region18: #{leafnet_forward.19} parent=11 // pred_check_branch
        %145 = sbr.rel (%p143) target = $region20
      $region19: #{leafnet_forward.19} parent=11 // pred_region
        _
      $region20: #{leafnet_forward.19} parent=11 // pred_fallthru
        _
      // Predicated region
      $region21: #{leafnet_forward.19} parent=11 // pred_check
        %p146 = pneg %p99
      $region22: #{leafnet_forward.19} parent=11 // pred_check_branch
        %148 = sbr.rel (%p146) target = $region24
      $region23: #{leafnet_forward.19} parent=11 // pred_region
        _
      $region24: #{leafnet_forward.19} parent=11 // pred_fallthru
        _
    $region12: #{leafnet_forward.19} parent=5 // pred_fallthru
      _
    %p149 = scmp.lt.s32.totalorder %s10, 2
    // Predicated region
    $region25: #{leafnet_forward.19} parent=5 // pred_check
      %p150 = pneg %p149
    $region26: #{leafnet_forward.19} parent=5 // pred_check_branch
      %152 = sbr.rel (%p150) target = $region28
    $region27: #{leafnet_forward.19} parent=5 // pred_region
      // Predicated region
      $region29: #{leafnet_forward.19} parent=27 // pred_check
        %p153 = pneg %p30
      $region30: #{leafnet_forward.19} parent=27 // pred_check_branch
        %155 = sbr.rel (%p153) target = $region32
      $region31: #{leafnet_forward.19} parent=27 // pred_region
        %p156 = scmp.lt.s32.totalorder %s10, 1
        %s157 = scalar_select %p156, %s10, 1
        %s158 = smul.addr %s157, 20
        %s159 = smul.addr %s158, 4
        %s160 = scalar_lea.vmem %s0, %s159
      $region32: #{leafnet_forward.19} parent=27 // pred_fallthru
        _
    $region28: #{leafnet_forward.19} parent=5 // pred_fallthru
      _
    %p161 = scmp.le.s32.totalorder 1, %s10
    %p162 = scmp.lt.s32.totalorder %s10, 3
    %p163 = pnand %p161, %p162
    %p164 = pneg %p163
    // Predicated region
    $region33: #{leafnet_forward.19} parent=5 // pred_check
      _
    $region34: #{leafnet_forward.19} parent=5 // pred_check_branch
      %166 = sbr.rel (%p163) target = $region36
    $region35: #{leafnet_forward.19} parent=5 // pred_region
      %s167 = ssub.s32 %s10, 1
      %p168 = scmp.lt.s32.totalorder %s15, 1
      %s169 = scalar_select %p168, %s15, 1
      %s170 = smul.addr %s169, 20
      %s171 = smul.addr %s170, 4
      %s172 = scalar_lea.vmem %s0, %s171
      %p173 = pneg %p36
      %p174 = pneg %p33
      %p175 = pneg %p57
      %p176 = pneg %p54
      %p177 = pneg %p78
      %p178 = pneg %p75
      %p179 = pneg %p99
      %p180 = pneg %p96
      %p181 = pneg %p125
      %p182 = pneg %p122
      %p183 = scmp.lt.s32.totalorder %s15, 1
      %s184 = scalar_select %p183, %s15, 1
      %s185 = smul.addr %s184, 8
      %s186 = smul.addr %s185, 4
      %s187 = scalar_lea.vmem %s4, %s186
      %p188 = scmp.lt.s32.totalorder %s15, 1
      %s189 = scalar_select %p188, %s15, 1
      %s190 = smul.addr %s189, 20
      %s191 = smul.addr %s190, 4
      %s192 = scalar_lea.vmem %s0, %s191
      %p193 = scmp.lt.s32.totalorder %s15, 1
      %s194 = scalar_select %p193, %s15, 1
      %s195 = smul.addr %s194, 8
      %s196 = smul.addr %s195, 4
      %s197 = scalar_lea.vmem %s4, %s196
      %v199 = vld [vmem:[%s192] sm:$0xf]
      %v200 = vld [vmem:[%s192 + $0x8] sm:$0xf]
      %v201 = vld [vmem:[%s192 + $0x10] sm:$0xf]
      %v202 = vld [vmem:[%s192 + $0x18] sm:$0xf]
      %v203 = vld [vmem:[%s192 + $0x20] sm:$0xf]
      %v204 = vld [vmem:[%s192 + $0x28] sm:$0xf]
      %v205 = vld [vmem:[%s192 + $0x30] sm:$0xf]
      %v206 = vld [vmem:[%s192 + $0x38] sm:$0xf]
      %v207 = vld [vmem:[%s1] sm:$0xf]
      %v208 = vld [vmem:[%s1 + $0x4] sm:$0xf]
      %v209 = vld [vmem:[%s1 + $0x8] sm:$0xf]
      %v210 = vld [vmem:[%s1 + $0xc] sm:$0xf]
      %v211 = vld [vmem:[%s1 + $0x10] sm:$0xf]
      %v212 = vld [vmem:[%s1 + $0x14] sm:$0xf]
      %v213 = vld [vmem:[%s1 + $0x18] sm:$0xf]
      %v214 = vld [vmem:[%s1 + $0x1c] sm:$0xf]
      %v215 = vld [vmem:[%s1 + $0x20] sm:$0xf]
      %v216 = vld [vmem:[%s1 + $0x24] sm:$0xf]
      %v217 = vld [vmem:[%s1 + $0x28] sm:$0xf]
      %v218 = vld [vmem:[%s1 + $0x2c] sm:$0xf]
      %v219 = vld [vmem:[%s1 + $0x30] sm:$0xf]
      %v220 = vld [vmem:[%s1 + $0x34] sm:$0xf]
      %v221 = vld [vmem:[%s1 + $0x38] sm:$0xf]
      %v222 = vld [vmem:[%s1 + $0x3c] sm:$0xf]
      %v223 = vld [vmem:[%s192 + $0x4] sm:$0x1]
      %v224 = vld [vmem:[%s192 + $0xc] sm:$0x1]
      %v225 = vld [vmem:[%s192 + $0x14] sm:$0x1]
      %v226 = vld [vmem:[%s192 + $0x1c] sm:$0x1]
      %v227 = vld [vmem:[%s192 + $0x24] sm:$0x1]
      %v228 = vld [vmem:[%s192 + $0x2c] sm:$0x1]
      %v229 = vld [vmem:[%s192 + $0x34] sm:$0x1]
      %v230 = vld [vmem:[%s192 + $0x3c] sm:$0x1]
      %vm231 = vsmask.f32 3328
      %vm232 = vsmask.f32 7440
      %vm233 = vmor %vm231, %vm232
      %v235 = vshrl.u32 %v199, 16
      %v237 = vrot.slane %v235, 4
      %v238 = vshll.u32 %v199, 16
      %v240 = vrot.slane %v238, 5
      %v241 = vor.u32 %v237, %v240
      %v242 = vrot.slane %v241, 4
      %v244 = vshll.u32 %v223, 16
      %v246 = vrot.slane %v244, 5
      %v247 = vsel %vm233, %v242, %v246
      %v249 = vshrl.u32 %v200, 16
      %v251 = vrot.slane %v249, 4
      %v252 = vshll.u32 %v200, 16
      %v254 = vrot.slane %v252, 5
      %v255 = vor.u32 %v251, %v254
      %v256 = vrot.slane %v255, 4
      %v258 = vshll.u32 %v224, 16
      %v260 = vrot.slane %v258, 5
      %v261 = vsel %vm233, %v256, %v260
      %v263 = vshrl.u32 %v201, 16
      %v265 = vrot.slane %v263, 4
      %v266 = vshll.u32 %v201, 16
      %v268 = vrot.slane %v266, 5
      %v269 = vor.u32 %v265, %v268
      %v270 = vrot.slane %v269, 4
      %v272 = vshll.u32 %v225, 16
      %v274 = vrot.slane %v272, 5
      %v275 = vsel %vm233, %v270, %v274
      %v277 = vshrl.u32 %v202, 16
      %v279 = vrot.slane %v277, 4
      %v280 = vshll.u32 %v202, 16
      %v282 = vrot.slane %v280, 5
      %v283 = vor.u32 %v279, %v282
      %v284 = vrot.slane %v283, 4
      %v286 = vshll.u32 %v226, 16
      %v288 = vrot.slane %v286, 5
      %v289 = vsel %vm233, %v284, %v288
      %v291 = vshrl.u32 %v203, 16
      %v293 = vrot.slane %v291, 4
      %v294 = vshll.u32 %v203, 16
      %v296 = vrot.slane %v294, 5
      %v297 = vor.u32 %v293, %v296
      %v298 = vrot.slane %v297, 4
      %v300 = vshll.u32 %v227, 16
      %v302 = vrot.slane %v300, 5
      %v303 = vsel %vm233, %v298, %v302
      %v305 = vshrl.u32 %v204, 16
      %v307 = vrot.slane %v305, 4
      %v308 = vshll.u32 %v204, 16
      %v310 = vrot.slane %v308, 5
      %v311 = vor.u32 %v307, %v310
      %v312 = vrot.slane %v311, 4
      %v314 = vshll.u32 %v228, 16
      %v316 = vrot.slane %v314, 5
      %v317 = vsel %vm233, %v312, %v316
      %v319 = vshrl.u32 %v205, 16
      %v321 = vrot.slane %v319, 4
      %v322 = vshll.u32 %v205, 16
      %v324 = vrot.slane %v322, 5
      %v325 = vor.u32 %v321, %v324
      %v326 = vrot.slane %v325, 4
      %v328 = vshll.u32 %v229, 16
      %v330 = vrot.slane %v328, 5
      %v331 = vsel %vm233, %v326, %v330
      %v333 = vshrl.u32 %v206, 16
      %v335 = vrot.slane %v333, 4
      %v336 = vshll.u32 %v206, 16
      %v338 = vrot.slane %v336, 5
      %v339 = vor.u32 %v335, %v338
      %v340 = vrot.slane %v339, 4
      %v342 = vshll.u32 %v230, 16
      %v344 = vrot.slane %v342, 5
      %v345 = vsel %vm233, %v340, %v344
      %s346 = scalar_lea.vmem %s1, 64
      %v347 = vld [vmem:[%s346] sm:$0xf]
      %v348 = vld [vmem:[%s346 + $0x4] sm:$0xf]
      %v349 = vld [vmem:[%s346 + $0x8] sm:$0xf]
      %v350 = vld [vmem:[%s346 + $0xc] sm:$0xf]
      %v351 = vld [vmem:[%s346 + $0x10] sm:$0xf]
      %v352 = vld [vmem:[%s346 + $0x14] sm:$0xf]
      %v353 = vld [vmem:[%s346 + $0x18] sm:$0xf]
      %v354 = vld [vmem:[%s346 + $0x1c] sm:$0xf]
      %v355 = vld [vmem:[%s346 + $0x20] sm:$0xf]
      %v356 = vld [vmem:[%s346 + $0x24] sm:$0xf]
      %v357 = vld [vmem:[%s346 + $0x28] sm:$0xf]
      %v358 = vld [vmem:[%s346 + $0x2c] sm:$0xf]
      %v359 = vld [vmem:[%s346 + $0x30] sm:$0xf]
      %v360 = vld [vmem:[%s346 + $0x34] sm:$0xf]
      %v361 = vld [vmem:[%s346 + $0x38] sm:$0xf]
      %v362 = vld [vmem:[%s346 + $0x3c] sm:$0xf]
      %v363 = vunpack.c.l.b16 %v247
      %v364 = vunpack.c.l.b16 %v261
      %v365 = vunpack.c.l.b16 %v275
      %v366 = vunpack.c.l.b16 %v289
      %v367 = vunpack.c.l.b16 %v303
      %v368 = vunpack.c.l.b16 %v317
      %v369 = vunpack.c.l.b16 %v331
      %v370 = vunpack.c.l.b16 %v345
      %v371 = vpack.c.b16 %v364, %v363
      %v372 = vpack.c.b16 %v366, %v365
      %v373 = vpack.c.b16 %v368, %v367
      %v374 = vpack.c.b16 %v370, %v369
      %v395 = vunpack.c.l.b16 %v347
      %v396 = vunpack.c.l.b16 %v348
      %v397 = vunpack.c.l.b16 %v349
      %v398 = vunpack.c.l.b16 %v350
      %v399 = vunpack.c.l.b16 %v351
      %v400 = vunpack.c.l.b16 %v352
      %v401 = vunpack.c.l.b16 %v353
      %v402 = vunpack.c.l.b16 %v354
      %v403 = vunpack.c.l.b16 %v355
      %v404 = vunpack.c.l.b16 %v356
      %v405 = vunpack.c.l.b16 %v357
      %v406 = vunpack.c.l.b16 %v358
      %v407 = vunpack.c.l.b16 %v359
      %v408 = vunpack.c.l.b16 %v360
      %v409 = vunpack.c.l.b16 %v361
      %v410 = vunpack.c.l.b16 %v362
      %v411 = vpack.c.b16 %v396, %v395
      %v412 = vpack.c.b16 %v398, %v397
      %v413 = vpack.c.b16 %v400, %v399
      %v414 = vpack.c.b16 %v402, %v401
      %v415 = vpack.c.b16 %v404, %v403
      %v416 = vpack.c.b16 %v406, %v405
      %v417 = vpack.c.b16 %v408, %v407
      %v418 = vpack.c.b16 %v410, %v409
      %427 = vmatprep.subr.bf16.mxu0 0
      %428 = vmatpush1.bf16.msra.mxu0 %v418
      %429 = vmatprep.subr.bf16.mxu0 0
      %430 = vmatpush1.bf16.msra.mxu0 %v417
      %431 = vmatprep.subr.bf16.mxu0 0
      %432 = vmatpush1.bf16.msra.mxu0 %v416
      %433 = vmatprep.subr.bf16.mxu0 0
      %434 = vmatpush1.bf16.msra.mxu0 %v415
      %435 = vmatprep.subr.bf16.mxu0 0
      %436 = vmatpush1.bf16.msra.mxu0 %v414
      %437 = vmatprep.subr.bf16.mxu0 0
      %438 = vmatpush1.bf16.msra.mxu0 %v413
      %439 = vmatprep.subr.bf16.mxu0 0
      %440 = vmatpush1.bf16.msra.mxu0 %v412
      %441 = vmatprep.subr.bf16.mxu0 0
      %442 = vmatpush1.bf16.msra.mxu0 %v411
      %443 = vmatprep.subr.bf16.mxu0 0
      %444 = vmatpush2.bf16.msra.mxu0 0
      %445 = vmatprep.subr.bf16.mxu0 0
      %446 = vmatpush2.bf16.msra.mxu0 0
      %447 = vmatprep.subr.bf16.mxu0 0
      %448 = vmatpush2.bf16.msra.mxu0 0
      %449 = vmatprep.subr.bf16.mxu0 0
      %450 = vmatpush2.bf16.msra.mxu0 0
      %451 = vmatprep.subr.bf16.mxu0 0
      %452 = vmatpush2.bf16.msra.mxu0 0
      %453 = vmatprep.subr.bf16.mxu0 0
      %454 = vmatpush2.bf16.msra.mxu0 0
      %455 = vmatprep.subr.bf16.mxu0 0
      %456 = vmatpush2.bf16.msra.mxu0 0
      %457 = vmatprep.subr.bf16.mxu0 0
      %458 = vmatpush2.bf16.msra.mxu0 0
      %459 = vmatprep.mubr.bf16.mxu0 0
      %460 = vmatmul.mubr.bf16.gmra.mxu0 %v371
      %v461 = vpop.f32.mrf.mxu0
      %v462 = vadd.f32 0.0, %v461
      %v463 = vpop.f32.mrf.mxu0
      %v464 = vpop.f32.mrf.mxu0
      %v465 = vadd.f32 0.0, %v464
      %v466 = vpop.f32.mrf.mxu0
      %467 = vmatprep.mubr.bf16.mxu0 0
      %468 = vmatmul.mubr.bf16.gmra.mxu0 %v372
      %v469 = vpop.f32.mrf.mxu0
      %v470 = vadd.f32 0.0, %v469
      %v471 = vpop.f32.mrf.mxu0
      %v472 = vpop.f32.mrf.mxu0
      %v473 = vadd.f32 0.0, %v472
      %v474 = vpop.f32.mrf.mxu0
      %475 = vmatprep.mubr.bf16.mxu0 0
      %476 = vmatmul.mubr.bf16.gmra.mxu0 %v373
      %v477 = vpop.f32.mrf.mxu0
      %v478 = vadd.f32 0.0, %v477
      %v479 = vpop.f32.mrf.mxu0
      %v480 = vpop.f32.mrf.mxu0
      %v481 = vadd.f32 0.0, %v480
      %v482 = vpop.f32.mrf.mxu0
      %483 = vmatprep.mubr.bf16.mxu0 0
      %484 = vmatmul.mubr.bf16.gmra.mxu0 %v374
      %v485 = vpop.f32.mrf.mxu0
      %v486 = vadd.f32 0.0, %v485
      %v487 = vpop.f32.mrf.mxu0
      %v488 = vpop.f32.mrf.mxu0
      %v489 = vadd.f32 0.0, %v488
      %v490 = vpop.f32.mrf.mxu0
      %491 = vdwg.mxu0
      %v500 = vunpack.c.l.b16 %v199
      %v501 = vunpack.c.l.b16 %v200
      %v502 = vunpack.c.l.b16 %v201
      %v503 = vunpack.c.l.b16 %v202
      %v504 = vunpack.c.l.b16 %v203
      %v505 = vunpack.c.l.b16 %v204
      %v506 = vunpack.c.l.b16 %v205
      %v507 = vunpack.c.l.b16 %v206
      %v508 = vpack.c.b16 %v501, %v500
      %v509 = vpack.c.b16 %v503, %v502
      %v510 = vpack.c.b16 %v505, %v504
      %v511 = vpack.c.b16 %v507, %v506
      %v532 = vunpack.c.l.b16 %v207
      %v533 = vunpack.c.l.b16 %v208
      %v534 = vunpack.c.l.b16 %v209
      %v535 = vunpack.c.l.b16 %v210
      %v536 = vunpack.c.l.b16 %v211
      %v537 = vunpack.c.l.b16 %v212
      %v538 = vunpack.c.l.b16 %v213
      %v539 = vunpack.c.l.b16 %v214
      %v540 = vunpack.c.l.b16 %v215
      %v541 = vunpack.c.l.b16 %v216
      %v542 = vunpack.c.l.b16 %v217
      %v543 = vunpack.c.l.b16 %v218
      %v544 = vunpack.c.l.b16 %v219
      %v545 = vunpack.c.l.b16 %v220
      %v546 = vunpack.c.l.b16 %v221
      %v547 = vunpack.c.l.b16 %v222
      %v548 = vpack.c.b16 %v533, %v532
      %v549 = vpack.c.b16 %v535, %v534
      %v550 = vpack.c.b16 %v537, %v536
      %v551 = vpack.c.b16 %v539, %v538
      %v552 = vpack.c.b16 %v541, %v540
      %v553 = vpack.c.b16 %v543, %v542
      %v554 = vpack.c.b16 %v545, %v544
      %v555 = vpack.c.b16 %v547, %v546
      %564 = vmatprep.subr.bf16.mxu0 0
      %565 = vmatpush1.bf16.msra.mxu0 %v555
      %566 = vmatprep.subr.bf16.mxu0 0
      %567 = vmatpush1.bf16.msra.mxu0 %v554
      %568 = vmatprep.subr.bf16.mxu0 0
      %569 = vmatpush1.bf16.msra.mxu0 %v553
      %570 = vmatprep.subr.bf16.mxu0 0
      %571 = vmatpush1.bf16.msra.mxu0 %v552
      %572 = vmatprep.subr.bf16.mxu0 0
      %573 = vmatpush1.bf16.msra.mxu0 %v551
      %574 = vmatprep.subr.bf16.mxu0 0
      %575 = vmatpush1.bf16.msra.mxu0 %v550
      %576 = vmatprep.subr.bf16.mxu0 0
      %577 = vmatpush1.bf16.msra.mxu0 %v549
      %578 = vmatprep.subr.bf16.mxu0 0
      %579 = vmatpush1.bf16.msra.mxu0 %v548
      %580 = vmatprep.subr.bf16.mxu0 0
      %581 = vmatpush2.bf16.msra.mxu0 0
      %582 = vmatprep.subr.bf16.mxu0 0
      %583 = vmatpush2.bf16.msra.mxu0 0
      %584 = vmatprep.subr.bf16.mxu0 0
      %585 = vmatpush2.bf16.msra.mxu0 0
      %586 = vmatprep.subr.bf16.mxu0 0
      %587 = vmatpush2.bf16.msra.mxu0 0
      %588 = vmatprep.subr.bf16.mxu0 0
      %589 = vmatpush2.bf16.msra.mxu0 0
      %590 = vmatprep.subr.bf16.mxu0 0
      %591 = vmatpush2.bf16.msra.mxu0 0
      %592 = vmatprep.subr.bf16.mxu0 0
      %593 = vmatpush2.bf16.msra.mxu0 0
      %594 = vmatprep.subr.bf16.mxu0 0
      %595 = vmatpush2.bf16.msra.mxu0 0
      %596 = vmatprep.mubr.bf16.mxu0 0
      %597 = vmatmul.mubr.bf16.gmra.mxu0 %v508
      %v598 = vpop.f32.mrf.mxu0
      %v599 = vadd.f32 %v462, %v598
      %v600 = vpop.f32.mrf.mxu0
      %v601 = vpop.f32.mrf.mxu0
      %v602 = vadd.f32 %v465, %v601
      %v603 = vpop.f32.mrf.mxu0
      %604 = vmatprep.mubr.bf16.mxu0 0
      %605 = vmatmul.mubr.bf16.gmra.mxu0 %v509
      %v606 = vpop.f32.mrf.mxu0
      %v607 = vadd.f32 %v470, %v606
      %v608 = vpop.f32.mrf.mxu0
      %v609 = vpop.f32.mrf.mxu0
      %v610 = vadd.f32 %v473, %v609
      %v611 = vpop.f32.mrf.mxu0
      %612 = vmatprep.mubr.bf16.mxu0 0
      %613 = vmatmul.mubr.bf16.gmra.mxu0 %v510
      %v614 = vpop.f32.mrf.mxu0
      %v615 = vadd.f32 %v478, %v614
      %v616 = vpop.f32.mrf.mxu0
      %v617 = vpop.f32.mrf.mxu0
      %v618 = vadd.f32 %v481, %v617
      %v619 = vpop.f32.mrf.mxu0
      %620 = vmatprep.mubr.bf16.mxu0 0
      %621 = vmatmul.mubr.bf16.gmra.mxu0 %v511
      %v622 = vpop.f32.mrf.mxu0
      %v623 = vadd.f32 %v486, %v622
      %v624 = vpop.f32.mrf.mxu0
      %v625 = vpop.f32.mrf.mxu0
      %v626 = vadd.f32 %v489, %v625
      %v627 = vpop.f32.mrf.mxu0
      %628 = vdwg.mxu0
      %v629 = vld [vmem:[%s192] sm:$0xe]
      %v630 = vld [vmem:[%s192 + $0x8] sm:$0xe]
      %v631 = vld [vmem:[%s192 + $0x10] sm:$0xe]
      %v632 = vld [vmem:[%s192 + $0x18] sm:$0xe]
      %v633 = vld [vmem:[%s192 + $0x20] sm:$0xe]
      %v634 = vld [vmem:[%s192 + $0x28] sm:$0xe]
      %v635 = vld [vmem:[%s192 + $0x30] sm:$0xe]
      %v636 = vld [vmem:[%s192 + $0x38] sm:$0xe]
      %vm653 = vcmask 1042432
      %vm654 = vcmask 1046532
      %vm655 = vmor %vm653, %vm654
      %v656 = vrot.slane %v629, 5
      %v657 = vrot.slane %v656, 4
      %v658 = vrot.slane %v223, 5
      %v659 = vsel %vm655, %v657, %v658
      %v660 = vrot.slane %v630, 5
      %v661 = vrot.slane %v660, 4
      %v662 = vrot.slane %v224, 5
      %v663 = vsel %vm655, %v661, %v662
      %v664 = vrot.slane %v631, 5
      %v665 = vrot.slane %v664, 4
      %v666 = vrot.slane %v225, 5
      %v667 = vsel %vm655, %v665, %v666
      %v668 = vrot.slane %v632, 5
      %v669 = vrot.slane %v668, 4
      %v670 = vrot.slane %v226, 5
      %v671 = vsel %vm655, %v669, %v670
      %v672 = vrot.slane %v633, 5
      %v673 = vrot.slane %v672, 4
      %v674 = vrot.slane %v227, 5
      %v675 = vsel %vm655, %v673, %v674
      %v676 = vrot.slane %v634, 5
      %v677 = vrot.slane %v676, 4
      %v678 = vrot.slane %v228, 5
      %v679 = vsel %vm655, %v677, %v678
      %v680 = vrot.slane %v635, 5
      %v681 = vrot.slane %v680, 4
      %v682 = vrot.slane %v229, 5
      %v683 = vsel %vm655, %v681, %v682
      %v684 = vrot.slane %v636, 5
      %v685 = vrot.slane %v684, 4
      %v686 = vrot.slane %v230, 5
      %v687 = vsel %vm655, %v685, %v686
      %s688 = scalar_lea.vmem %s1, 128
      %v689 = vld [vmem:[%s688] sm:$0xf]
      %v690 = vld [vmem:[%s688 + $0x4] sm:$0xf]
      %v691 = vld [vmem:[%s688 + $0x8] sm:$0xf]
      %v692 = vld [vmem:[%s688 + $0xc] sm:$0xf]
      %v693 = vld [vmem:[%s688 + $0x10] sm:$0xf]
      %v694 = vld [vmem:[%s688 + $0x14] sm:$0xf]
      %v695 = vld [vmem:[%s688 + $0x18] sm:$0xf]
      %v696 = vld [vmem:[%s688 + $0x1c] sm:$0xf]
      %v697 = vld [vmem:[%s688 + $0x20] sm:$0xf]
      %v698 = vld [vmem:[%s688 + $0x24] sm:$0xf]
      %v699 = vld [vmem:[%s688 + $0x28] sm:$0xf]
      %v700 = vld [vmem:[%s688 + $0x2c] sm:$0xf]
      %v701 = vld [vmem:[%s688 + $0x30] sm:$0xf]
      %v702 = vld [vmem:[%s688 + $0x34] sm:$0xf]
      %v703 = vld [vmem:[%s688 + $0x38] sm:$0xf]
      %v704 = vld [vmem:[%s688 + $0x3c] sm:$0xf]
      %v705 = vunpack.c.l.b16 %v659
      %v706 = vunpack.c.l.b16 %v663
      %v707 = vunpack.c.l.b16 %v667
      %v708 = vunpack.c.l.b16 %v671
      %v709 = vunpack.c.l.b16 %v675
      %v710 = vunpack.c.l.b16 %v679
      %v711 = vunpack.c.l.b16 %v683
      %v712 = vunpack.c.l.b16 %v687
      %v713 = vpack.c.b16 %v706, %v705
      %v714 = vpack.c.b16 %v708, %v707
      %v715 = vpack.c.b16 %v710, %v709
      %v716 = vpack.c.b16 %v712, %v711
      %v737 = vunpack.c.l.b16 %v689
      %v738 = vunpack.c.l.b16 %v690
      %v739 = vunpack.c.l.b16 %v691
      %v740 = vunpack.c.l.b16 %v692
      %v741 = vunpack.c.l.b16 %v693
      %v742 = vunpack.c.l.b16 %v694
      %v743 = vunpack.c.l.b16 %v695
      %v744 = vunpack.c.l.b16 %v696
      %v745 = vunpack.c.l.b16 %v697
      %v746 = vunpack.c.l.b16 %v698
      %v747 = vunpack.c.l.b16 %v699
      %v748 = vunpack.c.l.b16 %v700
      %v749 = vunpack.c.l.b16 %v701
      %v750 = vunpack.c.l.b16 %v702
      %v751 = vunpack.c.l.b16 %v703
      %v752 = vunpack.c.l.b16 %v704
      %v753 = vpack.c.b16 %v738, %v737
      %v754 = vpack.c.b16 %v740, %v739
      %v755 = vpack.c.b16 %v742, %v741
      %v756 = vpack.c.b16 %v744, %v743
      %v757 = vpack.c.b16 %v746, %v745
      %v758 = vpack.c.b16 %v748, %v747
      %v759 = vpack.c.b16 %v750, %v749
      %v760 = vpack.c.b16 %v752, %v751
      %769 = vmatprep.subr.bf16.mxu0 0
      %770 = vmatpush1.bf16.msra.mxu0 %v760
      %771 = vmatprep.subr.bf16.mxu0 0
      %772 = vmatpush1.bf16.msra.mxu0 %v759
      %773 = vmatprep.subr.bf16.mxu0 0
      %774 = vmatpush1.bf16.msra.mxu0 %v758
      %775 = vmatprep.subr.bf16.mxu0 0
      %776 = vmatpush1.bf16.msra.mxu0 %v757
      %777 = vmatprep.subr.bf16.mxu0 0
      %778 = vmatpush1.bf16.msra.mxu0 %v756
      %779 = vmatprep.subr.bf16.mxu0 0
      %780 = vmatpush1.bf16.msra.mxu0 %v755
      %781 = vmatprep.subr.bf16.mxu0 0
      %782 = vmatpush1.bf16.msra.mxu0 %v754
      %783 = vmatprep.subr.bf16.mxu0 0
      %784 = vmatpush1.bf16.msra.mxu0 %v753
      %785 = vmatprep.subr.bf16.mxu0 0
      %786 = vmatpush2.bf16.msra.mxu0 0
      %787 = vmatprep.subr.bf16.mxu0 0
      %788 = vmatpush2.bf16.msra.mxu0 0
      %789 = vmatprep.subr.bf16.mxu0 0
      %790 = vmatpush2.bf16.msra.mxu0 0
      %791 = vmatprep.subr.bf16.mxu0 0
      %792 = vmatpush2.bf16.msra.mxu0 0
      %793 = vmatprep.subr.bf16.mxu0 0
      %794 = vmatpush2.bf16.msra.mxu0 0
      %795 = vmatprep.subr.bf16.mxu0 0
      %796 = vmatpush2.bf16.msra.mxu0 0
      %797 = vmatprep.subr.bf16.mxu0 0
      %798 = vmatpush2.bf16.msra.mxu0 0
      %799 = vmatprep.subr.bf16.mxu0 0
      %800 = vmatpush2.bf16.msra.mxu0 0
      %801 = vmatprep.mubr.bf16.mxu0 0
      %802 = vmatmul.mubr.bf16.gmra.mxu0 %v713
      %v803 = vpop.f32.mrf.mxu0
      %v804 = vadd.f32 0.0, %v803
      %v805 = vpop.f32.mrf.mxu0
      %v806 = vpop.f32.mrf.mxu0
      %v807 = vadd.f32 0.0, %v806
      %v808 = vpop.f32.mrf.mxu0
      %809 = vmatprep.mubr.bf16.mxu0 0
      %810 = vmatmul.mubr.bf16.gmra.mxu0 %v714
      %v811 = vpop.f32.mrf.mxu0
      %v812 = vadd.f32 0.0, %v811
      %v813 = vpop.f32.mrf.mxu0
      %v814 = vpop.f32.mrf.mxu0
      %v815 = vadd.f32 0.0, %v814
      %v816 = vpop.f32.mrf.mxu0
      %817 = vmatprep.mubr.bf16.mxu0 0
      %818 = vmatmul.mubr.bf16.gmra.mxu0 %v715
      %v819 = vpop.f32.mrf.mxu0
      %v820 = vadd.f32 0.0, %v819
      %v821 = vpop.f32.mrf.mxu0
      %v822 = vpop.f32.mrf.mxu0
      %v823 = vadd.f32 0.0, %v822
      %v824 = vpop.f32.mrf.mxu0
      %825 = vmatprep.mubr.bf16.mxu0 0
      %826 = vmatmul.mubr.bf16.gmra.mxu0 %v716
      %v827 = vpop.f32.mrf.mxu0
      %v828 = vadd.f32 0.0, %v827
      %v829 = vpop.f32.mrf.mxu0
      %v830 = vpop.f32.mrf.mxu0
      %v831 = vadd.f32 0.0, %v830
      %v832 = vpop.f32.mrf.mxu0
      %833 = vdwg.mxu0
      %v834 = vadd.f32 %v599, %v804
      %v835 = vadd.f32 %v602, %v807
      %v836 = vadd.f32 %v607, %v812
      %v837 = vadd.f32 %v610, %v815
      %v838 = vadd.f32 %v615, %v820
      %v839 = vadd.f32 %v618, %v823
      %v840 = vadd.f32 %v623, %v828
      %v841 = vadd.f32 %v626, %v831
      %s842 = scalar_lea.vmem %s192, 8
      %v843 = vld [vmem:[%s842] sm:$0xf]
      %v844 = vld [vmem:[%s842 + $0x8] sm:$0xf]
      %v845 = vld [vmem:[%s842 + $0x10] sm:$0xf]
      %v846 = vld [vmem:[%s842 + $0x18] sm:$0xf]
      %v847 = vld [vmem:[%s842 + $0x20] sm:$0xf]
      %v848 = vld [vmem:[%s842 + $0x28] sm:$0xf]
      %v849 = vld [vmem:[%s842 + $0x30] sm:$0xf]
      %v850 = vld [vmem:[%s842 + $0x38] sm:$0xf]
      %s851 = scalar_lea.vmem %s1, 192
      %v852 = vld [vmem:[%s851] sm:$0xf]
      %v853 = vld [vmem:[%s851 + $0x4] sm:$0xf]
      %v854 = vld [vmem:[%s851 + $0x8] sm:$0xf]
      %v855 = vld [vmem:[%s851 + $0xc] sm:$0xf]
      %v856 = vld [vmem:[%s851 + $0x10] sm:$0xf]
      %v857 = vld [vmem:[%s851 + $0x14] sm:$0xf]
      %v858 = vld [vmem:[%s851 + $0x18] sm:$0xf]
      %v859 = vld [vmem:[%s851 + $0x1c] sm:$0xf]
      %v860 = vld [vmem:[%s851 + $0x20] sm:$0xf]
      %v861 = vld [vmem:[%s851 + $0x24] sm:$0xf]
      %v862 = vld [vmem:[%s851 + $0x28] sm:$0xf]
      %v863 = vld [vmem:[%s851 + $0x2c] sm:$0xf]
      %v864 = vld [vmem:[%s851 + $0x30] sm:$0xf]
      %v865 = vld [vmem:[%s851 + $0x34] sm:$0xf]
      %v866 = vld [vmem:[%s851 + $0x38] sm:$0xf]
      %v867 = vld [vmem:[%s851 + $0x3c] sm:$0xf]
      %v876 = vunpack.c.l.b16 %v843
      %v877 = vunpack.c.l.b16 %v844
      %v878 = vunpack.c.l.b16 %v845
      %v879 = vunpack.c.l.b16 %v846
      %v880 = vunpack.c.l.b16 %v847
      %v881 = vunpack.c.l.b16 %v848
      %v882 = vunpack.c.l.b16 %v849
      %v883 = vunpack.c.l.b16 %v850
      %v884 = vpack.c.b16 %v877, %v876
      %v885 = vpack.c.b16 %v879, %v878
      %v886 = vpack.c.b16 %v881, %v880
      %v887 = vpack.c.b16 %v883, %v882
      %v908 = vunpack.c.l.b16 %v852
      %v909 = vunpack.c.l.b16 %v853
      %v910 = vunpack.c.l.b16 %v854
      %v911 = vunpack.c.l.b16 %v855
      %v912 = vunpack.c.l.b16 %v856
      %v913 = vunpack.c.l.b16 %v857
      %v914 = vunpack.c.l.b16 %v858
      %v915 = vunpack.c.l.b16 %v859
      %v916 = vunpack.c.l.b16 %v860
      %v917 = vunpack.c.l.b16 %v861
      %v918 = vunpack.c.l.b16 %v862
      %v919 = vunpack.c.l.b16 %v863
      %v920 = vunpack.c.l.b16 %v864
      %v921 = vunpack.c.l.b16 %v865
      %v922 = vunpack.c.l.b16 %v866
      %v923 = vunpack.c.l.b16 %v867
      %v924 = vpack.c.b16 %v909, %v908
      %v925 = vpack.c.b16 %v911, %v910
      %v926 = vpack.c.b16 %v913, %v912
      %v927 = vpack.c.b16 %v915, %v914
      %v928 = vpack.c.b16 %v917, %v916
      %v929 = vpack.c.b16 %v919, %v918
      %v930 = vpack.c.b16 %v921, %v920
      %v931 = vpack.c.b16 %v923, %v922
      %940 = vmatprep.subr.bf16.mxu0 0
      %941 = vmatpush1.bf16.msra.mxu0 %v931
      %942 = vmatprep.subr.bf16.mxu0 0
      %943 = vmatpush1.bf16.msra.mxu0 %v930
      %944 = vmatprep.subr.bf16.mxu0 0
      %945 = vmatpush1.bf16.msra.mxu0 %v929
      %946 = vmatprep.subr.bf16.mxu0 0
      %947 = vmatpush1.bf16.msra.mxu0 %v928
      %948 = vmatprep.subr.bf16.mxu0 0
      %949 = vmatpush1.bf16.msra.mxu0 %v927
      %950 = vmatprep.subr.bf16.mxu0 0
      %951 = vmatpush1.bf16.msra.mxu0 %v926
      %952 = vmatprep.subr.bf16.mxu0 0
      %953 = vmatpush1.bf16.msra.mxu0 %v925
      %954 = vmatprep.subr.bf16.mxu0 0
      %955 = vmatpush1.bf16.msra.mxu0 %v924
      %956 = vmatprep.subr.bf16.mxu0 0
      %957 = vmatpush2.bf16.msra.mxu0 0
      %958 = vmatprep.subr.bf16.mxu0 0
      %959 = vmatpush2.bf16.msra.mxu0 0
      %960 = vmatprep.subr.bf16.mxu0 0
      %961 = vmatpush2.bf16.msra.mxu0 0
      %962 = vmatprep.subr.bf16.mxu0 0
      %963 = vmatpush2.bf16.msra.mxu0 0
      %964 = vmatprep.subr.bf16.mxu0 0
      %965 = vmatpush2.bf16.msra.mxu0 0
      %966 = vmatprep.subr.bf16.mxu0 0
      %967 = vmatpush2.bf16.msra.mxu0 0
      %968 = vmatprep.subr.bf16.mxu0 0
      %969 = vmatpush2.bf16.msra.mxu0 0
      %970 = vmatprep.subr.bf16.mxu0 0
      %971 = vmatpush2.bf16.msra.mxu0 0
      %972 = vmatprep.mubr.bf16.mxu0 0
      %973 = vmatmul.mubr.bf16.gmra.mxu0 %v884
      %v974 = vpop.f32.mrf.mxu0
      %v975 = vadd.f32 0.0, %v974
      %v976 = vpop.f32.mrf.mxu0
      %v977 = vpop.f32.mrf.mxu0
      %v978 = vadd.f32 0.0, %v977
      %v979 = vpop.f32.mrf.mxu0
      %980 = vmatprep.mubr.bf16.mxu0 0
      %981 = vmatmul.mubr.bf16.gmra.mxu0 %v885
      %v982 = vpop.f32.mrf.mxu0
      %v983 = vadd.f32 0.0, %v982
      %v984 = vpop.f32.mrf.mxu0
      %v985 = vpop.f32.mrf.mxu0
      %v986 = vadd.f32 0.0, %v985
      %v987 = vpop.f32.mrf.mxu0
      %988 = vmatprep.mubr.bf16.mxu0 0
      %989 = vmatmul.mubr.bf16.gmra.mxu0 %v886
      %v990 = vpop.f32.mrf.mxu0
      %v991 = vadd.f32 0.0, %v990
      %v992 = vpop.f32.mrf.mxu0
      %v993 = vpop.f32.mrf.mxu0
      %v994 = vadd.f32 0.0, %v993
      %v995 = vpop.f32.mrf.mxu0
      %996 = vmatprep.mubr.bf16.mxu0 0
      %997 = vmatmul.mubr.bf16.gmra.mxu0 %v887
      %v998 = vpop.f32.mrf.mxu0
      %v999 = vadd.f32 0.0, %v998
      %v1000 = vpop.f32.mrf.mxu0
      %v1001 = vpop.f32.mrf.mxu0
      %v1002 = vadd.f32 0.0, %v1001
      %v1003 = vpop.f32.mrf.mxu0
      %1004 = vdwg.mxu0
      %v1005 = vadd.f32 %v834, %v975
      %v1006 = vadd.f32 %v835, %v978
      %v1007 = vadd.f32 %v836, %v983
      %v1008 = vadd.f32 %v837, %v986
      %v1009 = vadd.f32 %v838, %v991
      %v1010 = vadd.f32 %v839, %v994
      %v1011 = vadd.f32 %v840, %v999
      %v1012 = vadd.f32 %v841, %v1002
      %v1013 = vld [vmem:[%s842] sm:$0xf]
      %v1014 = vld [vmem:[%s842 + $0x4] sm:$0x1]
      %v1015 = vld [vmem:[%s842 + $0x8] sm:$0xf]
      %v1016 = vld [vmem:[%s842 + $0xc] sm:$0x1]
      %v1017 = vld [vmem:[%s842 + $0x10] sm:$0xf]
      %v1018 = vld [vmem:[%s842 + $0x14] sm:$0x1]
      %v1019 = vld [vmem:[%s842 + $0x18] sm:$0xf]
      %v1020 = vld [vmem:[%s842 + $0x1c] sm:$0x1]
      %v1021 = vld [vmem:[%s842 + $0x20] sm:$0xf]
      %v1022 = vld [vmem:[%s842 + $0x24] sm:$0x1]
      %v1023 = vld [vmem:[%s842 + $0x28] sm:$0xf]
      %v1024 = vld [vmem:[%s842 + $0x2c] sm:$0x1]
      %v1025 = vld [vmem:[%s842 + $0x30] sm:$0xf]
      %v1026 = vld [vmem:[%s842 + $0x34] sm:$0x1]
      %v1027 = vld [vmem:[%s842 + $0x38] sm:$0xf]
      %v1028 = vld [vmem:[%s842 + $0x3c] sm:$0x1]
      %v1030 = vshrl.u32 %v1013, 16
      %v1032 = vrot.slane %v1030, 4
      %v1033 = vshll.u32 %v1013, 16
      %v1035 = vrot.slane %v1033, 5
      %v1036 = vor.u32 %v1032, %v1035
      %v1037 = vrot.slane %v1036, 4
      %v1039 = vshll.u32 %v1014, 16
      %v1041 = vrot.slane %v1039, 5
      %v1042 = vsel %vm233, %v1037, %v1041
      %v1044 = vshrl.u32 %v1015, 16
      %v1046 = vrot.slane %v1044, 4
      %v1047 = vshll.u32 %v1015, 16
      %v1049 = vrot.slane %v1047, 5
      %v1050 = vor.u32 %v1046, %v1049
      %v1051 = vrot.slane %v1050, 4
      %v1053 = vshll.u32 %v1016, 16
      %v1055 = vrot.slane %v1053, 5
      %v1056 = vsel %vm233, %v1051, %v1055
      %v1058 = vshrl.u32 %v1017, 16
      %v1060 = vrot.slane %v1058, 4
      %v1061 = vshll.u32 %v1017, 16
      %v1063 = vrot.slane %v1061, 5
      %v1064 = vor.u32 %v1060, %v1063
      %v1065 = vrot.slane %v1064, 4
      %v1067 = vshll.u32 %v1018, 16
      %v1069 = vrot.slane %v1067, 5
      %v1070 = vsel %vm233, %v1065, %v1069
      %v1072 = vshrl.u32 %v1019, 16
      %v1074 = vrot.slane %v1072, 4
      %v1075 = vshll.u32 %v1019, 16
      %v1077 = vrot.slane %v1075, 5
      %v1078 = vor.u32 %v1074, %v1077
      %v1079 = vrot.slane %v1078, 4
      %v1081 = vshll.u32 %v1020, 16
      %v1083 = vrot.slane %v1081, 5
      %v1084 = vsel %vm233, %v1079, %v1083
      %v1086 = vshrl.u32 %v1021, 16
      %v1088 = vrot.slane %v1086, 4
      %v1089 = vshll.u32 %v1021, 16
      %v1091 = vrot.slane %v1089, 5
      %v1092 = vor.u32 %v1088, %v1091
      %v1093 = vrot.slane %v1092, 4
      %v1095 = vshll.u32 %v1022, 16
      %v1097 = vrot.slane %v1095, 5
      %v1098 = vsel %vm233, %v1093, %v1097
      %v1100 = vshrl.u32 %v1023, 16
      %v1102 = vrot.slane %v1100, 4
      %v1103 = vshll.u32 %v1023, 16
      %v1105 = vrot.slane %v1103, 5
      %v1106 = vor.u32 %v1102, %v1105
      %v1107 = vrot.slane %v1106, 4
      %v1109 = vshll.u32 %v1024, 16
      %v1111 = vrot.slane %v1109, 5
      %v1112 = vsel %vm233, %v1107, %v1111
      %v1114 = vshrl.u32 %v1025, 16
      %v1116 = vrot.slane %v1114, 4
      %v1117 = vshll.u32 %v1025, 16
      %v1119 = vrot.slane %v1117, 5
      %v1120 = vor.u32 %v1116, %v1119
      %v1121 = vrot.slane %v1120, 4
      %v1123 = vshll.u32 %v1026, 16
      %v1125 = vrot.slane %v1123, 5
      %v1126 = vsel %vm233, %v1121, %v1125
      %v1128 = vshrl.u32 %v1027, 16
      %v1130 = vrot.slane %v1128, 4
      %v1131 = vshll.u32 %v1027, 16
      %v1133 = vrot.slane %v1131, 5
      %v1134 = vor.u32 %v1130, %v1133
      %v1135 = vrot.slane %v1134, 4
      %v1137 = vshll.u32 %v1028, 16
      %v1139 = vrot.slane %v1137, 5
      %v1140 = vsel %vm233, %v1135, %v1139
      %s1141 = scalar_lea.vmem %s1, 256
      %v1142 = vld [vmem:[%s1141] sm:$0xf]
      %v1143 = vld [vmem:[%s1141 + $0x4] sm:$0xf]
      %v1144 = vld [vmem:[%s1141 + $0x8] sm:$0xf]
      %v1145 = vld [vmem:[%s1141 + $0xc] sm:$0xf]
      %v1146 = vld [vmem:[%s1141 + $0x10] sm:$0xf]
      %v1147 = vld [vmem:[%s1141 + $0x14] sm:$0xf]
      %v1148 = vld [vmem:[%s1141 + $0x18] sm:$0xf]
      %v1149 = vld [vmem:[%s1141 + $0x1c] sm:$0xf]
      %v1150 = vld [vmem:[%s1141 + $0x20] sm:$0xf]
      %v1151 = vld [vmem:[%s1141 + $0x24] sm:$0xf]
      %v1152 = vld [vmem:[%s1141 + $0x28] sm:$0xf]
      %v1153 = vld [vmem:[%s1141 + $0x2c] sm:$0xf]
      %v1154 = vld [vmem:[%s1141 + $0x30] sm:$0xf]
      %v1155 = vld [vmem:[%s1141 + $0x34] sm:$0xf]
      %v1156 = vld [vmem:[%s1141 + $0x38] sm:$0xf]
      %v1157 = vld [vmem:[%s1141 + $0x3c] sm:$0xf]
      %v1158 = vunpack.c.l.b16 %v1042
      %v1159 = vunpack.c.l.b16 %v1056
      %v1160 = vunpack.c.l.b16 %v1070
      %v1161 = vunpack.c.l.b16 %v1084
      %v1162 = vunpack.c.l.b16 %v1098
      %v1163 = vunpack.c.l.b16 %v1112
      %v1164 = vunpack.c.l.b16 %v1126
      %v1165 = vunpack.c.l.b16 %v1140
      %v1166 = vpack.c.b16 %v1159, %v1158
      %v1167 = vpack.c.b16 %v1161, %v1160
      %v1168 = vpack.c.b16 %v1163, %v1162
      %v1169 = vpack.c.b16 %v1165, %v1164
      %v1190 = vunpack.c.l.b16 %v1142
      %v1191 = vunpack.c.l.b16 %v1143
      %v1192 = vunpack.c.l.b16 %v1144
      %v1193 = vunpack.c.l.b16 %v1145
      %v1194 = vunpack.c.l.b16 %v1146
      %v1195 = vunpack.c.l.b16 %v1147
      %v1196 = vunpack.c.l.b16 %v1148
      %v1197 = vunpack.c.l.b16 %v1149
      %v1198 = vunpack.c.l.b16 %v1150
      %v1199 = vunpack.c.l.b16 %v1151
      %v1200 = vunpack.c.l.b16 %v1152
      %v1201 = vunpack.c.l.b16 %v1153
      %v1202 = vunpack.c.l.b16 %v1154
      %v1203 = vunpack.c.l.b16 %v1155
      %v1204 = vunpack.c.l.b16 %v1156
      %v1205 = vunpack.c.l.b16 %v1157
      %v1206 = vpack.c.b16 %v1191, %v1190
      %v1207 = vpack.c.b16 %v1193, %v1192
      %v1208 = vpack.c.b16 %v1195, %v1194
      %v1209 = vpack.c.b16 %v1197, %v1196
      %v1210 = vpack.c.b16 %v1199, %v1198
      %v1211 = vpack.c.b16 %v1201, %v1200
      %v1212 = vpack.c.b16 %v1203, %v1202
      %v1213 = vpack.c.b16 %v1205, %v1204
      %1222 = vmatprep.subr.bf16.mxu0 0
      %1223 = vmatpush1.bf16.msra.mxu0 %v1213
      %1224 = vmatprep.subr.bf16.mxu0 0
      %1225 = vmatpush1.bf16.msra.mxu0 %v1212
      %1226 = vmatprep.subr.bf16.mxu0 0
      %1227 = vmatpush1.bf16.msra.mxu0 %v1211
      %1228 = vmatprep.subr.bf16.mxu0 0
      %1229 = vmatpush1.bf16.msra.mxu0 %v1210
      %1230 = vmatprep.subr.bf16.mxu0 0
      %1231 = vmatpush1.bf16.msra.mxu0 %v1209
      %1232 = vmatprep.subr.bf16.mxu0 0
      %1233 = vmatpush1.bf16.msra.mxu0 %v1208
      %1234 = vmatprep.subr.bf16.mxu0 0
      %1235 = vmatpush1.bf16.msra.mxu0 %v1207
      %1236 = vmatprep.subr.bf16.mxu0 0
      %1237 = vmatpush1.bf16.msra.mxu0 %v1206
      %1238 = vmatprep.subr.bf16.mxu0 0
      %1239 = vmatpush2.bf16.msra.mxu0 0
      %1240 = vmatprep.subr.bf16.mxu0 0
      %1241 = vmatpush2.bf16.msra.mxu0 0
      %1242 = vmatprep.subr.bf16.mxu0 0
      %1243 = vmatpush2.bf16.msra.mxu0 0
      %1244 = vmatprep.subr.bf16.mxu0 0
      %1245 = vmatpush2.bf16.msra.mxu0 0
      %1246 = vmatprep.subr.bf16.mxu0 0
      %1247 = vmatpush2.bf16.msra.mxu0 0
      %1248 = vmatprep.subr.bf16.mxu0 0
      %1249 = vmatpush2.bf16.msra.mxu0 0
      %1250 = vmatprep.subr.bf16.mxu0 0
      %1251 = vmatpush2.bf16.msra.mxu0 0
      %1252 = vmatprep.subr.bf16.mxu0 0
      %1253 = vmatpush2.bf16.msra.mxu0 0
      %1254 = vmatprep.mubr.bf16.mxu0 0
      %1255 = vmatmul.mubr.bf16.gmra.mxu0 %v1166
      %v1256 = vpop.f32.mrf.mxu0
      %v1257 = vadd.f32 0.0, %v1256
      %v1258 = vpop.f32.mrf.mxu0
      %v1259 = vpop.f32.mrf.mxu0
      %v1260 = vadd.f32 0.0, %v1259
      %v1261 = vpop.f32.mrf.mxu0
      %1262 = vmatprep.mubr.bf16.mxu0 0
      %1263 = vmatmul.mubr.bf16.gmra.mxu0 %v1167
      %v1264 = vpop.f32.mrf.mxu0
      %v1265 = vadd.f32 0.0, %v1264
      %v1266 = vpop.f32.mrf.mxu0
      %v1267 = vpop.f32.mrf.mxu0
      %v1268 = vadd.f32 0.0, %v1267
      %v1269 = vpop.f32.mrf.mxu0
      %1270 = vmatprep.mubr.bf16.mxu0 0
      %1271 = vmatmul.mubr.bf16.gmra.mxu0 %v1168
      %v1272 = vpop.f32.mrf.mxu0
      %v1273 = vadd.f32 0.0, %v1272
      %v1274 = vpop.f32.mrf.mxu0
      %v1275 = vpop.f32.mrf.mxu0
      %v1276 = vadd.f32 0.0, %v1275
      %v1277 = vpop.f32.mrf.mxu0
      %1278 = vmatprep.mubr.bf16.mxu0 0
      %1279 = vmatmul.mubr.bf16.gmra.mxu0 %v1169
      %v1280 = vpop.f32.mrf.mxu0
      %v1281 = vadd.f32 0.0, %v1280
      %v1282 = vpop.f32.mrf.mxu0
      %v1283 = vpop.f32.mrf.mxu0
      %v1284 = vadd.f32 0.0, %v1283
      %v1285 = vpop.f32.mrf.mxu0
      %1286 = vdwg.mxu0
      %v1287 = vadd.f32 %v1005, %v1257
      %v1288 = vadd.f32 %v1006, %v1260
      %v1289 = vadd.f32 %v1007, %v1265
      %v1290 = vadd.f32 %v1008, %v1268
      %v1291 = vadd.f32 %v1009, %v1273
      %v1292 = vadd.f32 %v1010, %v1276
      %v1293 = vadd.f32 %v1011, %v1281
      %v1294 = vadd.f32 %v1012, %v1284
      %v1295 = vld [vmem:[%s842] sm:$0xe]
      %v1296 = vld [vmem:[%s842 + $0x8] sm:$0xe]
      %v1297 = vld [vmem:[%s842 + $0x10] sm:$0xe]
      %v1298 = vld [vmem:[%s842 + $0x18] sm:$0xe]
      %v1299 = vld [vmem:[%s842 + $0x20] sm:$0xe]
      %v1300 = vld [vmem:[%s842 + $0x28] sm:$0xe]
      %v1301 = vld [vmem:[%s842 + $0x30] sm:$0xe]
      %v1302 = vld [vmem:[%s842 + $0x38] sm:$0xe]
      %v1319 = vrot.slane %v1295, 5
      %v1320 = vrot.slane %v1319, 4
      %v1321 = vrot.slane %v1014, 5
      %v1322 = vsel %vm655, %v1320, %v1321
      %v1323 = vrot.slane %v1296, 5
      %v1324 = vrot.slane %v1323, 4
      %v1325 = vrot.slane %v1016, 5
      %v1326 = vsel %vm655, %v1324, %v1325
      %v1327 = vrot.slane %v1297, 5
      %v1328 = vrot.slane %v1327, 4
      %v1329 = vrot.slane %v1018, 5
      %v1330 = vsel %vm655, %v1328, %v1329
      %v1331 = vrot.slane %v1298, 5
      %v1332 = vrot.slane %v1331, 4
      %v1333 = vrot.slane %v1020, 5
      %v1334 = vsel %vm655, %v1332, %v1333
      %v1335 = vrot.slane %v1299, 5
      %v1336 = vrot.slane %v1335, 4
      %v1337 = vrot.slane %v1022, 5
      %v1338 = vsel %vm655, %v1336, %v1337
      %v1339 = vrot.slane %v1300, 5
      %v1340 = vrot.slane %v1339, 4
      %v1341 = vrot.slane %v1024, 5
      %v1342 = vsel %vm655, %v1340, %v1341
      %v1343 = vrot.slane %v1301, 5
      %v1344 = vrot.slane %v1343, 4
      %v1345 = vrot.slane %v1026, 5
      %v1346 = vsel %vm655, %v1344, %v1345
      %v1347 = vrot.slane %v1302, 5
      %v1348 = vrot.slane %v1347, 4
      %v1349 = vrot.slane %v1028, 5
      %v1350 = vsel %vm655, %v1348, %v1349
      %s1351 = scalar_lea.vmem %s1, 320
      %v1352 = vld [vmem:[%s1351] sm:$0xf]
      %v1353 = vld [vmem:[%s1351 + $0x4] sm:$0xf]
      %v1354 = vld [vmem:[%s1351 + $0x8] sm:$0xf]
      %v1355 = vld [vmem:[%s1351 + $0xc] sm:$0xf]
      %v1356 = vld [vmem:[%s1351 + $0x10] sm:$0xf]
      %v1357 = vld [vmem:[%s1351 + $0x14] sm:$0xf]
      %v1358 = vld [vmem:[%s1351 + $0x18] sm:$0xf]
      %v1359 = vld [vmem:[%s1351 + $0x1c] sm:$0xf]
      %v1360 = vld [vmem:[%s1351 + $0x20] sm:$0xf]
      %v1361 = vld [vmem:[%s1351 + $0x24] sm:$0xf]
      %v1362 = vld [vmem:[%s1351 + $0x28] sm:$0xf]
      %v1363 = vld [vmem:[%s1351 + $0x2c] sm:$0xf]
      %v1364 = vld [vmem:[%s1351 + $0x30] sm:$0xf]
      %v1365 = vld [vmem:[%s1351 + $0x34] sm:$0xf]
      %v1366 = vld [vmem:[%s1351 + $0x38] sm:$0xf]
      %v1367 = vld [vmem:[%s1351 + $0x3c] sm:$0xf]
      %v1368 = vunpack.c.l.b16 %v1322
      %v1369 = vunpack.c.l.b16 %v1326
      %v1370 = vunpack.c.l.b16 %v1330
      %v1371 = vunpack.c.l.b16 %v1334
      %v1372 = vunpack.c.l.b16 %v1338
      %v1373 = vunpack.c.l.b16 %v1342
      %v1374 = vunpack.c.l.b16 %v1346
      %v1375 = vunpack.c.l.b16 %v1350
      %v1376 = vpack.c.b16 %v1369, %v1368
      %v1377 = vpack.c.b16 %v1371, %v1370
      %v1378 = vpack.c.b16 %v1373, %v1372
      %v1379 = vpack.c.b16 %v1375, %v1374
      %v1400 = vunpack.c.l.b16 %v1352
      %v1401 = vunpack.c.l.b16 %v1353
      %v1402 = vunpack.c.l.b16 %v1354
      %v1403 = vunpack.c.l.b16 %v1355
      %v1404 = vunpack.c.l.b16 %v1356
      %v1405 = vunpack.c.l.b16 %v1357
      %v1406 = vunpack.c.l.b16 %v1358
      %v1407 = vunpack.c.l.b16 %v1359
      %v1408 = vunpack.c.l.b16 %v1360
      %v1409 = vunpack.c.l.b16 %v1361
      %v1410 = vunpack.c.l.b16 %v1362
      %v1411 = vunpack.c.l.b16 %v1363
      %v1412 = vunpack.c.l.b16 %v1364
      %v1413 = vunpack.c.l.b16 %v1365
      %v1414 = vunpack.c.l.b16 %v1366
      %v1415 = vunpack.c.l.b16 %v1367
      %v1416 = vpack.c.b16 %v1401, %v1400
      %v1417 = vpack.c.b16 %v1403, %v1402
      %v1418 = vpack.c.b16 %v1405, %v1404
      %v1419 = vpack.c.b16 %v1407, %v1406
      %v1420 = vpack.c.b16 %v1409, %v1408
      %v1421 = vpack.c.b16 %v1411, %v1410
      %v1422 = vpack.c.b16 %v1413, %v1412
      %v1423 = vpack.c.b16 %v1415, %v1414
      %1432 = vmatprep.subr.bf16.mxu0 0
      %1433 = vmatpush1.bf16.msra.mxu0 %v1423
      %1434 = vmatprep.subr.bf16.mxu0 0
      %1435 = vmatpush1.bf16.msra.mxu0 %v1422
      %1436 = vmatprep.subr.bf16.mxu0 0
      %1437 = vmatpush1.bf16.msra.mxu0 %v1421
      %1438 = vmatprep.subr.bf16.mxu0 0
      %1439 = vmatpush1.bf16.msra.mxu0 %v1420
      %1440 = vmatprep.subr.bf16.mxu0 0
      %1441 = vmatpush1.bf16.msra.mxu0 %v1419
      %1442 = vmatprep.subr.bf16.mxu0 0
      %1443 = vmatpush1.bf16.msra.mxu0 %v1418
      %1444 = vmatprep.subr.bf16.mxu0 0
      %1445 = vmatpush1.bf16.msra.mxu0 %v1417
      %1446 = vmatprep.subr.bf16.mxu0 0
      %1447 = vmatpush1.bf16.msra.mxu0 %v1416
      %1448 = vmatprep.subr.bf16.mxu0 0
      %1449 = vmatpush2.bf16.msra.mxu0 0
      %1450 = vmatprep.subr.bf16.mxu0 0
      %1451 = vmatpush2.bf16.msra.mxu0 0
      %1452 = vmatprep.subr.bf16.mxu0 0
      %1453 = vmatpush2.bf16.msra.mxu0 0
      %1454 = vmatprep.subr.bf16.mxu0 0
      %1455 = vmatpush2.bf16.msra.mxu0 0
      %1456 = vmatprep.subr.bf16.mxu0 0
      %1457 = vmatpush2.bf16.msra.mxu0 0
      %1458 = vmatprep.subr.bf16.mxu0 0
      %1459 = vmatpush2.bf16.msra.mxu0 0
      %1460 = vmatprep.subr.bf16.mxu0 0
      %1461 = vmatpush2.bf16.msra.mxu0 0
      %1462 = vmatprep.subr.bf16.mxu0 0
      %1463 = vmatpush2.bf16.msra.mxu0 0
      %1464 = vmatprep.mubr.bf16.mxu0 0
      %1465 = vmatmul.mubr.bf16.gmra.mxu0 %v1376
      %v1466 = vpop.f32.mrf.mxu0
      %v1467 = vadd.f32 0.0, %v1466
      %v1468 = vpop.f32.mrf.mxu0
      %v1469 = vpop.f32.mrf.mxu0
      %v1470 = vadd.f32 0.0, %v1469
      %v1471 = vpop.f32.mrf.mxu0
      %1472 = vmatprep.mubr.bf16.mxu0 0
      %1473 = vmatmul.mubr.bf16.gmra.mxu0 %v1377
      %v1474 = vpop.f32.mrf.mxu0
      %v1475 = vadd.f32 0.0, %v1474
      %v1476 = vpop.f32.mrf.mxu0
      %v1477 = vpop.f32.mrf.mxu0
      %v1478 = vadd.f32 0.0, %v1477
      %v1479 = vpop.f32.mrf.mxu0
      %1480 = vmatprep.mubr.bf16.mxu0 0
      %1481 = vmatmul.mubr.bf16.gmra.mxu0 %v1378
      %v1482 = vpop.f32.mrf.mxu0
      %v1483 = vadd.f32 0.0, %v1482
      %v1484 = vpop.f32.mrf.mxu0
      %v1485 = vpop.f32.mrf.mxu0
      %v1486 = vadd.f32 0.0, %v1485
      %v1487 = vpop.f32.mrf.mxu0
      %1488 = vmatprep.mubr.bf16.mxu0 0
      %1489 = vmatmul.mubr.bf16.gmra.mxu0 %v1379
      %v1490 = vpop.f32.mrf.mxu0
      %v1491 = vadd.f32 0.0, %v1490
      %v1492 = vpop.f32.mrf.mxu0
      %v1493 = vpop.f32.mrf.mxu0
      %v1494 = vadd.f32 0.0, %v1493
      %v1495 = vpop.f32.mrf.mxu0
      %1496 = vdwg.mxu0
      %v1497 = vadd.f32 %v1287, %v1467
      %v1498 = vadd.f32 %v1288, %v1470
      %v1499 = vadd.f32 %v1289, %v1475
      %v1500 = vadd.f32 %v1290, %v1478
      %v1501 = vadd.f32 %v1291, %v1483
      %v1502 = vadd.f32 %v1292, %v1486
      %v1503 = vadd.f32 %v1293, %v1491
      %v1504 = vadd.f32 %v1294, %v1494
      %s1505 = scalar_lea.vmem %s192, 16
      %v1506 = vld [vmem:[%s1505] sm:$0xf]
      %v1507 = vld [vmem:[%s1505 + $0x8] sm:$0xf]
      %v1508 = vld [vmem:[%s1505 + $0x10] sm:$0xf]
      %v1509 = vld [vmem:[%s1505 + $0x18] sm:$0xf]
      %v1510 = vld [vmem:[%s1505 + $0x20] sm:$0xf]
      %v1511 = vld [vmem:[%s1505 + $0x28] sm:$0xf]
      %v1512 = vld [vmem:[%s1505 + $0x30] sm:$0xf]
      %v1513 = vld [vmem:[%s1505 + $0x38] sm:$0xf]
      %s1514 = scalar_lea.vmem %s1, 384
      %v1515 = vld [vmem:[%s1514] sm:$0xf]
      %v1516 = vld [vmem:[%s1514 + $0x4] sm:$0xf]
      %v1517 = vld [vmem:[%s1514 + $0x8] sm:$0xf]
      %v1518 = vld [vmem:[%s1514 + $0xc] sm:$0xf]
      %v1519 = vld [vmem:[%s1514 + $0x10] sm:$0xf]
      %v1520 = vld [vmem:[%s1514 + $0x14] sm:$0xf]
      %v1521 = vld [vmem:[%s1514 + $0x18] sm:$0xf]
      %v1522 = vld [vmem:[%s1514 + $0x1c] sm:$0xf]
      %v1523 = vld [vmem:[%s1514 + $0x20] sm:$0xf]
      %v1524 = vld [vmem:[%s1514 + $0x24] sm:$0xf]
      %v1525 = vld [vmem:[%s1514 + $0x28] sm:$0xf]
      %v1526 = vld [vmem:[%s1514 + $0x2c] sm:$0xf]
      %v1527 = vld [vmem:[%s1514 + $0x30] sm:$0xf]
      %v1528 = vld [vmem:[%s1514 + $0x34] sm:$0xf]
      %v1529 = vld [vmem:[%s1514 + $0x38] sm:$0xf]
      %v1530 = vld [vmem:[%s1514 + $0x3c] sm:$0xf]
      %v1539 = vunpack.c.l.b16 %v1506
      %v1540 = vunpack.c.l.b16 %v1507
      %v1541 = vunpack.c.l.b16 %v1508
      %v1542 = vunpack.c.l.b16 %v1509
      %v1543 = vunpack.c.l.b16 %v1510
      %v1544 = vunpack.c.l.b16 %v1511
      %v1545 = vunpack.c.l.b16 %v1512
      %v1546 = vunpack.c.l.b16 %v1513
      %v1547 = vpack.c.b16 %v1540, %v1539
      %v1548 = vpack.c.b16 %v1542, %v1541
      %v1549 = vpack.c.b16 %v1544, %v1543
      %v1550 = vpack.c.b16 %v1546, %v1545
      %v1571 = vunpack.c.l.b16 %v1515
      %v1572 = vunpack.c.l.b16 %v1516
      %v1573 = vunpack.c.l.b16 %v1517
      %v1574 = vunpack.c.l.b16 %v1518
      %v1575 = vunpack.c.l.b16 %v1519
      %v1576 = vunpack.c.l.b16 %v1520
      %v1577 = vunpack.c.l.b16 %v1521
      %v1578 = vunpack.c.l.b16 %v1522
      %v1579 = vunpack.c.l.b16 %v1523
      %v1580 = vunpack.c.l.b16 %v1524
      %v1581 = vunpack.c.l.b16 %v1525
      %v1582 = vunpack.c.l.b16 %v1526
      %v1583 = vunpack.c.l.b16 %v1527
      %v1584 = vunpack.c.l.b16 %v1528
      %v1585 = vunpack.c.l.b16 %v1529
      %v1586 = vunpack.c.l.b16 %v1530
      %v1587 = vpack.c.b16 %v1572, %v1571
      %v1588 = vpack.c.b16 %v1574, %v1573
      %v1589 = vpack.c.b16 %v1576, %v1575
      %v1590 = vpack.c.b16 %v1578, %v1577
      %v1591 = vpack.c.b16 %v1580, %v1579
      %v1592 = vpack.c.b16 %v1582, %v1581
      %v1593 = vpack.c.b16 %v1584, %v1583
      %v1594 = vpack.c.b16 %v1586, %v1585
      %1603 = vmatprep.subr.bf16.mxu0 0
      %1604 = vmatpush1.bf16.msra.mxu0 %v1594
      %1605 = vmatprep.subr.bf16.mxu0 0
      %1606 = vmatpush1.bf16.msra.mxu0 %v1593
      %1607 = vmatprep.subr.bf16.mxu0 0
      %1608 = vmatpush1.bf16.msra.mxu0 %v1592
      %1609 = vmatprep.subr.bf16.mxu0 0
      %1610 = vmatpush1.bf16.msra.mxu0 %v1591
      %1611 = vmatprep.subr.bf16.mxu0 0
      %1612 = vmatpush1.bf16.msra.mxu0 %v1590
      %1613 = vmatprep.subr.bf16.mxu0 0
      %1614 = vmatpush1.bf16.msra.mxu0 %v1589
      %1615 = vmatprep.subr.bf16.mxu0 0
      %1616 = vmatpush1.bf16.msra.mxu0 %v1588
      %1617 = vmatprep.subr.bf16.mxu0 0
      %1618 = vmatpush1.bf16.msra.mxu0 %v1587
      %1619 = vmatprep.subr.bf16.mxu0 0
      %1620 = vmatpush2.bf16.msra.mxu0 0
      %1621 = vmatprep.subr.bf16.mxu0 0
      %1622 = vmatpush2.bf16.msra.mxu0 0
      %1623 = vmatprep.subr.bf16.mxu0 0
      %1624 = vmatpush2.bf16.msra.mxu0 0
      %1625 = vmatprep.subr.bf16.mxu0 0
      %1626 = vmatpush2.bf16.msra.mxu0 0
      %1627 = vmatprep.subr.bf16.mxu0 0
      %1628 = vmatpush2.bf16.msra.mxu0 0
      %1629 = vmatprep.subr.bf16.mxu0 0
      %1630 = vmatpush2.bf16.msra.mxu0 0
      %1631 = vmatprep.subr.bf16.mxu0 0
      %1632 = vmatpush2.bf16.msra.mxu0 0
      %1633 = vmatprep.subr.bf16.mxu0 0
      %1634 = vmatpush2.bf16.msra.mxu0 0
      %1635 = vmatprep.mubr.bf16.mxu0 0
      %1636 = vmatmul.mubr.bf16.gmra.mxu0 %v1547
      %v1637 = vpop.f32.mrf.mxu0
      %v1638 = vadd.f32 0.0, %v1637
      %v1639 = vpop.f32.mrf.mxu0
      %v1640 = vpop.f32.mrf.mxu0
      %v1641 = vadd.f32 0.0, %v1640
      %v1642 = vpop.f32.mrf.mxu0
      %1643 = vmatprep.mubr.bf16.mxu0 0
      %1644 = vmatmul.mubr.bf16.gmra.mxu0 %v1548
      %v1645 = vpop.f32.mrf.mxu0
      %v1646 = vadd.f32 0.0, %v1645
      %v1647 = vpop.f32.mrf.mxu0
      %v1648 = vpop.f32.mrf.mxu0
      %v1649 = vadd.f32 0.0, %v1648
      %v1650 = vpop.f32.mrf.mxu0
      %1651 = vmatprep.mubr.bf16.mxu0 0
      %1652 = vmatmul.mubr.bf16.gmra.mxu0 %v1549
      %v1653 = vpop.f32.mrf.mxu0
      %v1654 = vadd.f32 0.0, %v1653
      %v1655 = vpop.f32.mrf.mxu0
      %v1656 = vpop.f32.mrf.mxu0
      %v1657 = vadd.f32 0.0, %v1656
      %v1658 = vpop.f32.mrf.mxu0
      %1659 = vmatprep.mubr.bf16.mxu0 0
      %1660 = vmatmul.mubr.bf16.gmra.mxu0 %v1550
      %v1661 = vpop.f32.mrf.mxu0
      %v1662 = vadd.f32 0.0, %v1661
      %v1663 = vpop.f32.mrf.mxu0
      %v1664 = vpop.f32.mrf.mxu0
      %v1665 = vadd.f32 0.0, %v1664
      %v1666 = vpop.f32.mrf.mxu0
      %1667 = vdwg.mxu0
      %v1668 = vadd.f32 %v1497, %v1638
      %v1669 = vadd.f32 %v1498, %v1641
      %v1670 = vadd.f32 %v1499, %v1646
      %v1671 = vadd.f32 %v1500, %v1649
      %v1672 = vadd.f32 %v1501, %v1654
      %v1673 = vadd.f32 %v1502, %v1657
      %v1674 = vadd.f32 %v1503, %v1662
      %v1675 = vadd.f32 %v1504, %v1665
      %v1676 = vld [vmem:[%s1505] sm:$0xf]
      %v1677 = vld [vmem:[%s1505 + $0x4] sm:$0x1]
      %v1678 = vld [vmem:[%s1505 + $0x8] sm:$0xf]
      %v1679 = vld [vmem:[%s1505 + $0xc] sm:$0x1]
      %v1680 = vld [vmem:[%s1505 + $0x10] sm:$0xf]
      %v1681 = vld [vmem:[%s1505 + $0x14] sm:$0x1]
      %v1682 = vld [vmem:[%s1505 + $0x18] sm:$0xf]
      %v1683 = vld [vmem:[%s1505 + $0x1c] sm:$0x1]
      %v1684 = vld [vmem:[%s1505 + $0x20] sm:$0xf]
      %v1685 = vld [vmem:[%s1505 + $0x24] sm:$0x1]
      %v1686 = vld [vmem:[%s1505 + $0x28] sm:$0xf]
      %v1687 = vld [vmem:[%s1505 + $0x2c] sm:$0x1]
      %v1688 = vld [vmem:[%s1505 + $0x30] sm:$0xf]
      %v1689 = vld [vmem:[%s1505 + $0x34] sm:$0x1]
      %v1690 = vld [vmem:[%s1505 + $0x38] sm:$0xf]
      %v1691 = vld [vmem:[%s1505 + $0x3c] sm:$0x1]
      %v1693 = vshrl.u32 %v1676, 16
      %v1695 = vrot.slane %v1693, 4
      %v1696 = vshll.u32 %v1676, 16
      %v1698 = vrot.slane %v1696, 5
      %v1699 = vor.u32 %v1695, %v1698
      %v1700 = vrot.slane %v1699, 4
      %v1702 = vshll.u32 %v1677, 16
      %v1704 = vrot.slane %v1702, 5
      %v1705 = vsel %vm233, %v1700, %v1704
      %v1707 = vshrl.u32 %v1678, 16
      %v1709 = vrot.slane %v1707, 4
      %v1710 = vshll.u32 %v1678, 16
      %v1712 = vrot.slane %v1710, 5
      %v1713 = vor.u32 %v1709, %v1712
      %v1714 = vrot.slane %v1713, 4
      %v1716 = vshll.u32 %v1679, 16
      %v1718 = vrot.slane %v1716, 5
      %v1719 = vsel %vm233, %v1714, %v1718
      %v1721 = vshrl.u32 %v1680, 16
      %v1723 = vrot.slane %v1721, 4
      %v1724 = vshll.u32 %v1680, 16
      %v1726 = vrot.slane %v1724, 5
      %v1727 = vor.u32 %v1723, %v1726
      %v1728 = vrot.slane %v1727, 4
      %v1730 = vshll.u32 %v1681, 16
      %v1732 = vrot.slane %v1730, 5
      %v1733 = vsel %vm233, %v1728, %v1732
      %v1735 = vshrl.u32 %v1682, 16
      %v1737 = vrot.slane %v1735, 4
      %v1738 = vshll.u32 %v1682, 16
      %v1740 = vrot.slane %v1738, 5
      %v1741 = vor.u32 %v1737, %v1740
      %v1742 = vrot.slane %v1741, 4
      %v1744 = vshll.u32 %v1683, 16
      %v1746 = vrot.slane %v1744, 5
      %v1747 = vsel %vm233, %v1742, %v1746
      %v1749 = vshrl.u32 %v1684, 16
      %v1751 = vrot.slane %v1749, 4
      %v1752 = vshll.u32 %v1684, 16
      %v1754 = vrot.slane %v1752, 5
      %v1755 = vor.u32 %v1751, %v1754
      %v1756 = vrot.slane %v1755, 4
      %v1758 = vshll.u32 %v1685, 16
      %v1760 = vrot.slane %v1758, 5
      %v1761 = vsel %vm233, %v1756, %v1760
      %v1763 = vshrl.u32 %v1686, 16
      %v1765 = vrot.slane %v1763, 4
      %v1766 = vshll.u32 %v1686, 16
      %v1768 = vrot.slane %v1766, 5
      %v1769 = vor.u32 %v1765, %v1768
      %v1770 = vrot.slane %v1769, 4
      %v1772 = vshll.u32 %v1687, 16
      %v1774 = vrot.slane %v1772, 5
      %v1775 = vsel %vm233, %v1770, %v1774
      %v1777 = vshrl.u32 %v1688, 16
      %v1779 = vrot.slane %v1777, 4
      %v1780 = vshll.u32 %v1688, 16
      %v1782 = vrot.slane %v1780, 5
      %v1783 = vor.u32 %v1779, %v1782
      %v1784 = vrot.slane %v1783, 4
      %v1786 = vshll.u32 %v1689, 16
      %v1788 = vrot.slane %v1786, 5
      %v1789 = vsel %vm233, %v1784, %v1788
      %v1791 = vshrl.u32 %v1690, 16
      %v1793 = vrot.slane %v1791, 4
      %v1794 = vshll.u32 %v1690, 16
      %v1796 = vrot.slane %v1794, 5
      %v1797 = vor.u32 %v1793, %v1796
      %v1798 = vrot.slane %v1797, 4
      %v1800 = vshll.u32 %v1691, 16
      %v1802 = vrot.slane %v1800, 5
      %v1803 = vsel %vm233, %v1798, %v1802
      %s1804 = scalar_lea.vmem %s1, 448
      %v1805 = vld [vmem:[%s1804] sm:$0xf]
      %v1806 = vld [vmem:[%s1804 + $0x4] sm:$0xf]
      %v1807 = vld [vmem:[%s1804 + $0x8] sm:$0xf]
      %v1808 = vld [vmem:[%s1804 + $0xc] sm:$0xf]
      %v1809 = vld [vmem:[%s1804 + $0x10] sm:$0xf]
      %v1810 = vld [vmem:[%s1804 + $0x14] sm:$0xf]
      %v1811 = vld [vmem:[%s1804 + $0x18] sm:$0xf]
      %v1812 = vld [vmem:[%s1804 + $0x1c] sm:$0xf]
      %v1813 = vld [vmem:[%s1804 + $0x20] sm:$0xf]
      %v1814 = vld [vmem:[%s1804 + $0x24] sm:$0xf]
      %v1815 = vld [vmem:[%s1804 + $0x28] sm:$0xf]
      %v1816 = vld [vmem:[%s1804 + $0x2c] sm:$0xf]
      %v1817 = vld [vmem:[%s1804 + $0x30] sm:$0xf]
      %v1818 = vld [vmem:[%s1804 + $0x34] sm:$0xf]
      %v1819 = vld [vmem:[%s1804 + $0x38] sm:$0xf]
      %v1820 = vld [vmem:[%s1804 + $0x3c] sm:$0xf]
      %v1821 = vunpack.c.l.b16 %v1705
      %v1822 = vunpack.c.l.b16 %v1719
      %v1823 = vunpack.c.l.b16 %v1733
      %v1824 = vunpack.c.l.b16 %v1747
      %v1825 = vunpack.c.l.b16 %v1761
      %v1826 = vunpack.c.l.b16 %v1775
      %v1827 = vunpack.c.l.b16 %v1789
      %v1828 = vunpack.c.l.b16 %v1803
      %v1829 = vpack.c.b16 %v1822, %v1821
      %v1830 = vpack.c.b16 %v1824, %v1823
      %v1831 = vpack.c.b16 %v1826, %v1825
      %v1832 = vpack.c.b16 %v1828, %v1827
      %v1853 = vunpack.c.l.b16 %v1805
      %v1854 = vunpack.c.l.b16 %v1806
      %v1855 = vunpack.c.l.b16 %v1807
      %v1856 = vunpack.c.l.b16 %v1808
      %v1857 = vunpack.c.l.b16 %v1809
      %v1858 = vunpack.c.l.b16 %v1810
      %v1859 = vunpack.c.l.b16 %v1811
      %v1860 = vunpack.c.l.b16 %v1812
      %v1861 = vunpack.c.l.b16 %v1813
      %v1862 = vunpack.c.l.b16 %v1814
      %v1863 = vunpack.c.l.b16 %v1815
      %v1864 = vunpack.c.l.b16 %v1816
      %v1865 = vunpack.c.l.b16 %v1817
      %v1866 = vunpack.c.l.b16 %v1818
      %v1867 = vunpack.c.l.b16 %v1819
      %v1868 = vunpack.c.l.b16 %v1820
      %v1869 = vpack.c.b16 %v1854, %v1853
      %v1870 = vpack.c.b16 %v1856, %v1855
      %v1871 = vpack.c.b16 %v1858, %v1857
      %v1872 = vpack.c.b16 %v1860, %v1859
      %v1873 = vpack.c.b16 %v1862, %v1861
      %v1874 = vpack.c.b16 %v1864, %v1863
      %v1875 = vpack.c.b16 %v1866, %v1865
      %v1876 = vpack.c.b16 %v1868, %v1867
      %1885 = vmatprep.subr.bf16.mxu0 0
      %1886 = vmatpush1.bf16.msra.mxu0 %v1876
      %1887 = vmatprep.subr.bf16.mxu0 0
      %1888 = vmatpush1.bf16.msra.mxu0 %v1875
      %1889 = vmatprep.subr.bf16.mxu0 0
      %1890 = vmatpush1.bf16.msra.mxu0 %v1874
      %1891 = vmatprep.subr.bf16.mxu0 0
      %1892 = vmatpush1.bf16.msra.mxu0 %v1873
      %1893 = vmatprep.subr.bf16.mxu0 0
      %1894 = vmatpush1.bf16.msra.mxu0 %v1872
      %1895 = vmatprep.subr.bf16.mxu0 0
      %1896 = vmatpush1.bf16.msra.mxu0 %v1871
      %1897 = vmatprep.subr.bf16.mxu0 0
      %1898 = vmatpush1.bf16.msra.mxu0 %v1870
      %1899 = vmatprep.subr.bf16.mxu0 0
      %1900 = vmatpush1.bf16.msra.mxu0 %v1869
      %1901 = vmatprep.subr.bf16.mxu0 0
      %1902 = vmatpush2.bf16.msra.mxu0 0
      %1903 = vmatprep.subr.bf16.mxu0 0
      %1904 = vmatpush2.bf16.msra.mxu0 0
      %1905 = vmatprep.subr.bf16.mxu0 0
      %1906 = vmatpush2.bf16.msra.mxu0 0
      %1907 = vmatprep.subr.bf16.mxu0 0
      %1908 = vmatpush2.bf16.msra.mxu0 0
      %1909 = vmatprep.subr.bf16.mxu0 0
      %1910 = vmatpush2.bf16.msra.mxu0 0
      %1911 = vmatprep.subr.bf16.mxu0 0
      %1912 = vmatpush2.bf16.msra.mxu0 0
      %1913 = vmatprep.subr.bf16.mxu0 0
      %1914 = vmatpush2.bf16.msra.mxu0 0
      %1915 = vmatprep.subr.bf16.mxu0 0
      %1916 = vmatpush2.bf16.msra.mxu0 0
      %1917 = vmatprep.mubr.bf16.mxu0 0
      %1918 = vmatmul.mubr.bf16.gmra.mxu0 %v1829
      %v1919 = vpop.f32.mrf.mxu0
      %v1920 = vadd.f32 0.0, %v1919
      %v1921 = vpop.f32.mrf.mxu0
      %v1922 = vpop.f32.mrf.mxu0
      %v1923 = vadd.f32 0.0, %v1922
      %v1924 = vpop.f32.mrf.mxu0
      %1925 = vmatprep.mubr.bf16.mxu0 0
      %1926 = vmatmul.mubr.bf16.gmra.mxu0 %v1830
      %v1927 = vpop.f32.mrf.mxu0
      %v1928 = vadd.f32 0.0, %v1927
      %v1929 = vpop.f32.mrf.mxu0
      %v1930 = vpop.f32.mrf.mxu0
      %v1931 = vadd.f32 0.0, %v1930
      %v1932 = vpop.f32.mrf.mxu0
      %1933 = vmatprep.mubr.bf16.mxu0 0
      %1934 = vmatmul.mubr.bf16.gmra.mxu0 %v1831
      %v1935 = vpop.f32.mrf.mxu0
      %v1936 = vadd.f32 0.0, %v1935
      %v1937 = vpop.f32.mrf.mxu0
      %v1938 = vpop.f32.mrf.mxu0
      %v1939 = vadd.f32 0.0, %v1938
      %v1940 = vpop.f32.mrf.mxu0
      %1941 = vmatprep.mubr.bf16.mxu0 0
      %1942 = vmatmul.mubr.bf16.gmra.mxu0 %v1832
      %v1943 = vpop.f32.mrf.mxu0
      %v1944 = vadd.f32 0.0, %v1943
      %v1945 = vpop.f32.mrf.mxu0
      %v1946 = vpop.f32.mrf.mxu0
      %v1947 = vadd.f32 0.0, %v1946
      %v1948 = vpop.f32.mrf.mxu0
      %1949 = vdwg.mxu0
      %v1950 = vadd.f32 %v1668, %v1920
      %v1951 = vadd.f32 %v1669, %v1923
      %v1952 = vadd.f32 %v1670, %v1928
      %v1953 = vadd.f32 %v1671, %v1931
      %v1954 = vadd.f32 %v1672, %v1936
      %v1955 = vadd.f32 %v1673, %v1939
      %v1956 = vadd.f32 %v1674, %v1944
      %v1957 = vadd.f32 %v1675, %v1947
      %v1958 = vld [vmem:[%s1505] sm:$0xe]
      %v1959 = vld [vmem:[%s1505 + $0x8] sm:$0xe]
      %v1960 = vld [vmem:[%s1505 + $0x10] sm:$0xe]
      %v1961 = vld [vmem:[%s1505 + $0x18] sm:$0xe]
      %v1962 = vld [vmem:[%s1505 + $0x20] sm:$0xe]
      %v1963 = vld [vmem:[%s1505 + $0x28] sm:$0xe]
      %v1964 = vld [vmem:[%s1505 + $0x30] sm:$0xe]
      %v1965 = vld [vmem:[%s1505 + $0x38] sm:$0xe]
      %v1982 = vrot.slane %v1958, 5
      %v1983 = vrot.slane %v1982, 4
      %v1984 = vrot.slane %v1677, 5
      %v1985 = vsel %vm655, %v1983, %v1984
      %v1986 = vrot.slane %v1959, 5
      %v1987 = vrot.slane %v1986, 4
      %v1988 = vrot.slane %v1679, 5
      %v1989 = vsel %vm655, %v1987, %v1988
      %v1990 = vrot.slane %v1960, 5
      %v1991 = vrot.slane %v1990, 4
      %v1992 = vrot.slane %v1681, 5
      %v1993 = vsel %vm655, %v1991, %v1992
      %v1994 = vrot.slane %v1961, 5
      %v1995 = vrot.slane %v1994, 4
      %v1996 = vrot.slane %v1683, 5
      %v1997 = vsel %vm655, %v1995, %v1996
      %v1998 = vrot.slane %v1962, 5
      %v1999 = vrot.slane %v1998, 4
      %v2000 = vrot.slane %v1685, 5
      %v2001 = vsel %vm655, %v1999, %v2000
      %v2002 = vrot.slane %v1963, 5
      %v2003 = vrot.slane %v2002, 4
      %v2004 = vrot.slane %v1687, 5
      %v2005 = vsel %vm655, %v2003, %v2004
      %v2006 = vrot.slane %v1964, 5
      %v2007 = vrot.slane %v2006, 4
      %v2008 = vrot.slane %v1689, 5
      %v2009 = vsel %vm655, %v2007, %v2008
      %v2010 = vrot.slane %v1965, 5
      %v2011 = vrot.slane %v2010, 4
      %v2012 = vrot.slane %v1691, 5
      %v2013 = vsel %vm655, %v2011, %v2012
      %s2014 = scalar_lea.vmem %s1, 512
      %v2015 = vld [vmem:[%s2014] sm:$0xf]
      %v2016 = vld [vmem:[%s2014 + $0x4] sm:$0xf]
      %v2017 = vld [vmem:[%s2014 + $0x8] sm:$0xf]
      %v2018 = vld [vmem:[%s2014 + $0xc] sm:$0xf]
      %v2019 = vld [vmem:[%s2014 + $0x10] sm:$0xf]
      %v2020 = vld [vmem:[%s2014 + $0x14] sm:$0xf]
      %v2021 = vld [vmem:[%s2014 + $0x18] sm:$0xf]
      %v2022 = vld [vmem:[%s2014 + $0x1c] sm:$0xf]
      %v2023 = vld [vmem:[%s2014 + $0x20] sm:$0xf]
      %v2024 = vld [vmem:[%s2014 + $0x24] sm:$0xf]
      %v2025 = vld [vmem:[%s2014 + $0x28] sm:$0xf]
      %v2026 = vld [vmem:[%s2014 + $0x2c] sm:$0xf]
      %v2027 = vld [vmem:[%s2014 + $0x30] sm:$0xf]
      %v2028 = vld [vmem:[%s2014 + $0x34] sm:$0xf]
      %v2029 = vld [vmem:[%s2014 + $0x38] sm:$0xf]
      %v2030 = vld [vmem:[%s2014 + $0x3c] sm:$0xf]
      %v2031 = vunpack.c.l.b16 %v1985
      %v2032 = vunpack.c.l.b16 %v1989
      %v2033 = vunpack.c.l.b16 %v1993
      %v2034 = vunpack.c.l.b16 %v1997
      %v2035 = vunpack.c.l.b16 %v2001
      %v2036 = vunpack.c.l.b16 %v2005
      %v2037 = vunpack.c.l.b16 %v2009
      %v2038 = vunpack.c.l.b16 %v2013
      %v2039 = vpack.c.b16 %v2032, %v2031
      %v2040 = vpack.c.b16 %v2034, %v2033
      %v2041 = vpack.c.b16 %v2036, %v2035
      %v2042 = vpack.c.b16 %v2038, %v2037
      %v2063 = vunpack.c.l.b16 %v2015
      %v2064 = vunpack.c.l.b16 %v2016
      %v2065 = vunpack.c.l.b16 %v2017
      %v2066 = vunpack.c.l.b16 %v2018
      %v2067 = vunpack.c.l.b16 %v2019
      %v2068 = vunpack.c.l.b16 %v2020
      %v2069 = vunpack.c.l.b16 %v2021
      %v2070 = vunpack.c.l.b16 %v2022
      %v2071 = vunpack.c.l.b16 %v2023
      %v2072 = vunpack.c.l.b16 %v2024
      %v2073 = vunpack.c.l.b16 %v2025
      %v2074 = vunpack.c.l.b16 %v2026
      %v2075 = vunpack.c.l.b16 %v2027
      %v2076 = vunpack.c.l.b16 %v2028
      %v2077 = vunpack.c.l.b16 %v2029
      %v2078 = vunpack.c.l.b16 %v2030
      %v2079 = vpack.c.b16 %v2064, %v2063
      %v2080 = vpack.c.b16 %v2066, %v2065
      %v2081 = vpack.c.b16 %v2068, %v2067
      %v2082 = vpack.c.b16 %v2070, %v2069
      %v2083 = vpack.c.b16 %v2072, %v2071
      %v2084 = vpack.c.b16 %v2074, %v2073
      %v2085 = vpack.c.b16 %v2076, %v2075
      %v2086 = vpack.c.b16 %v2078, %v2077
      %2095 = vmatprep.subr.bf16.mxu0 0
      %2096 = vmatpush1.bf16.msra.mxu0 %v2086
      %2097 = vmatprep.subr.bf16.mxu0 0
      %2098 = vmatpush1.bf16.msra.mxu0 %v2085
      %2099 = vmatprep.subr.bf16.mxu0 0
      %2100 = vmatpush1.bf16.msra.mxu0 %v2084
      %2101 = vmatprep.subr.bf16.mxu0 0
      %2102 = vmatpush1.bf16.msra.mxu0 %v2083
      %2103 = vmatprep.subr.bf16.mxu0 0
      %2104 = vmatpush1.bf16.msra.mxu0 %v2082
      %2105 = vmatprep.subr.bf16.mxu0 0
      %2106 = vmatpush1.bf16.msra.mxu0 %v2081
      %2107 = vmatprep.subr.bf16.mxu0 0
      %2108 = vmatpush1.bf16.msra.mxu0 %v2080
      %2109 = vmatprep.subr.bf16.mxu0 0
      %2110 = vmatpush1.bf16.msra.mxu0 %v2079
      %2111 = vmatprep.subr.bf16.mxu0 0
      %2112 = vmatpush2.bf16.msra.mxu0 0
      %2113 = vmatprep.subr.bf16.mxu0 0
      %2114 = vmatpush2.bf16.msra.mxu0 0
      %2115 = vmatprep.subr.bf16.mxu0 0
      %2116 = vmatpush2.bf16.msra.mxu0 0
      %2117 = vmatprep.subr.bf16.mxu0 0
      %2118 = vmatpush2.bf16.msra.mxu0 0
      %2119 = vmatprep.subr.bf16.mxu0 0
      %2120 = vmatpush2.bf16.msra.mxu0 0
      %2121 = vmatprep.subr.bf16.mxu0 0
      %2122 = vmatpush2.bf16.msra.mxu0 0
      %2123 = vmatprep.subr.bf16.mxu0 0
      %2124 = vmatpush2.bf16.msra.mxu0 0
      %2125 = vmatprep.subr.bf16.mxu0 0
      %2126 = vmatpush2.bf16.msra.mxu0 0
      %2127 = vmatprep.mubr.bf16.mxu0 0
      %2128 = vmatmul.mubr.bf16.gmra.mxu0 %v2039
      %v2129 = vpop.f32.mrf.mxu0
      %v2130 = vadd.f32 0.0, %v2129
      %v2131 = vpop.f32.mrf.mxu0
      %v2132 = vpop.f32.mrf.mxu0
      %v2133 = vadd.f32 0.0, %v2132
      %v2134 = vpop.f32.mrf.mxu0
      %2135 = vmatprep.mubr.bf16.mxu0 0
      %2136 = vmatmul.mubr.bf16.gmra.mxu0 %v2040
      %v2137 = vpop.f32.mrf.mxu0
      %v2138 = vadd.f32 0.0, %v2137
      %v2139 = vpop.f32.mrf.mxu0
      %v2140 = vpop.f32.mrf.mxu0
      %v2141 = vadd.f32 0.0, %v2140
      %v2142 = vpop.f32.mrf.mxu0
      %2143 = vmatprep.mubr.bf16.mxu0 0
      %2144 = vmatmul.mubr.bf16.gmra.mxu0 %v2041
      %v2145 = vpop.f32.mrf.mxu0
      %v2146 = vadd.f32 0.0, %v2145
      %v2147 = vpop.f32.mrf.mxu0
      %v2148 = vpop.f32.mrf.mxu0
      %v2149 = vadd.f32 0.0, %v2148
      %v2150 = vpop.f32.mrf.mxu0
      %2151 = vmatprep.mubr.bf16.mxu0 0
      %2152 = vmatmul.mubr.bf16.gmra.mxu0 %v2042
      %v2153 = vpop.f32.mrf.mxu0
      %v2154 = vadd.f32 0.0, %v2153
      %v2155 = vpop.f32.mrf.mxu0
      %v2156 = vpop.f32.mrf.mxu0
      %v2157 = vadd.f32 0.0, %v2156
      %v2158 = vpop.f32.mrf.mxu0
      %2159 = vdwg.mxu0
      %v2160 = vadd.f32 %v1950, %v2130
      %v2161 = vadd.f32 %v1951, %v2133
      %v2162 = vadd.f32 %v1952, %v2138
      %v2163 = vadd.f32 %v1953, %v2141
      %v2164 = vadd.f32 %v1954, %v2146
      %v2165 = vadd.f32 %v1955, %v2149
      %v2166 = vadd.f32 %v1956, %v2154
      %v2167 = vadd.f32 %v1957, %v2157
      %v2168 = vld [vmem:[%s2] sm:$0x1]
      %v2170 = vlaneseq
      %v2171 = vshrl.u32 %v2170, 7
      %v2172 = vsub.s32 0, %v2171
      %v2173 = vrot.slane %v2168, %v2172
      %v2175 = vmul.f32 %v2160, %v2173
      %v2176 = vmul.f32 %v2161, %v2173
      %v2177 = vmul.f32 %v2162, %v2173
      %v2178 = vmul.f32 %v2163, %v2173
      %v2179 = vmul.f32 %v2164, %v2173
      %v2180 = vmul.f32 %v2165, %v2173
      %v2181 = vmul.f32 %v2166, %v2173
      %v2182 = vmul.f32 %v2167, %v2173
      %v2183 = vld [vmem:[%s3] sm:$0x1]
      %v2185 = vlaneseq
      %v2186 = vshrl.u32 %v2185, 7
      %v2187 = vsub.s32 0, %v2186
      %v2188 = vrot.slane %v2183, %v2187
      %v2190 = vadd.f32 %v2175, %v2188
      %v2191 = vadd.f32 %v2176, %v2188
      %v2192 = vadd.f32 %v2177, %v2188
      %v2193 = vadd.f32 %v2178, %v2188
      %v2194 = vadd.f32 %v2179, %v2188
      %v2195 = vadd.f32 %v2180, %v2188
      %v2196 = vadd.f32 %v2181, %v2188
      %v2197 = vadd.f32 %v2182, %v2188
      %v2198 = vmax.f32 %v2190, 0.0
      %v2199 = vmax.f32 %v2191, 0.0
      %v2200 = vmax.f32 %v2192, 0.0
      %v2201 = vmax.f32 %v2193, 0.0
      %v2202 = vmax.f32 %v2194, 0.0
      %v2203 = vmax.f32 %v2195, 0.0
      %v2204 = vmax.f32 %v2196, 0.0
      %v2205 = vmax.f32 %v2197, 0.0
      %v2206 = vpack.c.bf16 %v2198, %v2198
      %v2207 = vpack.c.bf16 %v2199, %v2199
      %v2208 = vpack.c.bf16 %v2200, %v2200
      %v2209 = vpack.c.bf16 %v2201, %v2201
      %v2210 = vpack.c.bf16 %v2202, %v2202
      %v2211 = vpack.c.bf16 %v2203, %v2203
      %v2212 = vpack.c.bf16 %v2204, %v2204
      %v2213 = vpack.c.bf16 %v2205, %v2205
      %2214 = vst [vmem:[%s197] sm:$0xf] %v2206
      %2215 = vst [vmem:[%s197 + $0x4] sm:$0xf] %v2207
      %2216 = vst [vmem:[%s197 + $0x8] sm:$0xf] %v2208
      %2217 = vst [vmem:[%s197 + $0xc] sm:$0xf] %v2209
      %2218 = vst [vmem:[%s197 + $0x10] sm:$0xf] %v2210
      %2219 = vst [vmem:[%s197 + $0x14] sm:$0xf] %v2211
      %2220 = vst [vmem:[%s197 + $0x18] sm:$0xf] %v2212
      %2221 = vst [vmem:[%s197 + $0x1c] sm:$0xf] %v2213
      %p2222 = scmp.lt.s32.totalorder %s15, 1
      %s2223 = scalar_select %p2222, %s15, 1
      %s2224 = smul.addr %s2223, 8
      %s2225 = smul.addr %s2224, 4
      %s2226 = scalar_lea.vmem %s4, %s2225
      // Predicated region
      $region37: #{leafnet_forward.19} parent=35 // pred_check
        %p2227 = pneg %p122
      $region38: #{leafnet_forward.19} parent=35 // pred_check_branch
        %2229 = sbr.rel (%p2227) target = $region40
      $region39: #{leafnet_forward.19} parent=35 // pred_region
        _
      $region40: #{leafnet_forward.19} parent=35 // pred_fallthru
        _
    $region36: #{leafnet_forward.19} parent=5 // pred_fallthru
      _
    %p2230 = scmp.le.s32.totalorder 2, %s10
    // Predicated region
    $region41: #{leafnet_forward.19} parent=5 // pred_check
      %p2231 = pneg %p2230
    $region42: #{leafnet_forward.19} parent=5 // pred_check_branch
      %2233 = sbr.rel (%p2231) target = $region44
    $region43: #{leafnet_forward.19} parent=5 // pred_region
      %s2234 = ssub.s32 %s10, 2
      // Predicated region
      $region45: #{leafnet_forward.19} parent=43 // pred_check
        %p2235 = pneg %p128
      $region46: #{leafnet_forward.19} parent=43 // pred_check_branch
        %2237 = sbr.rel (%p2235) target = $region48
      $region47: #{leafnet_forward.19} parent=43 // pred_region
        %p2238 = scmp.lt.s32.totalorder %s16, 1
        %s2239 = scalar_select %p2238, %s16, 1
        %s2240 = smul.addr %s2239, 8
        %s2241 = smul.addr %s2240, 4
        %s2242 = scalar_lea.vmem %s4, %s2241
      $region48: #{leafnet_forward.19} parent=43 // pred_fallthru
        _
    $region44: #{leafnet_forward.19} parent=5 // pred_fallthru
      _
  $region6: #{leafnet_forward.19} parent=0 // loop_footer
    %s14 = sadd.s32 1, %s10
  $region7: #{leafnet_forward.19} parent=0 // loop_footer_branch
    %9 = sbr.rel target = $region3
  $region8: #{leafnet_forward.19} parent=0 // loop_exit
    _

// kernel: leafnet_forward.26
$region0: #{leafnet_forward.26}
  #allocation0 [shape = 'u32[]', space=smem, size = 0x4, offset = 0x4, fixed_abs, tag = 'smem constant byte address 0x4 - core index']
  #allocation1 [shape = 'u32[144,128]{1,0:T(1,128)}', space=vmem, size = 0x12000, scoped, tag = 'internal scratch']
  #allocation2 [shape = 'f32[32,128]{1,0:T(8,128)}', space=vmem, size = 0x4000, scoped, tag = 'scratch operand']
  %s0 = inlined_call_operand.vmem [shape: bf16[32,128], index: 0, kind: input, shape index: {}]
  %s1 = inlined_call_operand.vmem [shape: bf16[128,128], index: 1, kind: input, shape index: {}]
  %s2 = inlined_call_operand.vmem [shape: f32[1,128], index: 2, kind: input, shape index: {}]
  %s3 = inlined_call_operand.vmem [shape: f32[1,128], index: 3, kind: input, shape index: {}]
  %s4 = inlined_call_operand.vmem [shape: bf16[32,128], index: 4, kind: output, shape index: {}]
  %s5 = sld [smem:[#allocation0]]
  $region34: #{leafnet_forward.26} parent=0
    _
  %s7 = ssub.s32 1, %s5
  %s8 = scalar_select 0, %s7, %s5
  // Predicated region
  $region2: #{leafnet_forward.26} parent=0 // pred_check
    _
  $region3: #{leafnet_forward.26} parent=0 // pred_check_branch
    %10 = sbr.rel (0) target = $region5
  $region4: #{leafnet_forward.26} parent=0 // pred_region
    _
  $region5: #{leafnet_forward.26} parent=0 // pred_fallthru
    _
  // Predicated region
  $region6: #{leafnet_forward.26} parent=0 // pred_check
    _
  $region7: #{leafnet_forward.26} parent=0 // pred_check_branch
    %12 = sbr.rel (0) target = $region9
  $region8: #{leafnet_forward.26} parent=0 // pred_region
    _
  $region9: #{leafnet_forward.26} parent=0 // pred_fallthru
    _
  // Predicated region
  $region10: #{leafnet_forward.26} parent=0 // pred_check
    _
  $region11: #{leafnet_forward.26} parent=0 // pred_check_branch
    %14 = sbr.rel (0) target = $region13
  $region12: #{leafnet_forward.26} parent=0 // pred_region
    _
  $region13: #{leafnet_forward.26} parent=0 // pred_fallthru
    _
  // Predicated region
  $region14: #{leafnet_forward.26} parent=0 // pred_check
    _
  $region15: #{leafnet_forward.26} parent=0 // pred_check_branch
    %16 = sbr.rel (0) target = $region17
  $region16: #{leafnet_forward.26} parent=0 // pred_region
    _
  $region17: #{leafnet_forward.26} parent=0 // pred_fallthru
    _
  %p18 = scmp.eq.s32.totalorder 0, 0
  // Predicated region
  $region18: #{leafnet_forward.26} parent=0 // pred_check
    %p19 = pneg %p18
  $region19: #{leafnet_forward.26} parent=0 // pred_check_branch
    %21 = sbr.rel (%p19) target = $region21
  $region20: #{leafnet_forward.26} parent=0 // pred_region
    %22 = vst [vmem:[#allocation2] sm:$0xff] 0.0
    %23 = vst [vmem:[#allocation2 + $0x8] sm:$0xff] 0.0
    %24 = vst [vmem:[#allocation2 + $0x10] sm:$0xff] 0.0
    %25 = vst [vmem:[#allocation2 + $0x18] sm:$0xff] 0.0
  $region21: #{leafnet_forward.26} parent=0 // pred_fallthru
    _
  %v26 = vld [vmem:[#allocation2] sm:$0xff]
  %v27 = vld [vmem:[#allocation2 + $0x8] sm:$0xff]
  %v28 = vld [vmem:[#allocation2 + $0x10] sm:$0xff]
  %v29 = vld [vmem:[#allocation2 + $0x18] sm:$0xff]
  %v30 = vld [vmem:[%s0] sm:$0xf]
  %v31 = vld [vmem:[%s0 + $0x4] sm:$0xf]
  %v32 = vld [vmem:[%s0 + $0x8] sm:$0xf]
  %v33 = vld [vmem:[%s0 + $0xc] sm:$0xf]
  %v34 = vld [vmem:[%s1] sm:$0xf]
  %v35 = vld [vmem:[%s1 + $0x4] sm:$0xf]
  %v36 = vld [vmem:[%s1 + $0x8] sm:$0xf]
  %v37 = vld [vmem:[%s1 + $0xc] sm:$0xf]
  %v38 = vld [vmem:[%s1 + $0x10] sm:$0xf]
  %v39 = vld [vmem:[%s1 + $0x14] sm:$0xf]
  %v40 = vld [vmem:[%s1 + $0x18] sm:$0xf]
  %v41 = vld [vmem:[%s1 + $0x1c] sm:$0xf]
  %v42 = vld [vmem:[%s1 + $0x20] sm:$0xf]
  %v43 = vld [vmem:[%s1 + $0x24] sm:$0xf]
  %v44 = vld [vmem:[%s1 + $0x28] sm:$0xf]
  %v45 = vld [vmem:[%s1 + $0x2c] sm:$0xf]
  %v46 = vld [vmem:[%s1 + $0x30] sm:$0xf]
  %v47 = vld [vmem:[%s1 + $0x34] sm:$0xf]
  %v48 = vld [vmem:[%s1 + $0x38] sm:$0xf]
  %v49 = vld [vmem:[%s1 + $0x3c] sm:$0xf]
  %v54 = vunpack.c.l.b16 %v30
  %v55 = vunpack.c.l.b16 %v31
  %v56 = vunpack.c.l.b16 %v32
  %v57 = vunpack.c.l.b16 %v33
  %v58 = vpack.c.b16 %v55, %v54
  %v59 = vpack.c.b16 %v57, %v56
  %v78 = vunpack.c.l.b16 %v34
  %v79 = vunpack.c.l.b16 %v35
  %v80 = vunpack.c.l.b16 %v36
  %v81 = vunpack.c.l.b16 %v37
  %v82 = vunpack.c.l.b16 %v38
  %v83 = vunpack.c.l.b16 %v39
  %v84 = vunpack.c.l.b16 %v40
  %v85 = vunpack.c.l.b16 %v41
  %v86 = vunpack.c.l.b16 %v42
  %v87 = vunpack.c.l.b16 %v43
  %v88 = vunpack.c.l.b16 %v44
  %v89 = vunpack.c.l.b16 %v45
  %v90 = vunpack.c.l.b16 %v46
  %v91 = vunpack.c.l.b16 %v47
  %v92 = vunpack.c.l.b16 %v48
  %v93 = vunpack.c.l.b16 %v49
  %v94 = vpack.c.b16 %v79, %v78
  %v95 = vpack.c.b16 %v81, %v80
  %v96 = vpack.c.b16 %v83, %v82
  %v97 = vpack.c.b16 %v85, %v84
  %v98 = vpack.c.b16 %v87, %v86
  %v99 = vpack.c.b16 %v89, %v88
  %v100 = vpack.c.b16 %v91, %v90
  %v101 = vpack.c.b16 %v93, %v92
  %110 = vmatprep.subr.bf16.mxu0 0
  %111 = vmatpush1.bf16.msra.mxu0 %v101
  %112 = vmatprep.subr.bf16.mxu0 0
  %113 = vmatpush1.bf16.msra.mxu0 %v100
  %114 = vmatprep.subr.bf16.mxu0 0
  %115 = vmatpush1.bf16.msra.mxu0 %v99
  %116 = vmatprep.subr.bf16.mxu0 0
  %117 = vmatpush1.bf16.msra.mxu0 %v98
  %118 = vmatprep.subr.bf16.mxu0 0
  %119 = vmatpush1.bf16.msra.mxu0 %v97
  %120 = vmatprep.subr.bf16.mxu0 0
  %121 = vmatpush1.bf16.msra.mxu0 %v96
  %122 = vmatprep.subr.bf16.mxu0 0
  %123 = vmatpush1.bf16.msra.mxu0 %v95
  %124 = vmatprep.subr.bf16.mxu0 0
  %125 = vmatpush1.bf16.msra.mxu0 %v94
  %126 = vmatprep.subr.bf16.mxu0 0
  %127 = vmatpush2.bf16.msra.mxu0 0
  %128 = vmatprep.subr.bf16.mxu0 0
  %129 = vmatpush2.bf16.msra.mxu0 0
  %130 = vmatprep.subr.bf16.mxu0 0
  %131 = vmatpush2.bf16.msra.mxu0 0
  %132 = vmatprep.subr.bf16.mxu0 0
  %133 = vmatpush2.bf16.msra.mxu0 0
  %134 = vmatprep.subr.bf16.mxu0 0
  %135 = vmatpush2.bf16.msra.mxu0 0
  %136 = vmatprep.subr.bf16.mxu0 0
  %137 = vmatpush2.bf16.msra.mxu0 0
  %138 = vmatprep.subr.bf16.mxu0 0
  %139 = vmatpush2.bf16.msra.mxu0 0
  %140 = vmatprep.subr.bf16.mxu0 0
  %141 = vmatpush2.bf16.msra.mxu0 0
  %142 = vmatprep.mubr.bf16.mxu0 0
  %143 = vmatmul.mubr.bf16.gmra.mxu0 %v58
  %v144 = vpop.f32.mrf.mxu0
  %v145 = vadd.f32 0.0, %v144
  %v146 = vpop.f32.mrf.mxu0
  %v147 = vpop.f32.mrf.mxu0
  %v148 = vadd.f32 0.0, %v147
  %v149 = vpop.f32.mrf.mxu0
  %150 = vmatprep.mubr.bf16.mxu0 0
  %151 = vmatmul.mubr.bf16.gmra.mxu0 %v59
  %v152 = vpop.f32.mrf.mxu0
  %v153 = vadd.f32 0.0, %v152
  %v154 = vpop.f32.mrf.mxu0
  %v155 = vpop.f32.mrf.mxu0
  %v156 = vadd.f32 0.0, %v155
  %v157 = vpop.f32.mrf.mxu0
  %158 = vdwg.mxu0
  %v159 = vadd.f32 %v26, %v145
  %v160 = vadd.f32 %v27, %v148
  %v161 = vadd.f32 %v28, %v153
  %v162 = vadd.f32 %v29, %v156
  %163 = vst [vmem:[#allocation2] sm:$0xff] %v159
  %164 = vst [vmem:[#allocation2 + $0x8] sm:$0xff] %v160
  %165 = vst [vmem:[#allocation2 + $0x10] sm:$0xff] %v161
  %166 = vst [vmem:[#allocation2 + $0x18] sm:$0xff] %v162
  // Predicated region
  $region22: #{leafnet_forward.26} parent=0 // pred_check
    %p167 = pneg %p18
  $region23: #{leafnet_forward.26} parent=0 // pred_check_branch
    %169 = sbr.rel (%p167) target = $region25
  $region24: #{leafnet_forward.26} parent=0 // pred_region
    %v170 = vld [vmem:[#allocation2] sm:$0xff]
    %v171 = vld [vmem:[#allocation2 + $0x8] sm:$0xff]
    %v172 = vld [vmem:[#allocation2 + $0x10] sm:$0xff]
    %v173 = vld [vmem:[#allocation2 + $0x18] sm:$0xff]
    %v174 = vld [vmem:[%s2] sm:$0x1]
    %v176 = vlaneseq
    %v177 = vshrl.u32 %v176, 7
    %v178 = vsub.s32 0, %v177
    %v179 = vrot.slane %v174, %v178
    %v181 = vmul.f32 %v170, %v179
    %v182 = vmul.f32 %v171, %v179
    %v183 = vmul.f32 %v172, %v179
    %v184 = vmul.f32 %v173, %v179
    %v185 = vld [vmem:[%s3] sm:$0x1]
    %v187 = vlaneseq
    %v188 = vshrl.u32 %v187, 7
    %v189 = vsub.s32 0, %v188
    %v190 = vrot.slane %v185, %v189
    %v192 = vadd.f32 %v181, %v190
    %v193 = vadd.f32 %v182, %v190
    %v194 = vadd.f32 %v183, %v190
    %v195 = vadd.f32 %v184, %v190
    %v196 = vpack.c.bf16 %v193, %v192
    %v197 = vpack.c.bf16 %v195, %v194
    %v200 = vunpack.c.l.b16 %v196
    %v201 = vunpack.c.h.b16 %v196
    %v202 = vunpack.c.l.b16 %v197
    %v203 = vunpack.c.h.b16 %v197
    %v204 = vpack.c.b16 %v200, %v200
    %v205 = vpack.c.b16 %v201, %v201
    %v206 = vpack.c.b16 %v202, %v202
    %v207 = vpack.c.b16 %v203, %v203
    %212 = vst [vmem:[%s4] sm:$0xf] %v204
    %213 = vst [vmem:[%s4 + $0x4] sm:$0xf] %v205
    %214 = vst [vmem:[%s4 + $0x8] sm:$0xf] %v206
    %215 = vst [vmem:[%s4 + $0xc] sm:$0xf] %v207
  $region25: #{leafnet_forward.26} parent=0 // pred_fallthru
    _
  // Predicated region
  $region26: #{leafnet_forward.26} parent=0 // pred_check
    _
  $region27: #{leafnet_forward.26} parent=0 // pred_check_branch
    %217 = sbr.rel (0) target = $region29
  $region28: #{leafnet_forward.26} parent=0 // pred_region
    _
  $region29: #{leafnet_forward.26} parent=0 // pred_fallthru
    _
  // Predicated region
  $region30: #{leafnet_forward.26} parent=0 // pred_check
    _
  $region31: #{leafnet_forward.26} parent=0 // pred_check_branch
    %219 = sbr.rel (0) target = $region33
  $region32: #{leafnet_forward.26} parent=0 // pred_region
    _
  $region33: #{leafnet_forward.26} parent=0 // pred_fallthru
    _

// kernel: leafnet_forward.27
$region0: #{leafnet_forward.27}
  #allocation0 [shape = 'u32[]', space=smem, size = 0x4, offset = 0x4, fixed_abs, tag = 'smem constant byte address 0x4 - core index']
  #allocation1 [shape = 'u32[144,128]{1,0:T(1,128)}', space=vmem, size = 0x12000, scoped, tag = 'internal scratch']
  %s0 = inlined_call_operand.vmem [shape: bf16[2,16,128], index: 0, kind: input, shape index: {}]
  %s1 = inlined_call_operand.vmem [shape: f32[2,128], index: 1, kind: output, shape index: {}]
  %s2 = sld [smem:[#allocation0]]
  $region22: #{leafnet_forward.27} parent=0
    _
  %s4 = ssub.s32 1, %s2
  %s5 = scalar_select 0, %s4, %s2
  // Predicated region
  $region2: #{leafnet_forward.27} parent=0 // pred_check
    _
  $region3: #{leafnet_forward.27} parent=0 // pred_check_branch
    %7 = sbr.rel (0) target = $region5
  $region4: #{leafnet_forward.27} parent=0 // pred_region
    _
  $region5: #{leafnet_forward.27} parent=0 // pred_fallthru
    _
  %p8 = scmp.eq.s32.totalorder 0, 0
  // Predicated region
  $region6: #{leafnet_forward.27} parent=0 // pred_check
    %p9 = pneg %p8
  $region7: #{leafnet_forward.27} parent=0 // pred_check_branch
    %11 = sbr.rel (%p9) target = $region9
  $region8: #{leafnet_forward.27} parent=0 // pred_region
    %12 = vst [vmem:[%s1] sm:$0x3] 0.0
  $region9: #{leafnet_forward.27} parent=0 // pred_fallthru
    _
  %v13 = vld [vmem:[%s1] sm:$0x3]
  %v14 = vld [vmem:[%s0] sm:$0xf]
  %v15 = vld [vmem:[%s0 + $0x4] sm:$0xf]
  %v16 = vld [vmem:[%s0 + $0x8] sm:$0xf]
  %v17 = vld [vmem:[%s0 + $0xc] sm:$0xf]
  %v18 = vunpack.c.l.bf16 %v14
  %v19 = vunpack.c.l.bf16 %v15
  %v20 = vunpack.c.l.bf16 %v16
  %v21 = vunpack.c.l.bf16 %v17
  %v22 = vadd.f32 %v18, %v19
  %v23 = vrot.slane %v22, 4
  %v24 = vadd.f32 %v22, %v23
  %v25 = vrot.slane %v24, 2
  %v26 = vadd.f32 %v24, %v25
  %v27 = vrot.slane %v26, 1
  %v28 = vadd.f32 %v26, %v27
  %v29 = vadd.f32 %v20, %v21
  %v30 = vrot.slane %v29, 4
  %v31 = vadd.f32 %v29, %v30
  %v32 = vrot.slane %v31, 2
  %v33 = vadd.f32 %v31, %v32
  %v34 = vrot.slane %v33, 1
  %v35 = vadd.f32 %v33, %v34
  %vm38 = vcmask 1041409
  %v39 = vsel %vm38, %v35, %v28
  %v41 = vadd.f32 %v13, %v39
  %42 = vst [vmem:[%s1] sm:$0x3] %v41
  // Predicated region
  $region10: #{leafnet_forward.27} parent=0 // pred_check
    %p43 = pneg %p8
  $region11: #{leafnet_forward.27} parent=0 // pred_check_branch
    %45 = sbr.rel (%p43) target = $region13
  $region12: #{leafnet_forward.27} parent=0 // pred_region
    %v46 = vld [vmem:[%s1] sm:$0x3]
    %v47 = vmul.f32 %v46, 0.0625
    %48 = vst [vmem:[%s1] sm:$0x3] %v47
  $region13: #{leafnet_forward.27} parent=0 // pred_fallthru
    _
  // Predicated region
  $region14: #{leafnet_forward.27} parent=0 // pred_check
    _
  $region15: #{leafnet_forward.27} parent=0 // pred_check_branch
    %50 = sbr.rel (0) target = $region17
  $region16: #{leafnet_forward.27} parent=0 // pred_region
    _
  $region17: #{leafnet_forward.27} parent=0 // pred_fallthru
    _
  // Predicated region
  $region18: #{leafnet_forward.27} parent=0 // pred_check
    _
  $region19: #{leafnet_forward.27} parent=0 // pred_check_branch
    %52 = sbr.rel (0) target = $region21
  $region20: #{leafnet_forward.27} parent=0 // pred_region
    _
  $region21: #{leafnet_forward.27} parent=0 // pred_fallthru
    _

// kernel: leafnet_forward.29
$region0: #{leafnet_forward.29}
  #allocation0 [shape = 'u32[]', space=smem, size = 0x4, offset = 0x4, fixed_abs, tag = 'smem constant byte address 0x4 - core index']
  #allocation1 [shape = 'u32[144,128]{1,0:T(1,128)}', space=vmem, size = 0x12000, scoped, tag = 'internal scratch']
  %s0 = inlined_call_operand.vmem [shape: bf16[2,16,128], index: 0, kind: input, shape index: {}]
  %s1 = inlined_call_operand.vmem [shape: bf16[128,128], index: 1, kind: input, shape index: {}]
  %s2 = inlined_call_operand.vmem [shape: f32[1,128], index: 2, kind: input, shape index: {}]
  %s3 = inlined_call_operand.vmem [shape: f32[1,128], index: 3, kind: input, shape index: {}]
  %s4 = inlined_call_operand.vmem [shape: bf16[2,16,128], index: 4, kind: input, shape index: {}]
  %s5 = inlined_call_operand.vmem [shape: f32[2,1,128], index: 5, kind: input, shape index: {}]
  %s6 = inlined_call_operand.vmem [shape: bf16[2,16,128], index: 6, kind: output, shape index: {}]
  %s7 = sld [smem:[#allocation0]]
  $region57: #{leafnet_forward.29} parent=0
    _
  %s9 = ssub.s32 1, %s7
  %s10 = scalar_select 0, %s9, %s7
  loop: start=0, step=1, limit=4
  $region2: #{leafnet_forward.29} parent=0 // loop_pre_header
    _
  $region3: #{leafnet_forward.29} parent=0 // loop_header
    %s12 = sphi 0, %s16
    %p13 = scmp.ge.s32.totalorder %s12, 4
    %s22 = sphi 0, %s24
    %s25 = sphi 0, %s22
    %s26 = sphi 0, %s25
    %s42 = sphi 0, %s26
    %s46 = sphi 0, %s46
    %s48 = sphi 0, %s46
    %s49 = sphi 0, %s48
    %s63 = sphi 0, %s49
    %s67 = sphi 0, %s67
    %s69 = sphi 0, %s67
    %s70 = sphi 0, %s69
    %s84 = sphi 0, %s70
    %s88 = sphi 0, %s88
    %s90 = sphi 0, %s88
    %s91 = sphi 0, %s90
    %s105 = sphi 0, %s91
    %s111 = sphi 0, %s113
    %s114 = sphi 0, %s111
    %s115 = sphi 0, %s114
    %s131 = sphi 0, %s115
    %s137 = sphi 0, %s139
    %s140 = sphi 0, %s137
    %s141 = sphi 0, %s140
    %s157 = sphi 0, %s141
    %s163 = sphi 0, %s165
    %s166 = sphi 0, %s163
    %s167 = sphi 0, %s166
    %s183 = sphi 0, %s167
  $region4: #{leafnet_forward.29} parent=0 // loop_header_branch
    %15 = sbr.rel (%p13) target = $region8
  $region5: #{leafnet_forward.29} parent=0 // loop_body
    %s17 = ssub.s32 %s12, 1
    %s18 = ssub.s32 %s12, 2
    %s19 = sadd.s32 %s12, 1
    %s20 = ssub.s32 %s12, %s19
    %p21 = scmp.eq.s32.totalorder %s20, 0
    %s23 = sadd.s32 %s22, 1
    %s24 = scalar_select %p21, %s22, %s23
    %p27 = pneg %p21
    %p28 = scmp.eq.s32.totalorder %s12, 1
    %p29 = por %p27, %p28
    %p30 = scmp.ne.s32.totalorder %s22, %s25
    %p31 = scmp.eq.s32.totalorder %s12, 0
    %p32 = por %p30, %p31
    %p33 = scmp.ne.s32.totalorder %s22, %s25
    %p34 = scmp.eq.s32.totalorder %s17, 1
    %p35 = por %p33, %p34
    %p36 = scmp.ne.s32.totalorder %s25, %s26
    %p37 = scmp.eq.s32.totalorder %s17, 0
    %p38 = por %p36, %p37
    %p39 = scmp.ne.s32.totalorder %s25, %s26
    %p40 = scmp.eq.s32.totalorder %s18, 1
    %p41 = por %p39, %p40
    %p43 = scmp.ne.s32.totalorder %s26, %s42
    %p44 = scmp.eq.s32.totalorder %s18, 0
    %p45 = por %p43, %p44
    %s47 = sadd.s32 %s46, 1
    %p50 = scmp.eq.s32.totalorder %s12, 1
    %p51 = scmp.ne.s32.totalorder %s46, %s48
    %p52 = scmp.eq.s32.totalorder %s12, 0
    %p53 = por %p51, %p52
    %p54 = scmp.ne.s32.totalorder %s46, %s48
    %p55 = scmp.eq.s32.totalorder %s17, 1
    %p56 = por %p54, %p55
    %p57 = scmp.ne.s32.totalorder %s48, %s49
    %p58 = scmp.eq.s32.totalorder %s17, 0
    %p59 = por %p57, %p58
    %p60 = scmp.ne.s32.totalorder %s48, %s49
    %p61 = scmp.eq.s32.totalorder %s18, 1
    %p62 = por %p60, %p61
    %p64 = scmp.ne.s32.totalorder %s49, %s63
    %p65 = scmp.eq.s32.totalorder %s18, 0
    %p66 = por %p64, %p65
    %s68 = sadd.s32 %s67, 1
    %p71 = scmp.eq.s32.totalorder %s12, 1
    %p72 = scmp.ne.s32.totalorder %s67, %s69
    %p73 = scmp.eq.s32.totalorder %s12, 0
    %p74 = por %p72, %p73
    %p75 = scmp.ne.s32.totalorder %s67, %s69
    %p76 = scmp.eq.s32.totalorder %s17, 1
    %p77 = por %p75, %p76
    %p78 = scmp.ne.s32.totalorder %s69, %s70
    %p79 = scmp.eq.s32.totalorder %s17, 0
    %p80 = por %p78, %p79
    %p81 = scmp.ne.s32.totalorder %s69, %s70
    %p82 = scmp.eq.s32.totalorder %s18, 1
    %p83 = por %p81, %p82
    %p85 = scmp.ne.s32.totalorder %s70, %s84
    %p86 = scmp.eq.s32.totalorder %s18, 0
    %p87 = por %p85, %p86
    %s89 = sadd.s32 %s88, 1
    %p92 = scmp.eq.s32.totalorder %s12, 1
    %p93 = scmp.ne.s32.totalorder %s88, %s90
    %p94 = scmp.eq.s32.totalorder %s12, 0
    %p95 = por %p93, %p94
    %p96 = scmp.ne.s32.totalorder %s88, %s90
    %p97 = scmp.eq.s32.totalorder %s17, 1
    %p98 = por %p96, %p97
    %p99 = scmp.ne.s32.totalorder %s90, %s91
    %p100 = scmp.eq.s32.totalorder %s17, 0
    %p101 = por %p99, %p100
    %p102 = scmp.ne.s32.totalorder %s90, %s91
    %p103 = scmp.eq.s32.totalorder %s18, 1
    %p104 = por %p102, %p103
    %p106 = scmp.ne.s32.totalorder %s91, %s105
    %p107 = scmp.eq.s32.totalorder %s18, 0
    %p108 = por %p106, %p107
    %s109 = ssub.s32 %s12, %s19
    %p110 = scmp.eq.s32.totalorder %s109, 0
    %s112 = sadd.s32 %s111, 1
    %s113 = scalar_select %p110, %s111, %s112
    %p116 = pneg %p110
    %p117 = scmp.eq.s32.totalorder %s12, 1
    %p118 = por %p116, %p117
    %p119 = scmp.ne.s32.totalorder %s111, %s114
    %p120 = scmp.eq.s32.totalorder %s12, 0
    %p121 = por %p119, %p120
    %p122 = scmp.ne.s32.totalorder %s111, %s114
    %p123 = scmp.eq.s32.totalorder %s17, 1
    %p124 = por %p122, %p123
    %p125 = scmp.ne.s32.totalorder %s114, %s115
    %p126 = scmp.eq.s32.totalorder %s17, 0
    %p127 = por %p125, %p126
    %p128 = scmp.ne.s32.totalorder %s114, %s115
    %p129 = scmp.eq.s32.totalorder %s18, 1
    %p130 = por %p128, %p129
    %p132 = scmp.ne.s32.totalorder %s115, %s131
    %p133 = scmp.eq.s32.totalorder %s18, 0
    %p134 = por %p132, %p133
    %s135 = ssub.s32 %s12, %s19
    %p136 = scmp.eq.s32.totalorder %s135, 0
    %s138 = sadd.s32 %s137, 1
    %s139 = scalar_select %p136, %s137, %s138
    %p142 = pneg %p136
    %p143 = scmp.eq.s32.totalorder %s12, 1
    %p144 = por %p142, %p143
    %p145 = scmp.ne.s32.totalorder %s137, %s140
    %p146 = scmp.eq.s32.totalorder %s12, 0
    %p147 = por %p145, %p146
    %p148 = scmp.ne.s32.totalorder %s137, %s140
    %p149 = scmp.eq.s32.totalorder %s17, 1
    %p150 = por %p148, %p149
    %p151 = scmp.ne.s32.totalorder %s140, %s141
    %p152 = scmp.eq.s32.totalorder %s17, 0
    %p153 = por %p151, %p152
    %p154 = scmp.ne.s32.totalorder %s140, %s141
    %p155 = scmp.eq.s32.totalorder %s18, 1
    %p156 = por %p154, %p155
    %p158 = scmp.ne.s32.totalorder %s141, %s157
    %p159 = scmp.eq.s32.totalorder %s18, 0
    %p160 = por %p158, %p159
    %s161 = ssub.s32 %s12, %s19
    %p162 = scmp.eq.s32.totalorder %s161, 0
    %s164 = sadd.s32 %s163, 1
    %s165 = scalar_select %p162, %s163, %s164
    %p168 = pneg %p162
    %p169 = scmp.eq.s32.totalorder %s12, 1
    %p170 = por %p168, %p169
    %p171 = scmp.ne.s32.totalorder %s163, %s166
    %p172 = scmp.eq.s32.totalorder %s12, 0
    %p173 = por %p171, %p172
    %p174 = scmp.ne.s32.totalorder %s163, %s166
    %p175 = scmp.eq.s32.totalorder %s17, 1
    %p176 = por %p174, %p175
    %p177 = scmp.ne.s32.totalorder %s166, %s167
    %p178 = scmp.eq.s32.totalorder %s17, 0
    %p179 = por %p177, %p178
    %p180 = scmp.ne.s32.totalorder %s166, %s167
    %p181 = scmp.eq.s32.totalorder %s18, 1
    %p182 = por %p180, %p181
    %p184 = scmp.ne.s32.totalorder %s167, %s183
    %p185 = scmp.eq.s32.totalorder %s18, 0
    %p186 = por %p184, %p185
    %p187 = scmp.le.s32.totalorder 1, %s12
    %p188 = scmp.lt.s32.totalorder %s12, 3
    %p189 = pnand %p187, %p188
    %p190 = pneg %p189
    // Predicated region
    $region9: #{leafnet_forward.29} parent=5 // pred_check
      _
    $region10: #{leafnet_forward.29} parent=5 // pred_check_branch
      %192 = sbr.rel (%p189) target = $region12
    $region11: #{leafnet_forward.29} parent=5 // pred_region
      %s193 = ssub.s32 %s12, 1
      // Predicated region
      $region13: #{leafnet_forward.29} parent=11 // pred_check
        %p194 = pneg %p59
      $region14: #{leafnet_forward.29} parent=11 // pred_check_branch
        %196 = sbr.rel (%p194) target = $region16
      $region15: #{leafnet_forward.29} parent=11 // pred_region
        _
      $region16: #{leafnet_forward.29} parent=11 // pred_fallthru
        _
      // Predicated region
      $region17: #{leafnet_forward.29} parent=11 // pred_check
        %p197 = pneg %p80
      $region18: #{leafnet_forward.29} parent=11 // pred_check_branch
        %199 = sbr.rel (%p197) target = $region20
      $region19: #{leafnet_forward.29} parent=11 // pred_region
        _
      $region20: #{leafnet_forward.29} parent=11 // pred_fallthru
        _
      // Predicated region
      $region21: #{leafnet_forward.29} parent=11 // pred_check
        %p200 = pneg %p101
      $region22: #{leafnet_forward.29} parent=11 // pred_check_branch
        %202 = sbr.rel (%p200) target = $region24
      $region23: #{leafnet_forward.29} parent=11 // pred_region
        _
      $region24: #{leafnet_forward.29} parent=11 // pred_fallthru
        _
    $region12: #{leafnet_forward.29} parent=5 // pred_fallthru
      _
    %p203 = scmp.lt.s32.totalorder %s12, 2
    // Predicated region
    $region25: #{leafnet_forward.29} parent=5 // pred_check
      %p204 = pneg %p203
    $region26: #{leafnet_forward.29} parent=5 // pred_check_branch
      %206 = sbr.rel (%p204) target = $region28
    $region27: #{leafnet_forward.29} parent=5 // pred_region
      // Predicated region
      $region29: #{leafnet_forward.29} parent=27 // pred_check
        %p207 = pneg %p32
      $region30: #{leafnet_forward.29} parent=27 // pred_check_branch
        %209 = sbr.rel (%p207) target = $region32
      $region31: #{leafnet_forward.29} parent=27 // pred_region
        %p210 = scmp.lt.s32.totalorder %s12, 1
        %s211 = scalar_select %p210, %s12, 1
        %s212 = smul.addr %s211, 2
        %s213 = smul.addr %s212, 4
        %s214 = scalar_lea.vmem %s0, %s213
      $region32: #{leafnet_forward.29} parent=27 // pred_fallthru
        _
      // Predicated region
      $region33: #{leafnet_forward.29} parent=27 // pred_check
        %p215 = pneg %p121
      $region34: #{leafnet_forward.29} parent=27 // pred_check_branch
        %217 = sbr.rel (%p215) target = $region36
      $region35: #{leafnet_forward.29} parent=27 // pred_region
        %p218 = scmp.lt.s32.totalorder %s12, 1
        %s219 = scalar_select %p218, %s12, 1
        %s220 = smul.addr %s219, 2
        %s221 = smul.addr %s220, 4
        %s222 = scalar_lea.vmem %s4, %s221
      $region36: #{leafnet_forward.29} parent=27 // pred_fallthru
        _
      // Predicated region
      $region37: #{leafnet_forward.29} parent=27 // pred_check
        %p223 = pneg %p147
      $region38: #{leafnet_forward.29} parent=27 // pred_check_branch
        %225 = sbr.rel (%p223) target = $region40
      $region39: #{leafnet_forward.29} parent=27 // pred_region
        %p226 = scmp.lt.s32.totalorder %s12, 1
        %s227 = scalar_select %p226, %s12, 1
        %s228 = scalar_lea.vmem %s5, %s227
      $region40: #{leafnet_forward.29} parent=27 // pred_fallthru
        _
    $region28: #{leafnet_forward.29} parent=5 // pred_fallthru
      _
    %p229 = scmp.le.s32.totalorder 1, %s12
    %p230 = scmp.lt.s32.totalorder %s12, 3
    %p231 = pnand %p229, %p230
    %p232 = pneg %p231
    // Predicated region
    $region41: #{leafnet_forward.29} parent=5 // pred_check
      _
    $region42: #{leafnet_forward.29} parent=5 // pred_check_branch
      %234 = sbr.rel (%p231) target = $region44
    $region43: #{leafnet_forward.29} parent=5 // pred_region
      %s235 = ssub.s32 %s12, 1
      %p236 = scmp.lt.s32.totalorder %s17, 1
      %s237 = scalar_select %p236, %s17, 1
      %s238 = smul.addr %s237, 2
      %s239 = smul.addr %s238, 4
      %s240 = scalar_lea.vmem %s0, %s239
      %p241 = pneg %p38
      %p242 = pneg %p35
      %p243 = pneg %p59
      %p244 = pneg %p56
      %p245 = pneg %p80
      %p246 = pneg %p77
      %p247 = pneg %p101
      %p248 = pneg %p98
      %p249 = scmp.lt.s32.totalorder %s17, 1
      %s250 = scalar_select %p249, %s17, 1
      %s251 = smul.addr %s250, 2
      %s252 = smul.addr %s251, 4
      %s253 = scalar_lea.vmem %s4, %s252
      %p254 = pneg %p127
      %p255 = pneg %p124
      %p256 = scmp.lt.s32.totalorder %s17, 1
      %s257 = scalar_select %p256, %s17, 1
      %s258 = scalar_lea.vmem %s5, %s257
      %p259 = pneg %p153
      %p260 = pneg %p150
      %p261 = pneg %p179
      %p262 = pneg %p176
      %p263 = scmp.lt.s32.totalorder %s17, 1
      %s264 = scalar_select %p263, %s17, 1
      %s265 = smul.addr %s264, 2
      %s266 = smul.addr %s265, 4
      %s267 = scalar_lea.vmem %s6, %s266
      %p268 = scmp.lt.s32.totalorder %s17, 1
      %s269 = scalar_select %p268, %s17, 1
      %s270 = smul.addr %s269, 2
      %s271 = smul.addr %s270, 4
      %s272 = scalar_lea.vmem %s0, %s271
      %p273 = scmp.lt.s32.totalorder %s17, 1
      %s274 = scalar_select %p273, %s17, 1
      %s275 = smul.addr %s274, 2
      %s276 = smul.addr %s275, 4
      %s277 = scalar_lea.vmem %s4, %s276
      %p278 = scmp.lt.s32.totalorder %s17, 1
      %s279 = scalar_select %p278, %s17, 1
      %s280 = scalar_lea.vmem %s5, %s279
      %p281 = scmp.lt.s32.totalorder %s17, 1
      %s282 = scalar_select %p281, %s17, 1
      %s283 = smul.addr %s282, 2
      %s284 = smul.addr %s283, 4
      %s285 = scalar_lea.vmem %s6, %s284
      %v287 = vld [vmem:[%s272] sm:$0xf]
      %v288 = vld [vmem:[%s272 + $0x4] sm:$0xf]
      %v289 = vld [vmem:[%s1] sm:$0xf]
      %v290 = vld [vmem:[%s1 + $0x4] sm:$0xf]
      %v291 = vld [vmem:[%s1 + $0x8] sm:$0xf]
      %v292 = vld [vmem:[%s1 + $0xc] sm:$0xf]
      %v293 = vld [vmem:[%s1 + $0x10] sm:$0xf]
      %v294 = vld [vmem:[%s1 + $0x14] sm:$0xf]
      %v295 = vld [vmem:[%s1 + $0x18] sm:$0xf]
      %v296 = vld [vmem:[%s1 + $0x1c] sm:$0xf]
      %v297 = vld [vmem:[%s1 + $0x20] sm:$0xf]
      %v298 = vld [vmem:[%s1 + $0x24] sm:$0xf]
      %v299 = vld [vmem:[%s1 + $0x28] sm:$0xf]
      %v300 = vld [vmem:[%s1 + $0x2c] sm:$0xf]
      %v301 = vld [vmem:[%s1 + $0x30] sm:$0xf]
      %v302 = vld [vmem:[%s1 + $0x34] sm:$0xf]
      %v303 = vld [vmem:[%s1 + $0x38] sm:$0xf]
      %v304 = vld [vmem:[%s1 + $0x3c] sm:$0xf]
      %v307 = vunpack.c.l.b16 %v287
      %v308 = vunpack.c.l.b16 %v288
      %v309 = vpack.c.b16 %v308, %v307
      %v327 = vunpack.c.l.b16 %v289
      %v328 = vunpack.c.l.b16 %v290
      %v329 = vunpack.c.l.b16 %v291
      %v330 = vunpack.c.l.b16 %v292
      %v331 = vunpack.c.l.b16 %v293
      %v332 = vunpack.c.l.b16 %v294
      %v333 = vunpack.c.l.b16 %v295
      %v334 = vunpack.c.l.b16 %v296
      %v335 = vunpack.c.l.b16 %v297
      %v336 = vunpack.c.l.b16 %v298
      %v337 = vunpack.c.l.b16 %v299
      %v338 = vunpack.c.l.b16 %v300
      %v339 = vunpack.c.l.b16 %v301
      %v340 = vunpack.c.l.b16 %v302
      %v341 = vunpack.c.l.b16 %v303
      %v342 = vunpack.c.l.b16 %v304
      %v343 = vpack.c.b16 %v328, %v327
      %v344 = vpack.c.b16 %v330, %v329
      %v345 = vpack.c.b16 %v332, %v331
      %v346 = vpack.c.b16 %v334, %v333
      %v347 = vpack.c.b16 %v336, %v335
      %v348 = vpack.c.b16 %v338, %v337
      %v349 = vpack.c.b16 %v340, %v339
      %v350 = vpack.c.b16 %v342, %v341
      %359 = vmatprep.subr.bf16.mxu0 0
      %360 = vmatpush1.bf16.msra.mxu0 %v350
      %361 = vmatprep.subr.bf16.mxu0 0
      %362 = vmatpush1.bf16.msra.mxu0 %v349
      %363 = vmatprep.subr.bf16.mxu0 0
      %364 = vmatpush1.bf16.msra.mxu0 %v348
      %365 = vmatprep.subr.bf16.mxu0 0
      %366 = vmatpush1.bf16.msra.mxu0 %v347
      %367 = vmatprep.subr.bf16.mxu0 0
      %368 = vmatpush1.bf16.msra.mxu0 %v346
      %369 = vmatprep.subr.bf16.mxu0 0
      %370 = vmatpush1.bf16.msra.mxu0 %v345
      %371 = vmatprep.subr.bf16.mxu0 0
      %372 = vmatpush1.bf16.msra.mxu0 %v344
      %373 = vmatprep.subr.bf16.mxu0 0
      %374 = vmatpush1.bf16.msra.mxu0 %v343
      %375 = vmatprep.subr.bf16.mxu0 0
      %376 = vmatpush2.bf16.msra.mxu0 0
      %377 = vmatprep.subr.bf16.mxu0 0
      %378 = vmatpush2.bf16.msra.mxu0 0
      %379 = vmatprep.subr.bf16.mxu0 0
      %380 = vmatpush2.bf16.msra.mxu0 0
      %381 = vmatprep.subr.bf16.mxu0 0
      %382 = vmatpush2.bf16.msra.mxu0 0
      %383 = vmatprep.subr.bf16.mxu0 0
      %384 = vmatpush2.bf16.msra.mxu0 0
      %385 = vmatprep.subr.bf16.mxu0 0
      %386 = vmatpush2.bf16.msra.mxu0 0
      %387 = vmatprep.subr.bf16.mxu0 0
      %388 = vmatpush2.bf16.msra.mxu0 0
      %389 = vmatprep.subr.bf16.mxu0 0
      %390 = vmatpush2.bf16.msra.mxu0 0
      %391 = vmatprep.mubr.bf16.mxu0 0
      %392 = vmatmul.mubr.bf16.gmra.mxu0 %v309
      %v393 = vpop.f32.mrf.mxu0
      %v394 = vadd.f32 0.0, %v393
      %v395 = vpop.f32.mrf.mxu0
      %v396 = vpop.f32.mrf.mxu0
      %v397 = vadd.f32 0.0, %v396
      %v398 = vpop.f32.mrf.mxu0
      %399 = vdwg.mxu0
      %v400 = vld [vmem:[%s2] sm:$0x1]
      %v402 = vlaneseq
      %v403 = vshrl.u32 %v402, 7
      %v404 = vsub.s32 0, %v403
      %v405 = vrot.slane %v400, %v404
      %v407 = vmul.f32 %v394, %v405
      %v408 = vmul.f32 %v397, %v405
      %v409 = vld [vmem:[%s3] sm:$0x1]
      %v411 = vlaneseq
      %v412 = vshrl.u32 %v411, 7
      %v413 = vsub.s32 0, %v412
      %v414 = vrot.slane %v409, %v413
      %v416 = vadd.f32 %v407, %v414
      %v417 = vadd.f32 %v408, %v414
      %v418 = vld [vmem:[%s277] sm:$0xf]
      %v419 = vld [vmem:[%s277 + $0x4] sm:$0xf]
      %v420 = vunpack.c.l.bf16 %v418
      %v421 = vunpack.c.l.bf16 %v419
      %v422 = vld [vmem:[%s280] sm:$0x1]
      %v424 = vlaneseq
      %v425 = vshrl.u32 %v424, 7
      %v426 = vsub.s32 0, %v425
      %v427 = vrot.slane %v422, %v426
      %v429 = vmul.f32 %v420, %v427
      %v430 = vmul.f32 %v421, %v427
      %v431 = vadd.f32 %v429, %v416
      %v432 = vadd.f32 %v430, %v417
      %v433 = vmax.f32 %v431, 0.0
      %v434 = vmax.f32 %v432, 0.0
      %v435 = vpack.c.bf16 %v434, %v433
      %v437 = vunpack.c.l.b16 %v435
      %v438 = vunpack.c.h.b16 %v435
      %v439 = vpack.c.b16 %v437, %v437
      %v440 = vpack.c.b16 %v438, %v438
      %443 = vst [vmem:[%s285] sm:$0xf] %v439
      %444 = vst [vmem:[%s285 + $0x4] sm:$0xf] %v440
      %p445 = scmp.lt.s32.totalorder %s17, 1
      %s446 = scalar_select %p445, %s17, 1
      %s447 = smul.addr %s446, 2
      %s448 = smul.addr %s447, 4
      %s449 = scalar_lea.vmem %s6, %s448
      // Predicated region
      $region45: #{leafnet_forward.29} parent=43 // pred_check
        %p450 = pneg %p176
      $region46: #{leafnet_forward.29} parent=43 // pred_check_branch
        %452 = sbr.rel (%p450) target = $region48
      $region47: #{leafnet_forward.29} parent=43 // pred_region
        _
      $region48: #{leafnet_forward.29} parent=43 // pred_fallthru
        _
    $region44: #{leafnet_forward.29} parent=5 // pred_fallthru
      _
    %p453 = scmp.le.s32.totalorder 2, %s12
    // Predicated region
    $region49: #{leafnet_forward.29} parent=5 // pred_check
      %p454 = pneg %p453
    $region50: #{leafnet_forward.29} parent=5 // pred_check_branch
      %456 = sbr.rel (%p454) target = $region52
    $region51: #{leafnet_forward.29} parent=5 // pred_region
      %s457 = ssub.s32 %s12, 2
      // Predicated region
      $region53: #{leafnet_forward.29} parent=51 // pred_check
        %p458 = pneg %p182
      $region54: #{leafnet_forward.29} parent=51 // pred_check_branch
        %460 = sbr.rel (%p458) target = $region56
      $region55: #{leafnet_forward.29} parent=51 // pred_region
        %p461 = scmp.lt.s32.totalorder %s18, 1
        %s462 = scalar_select %p461, %s18, 1
        %s463 = smul.addr %s462, 2
        %s464 = smul.addr %s463, 4
        %s465 = scalar_lea.vmem %s6, %s464
      $region56: #{leafnet_forward.29} parent=51 // pred_fallthru
        _
    $region52: #{leafnet_forward.29} parent=5 // pred_fallthru
      _
  $region6: #{leafnet_forward.29} parent=0 // loop_footer
    %s16 = sadd.s32 1, %s12
  $region7: #{leafnet_forward.29} parent=0 // loop_footer_branch
    %11 = sbr.rel target = $region3
  $region8: #{leafnet_forward.29} parent=0 // loop_exit
    _

// kernel: leafnet_forward.31
$region0: #{leafnet_forward.31}
  #allocation0 [shape = 'u32[]', space=smem, size = 0x4, offset = 0x4, fixed_abs, tag = 'smem constant byte address 0x4 - core index']
  #allocation1 [shape = 'u32[144,128]{1,0:T(1,128)}', space=vmem, size = 0x12000, scoped, tag = 'internal scratch']
  #allocation2 [shape = 'f32[8,256]{1,0:T(8,128)}', space=vmem, size = 0x2000, scoped, tag = 'scratch operand']
  %s0 = inlined_call_operand.vmem [shape: bf16[8,128], index: 0, kind: input, shape index: {}]
  %s1 = inlined_call_operand.vmem [shape: bf16[128,256], index: 1, kind: input, shape index: {}]
  %s2 = inlined_call_operand.vmem [shape: f32[1,256], index: 2, kind: input, shape index: {}]
  %s3 = inlined_call_operand.vmem [shape: f32[1,256], index: 3, kind: input, shape index: {}]
  %s4 = inlined_call_operand.vmem [shape: f32[8,256], index: 4, kind: output, shape index: {}]
  %s5 = sld [smem:[#allocation0]]
  $region34: #{leafnet_forward.31} parent=0
    _
  %s7 = ssub.s32 1, %s5
  %s8 = scalar_select 0, %s7, %s5
  // Predicated region
  $region2: #{leafnet_forward.31} parent=0 // pred_check
    _
  $region3: #{leafnet_forward.31} parent=0 // pred_check_branch
    %10 = sbr.rel (0) target = $region5
  $region4: #{leafnet_forward.31} parent=0 // pred_region
    _
  $region5: #{leafnet_forward.31} parent=0 // pred_fallthru
    _
  // Predicated region
  $region6: #{leafnet_forward.31} parent=0 // pred_check
    _
  $region7: #{leafnet_forward.31} parent=0 // pred_check_branch
    %12 = sbr.rel (0) target = $region9
  $region8: #{leafnet_forward.31} parent=0 // pred_region
    _
  $region9: #{leafnet_forward.31} parent=0 // pred_fallthru
    _
  // Predicated region
  $region10: #{leafnet_forward.31} parent=0 // pred_check
    _
  $region11: #{leafnet_forward.31} parent=0 // pred_check_branch
    %14 = sbr.rel (0) target = $region13
  $region12: #{leafnet_forward.31} parent=0 // pred_region
    _
  $region13: #{leafnet_forward.31} parent=0 // pred_fallthru
    _
  // Predicated region
  $region14: #{leafnet_forward.31} parent=0 // pred_check
    _
  $region15: #{leafnet_forward.31} parent=0 // pred_check_branch
    %16 = sbr.rel (0) target = $region17
  $region16: #{leafnet_forward.31} parent=0 // pred_region
    _
  $region17: #{leafnet_forward.31} parent=0 // pred_fallthru
    _
  %p18 = scmp.eq.s32.totalorder 0, 0
  // Predicated region
  $region18: #{leafnet_forward.31} parent=0 // pred_check
    %p19 = pneg %p18
  $region19: #{leafnet_forward.31} parent=0 // pred_check_branch
    %21 = sbr.rel (%p19) target = $region21
  $region20: #{leafnet_forward.31} parent=0 // pred_region
    %22 = vst [vmem:[#allocation2] sm:$0xff] 0.0
    %23 = vst [vmem:[#allocation2 + $0x8] sm:$0xff] 0.0
  $region21: #{leafnet_forward.31} parent=0 // pred_fallthru
    _
  %v24 = vld [vmem:[#allocation2] sm:$0xff]
  %v25 = vld [vmem:[#allocation2 + $0x8] sm:$0xff]
  %v26 = vld [vmem:[%s0] sm:$0xf]
  %v27 = vld [vmem:[%s1] sm:$0xff]
  %v28 = vld [vmem:[%s1 + $0x8] sm:$0xff]
  %v29 = vld [vmem:[%s1 + $0x10] sm:$0xff]
  %v30 = vld [vmem:[%s1 + $0x18] sm:$0xff]
  %v31 = vld [vmem:[%s1 + $0x20] sm:$0xff]
  %v32 = vld [vmem:[%s1 + $0x28] sm:$0xff]
  %v33 = vld [vmem:[%s1 + $0x30] sm:$0xff]
  %v34 = vld [vmem:[%s1 + $0x38] sm:$0xff]
  %v35 = vld [vmem:[%s1 + $0x40] sm:$0xff]
  %v36 = vld [vmem:[%s1 + $0x48] sm:$0xff]
  %v37 = vld [vmem:[%s1 + $0x50] sm:$0xff]
  %v38 = vld [vmem:[%s1 + $0x58] sm:$0xff]
  %v39 = vld [vmem:[%s1 + $0x60] sm:$0xff]
  %v40 = vld [vmem:[%s1 + $0x68] sm:$0xff]
  %v41 = vld [vmem:[%s1 + $0x70] sm:$0xff]
  %v42 = vld [vmem:[%s1 + $0x78] sm:$0xff]
  %v59 = vunpack.c.l.b16 %v27
  %v60 = vunpack.c.h.b16 %v27
  %v61 = vunpack.c.l.b16 %v28
  %v62 = vunpack.c.h.b16 %v28
  %v63 = vunpack.c.l.b16 %v29
  %v64 = vunpack.c.h.b16 %v29
  %v65 = vunpack.c.l.b16 %v30
  %v66 = vunpack.c.h.b16 %v30
  %v67 = vunpack.c.l.b16 %v31
  %v68 = vunpack.c.h.b16 %v31
  %v69 = vunpack.c.l.b16 %v32
  %v70 = vunpack.c.h.b16 %v32
  %v71 = vunpack.c.l.b16 %v33
  %v72 = vunpack.c.h.b16 %v33
  %v73 = vunpack.c.l.b16 %v34
  %v74 = vunpack.c.h.b16 %v34
  %v75 = vunpack.c.l.b16 %v35
  %v76 = vunpack.c.h.b16 %v35
  %v77 = vunpack.c.l.b16 %v36
  %v78 = vunpack.c.h.b16 %v36
  %v79 = vunpack.c.l.b16 %v37
  %v80 = vunpack.c.h.b16 %v37
  %v81 = vunpack.c.l.b16 %v38
  %v82 = vunpack.c.h.b16 %v38
  %v83 = vunpack.c.l.b16 %v39
  %v84 = vunpack.c.h.b16 %v39
  %v85 = vunpack.c.l.b16 %v40
  %v86 = vunpack.c.h.b16 %v40
  %v87 = vunpack.c.l.b16 %v41
  %v88 = vunpack.c.h.b16 %v41
  %v89 = vunpack.c.l.b16 %v42
  %v90 = vunpack.c.h.b16 %v42
  %v91 = vpack.c.b16 %v61, %v59
  %v92 = vpack.c.b16 %v62, %v60
  %v93 = vpack.c.b16 %v65, %v63
  %v94 = vpack.c.b16 %v66, %v64
  %v95 = vpack.c.b16 %v69, %v67
  %v96 = vpack.c.b16 %v70, %v68
  %v97 = vpack.c.b16 %v73, %v71
  %v98 = vpack.c.b16 %v74, %v72
  %v99 = vpack.c.b16 %v77, %v75
  %v100 = vpack.c.b16 %v78, %v76
  %v101 = vpack.c.b16 %v81, %v79
  %v102 = vpack.c.b16 %v82, %v80
  %v103 = vpack.c.b16 %v85, %v83
  %v104 = vpack.c.b16 %v86, %v84
  %v105 = vpack.c.b16 %v89, %v87
  %v106 = vpack.c.b16 %v90, %v88
  %123 = vmatprep.subr.bf16.mxu0 %v106
  %124 = vmatpush1.bf16.msra.mxu0 %v105
  %125 = vmatprep.subr.bf16.mxu0 %v104
  %126 = vmatpush1.bf16.msra.mxu0 %v103
  %127 = vmatprep.subr.bf16.mxu0 %v102
  %128 = vmatpush1.bf16.msra.mxu0 %v101
  %129 = vmatprep.subr.bf16.mxu0 %v100
  %130 = vmatpush1.bf16.msra.mxu0 %v99
  %131 = vmatprep.subr.bf16.mxu0 %v98
  %132 = vmatpush1.bf16.msra.mxu0 %v97
  %133 = vmatprep.subr.bf16.mxu0 %v96
  %134 = vmatpush1.bf16.msra.mxu0 %v95
  %135 = vmatprep.subr.bf16.mxu0 %v94
  %136 = vmatpush1.bf16.msra.mxu0 %v93
  %137 = vmatprep.subr.bf16.mxu0 %v92
  %138 = vmatpush1.bf16.msra.mxu0 %v91
  %139 = vmatprep.subr.bf16.mxu0 0
  %140 = vmatpush2.bf16.msra.mxu0 0
  %141 = vmatprep.subr.bf16.mxu0 0
  %142 = vmatpush2.bf16.msra.mxu0 0
  %143 = vmatprep.subr.bf16.mxu0 0
  %144 = vmatpush2.bf16.msra.mxu0 0
  %145 = vmatprep.subr.bf16.mxu0 0
  %146 = vmatpush2.bf16.msra.mxu0 0
  %147 = vmatprep.subr.bf16.mxu0 0
  %148 = vmatpush2.bf16.msra.mxu0 0
  %149 = vmatprep.subr.bf16.mxu0 0
  %150 = vmatpush2.bf16.msra.mxu0 0
  %151 = vmatprep.subr.bf16.mxu0 0
  %152 = vmatpush2.bf16.msra.mxu0 0
  %153 = vmatprep.subr.bf16.mxu0 0
  %154 = vmatpush2.bf16.msra.mxu0 0
  %155 = vmatprep.mubr.bf16.mxu0 0
  %156 = vmatmul.mubr.bf16.gmra.mxu0 %v26
  %v157 = vpop.f32.mrf.mxu0
  %v158 = vadd.f32 0.0, %v157
  %v159 = vpop.f32.mrf.mxu0
  %v160 = vadd.f32 0.0, %v159
  %v161 = vpop.f32.mrf.mxu0
  %v162 = vpop.f32.mrf.mxu0
  %163 = vdwg.mxu0
  %v164 = vadd.f32 %v24, %v158
  %v165 = vadd.f32 %v25, %v160
  %166 = vst [vmem:[#allocation2] sm:$0xff] %v164
  %167 = vst [vmem:[#allocation2 + $0x8] sm:$0xff] %v165
  // Predicated region
  $region22: #{leafnet_forward.31} parent=0 // pred_check
    %p168 = pneg %p18
  $region23: #{leafnet_forward.31} parent=0 // pred_check_branch
    %170 = sbr.rel (%p168) target = $region25
  $region24: #{leafnet_forward.31} parent=0 // pred_region
    %v171 = vld [vmem:[#allocation2] sm:$0xff]
    %v172 = vld [vmem:[#allocation2 + $0x8] sm:$0xff]
    %v173 = vld [vmem:[%s2] sm:$0x3]
    %v175 = vlaneseq
    %v176 = vshrl.u32 %v175, 7
    %v177 = vsub.s32 0, %v176
    %v178 = vrot.slane %v173, %v177
    %v179 = vlaneseq
    %v180 = vshrl.u32 %v179, 7
    %v181 = vsub.s32 1, %v180
    %v182 = vrot.slane %v173, %v181
    %v185 = vmul.f32 %v171, %v178
    %v186 = vmul.f32 %v172, %v182
    %v187 = vld [vmem:[%s3] sm:$0x3]
    %v189 = vlaneseq
    %v190 = vshrl.u32 %v189, 7
    %v191 = vsub.s32 0, %v190
    %v192 = vrot.slane %v187, %v191
    %v193 = vlaneseq
    %v194 = vshrl.u32 %v193, 7
    %v195 = vsub.s32 1, %v194
    %v196 = vrot.slane %v187, %v195
    %v199 = vadd.f32 %v185, %v192
    %v200 = vadd.f32 %v186, %v196
    %201 = vst [vmem:[%s4] sm:$0xff] %v199
    %202 = vst [vmem:[%s4 + $0x8] sm:$0xff] %v200
  $region25: #{leafnet_forward.31} parent=0 // pred_fallthru
    _
  // Predicated region
  $region26: #{leafnet_forward.31} parent=0 // pred_check
    _
  $region27: #{leafnet_forward.31} parent=0 // pred_check_branch
    %204 = sbr.rel (0) target = $region29
  $region28: #{leafnet_forward.31} parent=0 // pred_region
    _
  $region29: #{leafnet_forward.31} parent=0 // pred_fallthru
    _
  // Predicated region
  $region30: #{leafnet_forward.31} parent=0 // pred_check
    _
  $region31: #{leafnet_forward.31} parent=0 // pred_check_branch
    %206 = sbr.rel (0) target = $region33
  $region32: #{leafnet_forward.31} parent=0 // pred_region
    _
  $region33: #{leafnet_forward.31} parent=0 // pred_fallthru
    _

// kernel: leafnet_forward.25
$region0: #{leafnet_forward.25}
  #allocation0 [shape = 'u32[]', space=smem, size = 0x4, offset = 0x4, fixed_abs, tag = 'smem constant byte address 0x4 - core index']
  #allocation1 [shape = 'u32[144,128]{1,0:T(1,128)}', space=vmem, size = 0x12000, scoped, tag = 'internal scratch']
  %s0 = inlined_call_operand.vmem [shape: bf16[2,20,16,128], index: 0, kind: input, shape index: {}]
  %s1 = inlined_call_operand.vmem [shape: bf16[9,128,128], index: 1, kind: input, shape index: {}]
  %s2 = inlined_call_operand.vmem [shape: f32[1,128], index: 2, kind: input, shape index: {}]
  %s3 = inlined_call_operand.vmem [shape: f32[1,128], index: 3, kind: input, shape index: {}]
  %s4 = inlined_call_operand.vmem [shape: bf16[2,4,4,128], index: 4, kind: output, shape index: {}]
  %s5 = sld [smem:[#allocation0]]
  $region49: #{leafnet_forward.25} parent=0
    _
  %s7 = ssub.s32 1, %s5
  %s8 = scalar_select 0, %s7, %s5
  loop: start=0, step=1, limit=4
  $region2: #{leafnet_forward.25} parent=0 // loop_pre_header
    _
  $region3: #{leafnet_forward.25} parent=0 // loop_header
    %s10 = sphi 0, %s14
    %p11 = scmp.ge.s32.totalorder %s10, 4
    %s20 = sphi 0, %s22
    %s23 = sphi 0, %s20
    %s24 = sphi 0, %s23
    %s40 = sphi 0, %s24
    %s44 = sphi 0, %s44
    %s46 = sphi 0, %s44
    %s47 = sphi 0, %s46
    %s61 = sphi 0, %s47
    %s65 = sphi 0, %s65
    %s67 = sphi 0, %s65
    %s68 = sphi 0, %s67
    %s82 = sphi 0, %s68
    %s86 = sphi 0, %s86
    %s88 = sphi 0, %s86
    %s89 = sphi 0, %s88
    %s103 = sphi 0, %s89
    %s109 = sphi 0, %s111
    %s112 = sphi 0, %s109
    %s113 = sphi 0, %s112
    %s129 = sphi 0, %s113
  $region4: #{leafnet_forward.25} parent=0 // loop_header_branch
    %13 = sbr.rel (%p11) target = $region8
  $region5: #{leafnet_forward.25} parent=0 // loop_body
    %s15 = ssub.s32 %s10, 1
    %s16 = ssub.s32 %s10, 2
    %s17 = sadd.s32 %s10, 1
    %s18 = ssub.s32 %s10, %s17
    %p19 = scmp.eq.s32.totalorder %s18, 0
    %s21 = sadd.s32 %s20, 1
    %s22 = scalar_select %p19, %s20, %s21
    %p25 = pneg %p19
    %p26 = scmp.eq.s32.totalorder %s10, 1
    %p27 = por %p25, %p26
    %p28 = scmp.ne.s32.totalorder %s20, %s23
    %p29 = scmp.eq.s32.totalorder %s10, 0
    %p30 = por %p28, %p29
    %p31 = scmp.ne.s32.totalorder %s20, %s23
    %p32 = scmp.eq.s32.totalorder %s15, 1
    %p33 = por %p31, %p32
    %p34 = scmp.ne.s32.totalorder %s23, %s24
    %p35 = scmp.eq.s32.totalorder %s15, 0
    %p36 = por %p34, %p35
    %p37 = scmp.ne.s32.totalorder %s23, %s24
    %p38 = scmp.eq.s32.totalorder %s16, 1
    %p39 = por %p37, %p38
    %p41 = scmp.ne.s32.totalorder %s24, %s40
    %p42 = scmp.eq.s32.totalorder %s16, 0
    %p43 = por %p41, %p42
    %s45 = sadd.s32 %s44, 1
    %p48 = scmp.eq.s32.totalorder %s10, 1
    %p49 = scmp.ne.s32.totalorder %s44, %s46
    %p50 = scmp.eq.s32.totalorder %s10, 0
    %p51 = por %p49, %p50
    %p52 = scmp.ne.s32.totalorder %s44, %s46
    %p53 = scmp.eq.s32.totalorder %s15, 1
    %p54 = por %p52, %p53
    %p55 = scmp.ne.s32.totalorder %s46, %s47
    %p56 = scmp.eq.s32.totalorder %s15, 0
    %p57 = por %p55, %p56
    %p58 = scmp.ne.s32.totalorder %s46, %s47
    %p59 = scmp.eq.s32.totalorder %s16, 1
    %p60 = por %p58, %p59
    %p62 = scmp.ne.s32.totalorder %s47, %s61
    %p63 = scmp.eq.s32.totalorder %s16, 0
    %p64 = por %p62, %p63
    %s66 = sadd.s32 %s65, 1
    %p69 = scmp.eq.s32.totalorder %s10, 1
    %p70 = scmp.ne.s32.totalorder %s65, %s67
    %p71 = scmp.eq.s32.totalorder %s10, 0
    %p72 = por %p70, %p71
    %p73 = scmp.ne.s32.totalorder %s65, %s67
    %p74 = scmp.eq.s32.totalorder %s15, 1
    %p75 = por %p73, %p74
    %p76 = scmp.ne.s32.totalorder %s67, %s68
    %p77 = scmp.eq.s32.totalorder %s15, 0
    %p78 = por %p76, %p77
    %p79 = scmp.ne.s32.totalorder %s67, %s68
    %p80 = scmp.eq.s32.totalorder %s16, 1
    %p81 = por %p79, %p80
    %p83 = scmp.ne.s32.totalorder %s68, %s82
    %p84 = scmp.eq.s32.totalorder %s16, 0
    %p85 = por %p83, %p84
    %s87 = sadd.s32 %s86, 1
    %p90 = scmp.eq.s32.totalorder %s10, 1
    %p91 = scmp.ne.s32.totalorder %s86, %s88
    %p92 = scmp.eq.s32.totalorder %s10, 0
    %p93 = por %p91, %p92
    %p94 = scmp.ne.s32.totalorder %s86, %s88
    %p95 = scmp.eq.s32.totalorder %s15, 1
    %p96 = por %p94, %p95
    %p97 = scmp.ne.s32.totalorder %s88, %s89
    %p98 = scmp.eq.s32.totalorder %s15, 0
    %p99 = por %p97, %p98
    %p100 = scmp.ne.s32.totalorder %s88, %s89
    %p101 = scmp.eq.s32.totalorder %s16, 1
    %p102 = por %p100, %p101
    %p104 = scmp.ne.s32.totalorder %s89, %s103
    %p105 = scmp.eq.s32.totalorder %s16, 0
    %p106 = por %p104, %p105
    %s107 = ssub.s32 %s10, %s17
    %p108 = scmp.eq.s32.totalorder %s107, 0
    %s110 = sadd.s32 %s109, 1
    %s111 = scalar_select %p108, %s109, %s110
    %p114 = pneg %p108
    %p115 = scmp.eq.s32.totalorder %s10, 1
    %p116 = por %p114, %p115
    %p117 = scmp.ne.s32.totalorder %s109, %s112
    %p118 = scmp.eq.s32.totalorder %s10, 0
    %p119 = por %p117, %p118
    %p120 = scmp.ne.s32.totalorder %s109, %s112
    %p121 = scmp.eq.s32.totalorder %s15, 1
    %p122 = por %p120, %p121
    %p123 = scmp.ne.s32.totalorder %s112, %s113
    %p124 = scmp.eq.s32.totalorder %s15, 0
    %p125 = por %p123, %p124
    %p126 = scmp.ne.s32.totalorder %s112, %s113
    %p127 = scmp.eq.s32.totalorder %s16, 1
    %p128 = por %p126, %p127
    %p130 = scmp.ne.s32.totalorder %s113, %s129
    %p131 = scmp.eq.s32.totalorder %s16, 0
    %p132 = por %p130, %p131
    %p133 = scmp.le.s32.totalorder 1, %s10
    %p134 = scmp.lt.s32.totalorder %s10, 3
    %p135 = pnand %p133, %p134
    %p136 = pneg %p135
    // Predicated region
    $region9: #{leafnet_forward.25} parent=5 // pred_check
      _
    $region10: #{leafnet_forward.25} parent=5 // pred_check_branch
      %138 = sbr.rel (%p135) target = $region12
    $region11: #{leafnet_forward.25} parent=5 // pred_region
      %s139 = ssub.s32 %s10, 1
      // Predicated region
      $region13: #{leafnet_forward.25} parent=11 // pred_check
        %p140 = pneg %p57
      $region14: #{leafnet_forward.25} parent=11 // pred_check_branch
        %142 = sbr.rel (%p140) target = $region16
      $region15: #{leafnet_forward.25} parent=11 // pred_region
        _
      $region16: #{leafnet_forward.25} parent=11 // pred_fallthru
        _
      // Predicated region
      $region17: #{leafnet_forward.25} parent=11 // pred_check
        %p143 = pneg %p78
      $region18: #{leafnet_forward.25} parent=11 // pred_check_branch
        %145 = sbr.rel (%p143) target = $region20
      $region19: #{leafnet_forward.25} parent=11 // pred_region
        _
      $region20: #{leafnet_forward.25} parent=11 // pred_fallthru
        _
      // Predicated region
      $region21: #{leafnet_forward.25} parent=11 // pred_check
        %p146 = pneg %p99
      $region22: #{leafnet_forward.25} parent=11 // pred_check_branch
        %148 = sbr.rel (%p146) target = $region24
      $region23: #{leafnet_forward.25} parent=11 // pred_region
        _
      $region24: #{leafnet_forward.25} parent=11 // pred_fallthru
        _
    $region12: #{leafnet_forward.25} parent=5 // pred_fallthru
      _
    %p149 = scmp.lt.s32.totalorder %s10, 2
    // Predicated region
    $region25: #{leafnet_forward.25} parent=5 // pred_check
      %p150 = pneg %p149
    $region26: #{leafnet_forward.25} parent=5 // pred_check_branch
      %152 = sbr.rel (%p150) target = $region28
    $region27: #{leafnet_forward.25} parent=5 // pred_region
      // Predicated region
      $region29: #{leafnet_forward.25} parent=27 // pred_check
        %p153 = pneg %p30
      $region30: #{leafnet_forward.25} parent=27 // pred_check_branch
        %155 = sbr.rel (%p153) target = $region32
      $region31: #{leafnet_forward.25} parent=27 // pred_region
        %p156 = scmp.lt.s32.totalorder %s10, 1
        %s157 = scalar_select %p156, %s10, 1
        %s158 = smul.addr %s157, 40
        %s159 = smul.addr %s158, 4
        %s160 = scalar_lea.vmem %s0, %s159
      $region32: #{leafnet_forward.25} parent=27 // pred_fallthru
        _
    $region28: #{leafnet_forward.25} parent=5 // pred_fallthru
      _
    %p161 = scmp.le.s32.totalorder 1, %s10
    %p162 = scmp.lt.s32.totalorder %s10, 3
    %p163 = pnand %p161, %p162
    %p164 = pneg %p163
    // Predicated region
    $region33: #{leafnet_forward.25} parent=5 // pred_check
      _
    $region34: #{leafnet_forward.25} parent=5 // pred_check_branch
      %166 = sbr.rel (%p163) target = $region36
    $region35: #{leafnet_forward.25} parent=5 // pred_region
      %s167 = ssub.s32 %s10, 1
      %p168 = scmp.lt.s32.totalorder %s15, 1
      %s169 = scalar_select %p168, %s15, 1
      %s170 = smul.addr %s169, 40
      %s171 = smul.addr %s170, 4
      %s172 = scalar_lea.vmem %s0, %s171
      %p173 = pneg %p36
      %p174 = pneg %p33
      %p175 = pneg %p57
      %p176 = pneg %p54
      %p177 = pneg %p78
      %p178 = pneg %p75
      %p179 = pneg %p99
      %p180 = pneg %p96
      %p181 = pneg %p125
      %p182 = pneg %p122
      %p183 = scmp.lt.s32.totalorder %s15, 1
      %s184 = scalar_select %p183, %s15, 1
      %s185 = smul.addr %s184, 4
      %s186 = smul.addr %s185, 2
      %s187 = scalar_lea.vmem %s4, %s186
      %p188 = scmp.lt.s32.totalorder %s15, 1
      %s189 = scalar_select %p188, %s15, 1
      %s190 = smul.addr %s189, 40
      %s191 = smul.addr %s190, 4
      %s192 = scalar_lea.vmem %s0, %s191
      %p193 = scmp.lt.s32.totalorder %s15, 1
      %s194 = scalar_select %p193, %s15, 1
      %s195 = smul.addr %s194, 4
      %s196 = smul.addr %s195, 2
      %s197 = scalar_lea.vmem %s4, %s196
      %v199 = vld [vmem:[%s192] sm:$0xf]
      %v200 = vld [vmem:[%s192 + $0x8] sm:$0xf]
      %v201 = vld [vmem:[%s192 + $0x10] sm:$0xf]
      %v202 = vld [vmem:[%s192 + $0x18] sm:$0xf]
      %v203 = vld [vmem:[%s1] sm:$0xf]
      %v204 = vld [vmem:[%s1 + $0x4] sm:$0xf]
      %v205 = vld [vmem:[%s1 + $0x8] sm:$0xf]
      %v206 = vld [vmem:[%s1 + $0xc] sm:$0xf]
      %v207 = vld [vmem:[%s1 + $0x10] sm:$0xf]
      %v208 = vld [vmem:[%s1 + $0x14] sm:$0xf]
      %v209 = vld [vmem:[%s1 + $0x18] sm:$0xf]
      %v210 = vld [vmem:[%s1 + $0x1c] sm:$0xf]
      %v211 = vld [vmem:[%s1 + $0x20] sm:$0xf]
      %v212 = vld [vmem:[%s1 + $0x24] sm:$0xf]
      %v213 = vld [vmem:[%s1 + $0x28] sm:$0xf]
      %v214 = vld [vmem:[%s1 + $0x2c] sm:$0xf]
      %v215 = vld [vmem:[%s1 + $0x30] sm:$0xf]
      %v216 = vld [vmem:[%s1 + $0x34] sm:$0xf]
      %v217 = vld [vmem:[%s1 + $0x38] sm:$0xf]
      %v218 = vld [vmem:[%s1 + $0x3c] sm:$0xf]
      %s219 = scalar_lea.vmem %s192, 40
      %v220 = vld [vmem:[%s219] sm:$0xf]
      %v221 = vld [vmem:[%s219 + $0x8] sm:$0xf]
      %v222 = vld [vmem:[%s219 + $0x10] sm:$0xf]
      %v223 = vld [vmem:[%s219 + $0x18] sm:$0xf]
      %s224 = scalar_lea.vmem %s1, 64
      %v225 = vld [vmem:[%s224] sm:$0xf]
      %v226 = vld [vmem:[%s224 + $0x4] sm:$0xf]
      %v227 = vld [vmem:[%s224 + $0x8] sm:$0xf]
      %v228 = vld [vmem:[%s224 + $0xc] sm:$0xf]
      %v229 = vld [vmem:[%s224 + $0x10] sm:$0xf]
      %v230 = vld [vmem:[%s224 + $0x14] sm:$0xf]
      %v231 = vld [vmem:[%s224 + $0x18] sm:$0xf]
      %v232 = vld [vmem:[%s224 + $0x1c] sm:$0xf]
      %v233 = vld [vmem:[%s224 + $0x20] sm:$0xf]
      %v234 = vld [vmem:[%s224 + $0x24] sm:$0xf]
      %v235 = vld [vmem:[%s224 + $0x28] sm:$0xf]
      %v236 = vld [vmem:[%s224 + $0x2c] sm:$0xf]
      %v237 = vld [vmem:[%s224 + $0x30] sm:$0xf]
      %v238 = vld [vmem:[%s224 + $0x34] sm:$0xf]
      %v239 = vld [vmem:[%s224 + $0x38] sm:$0xf]
      %v240 = vld [vmem:[%s224 + $0x3c] sm:$0xf]
      %v245 = vunpack.c.l.b16 %v220
      %v246 = vunpack.c.l.b16 %v221
      %v247 = vunpack.c.l.b16 %v222
      %v248 = vunpack.c.l.b16 %v223
      %v249 = vpack.c.b16 %v246, %v245
      %v250 = vpack.c.b16 %v248, %v247
      %v269 = vunpack.c.l.b16 %v225
      %v270 = vunpack.c.l.b16 %v226
      %v271 = vunpack.c.l.b16 %v227
      %v272 = vunpack.c.l.b16 %v228
      %v273 = vunpack.c.l.b16 %v229
      %v274 = vunpack.c.l.b16 %v230
      %v275 = vunpack.c.l.b16 %v231
      %v276 = vunpack.c.l.b16 %v232
      %v277 = vunpack.c.l.b16 %v233
      %v278 = vunpack.c.l.b16 %v234
      %v279 = vunpack.c.l.b16 %v235
      %v280 = vunpack.c.l.b16 %v236
      %v281 = vunpack.c.l.b16 %v237
      %v282 = vunpack.c.l.b16 %v238
      %v283 = vunpack.c.l.b16 %v239
      %v284 = vunpack.c.l.b16 %v240
      %v285 = vpack.c.b16 %v270, %v269
      %v286 = vpack.c.b16 %v272, %v271
      %v287 = vpack.c.b16 %v274, %v273
      %v288 = vpack.c.b16 %v276, %v275
      %v289 = vpack.c.b16 %v278, %v277
      %v290 = vpack.c.b16 %v280, %v279
      %v291 = vpack.c.b16 %v282, %v281
      %v292 = vpack.c.b16 %v284, %v283
      %301 = vmatprep.subr.bf16.mxu0 0
      %302 = vmatpush1.bf16.msra.mxu0 %v292
      %303 = vmatprep.subr.bf16.mxu0 0
      %304 = vmatpush1.bf16.msra.mxu0 %v291
      %305 = vmatprep.subr.bf16.mxu0 0
      %306 = vmatpush1.bf16.msra.mxu0 %v290
      %307 = vmatprep.subr.bf16.mxu0 0
      %308 = vmatpush1.bf16.msra.mxu0 %v289
      %309 = vmatprep.subr.bf16.mxu0 0
      %310 = vmatpush1.bf16.msra.mxu0 %v288
      %311 = vmatprep.subr.bf16.mxu0 0
      %312 = vmatpush1.bf16.msra.mxu0 %v287
      %313 = vmatprep.subr.bf16.mxu0 0
      %314 = vmatpush1.bf16.msra.mxu0 %v286
      %315 = vmatprep.subr.bf16.mxu0 0
      %316 = vmatpush1.bf16.msra.mxu0 %v285
      %317 = vmatprep.subr.bf16.mxu0 0
      %318 = vmatpush2.bf16.msra.mxu0 0
      %319 = vmatprep.subr.bf16.mxu0 0
      %320 = vmatpush2.bf16.msra.mxu0 0
      %321 = vmatprep.subr.bf16.mxu0 0
      %322 = vmatpush2.bf16.msra.mxu0 0
      %323 = vmatprep.subr.bf16.mxu0 0
      %324 = vmatpush2.bf16.msra.mxu0 0
      %325 = vmatprep.subr.bf16.mxu0 0
      %326 = vmatpush2.bf16.msra.mxu0 0
      %327 = vmatprep.subr.bf16.mxu0 0
      %328 = vmatpush2.bf16.msra.mxu0 0
      %329 = vmatprep.subr.bf16.mxu0 0
      %330 = vmatpush2.bf16.msra.mxu0 0
      %331 = vmatprep.subr.bf16.mxu0 0
      %332 = vmatpush2.bf16.msra.mxu0 0
      %333 = vmatprep.mubr.bf16.mxu0 0
      %334 = vmatmul.mubr.bf16.gmra.mxu0 %v249
      %v335 = vpop.f32.mrf.mxu0
      %v336 = vadd.f32 0.0, %v335
      %v337 = vpop.f32.mrf.mxu0
      %v338 = vpop.f32.mrf.mxu0
      %v339 = vadd.f32 0.0, %v338
      %v340 = vpop.f32.mrf.mxu0
      %341 = vmatprep.mubr.bf16.mxu0 0
      %342 = vmatmul.mubr.bf16.gmra.mxu0 %v250
      %v343 = vpop.f32.mrf.mxu0
      %v344 = vadd.f32 0.0, %v343
      %v345 = vpop.f32.mrf.mxu0
      %v346 = vpop.f32.mrf.mxu0
      %v347 = vadd.f32 0.0, %v346
      %v348 = vpop.f32.mrf.mxu0
      %349 = vdwg.mxu0
      %v354 = vunpack.c.l.b16 %v199
      %v355 = vunpack.c.l.b16 %v200
      %v356 = vunpack.c.l.b16 %v201
      %v357 = vunpack.c.l.b16 %v202
      %v358 = vpack.c.b16 %v355, %v354
      %v359 = vpack.c.b16 %v357, %v356
      %v378 = vunpack.c.l.b16 %v203
      %v379 = vunpack.c.l.b16 %v204
      %v380 = vunpack.c.l.b16 %v205
      %v381 = vunpack.c.l.b16 %v206
      %v382 = vunpack.c.l.b16 %v207
      %v383 = vunpack.c.l.b16 %v208
      %v384 = vunpack.c.l.b16 %v209
      %v385 = vunpack.c.l.b16 %v210
      %v386 = vunpack.c.l.b16 %v211
      %v387 = vunpack.c.l.b16 %v212
      %v388 = vunpack.c.l.b16 %v213
      %v389 = vunpack.c.l.b16 %v214
      %v390 = vunpack.c.l.b16 %v215
      %v391 = vunpack.c.l.b16 %v216
      %v392 = vunpack.c.l.b16 %v217
      %v393 = vunpack.c.l.b16 %v218
      %v394 = vpack.c.b16 %v379, %v378
      %v395 = vpack.c.b16 %v381, %v380
      %v396 = vpack.c.b16 %v383, %v382
      %v397 = vpack.c.b16 %v385, %v384
      %v398 = vpack.c.b16 %v387, %v386
      %v399 = vpack.c.b16 %v389, %v388
      %v400 = vpack.c.b16 %v391, %v390
      %v401 = vpack.c.b16 %v393, %v392
      %410 = vmatprep.subr.bf16.mxu0 0
      %411 = vmatpush1.bf16.msra.mxu0 %v401
      %412 = vmatprep.subr.bf16.mxu0 0
      %413 = vmatpush1.bf16.msra.mxu0 %v400
      %414 = vmatprep.subr.bf16.mxu0 0
      %415 = vmatpush1.bf16.msra.mxu0 %v399
      %416 = vmatprep.subr.bf16.mxu0 0
      %417 = vmatpush1.bf16.msra.mxu0 %v398
      %418 = vmatprep.subr.bf16.mxu0 0
      %419 = vmatpush1.bf16.msra.mxu0 %v397
      %420 = vmatprep.subr.bf16.mxu0 0
      %421 = vmatpush1.bf16.msra.mxu0 %v396
      %422 = vmatprep.subr.bf16.mxu0 0
      %423 = vmatpush1.bf16.msra.mxu0 %v395
      %424 = vmatprep.subr.bf16.mxu0 0
      %425 = vmatpush1.bf16.msra.mxu0 %v394
      %426 = vmatprep.subr.bf16.mxu0 0
      %427 = vmatpush2.bf16.msra.mxu0 0
      %428 = vmatprep.subr.bf16.mxu0 0
      %429 = vmatpush2.bf16.msra.mxu0 0
      %430 = vmatprep.subr.bf16.mxu0 0
      %431 = vmatpush2.bf16.msra.mxu0 0
      %432 = vmatprep.subr.bf16.mxu0 0
      %433 = vmatpush2.bf16.msra.mxu0 0
      %434 = vmatprep.subr.bf16.mxu0 0
      %435 = vmatpush2.bf16.msra.mxu0 0
      %436 = vmatprep.subr.bf16.mxu0 0
      %437 = vmatpush2.bf16.msra.mxu0 0
      %438 = vmatprep.subr.bf16.mxu0 0
      %439 = vmatpush2.bf16.msra.mxu0 0
      %440 = vmatprep.subr.bf16.mxu0 0
      %441 = vmatpush2.bf16.msra.mxu0 0
      %442 = vmatprep.mubr.bf16.mxu0 0
      %443 = vmatmul.mubr.bf16.gmra.mxu0 %v358
      %v444 = vpop.f32.mrf.mxu0
      %v445 = vadd.f32 %v336, %v444
      %v446 = vpop.f32.mrf.mxu0
      %v447 = vpop.f32.mrf.mxu0
      %v448 = vadd.f32 %v339, %v447
      %v449 = vpop.f32.mrf.mxu0
      %450 = vmatprep.mubr.bf16.mxu0 0
      %451 = vmatmul.mubr.bf16.gmra.mxu0 %v359
      %v452 = vpop.f32.mrf.mxu0
      %v453 = vadd.f32 %v344, %v452
      %v454 = vpop.f32.mrf.mxu0
      %v455 = vpop.f32.mrf.mxu0
      %v456 = vadd.f32 %v347, %v455
      %v457 = vpop.f32.mrf.mxu0
      %458 = vdwg.mxu0
      %v459 = vld [vmem:[%s192] sm:$0xf]
      %v460 = vld [vmem:[%s192 + $0x4] sm:$0x1]
      %v461 = vld [vmem:[%s192 + $0x8] sm:$0xf]
      %v462 = vld [vmem:[%s192 + $0xc] sm:$0x1]
      %v463 = vld [vmem:[%s192 + $0x10] sm:$0xf]
      %v464 = vld [vmem:[%s192 + $0x14] sm:$0x1]
      %v465 = vld [vmem:[%s192 + $0x18] sm:$0xf]
      %v466 = vld [vmem:[%s192 + $0x1c] sm:$0x1]
      %vm467 = vsmask.f32 3328
      %vm468 = vsmask.f32 7440
      %vm469 = vmor %vm467, %vm468
      %v471 = vshrl.u32 %v459, 16
      %v473 = vrot.slane %v471, 4
      %v474 = vshll.u32 %v459, 16
      %v476 = vrot.slane %v474, 5
      %v477 = vor.u32 %v473, %v476
      %v478 = vrot.slane %v477, 4
      %v480 = vshll.u32 %v460, 16
      %v482 = vrot.slane %v480, 5
      %v483 = vsel %vm469, %v478, %v482
      %v485 = vshrl.u32 %v461, 16
      %v487 = vrot.slane %v485, 4
      %v488 = vshll.u32 %v461, 16
      %v490 = vrot.slane %v488, 5
      %v491 = vor.u32 %v487, %v490
      %v492 = vrot.slane %v491, 4
      %v494 = vshll.u32 %v462, 16
      %v496 = vrot.slane %v494, 5
      %v497 = vsel %vm469, %v492, %v496
      %v499 = vshrl.u32 %v463, 16
      %v501 = vrot.slane %v499, 4
      %v502 = vshll.u32 %v463, 16
      %v504 = vrot.slane %v502, 5
      %v505 = vor.u32 %v501, %v504
      %v506 = vrot.slane %v505, 4
      %v508 = vshll.u32 %v464, 16
      %v510 = vrot.slane %v508, 5
      %v511 = vsel %vm469, %v506, %v510
      %v513 = vshrl.u32 %v465, 16
      %v515 = vrot.slane %v513, 4
      %v516 = vshll.u32 %v465, 16
      %v518 = vrot.slane %v516, 5
      %v519 = vor.u32 %v515, %v518
      %v520 = vrot.slane %v519, 4
      %v522 = vshll.u32 %v466, 16
      %v524 = vrot.slane %v522, 5
      %v525 = vsel %vm469, %v520, %v524
      %s526 = scalar_lea.vmem %s1, 128
      %v527 = vld [vmem:[%s526] sm:$0xf]
      %v528 = vld [vmem:[%s526 + $0x4] sm:$0xf]
      %v529 = vld [vmem:[%s526 + $0x8] sm:$0xf]
      %v530 = vld [vmem:[%s526 + $0xc] sm:$0xf]
      %v531 = vld [vmem:[%s526 + $0x10] sm:$0xf]
      %v532 = vld [vmem:[%s526 + $0x14] sm:$0xf]
      %v533 = vld [vmem:[%s526 + $0x18] sm:$0xf]
      %v534 = vld [vmem:[%s526 + $0x1c] sm:$0xf]
      %v535 = vld [vmem:[%s526 + $0x20] sm:$0xf]
      %v536 = vld [vmem:[%s526 + $0x24] sm:$0xf]
      %v537 = vld [vmem:[%s526 + $0x28] sm:$0xf]
      %v538 = vld [vmem:[%s526 + $0x2c] sm:$0xf]
      %v539 = vld [vmem:[%s526 + $0x30] sm:$0xf]
      %v540 = vld [vmem:[%s526 + $0x34] sm:$0xf]
      %v541 = vld [vmem:[%s526 + $0x38] sm:$0xf]
      %v542 = vld [vmem:[%s526 + $0x3c] sm:$0xf]
      %v543 = vunpack.c.l.b16 %v483
      %v544 = vunpack.c.l.b16 %v497
      %v545 = vunpack.c.l.b16 %v511
      %v546 = vunpack.c.l.b16 %v525
      %v547 = vpack.c.b16 %v544, %v543
      %v548 = vpack.c.b16 %v546, %v545
      %v567 = vunpack.c.l.b16 %v527
      %v568 = vunpack.c.l.b16 %v528
      %v569 = vunpack.c.l.b16 %v529
      %v570 = vunpack.c.l.b16 %v530
      %v571 = vunpack.c.l.b16 %v531
      %v572 = vunpack.c.l.b16 %v532
      %v573 = vunpack.c.l.b16 %v533
      %v574 = vunpack.c.l.b16 %v534
      %v575 = vunpack.c.l.b16 %v535
      %v576 = vunpack.c.l.b16 %v536
      %v577 = vunpack.c.l.b16 %v537
      %v578 = vunpack.c.l.b16 %v538
      %v579 = vunpack.c.l.b16 %v539
      %v580 = vunpack.c.l.b16 %v540
      %v581 = vunpack.c.l.b16 %v541
      %v582 = vunpack.c.l.b16 %v542
      %v583 = vpack.c.b16 %v568, %v567
      %v584 = vpack.c.b16 %v570, %v569
      %v585 = vpack.c.b16 %v572, %v571
      %v586 = vpack.c.b16 %v574, %v573
      %v587 = vpack.c.b16 %v576, %v575
      %v588 = vpack.c.b16 %v578, %v577
      %v589 = vpack.c.b16 %v580, %v579
      %v590 = vpack.c.b16 %v582, %v581
      %599 = vmatprep.subr.bf16.mxu0 0
      %600 = vmatpush1.bf16.msra.mxu0 %v590
      %601 = vmatprep.subr.bf16.mxu0 0
      %602 = vmatpush1.bf16.msra.mxu0 %v589
      %603 = vmatprep.subr.bf16.mxu0 0
      %604 = vmatpush1.bf16.msra.mxu0 %v588
      %605 = vmatprep.subr.bf16.mxu0 0
      %606 = vmatpush1.bf16.msra.mxu0 %v587
      %607 = vmatprep.subr.bf16.mxu0 0
      %608 = vmatpush1.bf16.msra.mxu0 %v586
      %609 = vmatprep.subr.bf16.mxu0 0
      %610 = vmatpush1.bf16.msra.mxu0 %v585
      %611 = vmatprep.subr.bf16.mxu0 0
      %612 = vmatpush1.bf16.msra.mxu0 %v584
      %613 = vmatprep.subr.bf16.mxu0 0
      %614 = vmatpush1.bf16.msra.mxu0 %v583
      %615 = vmatprep.subr.bf16.mxu0 0
      %616 = vmatpush2.bf16.msra.mxu0 0
      %617 = vmatprep.subr.bf16.mxu0 0
      %618 = vmatpush2.bf16.msra.mxu0 0
      %619 = vmatprep.subr.bf16.mxu0 0
      %620 = vmatpush2.bf16.msra.mxu0 0
      %621 = vmatprep.subr.bf16.mxu0 0
      %622 = vmatpush2.bf16.msra.mxu0 0
      %623 = vmatprep.subr.bf16.mxu0 0
      %624 = vmatpush2.bf16.msra.mxu0 0
      %625 = vmatprep.subr.bf16.mxu0 0
      %626 = vmatpush2.bf16.msra.mxu0 0
      %627 = vmatprep.subr.bf16.mxu0 0
      %628 = vmatpush2.bf16.msra.mxu0 0
      %629 = vmatprep.subr.bf16.mxu0 0
      %630 = vmatpush2.bf16.msra.mxu0 0
      %631 = vmatprep.mubr.bf16.mxu0 0
      %632 = vmatmul.mubr.bf16.gmra.mxu0 %v547
      %v633 = vpop.f32.mrf.mxu0
      %v634 = vadd.f32 0.0, %v633
      %v635 = vpop.f32.mrf.mxu0
      %v636 = vpop.f32.mrf.mxu0
      %v637 = vadd.f32 0.0, %v636
      %v638 = vpop.f32.mrf.mxu0
      %639 = vmatprep.mubr.bf16.mxu0 0
      %640 = vmatmul.mubr.bf16.gmra.mxu0 %v548
      %v641 = vpop.f32.mrf.mxu0
      %v642 = vadd.f32 0.0, %v641
      %v643 = vpop.f32.mrf.mxu0
      %v644 = vpop.f32.mrf.mxu0
      %v645 = vadd.f32 0.0, %v644
      %v646 = vpop.f32.mrf.mxu0
      %647 = vdwg.mxu0
      %v648 = vadd.f32 %v445, %v634
      %v649 = vadd.f32 %v448, %v637
      %v650 = vadd.f32 %v453, %v642
      %v651 = vadd.f32 %v456, %v645
      %s652 = scalar_lea.vmem %s192, 80
      %v653 = vld [vmem:[%s652] sm:$0xf]
      %v654 = vld [vmem:[%s652 + $0x8] sm:$0xf]
      %v655 = vld [vmem:[%s652 + $0x10] sm:$0xf]
      %v656 = vld [vmem:[%s652 + $0x18] sm:$0xf]
      %s657 = scalar_lea.vmem %s1, 192
      %v658 = vld [vmem:[%s657] sm:$0xf]
      %v659 = vld [vmem:[%s657 + $0x4] sm:$0xf]
      %v660 = vld [vmem:[%s657 + $0x8] sm:$0xf]
      %v661 = vld [vmem:[%s657 + $0xc] sm:$0xf]
      %v662 = vld [vmem:[%s657 + $0x10] sm:$0xf]
      %v663 = vld [vmem:[%s657 + $0x14] sm:$0xf]
      %v664 = vld [vmem:[%s657 + $0x18] sm:$0xf]
      %v665 = vld [vmem:[%s657 + $0x1c] sm:$0xf]
      %v666 = vld [vmem:[%s657 + $0x20] sm:$0xf]
      %v667 = vld [vmem:[%s657 + $0x24] sm:$0xf]
      %v668 = vld [vmem:[%s657 + $0x28] sm:$0xf]
      %v669 = vld [vmem:[%s657 + $0x2c] sm:$0xf]
      %v670 = vld [vmem:[%s657 + $0x30] sm:$0xf]
      %v671 = vld [vmem:[%s657 + $0x34] sm:$0xf]
      %v672 = vld [vmem:[%s657 + $0x38] sm:$0xf]
      %v673 = vld [vmem:[%s657 + $0x3c] sm:$0xf]
      %v678 = vunpack.c.l.b16 %v653
      %v679 = vunpack.c.l.b16 %v654
      %v680 = vunpack.c.l.b16 %v655
      %v681 = vunpack.c.l.b16 %v656
      %v682 = vpack.c.b16 %v679, %v678
      %v683 = vpack.c.b16 %v681, %v680
      %v702 = vunpack.c.l.b16 %v658
      %v703 = vunpack.c.l.b16 %v659
      %v704 = vunpack.c.l.b16 %v660
      %v705 = vunpack.c.l.b16 %v661
      %v706 = vunpack.c.l.b16 %v662
      %v707 = vunpack.c.l.b16 %v663
      %v708 = vunpack.c.l.b16 %v664
      %v709 = vunpack.c.l.b16 %v665
      %v710 = vunpack.c.l.b16 %v666
      %v711 = vunpack.c.l.b16 %v667
      %v712 = vunpack.c.l.b16 %v668
      %v713 = vunpack.c.l.b16 %v669
      %v714 = vunpack.c.l.b16 %v670
      %v715 = vunpack.c.l.b16 %v671
      %v716 = vunpack.c.l.b16 %v672
      %v717 = vunpack.c.l.b16 %v673
      %v718 = vpack.c.b16 %v703, %v702
      %v719 = vpack.c.b16 %v705, %v704
      %v720 = vpack.c.b16 %v707, %v706
      %v721 = vpack.c.b16 %v709, %v708
      %v722 = vpack.c.b16 %v711, %v710
      %v723 = vpack.c.b16 %v713, %v712
      %v724 = vpack.c.b16 %v715, %v714
      %v725 = vpack.c.b16 %v717, %v716
      %734 = vmatprep.subr.bf16.mxu0 0
      %735 = vmatpush1.bf16.msra.mxu0 %v725
      %736 = vmatprep.subr.bf16.mxu0 0
      %737 = vmatpush1.bf16.msra.mxu0 %v724
      %738 = vmatprep.subr.bf16.mxu0 0
      %739 = vmatpush1.bf16.msra.mxu0 %v723
      %740 = vmatprep.subr.bf16.mxu0 0
      %741 = vmatpush1.bf16.msra.mxu0 %v722
      %742 = vmatprep.subr.bf16.mxu0 0
      %743 = vmatpush1.bf16.msra.mxu0 %v721
      %744 = vmatprep.subr.bf16.mxu0 0
      %745 = vmatpush1.bf16.msra.mxu0 %v720
      %746 = vmatprep.subr.bf16.mxu0 0
      %747 = vmatpush1.bf16.msra.mxu0 %v719
      %748 = vmatprep.subr.bf16.mxu0 0
      %749 = vmatpush1.bf16.msra.mxu0 %v718
      %750 = vmatprep.subr.bf16.mxu0 0
      %751 = vmatpush2.bf16.msra.mxu0 0
      %752 = vmatprep.subr.bf16.mxu0 0
      %753 = vmatpush2.bf16.msra.mxu0 0
      %754 = vmatprep.subr.bf16.mxu0 0
      %755 = vmatpush2.bf16.msra.mxu0 0
      %756 = vmatprep.subr.bf16.mxu0 0
      %757 = vmatpush2.bf16.msra.mxu0 0
      %758 = vmatprep.subr.bf16.mxu0 0
      %759 = vmatpush2.bf16.msra.mxu0 0
      %760 = vmatprep.subr.bf16.mxu0 0
      %761 = vmatpush2.bf16.msra.mxu0 0
      %762 = vmatprep.subr.bf16.mxu0 0
      %763 = vmatpush2.bf16.msra.mxu0 0
      %764 = vmatprep.subr.bf16.mxu0 0
      %765 = vmatpush2.bf16.msra.mxu0 0
      %766 = vmatprep.mubr.bf16.mxu0 0
      %767 = vmatmul.mubr.bf16.gmra.mxu0 %v682
      %v768 = vpop.f32.mrf.mxu0
      %v769 = vadd.f32 0.0, %v768
      %v770 = vpop.f32.mrf.mxu0
      %v771 = vpop.f32.mrf.mxu0
      %v772 = vadd.f32 0.0, %v771
      %v773 = vpop.f32.mrf.mxu0
      %774 = vmatprep.mubr.bf16.mxu0 0
      %775 = vmatmul.mubr.bf16.gmra.mxu0 %v683
      %v776 = vpop.f32.mrf.mxu0
      %v777 = vadd.f32 0.0, %v776
      %v778 = vpop.f32.mrf.mxu0
      %v779 = vpop.f32.mrf.mxu0
      %v780 = vadd.f32 0.0, %v779
      %v781 = vpop.f32.mrf.mxu0
      %782 = vdwg.mxu0
      %v783 = vadd.f32 %v648, %v769
      %v784 = vadd.f32 %v649, %v772
      %v785 = vadd.f32 %v650, %v777
      %v786 = vadd.f32 %v651, %v780
      %s787 = scalar_lea.vmem %s192, 120
      %v788 = vld [vmem:[%s787] sm:$0xf]
      %v789 = vld [vmem:[%s787 + $0x8] sm:$0xf]
      %v790 = vld [vmem:[%s787 + $0x10] sm:$0xf]
      %v791 = vld [vmem:[%s787 + $0x18] sm:$0xf]
      %s792 = scalar_lea.vmem %s1, 256
      %v793 = vld [vmem:[%s792] sm:$0xf]
      %v794 = vld [vmem:[%s792 + $0x4] sm:$0xf]
      %v795 = vld [vmem:[%s792 + $0x8] sm:$0xf]
      %v796 = vld [vmem:[%s792 + $0xc] sm:$0xf]
      %v797 = vld [vmem:[%s792 + $0x10] sm:$0xf]
      %v798 = vld [vmem:[%s792 + $0x14] sm:$0xf]
      %v799 = vld [vmem:[%s792 + $0x18] sm:$0xf]
      %v800 = vld [vmem:[%s792 + $0x1c] sm:$0xf]
      %v801 = vld [vmem:[%s792 + $0x20] sm:$0xf]
      %v802 = vld [vmem:[%s792 + $0x24] sm:$0xf]
      %v803 = vld [vmem:[%s792 + $0x28] sm:$0xf]
      %v804 = vld [vmem:[%s792 + $0x2c] sm:$0xf]
      %v805 = vld [vmem:[%s792 + $0x30] sm:$0xf]
      %v806 = vld [vmem:[%s792 + $0x34] sm:$0xf]
      %v807 = vld [vmem:[%s792 + $0x38] sm:$0xf]
      %v808 = vld [vmem:[%s792 + $0x3c] sm:$0xf]
      %v813 = vunpack.c.l.b16 %v788
      %v814 = vunpack.c.l.b16 %v789
      %v815 = vunpack.c.l.b16 %v790
      %v816 = vunpack.c.l.b16 %v791
      %v817 = vpack.c.b16 %v814, %v813
      %v818 = vpack.c.b16 %v816, %v815
      %v837 = vunpack.c.l.b16 %v793
      %v838 = vunpack.c.l.b16 %v794
      %v839 = vunpack.c.l.b16 %v795
      %v840 = vunpack.c.l.b16 %v796
      %v841 = vunpack.c.l.b16 %v797
      %v842 = vunpack.c.l.b16 %v798
      %v843 = vunpack.c.l.b16 %v799
      %v844 = vunpack.c.l.b16 %v800
      %v845 = vunpack.c.l.b16 %v801
      %v846 = vunpack.c.l.b16 %v802
      %v847 = vunpack.c.l.b16 %v803
      %v848 = vunpack.c.l.b16 %v804
      %v849 = vunpack.c.l.b16 %v805
      %v850 = vunpack.c.l.b16 %v806
      %v851 = vunpack.c.l.b16 %v807
      %v852 = vunpack.c.l.b16 %v808
      %v853 = vpack.c.b16 %v838, %v837
      %v854 = vpack.c.b16 %v840, %v839
      %v855 = vpack.c.b16 %v842, %v841
      %v856 = vpack.c.b16 %v844, %v843
      %v857 = vpack.c.b16 %v846, %v845
      %v858 = vpack.c.b16 %v848, %v847
      %v859 = vpack.c.b16 %v850, %v849
      %v860 = vpack.c.b16 %v852, %v851
      %869 = vmatprep.subr.bf16.mxu0 0
      %870 = vmatpush1.bf16.msra.mxu0 %v860
      %871 = vmatprep.subr.bf16.mxu0 0
      %872 = vmatpush1.bf16.msra.mxu0 %v859
      %873 = vmatprep.subr.bf16.mxu0 0
      %874 = vmatpush1.bf16.msra.mxu0 %v858
      %875 = vmatprep.subr.bf16.mxu0 0
      %876 = vmatpush1.bf16.msra.mxu0 %v857
      %877 = vmatprep.subr.bf16.mxu0 0
      %878 = vmatpush1.bf16.msra.mxu0 %v856
      %879 = vmatprep.subr.bf16.mxu0 0
      %880 = vmatpush1.bf16.msra.mxu0 %v855
      %881 = vmatprep.subr.bf16.mxu0 0
      %882 = vmatpush1.bf16.msra.mxu0 %v854
      %883 = vmatprep.subr.bf16.mxu0 0
      %884 = vmatpush1.bf16.msra.mxu0 %v853
      %885 = vmatprep.subr.bf16.mxu0 0
      %886 = vmatpush2.bf16.msra.mxu0 0
      %887 = vmatprep.subr.bf16.mxu0 0
      %888 = vmatpush2.bf16.msra.mxu0 0
      %889 = vmatprep.subr.bf16.mxu0 0
      %890 = vmatpush2.bf16.msra.mxu0 0
      %891 = vmatprep.subr.bf16.mxu0 0
      %892 = vmatpush2.bf16.msra.mxu0 0
      %893 = vmatprep.subr.bf16.mxu0 0
      %894 = vmatpush2.bf16.msra.mxu0 0
      %895 = vmatprep.subr.bf16.mxu0 0
      %896 = vmatpush2.bf16.msra.mxu0 0
      %897 = vmatprep.subr.bf16.mxu0 0
      %898 = vmatpush2.bf16.msra.mxu0 0
      %899 = vmatprep.subr.bf16.mxu0 0
      %900 = vmatpush2.bf16.msra.mxu0 0
      %901 = vmatprep.mubr.bf16.mxu0 0
      %902 = vmatmul.mubr.bf16.gmra.mxu0 %v817
      %v903 = vpop.f32.mrf.mxu0
      %v904 = vadd.f32 0.0, %v903
      %v905 = vpop.f32.mrf.mxu0
      %v906 = vpop.f32.mrf.mxu0
      %v907 = vadd.f32 0.0, %v906
      %v908 = vpop.f32.mrf.mxu0
      %909 = vmatprep.mubr.bf16.mxu0 0
      %910 = vmatmul.mubr.bf16.gmra.mxu0 %v818
      %v911 = vpop.f32.mrf.mxu0
      %v912 = vadd.f32 0.0, %v911
      %v913 = vpop.f32.mrf.mxu0
      %v914 = vpop.f32.mrf.mxu0
      %v915 = vadd.f32 0.0, %v914
      %v916 = vpop.f32.mrf.mxu0
      %917 = vdwg.mxu0
      %v918 = vadd.f32 %v783, %v904
      %v919 = vadd.f32 %v784, %v907
      %v920 = vadd.f32 %v785, %v912
      %v921 = vadd.f32 %v786, %v915
      %v922 = vld [vmem:[%s652] sm:$0xf]
      %v923 = vld [vmem:[%s652 + $0x4] sm:$0x1]
      %v924 = vld [vmem:[%s652 + $0x8] sm:$0xf]
      %v925 = vld [vmem:[%s652 + $0xc] sm:$0x1]
      %v926 = vld [vmem:[%s652 + $0x10] sm:$0xf]
      %v927 = vld [vmem:[%s652 + $0x14] sm:$0x1]
      %v928 = vld [vmem:[%s652 + $0x18] sm:$0xf]
      %v929 = vld [vmem:[%s652 + $0x1c] sm:$0x1]
      %v931 = vshrl.u32 %v922, 16
      %v933 = vrot.slane %v931, 4
      %v934 = vshll.u32 %v922, 16
      %v936 = vrot.slane %v934, 5
      %v937 = vor.u32 %v933, %v936
      %v938 = vrot.slane %v937, 4
      %v940 = vshll.u32 %v923, 16
      %v942 = vrot.slane %v940, 5
      %v943 = vsel %vm469, %v938, %v942
      %v945 = vshrl.u32 %v924, 16
      %v947 = vrot.slane %v945, 4
      %v948 = vshll.u32 %v924, 16
      %v950 = vrot.slane %v948, 5
      %v951 = vor.u32 %v947, %v950
      %v952 = vrot.slane %v951, 4
      %v954 = vshll.u32 %v925, 16
      %v956 = vrot.slane %v954, 5
      %v957 = vsel %vm469, %v952, %v956
      %v959 = vshrl.u32 %v926, 16
      %v961 = vrot.slane %v959, 4
      %v962 = vshll.u32 %v926, 16
      %v964 = vrot.slane %v962, 5
      %v965 = vor.u32 %v961, %v964
      %v966 = vrot.slane %v965, 4
      %v968 = vshll.u32 %v927, 16
      %v970 = vrot.slane %v968, 5
      %v971 = vsel %vm469, %v966, %v970
      %v973 = vshrl.u32 %v928, 16
      %v975 = vrot.slane %v973, 4
      %v976 = vshll.u32 %v928, 16
      %v978 = vrot.slane %v976, 5
      %v979 = vor.u32 %v975, %v978
      %v980 = vrot.slane %v979, 4
      %v982 = vshll.u32 %v929, 16
      %v984 = vrot.slane %v982, 5
      %v985 = vsel %vm469, %v980, %v984
      %s986 = scalar_lea.vmem %s1, 320
      %v987 = vld [vmem:[%s986] sm:$0xf]
      %v988 = vld [vmem:[%s986 + $0x4] sm:$0xf]
      %v989 = vld [vmem:[%s986 + $0x8] sm:$0xf]
      %v990 = vld [vmem:[%s986 + $0xc] sm:$0xf]
      %v991 = vld [vmem:[%s986 + $0x10] sm:$0xf]
      %v992 = vld [vmem:[%s986 + $0x14] sm:$0xf]
      %v993 = vld [vmem:[%s986 + $0x18] sm:$0xf]
      %v994 = vld [vmem:[%s986 + $0x1c] sm:$0xf]
      %v995 = vld [vmem:[%s986 + $0x20] sm:$0xf]
      %v996 = vld [vmem:[%s986 + $0x24] sm:$0xf]
      %v997 = vld [vmem:[%s986 + $0x28] sm:$0xf]
      %v998 = vld [vmem:[%s986 + $0x2c] sm:$0xf]
      %v999 = vld [vmem:[%s986 + $0x30] sm:$0xf]
      %v1000 = vld [vmem:[%s986 + $0x34] sm:$0xf]
      %v1001 = vld [vmem:[%s986 + $0x38] sm:$0xf]
      %v1002 = vld [vmem:[%s986 + $0x3c] sm:$0xf]
      %v1003 = vunpack.c.l.b16 %v943
      %v1004 = vunpack.c.l.b16 %v957
      %v1005 = vunpack.c.l.b16 %v971
      %v1006 = vunpack.c.l.b16 %v985
      %v1007 = vpack.c.b16 %v1004, %v1003
      %v1008 = vpack.c.b16 %v1006, %v1005
      %v1027 = vunpack.c.l.b16 %v987
      %v1028 = vunpack.c.l.b16 %v988
      %v1029 = vunpack.c.l.b16 %v989
      %v1030 = vunpack.c.l.b16 %v990
      %v1031 = vunpack.c.l.b16 %v991
      %v1032 = vunpack.c.l.b16 %v992
      %v1033 = vunpack.c.l.b16 %v993
      %v1034 = vunpack.c.l.b16 %v994
      %v1035 = vunpack.c.l.b16 %v995
      %v1036 = vunpack.c.l.b16 %v996
      %v1037 = vunpack.c.l.b16 %v997
      %v1038 = vunpack.c.l.b16 %v998
      %v1039 = vunpack.c.l.b16 %v999
      %v1040 = vunpack.c.l.b16 %v1000
      %v1041 = vunpack.c.l.b16 %v1001
      %v1042 = vunpack.c.l.b16 %v1002
      %v1043 = vpack.c.b16 %v1028, %v1027
      %v1044 = vpack.c.b16 %v1030, %v1029
      %v1045 = vpack.c.b16 %v1032, %v1031
      %v1046 = vpack.c.b16 %v1034, %v1033
      %v1047 = vpack.c.b16 %v1036, %v1035
      %v1048 = vpack.c.b16 %v1038, %v1037
      %v1049 = vpack.c.b16 %v1040, %v1039
      %v1050 = vpack.c.b16 %v1042, %v1041
      %1059 = vmatprep.subr.bf16.mxu0 0
      %1060 = vmatpush1.bf16.msra.mxu0 %v1050
      %1061 = vmatprep.subr.bf16.mxu0 0
      %1062 = vmatpush1.bf16.msra.mxu0 %v1049
      %1063 = vmatprep.subr.bf16.mxu0 0
      %1064 = vmatpush1.bf16.msra.mxu0 %v1048
      %1065 = vmatprep.subr.bf16.mxu0 0
      %1066 = vmatpush1.bf16.msra.mxu0 %v1047
      %1067 = vmatprep.subr.bf16.mxu0 0
      %1068 = vmatpush1.bf16.msra.mxu0 %v1046
      %1069 = vmatprep.subr.bf16.mxu0 0
      %1070 = vmatpush1.bf16.msra.mxu0 %v1045
      %1071 = vmatprep.subr.bf16.mxu0 0
      %1072 = vmatpush1.bf16.msra.mxu0 %v1044
      %1073 = vmatprep.subr.bf16.mxu0 0
      %1074 = vmatpush1.bf16.msra.mxu0 %v1043
      %1075 = vmatprep.subr.bf16.mxu0 0
      %1076 = vmatpush2.bf16.msra.mxu0 0
      %1077 = vmatprep.subr.bf16.mxu0 0
      %1078 = vmatpush2.bf16.msra.mxu0 0
      %1079 = vmatprep.subr.bf16.mxu0 0
      %1080 = vmatpush2.bf16.msra.mxu0 0
      %1081 = vmatprep.subr.bf16.mxu0 0
      %1082 = vmatpush2.bf16.msra.mxu0 0
      %1083 = vmatprep.subr.bf16.mxu0 0
      %1084 = vmatpush2.bf16.msra.mxu0 0
      %1085 = vmatprep.subr.bf16.mxu0 0
      %1086 = vmatpush2.bf16.msra.mxu0 0
      %1087 = vmatprep.subr.bf16.mxu0 0
      %1088 = vmatpush2.bf16.msra.mxu0 0
      %1089 = vmatprep.subr.bf16.mxu0 0
      %1090 = vmatpush2.bf16.msra.mxu0 0
      %1091 = vmatprep.mubr.bf16.mxu0 0
      %1092 = vmatmul.mubr.bf16.gmra.mxu0 %v1007
      %v1093 = vpop.f32.mrf.mxu0
      %v1094 = vadd.f32 0.0, %v1093
      %v1095 = vpop.f32.mrf.mxu0
      %v1096 = vpop.f32.mrf.mxu0
      %v1097 = vadd.f32 0.0, %v1096
      %v1098 = vpop.f32.mrf.mxu0
      %1099 = vmatprep.mubr.bf16.mxu0 0
      %1100 = vmatmul.mubr.bf16.gmra.mxu0 %v1008
      %v1101 = vpop.f32.mrf.mxu0
      %v1102 = vadd.f32 0.0, %v1101
      %v1103 = vpop.f32.mrf.mxu0
      %v1104 = vpop.f32.mrf.mxu0
      %v1105 = vadd.f32 0.0, %v1104
      %v1106 = vpop.f32.mrf.mxu0
      %1107 = vdwg.mxu0
      %v1108 = vadd.f32 %v918, %v1094
      %v1109 = vadd.f32 %v919, %v1097
      %v1110 = vadd.f32 %v920, %v1102
      %v1111 = vadd.f32 %v921, %v1105
      %s1112 = scalar_lea.vmem %s192, 8
      %v1113 = vld [vmem:[%s1112] sm:$0xf]
      %v1114 = vld [vmem:[%s1112 + $0x8] sm:$0xf]
      %v1115 = vld [vmem:[%s1112 + $0x10] sm:$0xf]
      %v1116 = vld [vmem:[%s1112 + $0x18] sm:$0xf]
      %s1117 = scalar_lea.vmem %s1, 384
      %v1118 = vld [vmem:[%s1117] sm:$0xf]
      %v1119 = vld [vmem:[%s1117 + $0x4] sm:$0xf]
      %v1120 = vld [vmem:[%s1117 + $0x8] sm:$0xf]
      %v1121 = vld [vmem:[%s1117 + $0xc] sm:$0xf]
      %v1122 = vld [vmem:[%s1117 + $0x10] sm:$0xf]
      %v1123 = vld [vmem:[%s1117 + $0x14] sm:$0xf]
      %v1124 = vld [vmem:[%s1117 + $0x18] sm:$0xf]
      %v1125 = vld [vmem:[%s1117 + $0x1c] sm:$0xf]
      %v1126 = vld [vmem:[%s1117 + $0x20] sm:$0xf]
      %v1127 = vld [vmem:[%s1117 + $0x24] sm:$0xf]
      %v1128 = vld [vmem:[%s1117 + $0x28] sm:$0xf]
      %v1129 = vld [vmem:[%s1117 + $0x2c] sm:$0xf]
      %v1130 = vld [vmem:[%s1117 + $0x30] sm:$0xf]
      %v1131 = vld [vmem:[%s1117 + $0x34] sm:$0xf]
      %v1132 = vld [vmem:[%s1117 + $0x38] sm:$0xf]
      %v1133 = vld [vmem:[%s1117 + $0x3c] sm:$0xf]
      %v1138 = vunpack.c.l.b16 %v1113
      %v1139 = vunpack.c.l.b16 %v1114
      %v1140 = vunpack.c.l.b16 %v1115
      %v1141 = vunpack.c.l.b16 %v1116
      %v1142 = vpack.c.b16 %v1139, %v1138
      %v1143 = vpack.c.b16 %v1141, %v1140
      %v1162 = vunpack.c.l.b16 %v1118
      %v1163 = vunpack.c.l.b16 %v1119
      %v1164 = vunpack.c.l.b16 %v1120
      %v1165 = vunpack.c.l.b16 %v1121
      %v1166 = vunpack.c.l.b16 %v1122
      %v1167 = vunpack.c.l.b16 %v1123
      %v1168 = vunpack.c.l.b16 %v1124
      %v1169 = vunpack.c.l.b16 %v1125
      %v1170 = vunpack.c.l.b16 %v1126
      %v1171 = vunpack.c.l.b16 %v1127
      %v1172 = vunpack.c.l.b16 %v1128
      %v1173 = vunpack.c.l.b16 %v1129
      %v1174 = vunpack.c.l.b16 %v1130
      %v1175 = vunpack.c.l.b16 %v1131
      %v1176 = vunpack.c.l.b16 %v1132
      %v1177 = vunpack.c.l.b16 %v1133
      %v1178 = vpack.c.b16 %v1163, %v1162
      %v1179 = vpack.c.b16 %v1165, %v1164
      %v1180 = vpack.c.b16 %v1167, %v1166
      %v1181 = vpack.c.b16 %v1169, %v1168
      %v1182 = vpack.c.b16 %v1171, %v1170
      %v1183 = vpack.c.b16 %v1173, %v1172
      %v1184 = vpack.c.b16 %v1175, %v1174
      %v1185 = vpack.c.b16 %v1177, %v1176
      %1194 = vmatprep.subr.bf16.mxu0 0
      %1195 = vmatpush1.bf16.msra.mxu0 %v1185
      %1196 = vmatprep.subr.bf16.mxu0 0
      %1197 = vmatpush1.bf16.msra.mxu0 %v1184
      %1198 = vmatprep.subr.bf16.mxu0 0
      %1199 = vmatpush1.bf16.msra.mxu0 %v1183
      %1200 = vmatprep.subr.bf16.mxu0 0
      %1201 = vmatpush1.bf16.msra.mxu0 %v1182
      %1202 = vmatprep.subr.bf16.mxu0 0
      %1203 = vmatpush1.bf16.msra.mxu0 %v1181
      %1204 = vmatprep.subr.bf16.mxu0 0
      %1205 = vmatpush1.bf16.msra.mxu0 %v1180
      %1206 = vmatprep.subr.bf16.mxu0 0
      %1207 = vmatpush1.bf16.msra.mxu0 %v1179
      %1208 = vmatprep.subr.bf16.mxu0 0
      %1209 = vmatpush1.bf16.msra.mxu0 %v1178
      %1210 = vmatprep.subr.bf16.mxu0 0
      %1211 = vmatpush2.bf16.msra.mxu0 0
      %1212 = vmatprep.subr.bf16.mxu0 0
      %1213 = vmatpush2.bf16.msra.mxu0 0
      %1214 = vmatprep.subr.bf16.mxu0 0
      %1215 = vmatpush2.bf16.msra.mxu0 0
      %1216 = vmatprep.subr.bf16.mxu0 0
      %1217 = vmatpush2.bf16.msra.mxu0 0
      %1218 = vmatprep.subr.bf16.mxu0 0
      %1219 = vmatpush2.bf16.msra.mxu0 0
      %1220 = vmatprep.subr.bf16.mxu0 0
      %1221 = vmatpush2.bf16.msra.mxu0 0
      %1222 = vmatprep.subr.bf16.mxu0 0
      %1223 = vmatpush2.bf16.msra.mxu0 0
      %1224 = vmatprep.subr.bf16.mxu0 0
      %1225 = vmatpush2.bf16.msra.mxu0 0
      %1226 = vmatprep.mubr.bf16.mxu0 0
      %1227 = vmatmul.mubr.bf16.gmra.mxu0 %v1142
      %v1228 = vpop.f32.mrf.mxu0
      %v1229 = vadd.f32 0.0, %v1228
      %v1230 = vpop.f32.mrf.mxu0
      %v1231 = vpop.f32.mrf.mxu0
      %v1232 = vadd.f32 0.0, %v1231
      %v1233 = vpop.f32.mrf.mxu0
      %1234 = vmatprep.mubr.bf16.mxu0 0
      %1235 = vmatmul.mubr.bf16.gmra.mxu0 %v1143
      %v1236 = vpop.f32.mrf.mxu0
      %v1237 = vadd.f32 0.0, %v1236
      %v1238 = vpop.f32.mrf.mxu0
      %v1239 = vpop.f32.mrf.mxu0
      %v1240 = vadd.f32 0.0, %v1239
      %v1241 = vpop.f32.mrf.mxu0
      %1242 = vdwg.mxu0
      %v1243 = vadd.f32 %v1108, %v1229
      %v1244 = vadd.f32 %v1109, %v1232
      %v1245 = vadd.f32 %v1110, %v1237
      %v1246 = vadd.f32 %v1111, %v1240
      %s1247 = scalar_lea.vmem %s192, 48
      %v1248 = vld [vmem:[%s1247] sm:$0xf]
      %v1249 = vld [vmem:[%s1247 + $0x8] sm:$0xf]
      %v1250 = vld [vmem:[%s1247 + $0x10] sm:$0xf]
      %v1251 = vld [vmem:[%s1247 + $0x18] sm:$0xf]
      %s1252 = scalar_lea.vmem %s1, 448
      %v1253 = vld [vmem:[%s1252] sm:$0xf]
      %v1254 = vld [vmem:[%s1252 + $0x4] sm:$0xf]
      %v1255 = vld [vmem:[%s1252 + $0x8] sm:$0xf]
      %v1256 = vld [vmem:[%s1252 + $0xc] sm:$0xf]
      %v1257 = vld [vmem:[%s1252 + $0x10] sm:$0xf]
      %v1258 = vld [vmem:[%s1252 + $0x14] sm:$0xf]
      %v1259 = vld [vmem:[%s1252 + $0x18] sm:$0xf]
      %v1260 = vld [vmem:[%s1252 + $0x1c] sm:$0xf]
      %v1261 = vld [vmem:[%s1252 + $0x20] sm:$0xf]
      %v1262 = vld [vmem:[%s1252 + $0x24] sm:$0xf]
      %v1263 = vld [vmem:[%s1252 + $0x28] sm:$0xf]
      %v1264 = vld [vmem:[%s1252 + $0x2c] sm:$0xf]
      %v1265 = vld [vmem:[%s1252 + $0x30] sm:$0xf]
      %v1266 = vld [vmem:[%s1252 + $0x34] sm:$0xf]
      %v1267 = vld [vmem:[%s1252 + $0x38] sm:$0xf]
      %v1268 = vld [vmem:[%s1252 + $0x3c] sm:$0xf]
      %v1273 = vunpack.c.l.b16 %v1248
      %v1274 = vunpack.c.l.b16 %v1249
      %v1275 = vunpack.c.l.b16 %v1250
      %v1276 = vunpack.c.l.b16 %v1251
      %v1277 = vpack.c.b16 %v1274, %v1273
      %v1278 = vpack.c.b16 %v1276, %v1275
      %v1297 = vunpack.c.l.b16 %v1253
      %v1298 = vunpack.c.l.b16 %v1254
      %v1299 = vunpack.c.l.b16 %v1255
      %v1300 = vunpack.c.l.b16 %v1256
      %v1301 = vunpack.c.l.b16 %v1257
      %v1302 = vunpack.c.l.b16 %v1258
      %v1303 = vunpack.c.l.b16 %v1259
      %v1304 = vunpack.c.l.b16 %v1260
      %v1305 = vunpack.c.l.b16 %v1261
      %v1306 = vunpack.c.l.b16 %v1262
      %v1307 = vunpack.c.l.b16 %v1263
      %v1308 = vunpack.c.l.b16 %v1264
      %v1309 = vunpack.c.l.b16 %v1265
      %v1310 = vunpack.c.l.b16 %v1266
      %v1311 = vunpack.c.l.b16 %v1267
      %v1312 = vunpack.c.l.b16 %v1268
      %v1313 = vpack.c.b16 %v1298, %v1297
      %v1314 = vpack.c.b16 %v1300, %v1299
      %v1315 = vpack.c.b16 %v1302, %v1301
      %v1316 = vpack.c.b16 %v1304, %v1303
      %v1317 = vpack.c.b16 %v1306, %v1305
      %v1318 = vpack.c.b16 %v1308, %v1307
      %v1319 = vpack.c.b16 %v1310, %v1309
      %v1320 = vpack.c.b16 %v1312, %v1311
      %1329 = vmatprep.subr.bf16.mxu0 0
      %1330 = vmatpush1.bf16.msra.mxu0 %v1320
      %1331 = vmatprep.subr.bf16.mxu0 0
      %1332 = vmatpush1.bf16.msra.mxu0 %v1319
      %1333 = vmatprep.subr.bf16.mxu0 0
      %1334 = vmatpush1.bf16.msra.mxu0 %v1318
      %1335 = vmatprep.subr.bf16.mxu0 0
      %1336 = vmatpush1.bf16.msra.mxu0 %v1317
      %1337 = vmatprep.subr.bf16.mxu0 0
      %1338 = vmatpush1.bf16.msra.mxu0 %v1316
      %1339 = vmatprep.subr.bf16.mxu0 0
      %1340 = vmatpush1.bf16.msra.mxu0 %v1315
      %1341 = vmatprep.subr.bf16.mxu0 0
      %1342 = vmatpush1.bf16.msra.mxu0 %v1314
      %1343 = vmatprep.subr.bf16.mxu0 0
      %1344 = vmatpush1.bf16.msra.mxu0 %v1313
      %1345 = vmatprep.subr.bf16.mxu0 0
      %1346 = vmatpush2.bf16.msra.mxu0 0
      %1347 = vmatprep.subr.bf16.mxu0 0
      %1348 = vmatpush2.bf16.msra.mxu0 0
      %1349 = vmatprep.subr.bf16.mxu0 0
      %1350 = vmatpush2.bf16.msra.mxu0 0
      %1351 = vmatprep.subr.bf16.mxu0 0
      %1352 = vmatpush2.bf16.msra.mxu0 0
      %1353 = vmatprep.subr.bf16.mxu0 0
      %1354 = vmatpush2.bf16.msra.mxu0 0
      %1355 = vmatprep.subr.bf16.mxu0 0
      %1356 = vmatpush2.bf16.msra.mxu0 0
      %1357 = vmatprep.subr.bf16.mxu0 0
      %1358 = vmatpush2.bf16.msra.mxu0 0
      %1359 = vmatprep.subr.bf16.mxu0 0
      %1360 = vmatpush2.bf16.msra.mxu0 0
      %1361 = vmatprep.mubr.bf16.mxu0 0
      %1362 = vmatmul.mubr.bf16.gmra.mxu0 %v1277
      %v1363 = vpop.f32.mrf.mxu0
      %v1364 = vadd.f32 0.0, %v1363
      %v1365 = vpop.f32.mrf.mxu0
      %v1366 = vpop.f32.mrf.mxu0
      %v1367 = vadd.f32 0.0, %v1366
      %v1368 = vpop.f32.mrf.mxu0
      %1369 = vmatprep.mubr.bf16.mxu0 0
      %1370 = vmatmul.mubr.bf16.gmra.mxu0 %v1278
      %v1371 = vpop.f32.mrf.mxu0
      %v1372 = vadd.f32 0.0, %v1371
      %v1373 = vpop.f32.mrf.mxu0
      %v1374 = vpop.f32.mrf.mxu0
      %v1375 = vadd.f32 0.0, %v1374
      %v1376 = vpop.f32.mrf.mxu0
      %1377 = vdwg.mxu0
      %v1378 = vadd.f32 %v1243, %v1364
      %v1379 = vadd.f32 %v1244, %v1367
      %v1380 = vadd.f32 %v1245, %v1372
      %v1381 = vadd.f32 %v1246, %v1375
      %v1382 = vld [vmem:[%s1112] sm:$0xf]
      %v1383 = vld [vmem:[%s1112 + $0x4] sm:$0x1]
      %v1384 = vld [vmem:[%s1112 + $0x8] sm:$0xf]
      %v1385 = vld [vmem:[%s1112 + $0xc] sm:$0x1]
      %v1386 = vld [vmem:[%s1112 + $0x10] sm:$0xf]
      %v1387 = vld [vmem:[%s1112 + $0x14] sm:$0x1]
      %v1388 = vld [vmem:[%s1112 + $0x18] sm:$0xf]
      %v1389 = vld [vmem:[%s1112 + $0x1c] sm:$0x1]
      %v1391 = vshrl.u32 %v1382, 16
      %v1393 = vrot.slane %v1391, 4
      %v1394 = vshll.u32 %v1382, 16
      %v1396 = vrot.slane %v1394, 5
      %v1397 = vor.u32 %v1393, %v1396
      %v1398 = vrot.slane %v1397, 4
      %v1400 = vshll.u32 %v1383, 16
      %v1402 = vrot.slane %v1400, 5
      %v1403 = vsel %vm469, %v1398, %v1402
      %v1405 = vshrl.u32 %v1384, 16
      %v1407 = vrot.slane %v1405, 4
      %v1408 = vshll.u32 %v1384, 16
      %v1410 = vrot.slane %v1408, 5
      %v1411 = vor.u32 %v1407, %v1410
      %v1412 = vrot.slane %v1411, 4
      %v1414 = vshll.u32 %v1385, 16
      %v1416 = vrot.slane %v1414, 5
      %v1417 = vsel %vm469, %v1412, %v1416
      %v1419 = vshrl.u32 %v1386, 16
      %v1421 = vrot.slane %v1419, 4
      %v1422 = vshll.u32 %v1386, 16
      %v1424 = vrot.slane %v1422, 5
      %v1425 = vor.u32 %v1421, %v1424
      %v1426 = vrot.slane %v1425, 4
      %v1428 = vshll.u32 %v1387, 16
      %v1430 = vrot.slane %v1428, 5
      %v1431 = vsel %vm469, %v1426, %v1430
      %v1433 = vshrl.u32 %v1388, 16
      %v1435 = vrot.slane %v1433, 4
      %v1436 = vshll.u32 %v1388, 16
      %v1438 = vrot.slane %v1436, 5
      %v1439 = vor.u32 %v1435, %v1438
      %v1440 = vrot.slane %v1439, 4
      %v1442 = vshll.u32 %v1389, 16
      %v1444 = vrot.slane %v1442, 5
      %v1445 = vsel %vm469, %v1440, %v1444
      %s1446 = scalar_lea.vmem %s1, 512
      %v1447 = vld [vmem:[%s1446] sm:$0xf]
      %v1448 = vld [vmem:[%s1446 + $0x4] sm:$0xf]
      %v1449 = vld [vmem:[%s1446 + $0x8] sm:$0xf]
      %v1450 = vld [vmem:[%s1446 + $0xc] sm:$0xf]
      %v1451 = vld [vmem:[%s1446 + $0x10] sm:$0xf]
      %v1452 = vld [vmem:[%s1446 + $0x14] sm:$0xf]
      %v1453 = vld [vmem:[%s1446 + $0x18] sm:$0xf]
      %v1454 = vld [vmem:[%s1446 + $0x1c] sm:$0xf]
      %v1455 = vld [vmem:[%s1446 + $0x20] sm:$0xf]
      %v1456 = vld [vmem:[%s1446 + $0x24] sm:$0xf]
      %v1457 = vld [vmem:[%s1446 + $0x28] sm:$0xf]
      %v1458 = vld [vmem:[%s1446 + $0x2c] sm:$0xf]
      %v1459 = vld [vmem:[%s1446 + $0x30] sm:$0xf]
      %v1460 = vld [vmem:[%s1446 + $0x34] sm:$0xf]
      %v1461 = vld [vmem:[%s1446 + $0x38] sm:$0xf]
      %v1462 = vld [vmem:[%s1446 + $0x3c] sm:$0xf]
      %v1463 = vunpack.c.l.b16 %v1403
      %v1464 = vunpack.c.l.b16 %v1417
      %v1465 = vunpack.c.l.b16 %v1431
      %v1466 = vunpack.c.l.b16 %v1445
      %v1467 = vpack.c.b16 %v1464, %v1463
      %v1468 = vpack.c.b16 %v1466, %v1465
      %v1487 = vunpack.c.l.b16 %v1447
      %v1488 = vunpack.c.l.b16 %v1448
      %v1489 = vunpack.c.l.b16 %v1449
      %v1490 = vunpack.c.l.b16 %v1450
      %v1491 = vunpack.c.l.b16 %v1451
      %v1492 = vunpack.c.l.b16 %v1452
      %v1493 = vunpack.c.l.b16 %v1453
      %v1494 = vunpack.c.l.b16 %v1454
      %v1495 = vunpack.c.l.b16 %v1455
      %v1496 = vunpack.c.l.b16 %v1456
      %v1497 = vunpack.c.l.b16 %v1457
      %v1498 = vunpack.c.l.b16 %v1458
      %v1499 = vunpack.c.l.b16 %v1459
      %v1500 = vunpack.c.l.b16 %v1460
      %v1501 = vunpack.c.l.b16 %v1461
      %v1502 = vunpack.c.l.b16 %v1462
      %v1503 = vpack.c.b16 %v1488, %v1487
      %v1504 = vpack.c.b16 %v1490, %v1489
      %v1505 = vpack.c.b16 %v1492, %v1491
      %v1506 = vpack.c.b16 %v1494, %v1493
      %v1507 = vpack.c.b16 %v1496, %v1495
      %v1508 = vpack.c.b16 %v1498, %v1497
      %v1509 = vpack.c.b16 %v1500, %v1499
      %v1510 = vpack.c.b16 %v1502, %v1501
      %1519 = vmatprep.subr.bf16.mxu0 0
      %1520 = vmatpush1.bf16.msra.mxu0 %v1510
      %1521 = vmatprep.subr.bf16.mxu0 0
      %1522 = vmatpush1.bf16.msra.mxu0 %v1509
      %1523 = vmatprep.subr.bf16.mxu0 0
      %1524 = vmatpush1.bf16.msra.mxu0 %v1508
      %1525 = vmatprep.subr.bf16.mxu0 0
      %1526 = vmatpush1.bf16.msra.mxu0 %v1507
      %1527 = vmatprep.subr.bf16.mxu0 0
      %1528 = vmatpush1.bf16.msra.mxu0 %v1506
      %1529 = vmatprep.subr.bf16.mxu0 0
      %1530 = vmatpush1.bf16.msra.mxu0 %v1505
      %1531 = vmatprep.subr.bf16.mxu0 0
      %1532 = vmatpush1.bf16.msra.mxu0 %v1504
      %1533 = vmatprep.subr.bf16.mxu0 0
      %1534 = vmatpush1.bf16.msra.mxu0 %v1503
      %1535 = vmatprep.subr.bf16.mxu0 0
      %1536 = vmatpush2.bf16.msra.mxu0 0
      %1537 = vmatprep.subr.bf16.mxu0 0
      %1538 = vmatpush2.bf16.msra.mxu0 0
      %1539 = vmatprep.subr.bf16.mxu0 0
      %1540 = vmatpush2.bf16.msra.mxu0 0
      %1541 = vmatprep.subr.bf16.mxu0 0
      %1542 = vmatpush2.bf16.msra.mxu0 0
      %1543 = vmatprep.subr.bf16.mxu0 0
      %1544 = vmatpush2.bf16.msra.mxu0 0
      %1545 = vmatprep.subr.bf16.mxu0 0
      %1546 = vmatpush2.bf16.msra.mxu0 0
      %1547 = vmatprep.subr.bf16.mxu0 0
      %1548 = vmatpush2.bf16.msra.mxu0 0
      %1549 = vmatprep.subr.bf16.mxu0 0
      %1550 = vmatpush2.bf16.msra.mxu0 0
      %1551 = vmatprep.mubr.bf16.mxu0 0
      %1552 = vmatmul.mubr.bf16.gmra.mxu0 %v1467
      %v1553 = vpop.f32.mrf.mxu0
      %v1554 = vadd.f32 0.0, %v1553
      %v1555 = vpop.f32.mrf.mxu0
      %v1556 = vpop.f32.mrf.mxu0
      %v1557 = vadd.f32 0.0, %v1556
      %v1558 = vpop.f32.mrf.mxu0
      %1559 = vmatprep.mubr.bf16.mxu0 0
      %1560 = vmatmul.mubr.bf16.gmra.mxu0 %v1468
      %v1561 = vpop.f32.mrf.mxu0
      %v1562 = vadd.f32 0.0, %v1561
      %v1563 = vpop.f32.mrf.mxu0
      %v1564 = vpop.f32.mrf.mxu0
      %v1565 = vadd.f32 0.0, %v1564
      %v1566 = vpop.f32.mrf.mxu0
      %1567 = vdwg.mxu0
      %v1568 = vadd.f32 %v1378, %v1554
      %v1569 = vadd.f32 %v1379, %v1557
      %v1570 = vadd.f32 %v1380, %v1562
      %v1571 = vadd.f32 %v1381, %v1565
      %v1572 = vld [vmem:[%s2] sm:$0x1]
      %v1574 = vlaneseq
      %v1575 = vshrl.u32 %v1574, 7
      %v1576 = vsub.s32 0, %v1575
      %v1577 = vrot.slane %v1572, %v1576
      %v1579 = vmul.f32 %v1568, %v1577
      %v1580 = vmul.f32 %v1569, %v1577
      %v1581 = vmul.f32 %v1570, %v1577
      %v1582 = vmul.f32 %v1571, %v1577
      %v1583 = vld [vmem:[%s3] sm:$0x1]
      %v1585 = vlaneseq
      %v1586 = vshrl.u32 %v1585, 7
      %v1587 = vsub.s32 0, %v1586
      %v1588 = vrot.slane %v1583, %v1587
      %v1590 = vadd.f32 %v1579, %v1588
      %v1591 = vadd.f32 %v1580, %v1588
      %v1592 = vadd.f32 %v1581, %v1588
      %v1593 = vadd.f32 %v1582, %v1588
      %v1594 = vmax.f32 %v1590, 0.0
      %v1595 = vmax.f32 %v1591, 0.0
      %v1596 = vmax.f32 %v1592, 0.0
      %v1597 = vmax.f32 %v1593, 0.0
      %v1598 = vpack.c.bf16 %v1594, %v1594
      %v1599 = vpack.c.bf16 %v1595, %v1595
      %v1600 = vpack.c.bf16 %v1596, %v1596
      %v1601 = vpack.c.bf16 %v1597, %v1597
      %1602 = vst [vmem:[%s197] sm:$0x3] %v1598
      %1603 = vst [vmem:[%s197 + $0x2] sm:$0x3] %v1599
      %1604 = vst [vmem:[%s197 + $0x4] sm:$0x3] %v1600
      %1605 = vst [vmem:[%s197 + $0x6] sm:$0x3] %v1601
      %p1606 = scmp.lt.s32.totalorder %s15, 1
      %s1607 = scalar_select %p1606, %s15, 1
      %s1608 = smul.addr %s1607, 4
      %s1609 = smul.addr %s1608, 2
      %s1610 = scalar_lea.vmem %s4, %s1609
      // Predicated region
      $region37: #{leafnet_forward.25} parent=35 // pred_check
        %p1611 = pneg %p122
      $region38: #{leafnet_forward.25} parent=35 // pred_check_branch
        %1613 = sbr.rel (%p1611) target = $region40
      $region39: #{leafnet_forward.25} parent=35 // pred_region
        _
      $region40: #{leafnet_forward.25} parent=35 // pred_fallthru
        _
    $region36: #{leafnet_forward.25} parent=5 // pred_fallthru
      _
    %p1614 = scmp.le.s32.totalorder 2, %s10
    // Predicated region
    $region41: #{leafnet_forward.25} parent=5 // pred_check
      %p1615 = pneg %p1614
    $region42: #{leafnet_forward.25} parent=5 // pred_check_branch
      %1617 = sbr.rel (%p1615) target = $region44
    $region43: #{leafnet_forward.25} parent=5 // pred_region
      %s1618 = ssub.s32 %s10, 2
      // Predicated region
      $region45: #{leafnet_forward.25} parent=43 // pred_check
        %p1619 = pneg %p128
      $region46: #{leafnet_forward.25} parent=43 // pred_check_branch
        %1621 = sbr.rel (%p1619) target = $region48
      $region47: #{leafnet_forward.25} parent=43 // pred_region
        %p1622 = scmp.lt.s32.totalorder %s16, 1
        %s1623 = scalar_select %p1622, %s16, 1
        %s1624 = smul.addr %s1623, 4
        %s1625 = smul.addr %s1624, 2
        %s1626 = scalar_lea.vmem %s4, %s1625
      $region48: #{leafnet_forward.25} parent=43 // pred_fallthru
        _
    $region44: #{leafnet_forward.25} parent=5 // pred_fallthru
      _
  $region6: #{leafnet_forward.25} parent=0 // loop_footer
    %s14 = sadd.s32 1, %s10
  $region7: #{leafnet_forward.25} parent=0 // loop_footer_branch
    %9 = sbr.rel target = $region3
  $region8: #{leafnet_forward.25} parent=0 // loop_exit
    _

</llo_original>
